<compile_context>
chip_gen: v7x
topology: tpu7x:2x2x1
jax: 0.10.0
libtpu: 0.0.40
codegen_flags: <defaults>
</compile_context>

<pallas_src>
import jax
import jax.numpy as jnp
from jax import lax
from jax.experimental import pallas as pl
from jax.experimental.pallas import tpu as pltpu

# Network dims implied by the module (fc1 expects 40*6*4 = 960 features -> input 1x30x22).
H0, W0 = 30, 22          # input spatial size
C1, KK = 20, 3           # conv1 channels / kernel size
HP1, WP1 = 14, 10        # pool1 output
C2 = 40                  # conv2 channels
HP2, WP2 = 6, 4          # pool2 output
F1, F2 = 80, 16          # fc sizes
OUT_PAD = 128            # lane-dense output block width (logits live in cols [0,16))

TB = 32                  # images per grid step (batch tile); for v7x throughput keep
                         # total batch >= 2*TB so both TensorCores get grid steps
R = TB * H0              # rows per block: (h, image) pairs = 960


# ------------------------------- fused kernel -------------------------------

def _cnn_fused_kernel(x_ref, m1_ref, b1_ref, m2_ref, b2_ref,
                      fw1_ref, fb1_ref, fw2_ref, fb2_ref, o_ref):
    mx_dtype = m1_ref.dtype          # matmul operand dtype (bf16 by default, f32 allowed)

    def mm(a, b):
        return jnp.dot(a.astype(mx_dtype), b, preferred_element_type=jnp.float32)

    def up(a, k):
        # rows: result[r] = a[(r + k) mod R].  Rows are grouped by h (row = h*TB + n),
        # so a shift of k = d*TB moves data by d in h within the same image; wrapped
        # rows only land at heights that are discarded downstream.
        return pltpu.roll(a, a.shape[0] - k, axis=0)

    x = x_ref[...]                                                   # (R, 22), rows = (h, n)

    # ---- conv1 (3x3) + ReLU + 2x2 maxpool ----
    # vertical taps fused along K via rolled copies; W-pool folded into the two
    # tap-parity matmuls; H-pool = elementwise max with the TB-row-shifted copy;
    # bias + ReLU applied once after all the maxes.
    xcat = jnp.concatenate([x, up(x, TB), up(x, 2 * TB)], axis=1)    # (R, 66)
    a = jnp.maximum(mm(xcat, m1_ref[0]), mm(xcat, m1_ref[1]))        # (R, 200) f32
    v = jnp.maximum(jnp.maximum(a, up(a, TB)) + b1_ref[...], 0.0)    # valid at even h

    # ---- conv2 (3x3) + ReLU + 2x2 maxpool (valid rows live 2*TB apart) ----
    vcat = jnp.concatenate([v, up(v, 2 * TB), up(v, 4 * TB)], axis=1)   # (R, 600)
    c = jnp.maximum(mm(vcat, m2_ref[0]), mm(vcat, m2_ref[1]))           # (R, 160) f32
    p2 = jnp.maximum(jnp.maximum(c, up(c, 2 * TB)) + b2_ref[...], 0.0)  # valid at h in {0,4,..,20}

    # ---- flatten (torch NCHW order folded into fw1) + FC1 + ReLU + FC2 ----
    # Row h = 4*hp2 of image n sits at row 4*hp2*TB + n: six static, aligned slices.
    g = jnp.concatenate(
        [p2[4 * h * TB:(4 * h + 1) * TB, :] for h in range(HP2)], axis=1)   # (TB, 960)
    h1 = jnp.maximum(mm(g, fw1_ref[...]) + fb1_ref[...], 0.0)               # (TB, 80)
    o_ref[...] = (mm(h1, fw2_ref[...]) + fb2_ref[...]).astype(o_ref.dtype)  # (TB, 128)


# --------------------------- one-time weight prep ----------------------------

def prepare_kernel_consts(params, mm_dtype=jnp.bfloat16):
    """Reshuffle PyTorch-style weights into the matrices used by the fused kernel."""
    f32 = jnp.float32
    w1 = jnp.asarray(params["w1"], f32)      # (C1, 1, 3, 3)
    b1 = jnp.asarray(params["b1"], f32)
    w2 = jnp.asarray(params["w2"], f32)      # (C2, C1, 3, 3)
    b2 = jnp.asarray(params["b2"], f32)
    fw1 = jnp.asarray(params["fw1"], f32)    # (F1, C2*HP2*WP2)
    fb1 = jnp.asarray(params["fb1"], f32)
    fw2 = jnp.asarray(params["fw2"], f32)    # (F2, F1)
    fb2 = jnp.asarray(params["fb2"], f32)

    # conv1 tap matrices, vertical taps stacked along K, one per pool parity p:
    #   m1[p][di*W0 + wi, wp*C1 + c] = w1[c, 0, di, wi - (2*wp + p)]
    wi = jnp.arange(W0)
    wp = jnp.arange(WP1)
    m1 = []
    for p in range(2):
        dj = wi[:, None] - (2 * wp + p)[None, :]               # (W0, WP1)
        valid = (dj >= 0) & (dj < KK)
        g = w1[:, 0][:, :, jnp.clip(dj, 0, KK - 1)]            # (C1, KK, W0, WP1)
        g = jnp.where(valid[None, None], g, 0.0)
        m1.append(jnp.transpose(g, (1, 2, 3, 0)).reshape(KK * W0, WP1 * C1))
    m1 = jnp.stack(m1, axis=0)                                  # (2, 66, 200)
    b1row = jnp.tile(b1, WP1).reshape(1, WP1 * C1)

    # conv2 tap matrices:
    #   m2[p][di*(WP1*C1) + wp*C1 + ci, wp2*C2 + c2] = w2[c2, ci, di, wp - (2*wp2 + p)]
    wpv = jnp.arange(WP1)
    wp2 = jnp.arange(WP2)
    m2 = []
    for p in range(2):
        dj = wpv[:, None] - (2 * wp2 + p)[None, :]             # (WP1, WP2)
        valid = (dj >= 0) & (dj < KK)
        g = w2[:, :, :, jnp.clip(dj, 0, KK - 1)]               # (C2, C1, KK, WP1, WP2)
        g = jnp.where(valid[None, None, None], g, 0.0)
        m2.append(jnp.transpose(g, (2, 3, 1, 4, 0)).reshape(KK * WP1 * C1, WP2 * C2))
    m2 = jnp.stack(m2, axis=0)                                  # (2, 600, 160)
    b2row = jnp.tile(b2, WP2).reshape(1, WP2 * C2)

    # FC1 weight reordered to the kernel's flatten order (hp2, wp2, c2); FC2 weight/bias
    # padded to a lane-dense 128-wide output block (logits live in cols [0,16)).
    fw1r = jnp.transpose(fw1.reshape(F1, C2, HP2, WP2), (2, 3, 1, 0))
    fw1r = fw1r.reshape(HP2 * WP2 * C2, F1)                     # (960, 80)
    fw2p = jnp.zeros((F1, OUT_PAD), f32).at[:, :F2].set(fw2.T)  # (80, 128)
    fb2p = jnp.zeros((1, OUT_PAD), f32).at[0, :F2].set(fb2)

    return dict(m1=m1.astype(mm_dtype), b1=b1row,
                m2=m2.astype(mm_dtype), b2=b2row,
                fw1=fw1r.astype(mm_dtype), fb1=fb1.reshape(1, F1),
                fw2=fw2p.astype(mm_dtype), fb2=fb2p)


# ------------------------------ forward wrapper ------------------------------

def cnn_forward_pallas(consts, x_nchw):
    """Pallas-backed forward pass matching CNN.forward (returns pre-softmax logits)."""
    n = x_nchw.shape[0]
    assert x_nchw.shape[1:] == (1, H0, W0), x_nchw.shape
    ntiles = (n + TB - 1) // TB
    npad = ntiles * TB

    x = x_nchw.astype(jnp.float32).reshape(n, H0, W0)
    if npad != n:                                   # skip the pad copy when not needed
        x = jnp.pad(x, ((0, npad - n), (0, 0), (0, 0)))
    # Row layout inside each batch tile is (h, image): row = h*TB + n_local, so every
    # row shift used by the kernel is a whole-h shift (multiple of TB) and the FC
    # gather is six static, sublane-aligned row slices.
    x2d = x.reshape(ntiles, TB, H0, W0).transpose(0, 2, 1, 3).reshape(ntiles * R, W0)

    const_args = (consts["m1"], consts["b1"], consts["m2"], consts["b2"],
                  consts["fw1"], consts["fb1"], consts["fw2"], consts["fb2"])

    def const_spec(a):
        nd = a.ndim
        return pl.BlockSpec(a.shape, lambda i, _nd=nd: (0,) * _nd)

    out = pl.pallas_call(
        _cnn_fused_kernel,
        out_shape=jax.ShapeDtypeStruct((npad, OUT_PAD), jnp.float32),
        grid=(ntiles,),
        in_specs=[pl.BlockSpec((R, W0), lambda i: (i, 0))]
                 + [const_spec(a) for a in const_args],
        out_specs=pl.BlockSpec((TB, OUT_PAD), lambda i: (i, 0)),
        compiler_params=pltpu.CompilerParams(dimension_semantics=("parallel",)),
    )(x2d, *const_args)
    return out[:n, :F2]


# ----------------------------- reference / params ----------------------------

def init_params(key):
    """Deterministic PyTorch-default-style (uniform +/- 1/sqrt(fan_in)) initialization."""
    ks = jax.random.split(key, 8)

    def u(k, shape, fan_in):
        bound = 1.0 / float(fan_in) ** 0.5
        return jax.random.uniform(k, shape, jnp.float32, -bound, bound)

    return {
        "w1": u(ks[0], (20, 1, 3, 3), 1 * 3 * 3),
        "b1": u(ks[1], (20,), 1 * 3 * 3),
        "w2": u(ks[2], (40, 20, 3, 3), 20 * 3 * 3),
        "b2": u(ks[3], (40,), 20 * 3 * 3),
        "fw1": u(ks[4], (80, 40 * 6 * 4), 40 * 6 * 4),
        "fb1": u(ks[5], (80,), 40 * 6 * 4),
        "fw2": u(ks[6], (16, 80), 80),
        "fb2": u(ks[7], (16,), 80),
    }


def cnn_forward_ref(params, x):
    """Pure-JAX (XLA) reference used only to validate the Pallas kernel numerically."""
    dn = ("NCHW", "OIHW", "NCHW")
    y = lax.conv_general_dilated(x, params["w1"], (1, 1), "VALID", dimension_numbers=dn)
    y = jnp.maximum(y + params["b1"][None, :, None, None], 0.0)
    y = lax.reduce_window(y, -jnp.inf, lax.max, (1, 1, 2, 2), (1, 1, 2, 2), "VALID")
    y = lax.conv_general_dilated(y, params["w2"], (1, 1), "VALID", dimension_numbers=dn)
    y = jnp.maximum(y + params["b2"][None, :, None, None], 0.0)
    y = lax.reduce_window(y, -jnp.inf, lax.max, (1, 1, 2, 2), (1, 1, 2, 2), "VALID")
    flat = y.reshape(y.shape[0], -1)
    h = jnp.maximum(flat @ params["fw1"].T + params["fb1"], 0.0)
    return h @ params["fw2"].T + params["fb2"]


if __name__ == "__main__":
    key = jax.random.PRNGKey(0)
    k_param, k_x1, k_x2 = jax.random.split(key, 3)

    params = init_params(k_param)
    forward = jax.jit(cnn_forward_pallas)

    # 1) exact-structure check in f32 matmul mode (tight tolerance), tiny batch.
    x = jax.random.normal(k_x1, (2, 1, H0, W0), dtype=jnp.float32)
    consts_f32 = prepare_kernel_consts(params, mm_dtype=jnp.float32)
    logits = jax.block_until_ready(forward(consts_f32, x))
    assert logits.shape == (2, F2) and logits.dtype == jnp.float32
    ref = jax.block_until_ready(cnn_forward_ref(params, x))
    err = float(jnp.max(jnp.abs(logits - ref)))
    assert err < 2e-3, f"f32 Pallas output mismatch vs JAX reference (max |err| = {err})"

    # 2) default bf16-operand / f32-accumulate mode, multi-tile batch with padding.
    consts = prepare_kernel_consts(params)                       # bf16 matmul operands
    xb = jax.random.normal(k_x2, (67, 1, H0, W0), dtype=jnp.float32)
    logits_b = jax.block_until_ready(forward(consts, xb))
    ref_b = jax.block_until_ready(cnn_forward_ref(params, xb))
    err_b = float(jnp.max(jnp.abs(logits_b - ref_b)))
    assert logits_b.shape == (67, F2)
    assert err_b < 2e-2, f"bf16 Pallas output mismatch vs JAX reference (max |err| = {err_b})"

    # TODO(synk): predict_prob/predict (softmax/argmax) and the training loop are plain
    # JAX post-processing and are not part of forward(); omitted here.
    print("KERNEL_OK")
</pallas_src>

<mosaic_0001>
module attributes {stable_mosaic.version = 11 : i64} {
  func.func @_cnn_fused_kernel(%arg0: i32, %arg1: memref<960x22xf32, #tpu.memory_space<vmem>>, %arg2: memref<2x66x200xf32, #tpu.memory_space<vmem>>, %arg3: memref<1x200xf32, #tpu.memory_space<vmem>>, %arg4: memref<2x600x160xf32, #tpu.memory_space<vmem>>, %arg5: memref<1x160xf32, #tpu.memory_space<vmem>>, %arg6: memref<960x80xf32, #tpu.memory_space<vmem>>, %arg7: memref<1x80xf32, #tpu.memory_space<vmem>>, %arg8: memref<80x128xf32, #tpu.memory_space<vmem>>, %arg9: memref<1x128xf32, #tpu.memory_space<vmem>>, %arg10: memref<32x128xf32, #tpu.memory_space<vmem>>) attributes {dimension_semantics = [#tpu.dimension_semantics<parallel>], iteration_bounds = array<i64: 1>, scalar_prefetch = 0 : i64, scratch_operands = 0 : i64, tpu.core_type = #tpu.core_type<tc>, window_params = [{transform_indices = @transform_0, window_bounds = array<i64: 960, 22>}, {pipeline_mode = #tpu.pipeline_mode<synchronous>, transform_indices = @transform_1, window_bounds = array<i64: 2, 66, 200>}, {pipeline_mode = #tpu.pipeline_mode<synchronous>, transform_indices = @transform_2, window_bounds = array<i64: 1, 200>}, {pipeline_mode = #tpu.pipeline_mode<synchronous>, transform_indices = @transform_3, window_bounds = array<i64: 2, 600, 160>}, {pipeline_mode = #tpu.pipeline_mode<synchronous>, transform_indices = @transform_4, window_bounds = array<i64: 1, 160>}, {pipeline_mode = #tpu.pipeline_mode<synchronous>, transform_indices = @transform_5, window_bounds = array<i64: 960, 80>}, {pipeline_mode = #tpu.pipeline_mode<synchronous>, transform_indices = @transform_6, window_bounds = array<i64: 1, 80>}, {pipeline_mode = #tpu.pipeline_mode<synchronous>, transform_indices = @transform_7, window_bounds = array<i64: 80, 128>}, {pipeline_mode = #tpu.pipeline_mode<synchronous>, transform_indices = @transform_8, window_bounds = array<i64: 1, 128>}, {transform_indices = @transform_9, window_bounds = array<i64: 32, 128>}]} {
    %c0 = arith.constant 0 : index
    %c0_0 = arith.constant 0 : index
    %0 = vector.load %arg1[%c0, %c0_0] : memref<960x22xf32, #tpu.memory_space<vmem>>, vector<960x22xf32>
    %c928_i32 = arith.constant 928 : i32
    %1 = tpu.dynamic_rotate %0 by %c928_i32 dim 0 : vector<960x22xf32>, i32 -> vector<960x22xf32>
    %c896_i32 = arith.constant 896 : i32
    %2 = tpu.dynamic_rotate %0 by %c896_i32 dim 0 : vector<960x22xf32>, i32 -> vector<960x22xf32>
    %3 = tpu.concatenate %0, %1, %2 in 1 : vector<960x22xf32>, vector<960x22xf32>, vector<960x22xf32> -> vector<960x66xf32>
    %c0_1 = arith.constant 0 : index
    %c0_2 = arith.constant 0 : index
    %c0_3 = arith.constant 0 : index
    %4 = vector.load %arg2[%c0_1, %c0_2, %c0_3] : memref<2x66x200xf32, #tpu.memory_space<vmem>>, vector<1x66x200xf32>
    %5 = vector.shape_cast %4 : vector<1x66x200xf32> to vector<66x200xf32>
    %cst = arith.constant dense<0.000000e+00> : vector<960x200xf32>
    %6 = tpu.matmul %3, %5, %cst {dimension_numbers = #tpu.dot_dimension_numbers<[1], [0], [0], [1], [0, 0, 1, 1], [], []>} : vector<960x66xf32>, vector<66x200xf32>, vector<960x200xf32> -> vector<960x200xf32>
    %c1 = arith.constant 1 : index
    %c0_4 = arith.constant 0 : index
    %c0_5 = arith.constant 0 : index
    %7 = vector.load %arg2[%c1, %c0_4, %c0_5] : memref<2x66x200xf32, #tpu.memory_space<vmem>>, vector<1x66x200xf32>
    %8 = vector.shape_cast %7 : vector<1x66x200xf32> to vector<66x200xf32>
    %cst_6 = arith.constant dense<0.000000e+00> : vector<960x200xf32>
    %9 = tpu.matmul %3, %8, %cst_6 {dimension_numbers = #tpu.dot_dimension_numbers<[1], [0], [0], [1], [0, 0, 1, 1], [], []>} : vector<960x66xf32>, vector<66x200xf32>, vector<960x200xf32> -> vector<960x200xf32>
    %10 = arith.maximumf %6, %9 : vector<960x200xf32>
    %c928_i32_7 = arith.constant 928 : i32
    %11 = tpu.dynamic_rotate %10 by %c928_i32_7 dim 0 : vector<960x200xf32>, i32 -> vector<960x200xf32>
    %12 = arith.maximumf %10, %11 : vector<960x200xf32>
    %c0_8 = arith.constant 0 : index
    %c0_9 = arith.constant 0 : index
    %13 = vector.load %arg3[%c0_8, %c0_9] : memref<1x200xf32, #tpu.memory_space<vmem>>, vector<1x200xf32>
    %14 = vector.broadcast %13 : vector<1x200xf32> to vector<960x200xf32>
    %15 = arith.addf %12, %14 : vector<960x200xf32>
    %cst_10 = arith.constant 0.000000e+00 : f32
    %16 = vector.broadcast %cst_10 : f32 to vector<960x200xf32>
    %17 = arith.maximumf %15, %16 : vector<960x200xf32>
    %c896_i32_11 = arith.constant 896 : i32
    %18 = tpu.dynamic_rotate %17 by %c896_i32_11 dim 0 : vector<960x200xf32>, i32 -> vector<960x200xf32>
    %c832_i32 = arith.constant 832 : i32
    %19 = tpu.dynamic_rotate %17 by %c832_i32 dim 0 : vector<960x200xf32>, i32 -> vector<960x200xf32>
    %20 = tpu.concatenate %17, %18, %19 in 1 : vector<960x200xf32>, vector<960x200xf32>, vector<960x200xf32> -> vector<960x600xf32>
    %c0_12 = arith.constant 0 : index
    %c0_13 = arith.constant 0 : index
    %c0_14 = arith.constant 0 : index
    %21 = vector.load %arg4[%c0_12, %c0_13, %c0_14] : memref<2x600x160xf32, #tpu.memory_space<vmem>>, vector<1x600x160xf32>
    %22 = vector.shape_cast %21 : vector<1x600x160xf32> to vector<600x160xf32>
    %cst_15 = arith.constant dense<0.000000e+00> : vector<960x160xf32>
    %23 = tpu.matmul %20, %22, %cst_15 {dimension_numbers = #tpu.dot_dimension_numbers<[1], [0], [0], [1], [0, 0, 1, 1], [], []>} : vector<960x600xf32>, vector<600x160xf32>, vector<960x160xf32> -> vector<960x160xf32>
    %c1_16 = arith.constant 1 : index
    %c0_17 = arith.constant 0 : index
    %c0_18 = arith.constant 0 : index
    %24 = vector.load %arg4[%c1_16, %c0_17, %c0_18] : memref<2x600x160xf32, #tpu.memory_space<vmem>>, vector<1x600x160xf32>
    %25 = vector.shape_cast %24 : vector<1x600x160xf32> to vector<600x160xf32>
    %cst_19 = arith.constant dense<0.000000e+00> : vector<960x160xf32>
    %26 = tpu.matmul %20, %25, %cst_19 {dimension_numbers = #tpu.dot_dimension_numbers<[1], [0], [0], [1], [0, 0, 1, 1], [], []>} : vector<960x600xf32>, vector<600x160xf32>, vector<960x160xf32> -> vector<960x160xf32>
    %27 = arith.maximumf %23, %26 : vector<960x160xf32>
    %c896_i32_20 = arith.constant 896 : i32
    %28 = tpu.dynamic_rotate %27 by %c896_i32_20 dim 0 : vector<960x160xf32>, i32 -> vector<960x160xf32>
    %29 = arith.maximumf %27, %28 : vector<960x160xf32>
    %c0_21 = arith.constant 0 : index
    %c0_22 = arith.constant 0 : index
    %30 = vector.load %arg5[%c0_21, %c0_22] : memref<1x160xf32, #tpu.memory_space<vmem>>, vector<1x160xf32>
    %31 = vector.broadcast %30 : vector<1x160xf32> to vector<960x160xf32>
    %32 = arith.addf %29, %31 : vector<960x160xf32>
    %cst_23 = arith.constant 0.000000e+00 : f32
    %33 = vector.broadcast %cst_23 : f32 to vector<960x160xf32>
    %34 = arith.maximumf %32, %33 : vector<960x160xf32>
    %35 = vector.extract_strided_slice %34 {offsets = [0, 0], sizes = [32, 160], strides = [1, 1]} : vector<960x160xf32> to vector<32x160xf32>
    %36 = vector.extract_strided_slice %34 {offsets = [128, 0], sizes = [32, 160], strides = [1, 1]} : vector<960x160xf32> to vector<32x160xf32>
    %37 = vector.extract_strided_slice %34 {offsets = [256, 0], sizes = [32, 160], strides = [1, 1]} : vector<960x160xf32> to vector<32x160xf32>
    %38 = vector.extract_strided_slice %34 {offsets = [384, 0], sizes = [32, 160], strides = [1, 1]} : vector<960x160xf32> to vector<32x160xf32>
    %39 = vector.extract_strided_slice %34 {offsets = [512, 0], sizes = [32, 160], strides = [1, 1]} : vector<960x160xf32> to vector<32x160xf32>
    %40 = vector.extract_strided_slice %34 {offsets = [640, 0], sizes = [32, 160], strides = [1, 1]} : vector<960x160xf32> to vector<32x160xf32>
    %41 = tpu.concatenate %35, %36, %37, %38, %39, %40 in 1 : vector<32x160xf32>, vector<32x160xf32>, vector<32x160xf32>, vector<32x160xf32>, vector<32x160xf32>, vector<32x160xf32> -> vector<32x960xf32>
    %c0_24 = arith.constant 0 : index
    %c0_25 = arith.constant 0 : index
    %42 = vector.load %arg6[%c0_24, %c0_25] : memref<960x80xf32, #tpu.memory_space<vmem>>, vector<960x80xf32>
    %cst_26 = arith.constant dense<0.000000e+00> : vector<32x80xf32>
    %43 = tpu.matmul %41, %42, %cst_26 {dimension_numbers = #tpu.dot_dimension_numbers<[1], [0], [0], [1], [0, 0, 1, 1], [], []>} : vector<32x960xf32>, vector<960x80xf32>, vector<32x80xf32> -> vector<32x80xf32>
    %c0_27 = arith.constant 0 : index
    %c0_28 = arith.constant 0 : index
    %44 = vector.load %arg7[%c0_27, %c0_28] : memref<1x80xf32, #tpu.memory_space<vmem>>, vector<1x80xf32>
    %45 = vector.broadcast %44 : vector<1x80xf32> to vector<32x80xf32>
    %46 = arith.addf %43, %45 : vector<32x80xf32>
    %cst_29 = arith.constant 0.000000e+00 : f32
    %47 = vector.broadcast %cst_29 : f32 to vector<32x80xf32>
    %48 = arith.maximumf %46, %47 : vector<32x80xf32>
    %c0_30 = arith.constant 0 : index
    %c0_31 = arith.constant 0 : index
    %49 = vector.load %arg8[%c0_30, %c0_31] : memref<80x128xf32, #tpu.memory_space<vmem>>, vector<80x128xf32>
    %cst_32 = arith.constant dense<0.000000e+00> : vector<32x128xf32>
    %50 = tpu.matmul %48, %49, %cst_32 {dimension_numbers = #tpu.dot_dimension_numbers<[1], [0], [0], [1], [0, 0, 1, 1], [], []>} : vector<32x80xf32>, vector<80x128xf32>, vector<32x128xf32> -> vector<32x128xf32>
    %c0_33 = arith.constant 0 : index
    %c0_34 = arith.constant 0 : index
    %51 = vector.load %arg9[%c0_33, %c0_34] : memref<1x128xf32, #tpu.memory_space<vmem>>, vector<1x128xf32>
    %52 = vector.broadcast %51 : vector<1x128xf32> to vector<32x128xf32>
    %53 = arith.addf %50, %52 : vector<32x128xf32>
    %c0_35 = arith.constant 0 : index
    %c0_36 = arith.constant 0 : index
    %54 = vector.load %arg10[%c0_35, %c0_36] : memref<32x128xf32, #tpu.memory_space<vmem>>, vector<32x128xf32>
    tpu.vector_store %arg10[%c0_35, %c0_36], %53 {strides = array<i32>} : memref<32x128xf32, #tpu.memory_space<vmem>>, vector<32x128xf32>,
    return
  }
  func.func @transform_0(%arg0: i32) -> (i32, i32) {
    %c0_i32 = arith.constant 0 : i32
    %c0_i32_0 = arith.constant 0 : i32
    return %arg0, %c0_i32 : i32, i32
  }
  func.func @transform_1(%arg0: i32) -> (i32, i32, i32) {
    %c0_i32 = arith.constant 0 : i32
    %c0_i32_0 = arith.constant 0 : i32
    %c0_i32_1 = arith.constant 0 : i32
    %c0_i32_2 = arith.constant 0 : i32
    return %c0_i32, %c0_i32_0, %c0_i32_1 : i32, i32, i32
  }
  func.func @transform_2(%arg0: i32) -> (i32, i32) {
    %c0_i32 = arith.constant 0 : i32
    %c0_i32_0 = arith.constant 0 : i32
    %c0_i32_1 = arith.constant 0 : i32
    return %c0_i32, %c0_i32_0 : i32, i32
  }
  func.func @transform_3(%arg0: i32) -> (i32, i32, i32) {
    %c0_i32 = arith.constant 0 : i32
    %c0_i32_0 = arith.constant 0 : i32
    %c0_i32_1 = arith.constant 0 : i32
    %c0_i32_2 = arith.constant 0 : i32
    return %c0_i32, %c0_i32_0, %c0_i32_1 : i32, i32, i32
  }
  func.func @transform_4(%arg0: i32) -> (i32, i32) {
    %c0_i32 = arith.constant 0 : i32
    %c0_i32_0 = arith.constant 0 : i32
    %c0_i32_1 = arith.constant 0 : i32
    return %c0_i32, %c0_i32_0 : i32, i32
  }
  func.func @transform_5(%arg0: i32) -> (i32, i32) {
    %c0_i32 = arith.constant 0 : i32
    %c0_i32_0 = arith.constant 0 : i32
    %c0_i32_1 = arith.constant 0 : i32
    return %c0_i32, %c0_i32_0 : i32, i32
  }
  func.func @transform_6(%arg0: i32) -> (i32, i32) {
    %c0_i32 = arith.constant 0 : i32
    %c0_i32_0 = arith.constant 0 : i32
    %c0_i32_1 = arith.constant 0 : i32
    return %c0_i32, %c0_i32_0 : i32, i32
  }
  func.func @transform_7(%arg0: i32) -> (i32, i32) {
    %c0_i32 = arith.constant 0 : i32
    %c0_i32_0 = arith.constant 0 : i32
    %c0_i32_1 = arith.constant 0 : i32
    return %c0_i32, %c0_i32_0 : i32, i32
  }
  func.func @transform_8(%arg0: i32) -> (i32, i32) {
    %c0_i32 = arith.constant 0 : i32
    %c0_i32_0 = arith.constant 0 : i32
    %c0_i32_1 = arith.constant 0 : i32
    return %c0_i32, %c0_i32_0 : i32, i32
  }
  func.func @transform_9(%arg0: i32) -> (i32, i32) {
    %c0_i32 = arith.constant 0 : i32
    %c0_i32_0 = arith.constant 0 : i32
    return %arg0, %c0_i32 : i32, i32
  }
}

</mosaic_0001>

<llo_original>
// kernel: cnn_forward_pallas.1
$region0: #{cnn_forward_pallas.1}
  #allocation0 [shape = 'u32[]', space=smem, size = 0x4, offset = 0x4, fixed_abs, tag = 'smem constant byte address 0x4 - core index']
  #allocation1 [shape = 'u32[144,128]{1,0:T(1,128)}', space=vmem, size = 0x12000, scoped, tag = 'internal scratch']
  %s0 = inlined_call_operand.vmem [shape: f32[960,22], index: 0, kind: input, shape index: {}]
  %s1 = inlined_call_operand.vmem [shape: f32[2,66,200], index: 1, kind: input, shape index: {}]
  %s2 = inlined_call_operand.vmem [shape: f32[1,200], index: 2, kind: input, shape index: {}]
  %s3 = inlined_call_operand.vmem [shape: f32[2,600,160], index: 3, kind: input, shape index: {}]
  %s4 = inlined_call_operand.vmem [shape: f32[1,160], index: 4, kind: input, shape index: {}]
  %s5 = inlined_call_operand.vmem [shape: f32[960,80], index: 5, kind: input, shape index: {}]
  %s6 = inlined_call_operand.vmem [shape: f32[1,80], index: 6, kind: input, shape index: {}]
  %s7 = inlined_call_operand.vmem [shape: f32[80,128], index: 7, kind: input, shape index: {}]
  %s8 = inlined_call_operand.vmem [shape: f32[1,128], index: 8, kind: input, shape index: {}]
  %s9 = inlined_call_operand.vmem [shape: f32[32,128], index: 9, kind: output, shape index: {}]
  %s10 = sld [smem:[#allocation0]]
  $region46: #{cnn_forward_pallas.1} parent=0
    _
  %s12 = ssub.s32 1, %s10
  %s13 = scalar_select 0, %s12, %s10
  // Predicated region
  $region2: #{cnn_forward_pallas.1} parent=0 // pred_check
    _
  $region3: #{cnn_forward_pallas.1} parent=0 // pred_check_branch
    %15 = sbr.rel (0) target = $region5
  $region4: #{cnn_forward_pallas.1} parent=0 // pred_region
    _
  $region5: #{cnn_forward_pallas.1} parent=0 // pred_fallthru
    _
  // Predicated region
  $region6: #{cnn_forward_pallas.1} parent=0 // pred_check
    _
  $region7: #{cnn_forward_pallas.1} parent=0 // pred_check_branch
    %17 = sbr.rel (0) target = $region9
  $region8: #{cnn_forward_pallas.1} parent=0 // pred_region
    _
  $region9: #{cnn_forward_pallas.1} parent=0 // pred_fallthru
    _
  // Predicated region
  $region10: #{cnn_forward_pallas.1} parent=0 // pred_check
    _
  $region11: #{cnn_forward_pallas.1} parent=0 // pred_check_branch
    %19 = sbr.rel (0) target = $region13
  $region12: #{cnn_forward_pallas.1} parent=0 // pred_region
    _
  $region13: #{cnn_forward_pallas.1} parent=0 // pred_fallthru
    _
  // Predicated region
  $region14: #{cnn_forward_pallas.1} parent=0 // pred_check
    _
  $region15: #{cnn_forward_pallas.1} parent=0 // pred_check_branch
    %21 = sbr.rel (0) target = $region17
  $region16: #{cnn_forward_pallas.1} parent=0 // pred_region
    _
  $region17: #{cnn_forward_pallas.1} parent=0 // pred_fallthru
    _
  // Predicated region
  $region18: #{cnn_forward_pallas.1} parent=0 // pred_check
    _
  $region19: #{cnn_forward_pallas.1} parent=0 // pred_check_branch
    %23 = sbr.rel (0) target = $region21
  $region20: #{cnn_forward_pallas.1} parent=0 // pred_region
    _
  $region21: #{cnn_forward_pallas.1} parent=0 // pred_fallthru
    _
  // Predicated region
  $region22: #{cnn_forward_pallas.1} parent=0 // pred_check
    _
  $region23: #{cnn_forward_pallas.1} parent=0 // pred_check_branch
    %25 = sbr.rel (0) target = $region25
  $region24: #{cnn_forward_pallas.1} parent=0 // pred_region
    _
  $region25: #{cnn_forward_pallas.1} parent=0 // pred_fallthru
    _
  // Predicated region
  $region26: #{cnn_forward_pallas.1} parent=0 // pred_check
    _
  $region27: #{cnn_forward_pallas.1} parent=0 // pred_check_branch
    %27 = sbr.rel (0) target = $region29
  $region28: #{cnn_forward_pallas.1} parent=0 // pred_region
    _
  $region29: #{cnn_forward_pallas.1} parent=0 // pred_fallthru
    _
  // Predicated region
  $region30: #{cnn_forward_pallas.1} parent=0 // pred_check
    _
  $region31: #{cnn_forward_pallas.1} parent=0 // pred_check_branch
    %29 = sbr.rel (0) target = $region33
  $region32: #{cnn_forward_pallas.1} parent=0 // pred_region
    _
  $region33: #{cnn_forward_pallas.1} parent=0 // pred_fallthru
    _
  // Predicated region
  $region34: #{cnn_forward_pallas.1} parent=0 // pred_check
    _
  $region35: #{cnn_forward_pallas.1} parent=0 // pred_check_branch
    %31 = sbr.rel (0) target = $region37
  $region36: #{cnn_forward_pallas.1} parent=0 // pred_region
    _
  $region37: #{cnn_forward_pallas.1} parent=0 // pred_fallthru
    _
  %v32 = vld [vmem:[%s0] sm:$0xff]
  %v33 = vld [vmem:[%s0 + $0x8] sm:$0xff]
  %v34 = vld [vmem:[%s0 + $0x10] sm:$0xff]
  %v35 = vld [vmem:[%s0 + $0x18] sm:$0xff]
  %v36 = vld [vmem:[%s0 + $0x20] sm:$0xff]
  %v37 = vld [vmem:[%s0 + $0x28] sm:$0xff]
  %v38 = vld [vmem:[%s0 + $0x30] sm:$0xff]
  %v39 = vld [vmem:[%s0 + $0x38] sm:$0xff]
  %v40 = vld [vmem:[%s0 + $0x40] sm:$0xff]
  %v41 = vld [vmem:[%s0 + $0x48] sm:$0xff]
  %v42 = vld [vmem:[%s0 + $0x50] sm:$0xff]
  %v43 = vld [vmem:[%s0 + $0x58] sm:$0xff]
  %v44 = vld [vmem:[%s0 + $0x60] sm:$0xff]
  %v45 = vld [vmem:[%s0 + $0x68] sm:$0xff]
  %v46 = vld [vmem:[%s0 + $0x70] sm:$0xff]
  %v47 = vld [vmem:[%s0 + $0x78] sm:$0xff]
  %v48 = vld [vmem:[%s0 + $0x80] sm:$0xff]
  %v49 = vld [vmem:[%s0 + $0x88] sm:$0xff]
  %v50 = vld [vmem:[%s0 + $0x90] sm:$0xff]
  %v51 = vld [vmem:[%s0 + $0x98] sm:$0xff]
  %v52 = vld [vmem:[%s0 + $0xa0] sm:$0xff]
  %v53 = vld [vmem:[%s0 + $0xa8] sm:$0xff]
  %v54 = vld [vmem:[%s0 + $0xb0] sm:$0xff]
  %v55 = vld [vmem:[%s0 + $0xb8] sm:$0xff]
  %v56 = vld [vmem:[%s0 + $0xc0] sm:$0xff]
  %v57 = vld [vmem:[%s0 + $0xc8] sm:$0xff]
  %v58 = vld [vmem:[%s0 + $0xd0] sm:$0xff]
  %v59 = vld [vmem:[%s0 + $0xd8] sm:$0xff]
  %v60 = vld [vmem:[%s0 + $0xe0] sm:$0xff]
  %v61 = vld [vmem:[%s0 + $0xe8] sm:$0xff]
  %v62 = vld [vmem:[%s0 + $0xf0] sm:$0xff]
  %v63 = vld [vmem:[%s0 + $0xf8] sm:$0xff]
  %v64 = vld [vmem:[%s0 + $0x100] sm:$0xff]
  %v65 = vld [vmem:[%s0 + $0x108] sm:$0xff]
  %v66 = vld [vmem:[%s0 + $0x110] sm:$0xff]
  %v67 = vld [vmem:[%s0 + $0x118] sm:$0xff]
  %v68 = vld [vmem:[%s0 + $0x120] sm:$0xff]
  %v69 = vld [vmem:[%s0 + $0x128] sm:$0xff]
  %v70 = vld [vmem:[%s0 + $0x130] sm:$0xff]
  %v71 = vld [vmem:[%s0 + $0x138] sm:$0xff]
  %v72 = vld [vmem:[%s0 + $0x140] sm:$0xff]
  %v73 = vld [vmem:[%s0 + $0x148] sm:$0xff]
  %v74 = vld [vmem:[%s0 + $0x150] sm:$0xff]
  %v75 = vld [vmem:[%s0 + $0x158] sm:$0xff]
  %v76 = vld [vmem:[%s0 + $0x160] sm:$0xff]
  %v77 = vld [vmem:[%s0 + $0x168] sm:$0xff]
  %v78 = vld [vmem:[%s0 + $0x170] sm:$0xff]
  %v79 = vld [vmem:[%s0 + $0x178] sm:$0xff]
  %v80 = vld [vmem:[%s0 + $0x180] sm:$0xff]
  %v81 = vld [vmem:[%s0 + $0x188] sm:$0xff]
  %v82 = vld [vmem:[%s0 + $0x190] sm:$0xff]
  %v83 = vld [vmem:[%s0 + $0x198] sm:$0xff]
  %v84 = vld [vmem:[%s0 + $0x1a0] sm:$0xff]
  %v85 = vld [vmem:[%s0 + $0x1a8] sm:$0xff]
  %v86 = vld [vmem:[%s0 + $0x1b0] sm:$0xff]
  %v87 = vld [vmem:[%s0 + $0x1b8] sm:$0xff]
  %v88 = vld [vmem:[%s0 + $0x1c0] sm:$0xff]
  %v89 = vld [vmem:[%s0 + $0x1c8] sm:$0xff]
  %v90 = vld [vmem:[%s0 + $0x1d0] sm:$0xff]
  %v91 = vld [vmem:[%s0 + $0x1d8] sm:$0xff]
  %v92 = vld [vmem:[%s0 + $0x1e0] sm:$0xff]
  %v93 = vld [vmem:[%s0 + $0x1e8] sm:$0xff]
  %v94 = vld [vmem:[%s0 + $0x1f0] sm:$0xff]
  %v95 = vld [vmem:[%s0 + $0x1f8] sm:$0xff]
  %v96 = vld [vmem:[%s0 + $0x200] sm:$0xff]
  %v97 = vld [vmem:[%s0 + $0x208] sm:$0xff]
  %v98 = vld [vmem:[%s0 + $0x210] sm:$0xff]
  %v99 = vld [vmem:[%s0 + $0x218] sm:$0xff]
  %v100 = vld [vmem:[%s0 + $0x220] sm:$0xff]
  %v101 = vld [vmem:[%s0 + $0x228] sm:$0xff]
  %v102 = vld [vmem:[%s0 + $0x230] sm:$0xff]
  %v103 = vld [vmem:[%s0 + $0x238] sm:$0xff]
  %v104 = vld [vmem:[%s0 + $0x240] sm:$0xff]
  %v105 = vld [vmem:[%s0 + $0x248] sm:$0xff]
  %v106 = vld [vmem:[%s0 + $0x250] sm:$0xff]
  %v107 = vld [vmem:[%s0 + $0x258] sm:$0xff]
  %v108 = vld [vmem:[%s0 + $0x260] sm:$0xff]
  %v109 = vld [vmem:[%s0 + $0x268] sm:$0xff]
  %v110 = vld [vmem:[%s0 + $0x270] sm:$0xff]
  %v111 = vld [vmem:[%s0 + $0x278] sm:$0xff]
  %v112 = vld [vmem:[%s0 + $0x280] sm:$0xff]
  %v113 = vld [vmem:[%s0 + $0x288] sm:$0xff]
  %v114 = vld [vmem:[%s0 + $0x290] sm:$0xff]
  %v115 = vld [vmem:[%s0 + $0x298] sm:$0xff]
  %v116 = vld [vmem:[%s0 + $0x2a0] sm:$0xff]
  %v117 = vld [vmem:[%s0 + $0x2a8] sm:$0xff]
  %v118 = vld [vmem:[%s0 + $0x2b0] sm:$0xff]
  %v119 = vld [vmem:[%s0 + $0x2b8] sm:$0xff]
  %v120 = vld [vmem:[%s0 + $0x2c0] sm:$0xff]
  %v121 = vld [vmem:[%s0 + $0x2c8] sm:$0xff]
  %v122 = vld [vmem:[%s0 + $0x2d0] sm:$0xff]
  %v123 = vld [vmem:[%s0 + $0x2d8] sm:$0xff]
  %v124 = vld [vmem:[%s0 + $0x2e0] sm:$0xff]
  %v125 = vld [vmem:[%s0 + $0x2e8] sm:$0xff]
  %v126 = vld [vmem:[%s0 + $0x2f0] sm:$0xff]
  %v127 = vld [vmem:[%s0 + $0x2f8] sm:$0xff]
  %v128 = vld [vmem:[%s0 + $0x300] sm:$0xff]
  %v129 = vld [vmem:[%s0 + $0x308] sm:$0xff]
  %v130 = vld [vmem:[%s0 + $0x310] sm:$0xff]
  %v131 = vld [vmem:[%s0 + $0x318] sm:$0xff]
  %v132 = vld [vmem:[%s0 + $0x320] sm:$0xff]
  %v133 = vld [vmem:[%s0 + $0x328] sm:$0xff]
  %v134 = vld [vmem:[%s0 + $0x330] sm:$0xff]
  %v135 = vld [vmem:[%s0 + $0x338] sm:$0xff]
  %v136 = vld [vmem:[%s0 + $0x340] sm:$0xff]
  %v137 = vld [vmem:[%s0 + $0x348] sm:$0xff]
  %v138 = vld [vmem:[%s0 + $0x350] sm:$0xff]
  %v139 = vld [vmem:[%s0 + $0x358] sm:$0xff]
  %v140 = vld [vmem:[%s0 + $0x360] sm:$0xff]
  %v141 = vld [vmem:[%s0 + $0x368] sm:$0xff]
  %v142 = vld [vmem:[%s0 + $0x370] sm:$0xff]
  %v143 = vld [vmem:[%s0 + $0x378] sm:$0xff]
  %v144 = vld [vmem:[%s0 + $0x380] sm:$0xff]
  %v145 = vld [vmem:[%s0 + $0x388] sm:$0xff]
  %v146 = vld [vmem:[%s0 + $0x390] sm:$0xff]
  %v147 = vld [vmem:[%s0 + $0x398] sm:$0xff]
  %v148 = vld [vmem:[%s0 + $0x3a0] sm:$0xff]
  %v149 = vld [vmem:[%s0 + $0x3a8] sm:$0xff]
  %v150 = vld [vmem:[%s0 + $0x3b0] sm:$0xff]
  %v151 = vld [vmem:[%s0 + $0x3b8] sm:$0xff]
  %272 = vrot.lane.b32.xlu0 %v36, 22
  %v273 = vpop.permute.xlu0 %272
  %274 = vrot.lane.b32.xlu0 %v37, 22
  %v275 = vpop.permute.xlu0 %274
  %276 = vrot.lane.b32.xlu0 %v38, 22
  %v277 = vpop.permute.xlu0 %276
  %278 = vrot.lane.b32.xlu0 %v39, 22
  %v279 = vpop.permute.xlu0 %278
  %280 = vrot.lane.b32.xlu0 %v40, 22
  %v281 = vpop.permute.xlu0 %280
  %282 = vrot.lane.b32.xlu0 %v41, 22
  %v283 = vpop.permute.xlu0 %282
  %284 = vrot.lane.b32.xlu0 %v42, 22
  %v285 = vpop.permute.xlu0 %284
  %286 = vrot.lane.b32.xlu0 %v43, 22
  %v287 = vpop.permute.xlu0 %286
  %288 = vrot.lane.b32.xlu0 %v44, 22
  %v289 = vpop.permute.xlu0 %288
  %290 = vrot.lane.b32.xlu0 %v45, 22
  %v291 = vpop.permute.xlu0 %290
  %292 = vrot.lane.b32.xlu0 %v46, 22
  %v293 = vpop.permute.xlu0 %292
  %294 = vrot.lane.b32.xlu0 %v47, 22
  %v295 = vpop.permute.xlu0 %294
  %296 = vrot.lane.b32.xlu0 %v48, 22
  %v297 = vpop.permute.xlu0 %296
  %298 = vrot.lane.b32.xlu0 %v49, 22
  %v299 = vpop.permute.xlu0 %298
  %300 = vrot.lane.b32.xlu0 %v50, 22
  %v301 = vpop.permute.xlu0 %300
  %302 = vrot.lane.b32.xlu0 %v51, 22
  %v303 = vpop.permute.xlu0 %302
  %304 = vrot.lane.b32.xlu0 %v52, 22
  %v305 = vpop.permute.xlu0 %304
  %306 = vrot.lane.b32.xlu0 %v53, 22
  %v307 = vpop.permute.xlu0 %306
  %308 = vrot.lane.b32.xlu0 %v54, 22
  %v309 = vpop.permute.xlu0 %308
  %310 = vrot.lane.b32.xlu0 %v55, 22
  %v311 = vpop.permute.xlu0 %310
  %312 = vrot.lane.b32.xlu0 %v56, 22
  %v313 = vpop.permute.xlu0 %312
  %314 = vrot.lane.b32.xlu0 %v57, 22
  %v315 = vpop.permute.xlu0 %314
  %316 = vrot.lane.b32.xlu0 %v58, 22
  %v317 = vpop.permute.xlu0 %316
  %318 = vrot.lane.b32.xlu0 %v59, 22
  %v319 = vpop.permute.xlu0 %318
  %320 = vrot.lane.b32.xlu0 %v60, 22
  %v321 = vpop.permute.xlu0 %320
  %322 = vrot.lane.b32.xlu0 %v61, 22
  %v323 = vpop.permute.xlu0 %322
  %324 = vrot.lane.b32.xlu0 %v62, 22
  %v325 = vpop.permute.xlu0 %324
  %326 = vrot.lane.b32.xlu0 %v63, 22
  %v327 = vpop.permute.xlu0 %326
  %328 = vrot.lane.b32.xlu0 %v64, 22
  %v329 = vpop.permute.xlu0 %328
  %330 = vrot.lane.b32.xlu0 %v65, 22
  %v331 = vpop.permute.xlu0 %330
  %332 = vrot.lane.b32.xlu0 %v66, 22
  %v333 = vpop.permute.xlu0 %332
  %334 = vrot.lane.b32.xlu0 %v67, 22
  %v335 = vpop.permute.xlu0 %334
  %336 = vrot.lane.b32.xlu0 %v68, 22
  %v337 = vpop.permute.xlu0 %336
  %338 = vrot.lane.b32.xlu0 %v69, 22
  %v339 = vpop.permute.xlu0 %338
  %340 = vrot.lane.b32.xlu0 %v70, 22
  %v341 = vpop.permute.xlu0 %340
  %342 = vrot.lane.b32.xlu0 %v71, 22
  %v343 = vpop.permute.xlu0 %342
  %344 = vrot.lane.b32.xlu0 %v72, 22
  %v345 = vpop.permute.xlu0 %344
  %346 = vrot.lane.b32.xlu0 %v73, 22
  %v347 = vpop.permute.xlu0 %346
  %348 = vrot.lane.b32.xlu0 %v74, 22
  %v349 = vpop.permute.xlu0 %348
  %350 = vrot.lane.b32.xlu0 %v75, 22
  %v351 = vpop.permute.xlu0 %350
  %352 = vrot.lane.b32.xlu0 %v76, 22
  %v353 = vpop.permute.xlu0 %352
  %354 = vrot.lane.b32.xlu0 %v77, 22
  %v355 = vpop.permute.xlu0 %354
  %356 = vrot.lane.b32.xlu0 %v78, 22
  %v357 = vpop.permute.xlu0 %356
  %358 = vrot.lane.b32.xlu0 %v79, 22
  %v359 = vpop.permute.xlu0 %358
  %360 = vrot.lane.b32.xlu0 %v80, 22
  %v361 = vpop.permute.xlu0 %360
  %362 = vrot.lane.b32.xlu0 %v81, 22
  %v363 = vpop.permute.xlu0 %362
  %364 = vrot.lane.b32.xlu0 %v82, 22
  %v365 = vpop.permute.xlu0 %364
  %366 = vrot.lane.b32.xlu0 %v83, 22
  %v367 = vpop.permute.xlu0 %366
  %368 = vrot.lane.b32.xlu0 %v84, 22
  %v369 = vpop.permute.xlu0 %368
  %370 = vrot.lane.b32.xlu0 %v85, 22
  %v371 = vpop.permute.xlu0 %370
  %372 = vrot.lane.b32.xlu0 %v86, 22
  %v373 = vpop.permute.xlu0 %372
  %374 = vrot.lane.b32.xlu0 %v87, 22
  %v375 = vpop.permute.xlu0 %374
  %376 = vrot.lane.b32.xlu0 %v88, 22
  %v377 = vpop.permute.xlu0 %376
  %378 = vrot.lane.b32.xlu0 %v89, 22
  %v379 = vpop.permute.xlu0 %378
  %380 = vrot.lane.b32.xlu0 %v90, 22
  %v381 = vpop.permute.xlu0 %380
  %382 = vrot.lane.b32.xlu0 %v91, 22
  %v383 = vpop.permute.xlu0 %382
  %384 = vrot.lane.b32.xlu0 %v92, 22
  %v385 = vpop.permute.xlu0 %384
  %386 = vrot.lane.b32.xlu0 %v93, 22
  %v387 = vpop.permute.xlu0 %386
  %388 = vrot.lane.b32.xlu0 %v94, 22
  %v389 = vpop.permute.xlu0 %388
  %390 = vrot.lane.b32.xlu0 %v95, 22
  %v391 = vpop.permute.xlu0 %390
  %392 = vrot.lane.b32.xlu0 %v96, 22
  %v393 = vpop.permute.xlu0 %392
  %394 = vrot.lane.b32.xlu0 %v97, 22
  %v395 = vpop.permute.xlu0 %394
  %396 = vrot.lane.b32.xlu0 %v98, 22
  %v397 = vpop.permute.xlu0 %396
  %398 = vrot.lane.b32.xlu0 %v99, 22
  %v399 = vpop.permute.xlu0 %398
  %400 = vrot.lane.b32.xlu0 %v100, 22
  %v401 = vpop.permute.xlu0 %400
  %402 = vrot.lane.b32.xlu0 %v101, 22
  %v403 = vpop.permute.xlu0 %402
  %404 = vrot.lane.b32.xlu0 %v102, 22
  %v405 = vpop.permute.xlu0 %404
  %406 = vrot.lane.b32.xlu0 %v103, 22
  %v407 = vpop.permute.xlu0 %406
  %408 = vrot.lane.b32.xlu0 %v104, 22
  %v409 = vpop.permute.xlu0 %408
  %410 = vrot.lane.b32.xlu0 %v105, 22
  %v411 = vpop.permute.xlu0 %410
  %412 = vrot.lane.b32.xlu0 %v106, 22
  %v413 = vpop.permute.xlu0 %412
  %414 = vrot.lane.b32.xlu0 %v107, 22
  %v415 = vpop.permute.xlu0 %414
  %416 = vrot.lane.b32.xlu0 %v108, 22
  %v417 = vpop.permute.xlu0 %416
  %418 = vrot.lane.b32.xlu0 %v109, 22
  %v419 = vpop.permute.xlu0 %418
  %420 = vrot.lane.b32.xlu0 %v110, 22
  %v421 = vpop.permute.xlu0 %420
  %422 = vrot.lane.b32.xlu0 %v111, 22
  %v423 = vpop.permute.xlu0 %422
  %424 = vrot.lane.b32.xlu0 %v112, 22
  %v425 = vpop.permute.xlu0 %424
  %426 = vrot.lane.b32.xlu0 %v113, 22
  %v427 = vpop.permute.xlu0 %426
  %428 = vrot.lane.b32.xlu0 %v114, 22
  %v429 = vpop.permute.xlu0 %428
  %430 = vrot.lane.b32.xlu0 %v115, 22
  %v431 = vpop.permute.xlu0 %430
  %432 = vrot.lane.b32.xlu0 %v116, 22
  %v433 = vpop.permute.xlu0 %432
  %434 = vrot.lane.b32.xlu0 %v117, 22
  %v435 = vpop.permute.xlu0 %434
  %436 = vrot.lane.b32.xlu0 %v118, 22
  %v437 = vpop.permute.xlu0 %436
  %438 = vrot.lane.b32.xlu0 %v119, 22
  %v439 = vpop.permute.xlu0 %438
  %440 = vrot.lane.b32.xlu0 %v120, 22
  %v441 = vpop.permute.xlu0 %440
  %442 = vrot.lane.b32.xlu0 %v121, 22
  %v443 = vpop.permute.xlu0 %442
  %444 = vrot.lane.b32.xlu0 %v122, 22
  %v445 = vpop.permute.xlu0 %444
  %446 = vrot.lane.b32.xlu0 %v123, 22
  %v447 = vpop.permute.xlu0 %446
  %448 = vrot.lane.b32.xlu0 %v124, 22
  %v449 = vpop.permute.xlu0 %448
  %450 = vrot.lane.b32.xlu0 %v125, 22
  %v451 = vpop.permute.xlu0 %450
  %452 = vrot.lane.b32.xlu0 %v126, 22
  %v453 = vpop.permute.xlu0 %452
  %454 = vrot.lane.b32.xlu0 %v127, 22
  %v455 = vpop.permute.xlu0 %454
  %456 = vrot.lane.b32.xlu0 %v128, 22
  %v457 = vpop.permute.xlu0 %456
  %458 = vrot.lane.b32.xlu0 %v129, 22
  %v459 = vpop.permute.xlu0 %458
  %460 = vrot.lane.b32.xlu0 %v130, 22
  %v461 = vpop.permute.xlu0 %460
  %462 = vrot.lane.b32.xlu0 %v131, 22
  %v463 = vpop.permute.xlu0 %462
  %464 = vrot.lane.b32.xlu0 %v132, 22
  %v465 = vpop.permute.xlu0 %464
  %466 = vrot.lane.b32.xlu0 %v133, 22
  %v467 = vpop.permute.xlu0 %466
  %468 = vrot.lane.b32.xlu0 %v134, 22
  %v469 = vpop.permute.xlu0 %468
  %470 = vrot.lane.b32.xlu0 %v135, 22
  %v471 = vpop.permute.xlu0 %470
  %472 = vrot.lane.b32.xlu0 %v136, 22
  %v473 = vpop.permute.xlu0 %472
  %474 = vrot.lane.b32.xlu0 %v137, 22
  %v475 = vpop.permute.xlu0 %474
  %476 = vrot.lane.b32.xlu0 %v138, 22
  %v477 = vpop.permute.xlu0 %476
  %478 = vrot.lane.b32.xlu0 %v139, 22
  %v479 = vpop.permute.xlu0 %478
  %480 = vrot.lane.b32.xlu0 %v140, 22
  %v481 = vpop.permute.xlu0 %480
  %482 = vrot.lane.b32.xlu0 %v141, 22
  %v483 = vpop.permute.xlu0 %482
  %484 = vrot.lane.b32.xlu0 %v142, 22
  %v485 = vpop.permute.xlu0 %484
  %486 = vrot.lane.b32.xlu0 %v143, 22
  %v487 = vpop.permute.xlu0 %486
  %488 = vrot.lane.b32.xlu0 %v144, 22
  %v489 = vpop.permute.xlu0 %488
  %490 = vrot.lane.b32.xlu0 %v145, 22
  %v491 = vpop.permute.xlu0 %490
  %492 = vrot.lane.b32.xlu0 %v146, 22
  %v493 = vpop.permute.xlu0 %492
  %494 = vrot.lane.b32.xlu0 %v147, 22
  %v495 = vpop.permute.xlu0 %494
  %496 = vrot.lane.b32.xlu0 %v148, 22
  %v497 = vpop.permute.xlu0 %496
  %498 = vrot.lane.b32.xlu0 %v149, 22
  %v499 = vpop.permute.xlu0 %498
  %500 = vrot.lane.b32.xlu0 %v150, 22
  %v501 = vpop.permute.xlu0 %500
  %502 = vrot.lane.b32.xlu0 %v151, 22
  %v503 = vpop.permute.xlu0 %502
  %504 = vrot.lane.b32.xlu0 %v32, 22
  %v505 = vpop.permute.xlu0 %504
  %506 = vrot.lane.b32.xlu0 %v33, 22
  %v507 = vpop.permute.xlu0 %506
  %508 = vrot.lane.b32.xlu0 %v34, 22
  %v509 = vpop.permute.xlu0 %508
  %510 = vrot.lane.b32.xlu0 %v35, 22
  %v511 = vpop.permute.xlu0 %510
  %632 = vrot.lane.b32.xlu0 %v40, 44
  %v633 = vpop.permute.xlu0 %632
  %634 = vrot.lane.b32.xlu0 %v41, 44
  %v635 = vpop.permute.xlu0 %634
  %636 = vrot.lane.b32.xlu0 %v42, 44
  %v637 = vpop.permute.xlu0 %636
  %638 = vrot.lane.b32.xlu0 %v43, 44
  %v639 = vpop.permute.xlu0 %638
  %640 = vrot.lane.b32.xlu0 %v44, 44
  %v641 = vpop.permute.xlu0 %640
  %642 = vrot.lane.b32.xlu0 %v45, 44
  %v643 = vpop.permute.xlu0 %642
  %644 = vrot.lane.b32.xlu0 %v46, 44
  %v645 = vpop.permute.xlu0 %644
  %646 = vrot.lane.b32.xlu0 %v47, 44
  %v647 = vpop.permute.xlu0 %646
  %648 = vrot.lane.b32.xlu0 %v48, 44
  %v649 = vpop.permute.xlu0 %648
  %650 = vrot.lane.b32.xlu0 %v49, 44
  %v651 = vpop.permute.xlu0 %650
  %652 = vrot.lane.b32.xlu0 %v50, 44
  %v653 = vpop.permute.xlu0 %652
  %654 = vrot.lane.b32.xlu0 %v51, 44
  %v655 = vpop.permute.xlu0 %654
  %656 = vrot.lane.b32.xlu0 %v52, 44
  %v657 = vpop.permute.xlu0 %656
  %658 = vrot.lane.b32.xlu0 %v53, 44
  %v659 = vpop.permute.xlu0 %658
  %660 = vrot.lane.b32.xlu0 %v54, 44
  %v661 = vpop.permute.xlu0 %660
  %662 = vrot.lane.b32.xlu0 %v55, 44
  %v663 = vpop.permute.xlu0 %662
  %664 = vrot.lane.b32.xlu0 %v56, 44
  %v665 = vpop.permute.xlu0 %664
  %666 = vrot.lane.b32.xlu0 %v57, 44
  %v667 = vpop.permute.xlu0 %666
  %668 = vrot.lane.b32.xlu0 %v58, 44
  %v669 = vpop.permute.xlu0 %668
  %670 = vrot.lane.b32.xlu0 %v59, 44
  %v671 = vpop.permute.xlu0 %670
  %672 = vrot.lane.b32.xlu0 %v60, 44
  %v673 = vpop.permute.xlu0 %672
  %674 = vrot.lane.b32.xlu0 %v61, 44
  %v675 = vpop.permute.xlu0 %674
  %676 = vrot.lane.b32.xlu0 %v62, 44
  %v677 = vpop.permute.xlu0 %676
  %678 = vrot.lane.b32.xlu0 %v63, 44
  %v679 = vpop.permute.xlu0 %678
  %680 = vrot.lane.b32.xlu0 %v64, 44
  %v681 = vpop.permute.xlu0 %680
  %682 = vrot.lane.b32.xlu0 %v65, 44
  %v683 = vpop.permute.xlu0 %682
  %684 = vrot.lane.b32.xlu0 %v66, 44
  %v685 = vpop.permute.xlu0 %684
  %686 = vrot.lane.b32.xlu0 %v67, 44
  %v687 = vpop.permute.xlu0 %686
  %688 = vrot.lane.b32.xlu0 %v68, 44
  %v689 = vpop.permute.xlu0 %688
  %690 = vrot.lane.b32.xlu0 %v69, 44
  %v691 = vpop.permute.xlu0 %690
  %692 = vrot.lane.b32.xlu0 %v70, 44
  %v693 = vpop.permute.xlu0 %692
  %694 = vrot.lane.b32.xlu0 %v71, 44
  %v695 = vpop.permute.xlu0 %694
  %696 = vrot.lane.b32.xlu0 %v72, 44
  %v697 = vpop.permute.xlu0 %696
  %698 = vrot.lane.b32.xlu0 %v73, 44
  %v699 = vpop.permute.xlu0 %698
  %700 = vrot.lane.b32.xlu0 %v74, 44
  %v701 = vpop.permute.xlu0 %700
  %702 = vrot.lane.b32.xlu0 %v75, 44
  %v703 = vpop.permute.xlu0 %702
  %704 = vrot.lane.b32.xlu0 %v76, 44
  %v705 = vpop.permute.xlu0 %704
  %706 = vrot.lane.b32.xlu0 %v77, 44
  %v707 = vpop.permute.xlu0 %706
  %708 = vrot.lane.b32.xlu0 %v78, 44
  %v709 = vpop.permute.xlu0 %708
  %710 = vrot.lane.b32.xlu0 %v79, 44
  %v711 = vpop.permute.xlu0 %710
  %712 = vrot.lane.b32.xlu0 %v80, 44
  %v713 = vpop.permute.xlu0 %712
  %714 = vrot.lane.b32.xlu0 %v81, 44
  %v715 = vpop.permute.xlu0 %714
  %716 = vrot.lane.b32.xlu0 %v82, 44
  %v717 = vpop.permute.xlu0 %716
  %718 = vrot.lane.b32.xlu0 %v83, 44
  %v719 = vpop.permute.xlu0 %718
  %720 = vrot.lane.b32.xlu0 %v84, 44
  %v721 = vpop.permute.xlu0 %720
  %722 = vrot.lane.b32.xlu0 %v85, 44
  %v723 = vpop.permute.xlu0 %722
  %724 = vrot.lane.b32.xlu0 %v86, 44
  %v725 = vpop.permute.xlu0 %724
  %726 = vrot.lane.b32.xlu0 %v87, 44
  %v727 = vpop.permute.xlu0 %726
  %728 = vrot.lane.b32.xlu0 %v88, 44
  %v729 = vpop.permute.xlu0 %728
  %730 = vrot.lane.b32.xlu0 %v89, 44
  %v731 = vpop.permute.xlu0 %730
  %732 = vrot.lane.b32.xlu0 %v90, 44
  %v733 = vpop.permute.xlu0 %732
  %734 = vrot.lane.b32.xlu0 %v91, 44
  %v735 = vpop.permute.xlu0 %734
  %736 = vrot.lane.b32.xlu0 %v92, 44
  %v737 = vpop.permute.xlu0 %736
  %738 = vrot.lane.b32.xlu0 %v93, 44
  %v739 = vpop.permute.xlu0 %738
  %740 = vrot.lane.b32.xlu0 %v94, 44
  %v741 = vpop.permute.xlu0 %740
  %742 = vrot.lane.b32.xlu0 %v95, 44
  %v743 = vpop.permute.xlu0 %742
  %744 = vrot.lane.b32.xlu0 %v96, 44
  %v745 = vpop.permute.xlu0 %744
  %746 = vrot.lane.b32.xlu0 %v97, 44
  %v747 = vpop.permute.xlu0 %746
  %748 = vrot.lane.b32.xlu0 %v98, 44
  %v749 = vpop.permute.xlu0 %748
  %750 = vrot.lane.b32.xlu0 %v99, 44
  %v751 = vpop.permute.xlu0 %750
  %752 = vrot.lane.b32.xlu0 %v100, 44
  %v753 = vpop.permute.xlu0 %752
  %754 = vrot.lane.b32.xlu0 %v101, 44
  %v755 = vpop.permute.xlu0 %754
  %756 = vrot.lane.b32.xlu0 %v102, 44
  %v757 = vpop.permute.xlu0 %756
  %758 = vrot.lane.b32.xlu0 %v103, 44
  %v759 = vpop.permute.xlu0 %758
  %760 = vrot.lane.b32.xlu0 %v104, 44
  %v761 = vpop.permute.xlu0 %760
  %762 = vrot.lane.b32.xlu0 %v105, 44
  %v763 = vpop.permute.xlu0 %762
  %764 = vrot.lane.b32.xlu0 %v106, 44
  %v765 = vpop.permute.xlu0 %764
  %766 = vrot.lane.b32.xlu0 %v107, 44
  %v767 = vpop.permute.xlu0 %766
  %768 = vrot.lane.b32.xlu0 %v108, 44
  %v769 = vpop.permute.xlu0 %768
  %770 = vrot.lane.b32.xlu0 %v109, 44
  %v771 = vpop.permute.xlu0 %770
  %772 = vrot.lane.b32.xlu0 %v110, 44
  %v773 = vpop.permute.xlu0 %772
  %774 = vrot.lane.b32.xlu0 %v111, 44
  %v775 = vpop.permute.xlu0 %774
  %776 = vrot.lane.b32.xlu0 %v112, 44
  %v777 = vpop.permute.xlu0 %776
  %778 = vrot.lane.b32.xlu0 %v113, 44
  %v779 = vpop.permute.xlu0 %778
  %780 = vrot.lane.b32.xlu0 %v114, 44
  %v781 = vpop.permute.xlu0 %780
  %782 = vrot.lane.b32.xlu0 %v115, 44
  %v783 = vpop.permute.xlu0 %782
  %784 = vrot.lane.b32.xlu0 %v116, 44
  %v785 = vpop.permute.xlu0 %784
  %786 = vrot.lane.b32.xlu0 %v117, 44
  %v787 = vpop.permute.xlu0 %786
  %788 = vrot.lane.b32.xlu0 %v118, 44
  %v789 = vpop.permute.xlu0 %788
  %790 = vrot.lane.b32.xlu0 %v119, 44
  %v791 = vpop.permute.xlu0 %790
  %792 = vrot.lane.b32.xlu0 %v120, 44
  %v793 = vpop.permute.xlu0 %792
  %794 = vrot.lane.b32.xlu0 %v121, 44
  %v795 = vpop.permute.xlu0 %794
  %796 = vrot.lane.b32.xlu0 %v122, 44
  %v797 = vpop.permute.xlu0 %796
  %798 = vrot.lane.b32.xlu0 %v123, 44
  %v799 = vpop.permute.xlu0 %798
  %800 = vrot.lane.b32.xlu0 %v124, 44
  %v801 = vpop.permute.xlu0 %800
  %802 = vrot.lane.b32.xlu0 %v125, 44
  %v803 = vpop.permute.xlu0 %802
  %804 = vrot.lane.b32.xlu0 %v126, 44
  %v805 = vpop.permute.xlu0 %804
  %806 = vrot.lane.b32.xlu0 %v127, 44
  %v807 = vpop.permute.xlu0 %806
  %808 = vrot.lane.b32.xlu0 %v128, 44
  %v809 = vpop.permute.xlu0 %808
  %810 = vrot.lane.b32.xlu0 %v129, 44
  %v811 = vpop.permute.xlu0 %810
  %812 = vrot.lane.b32.xlu0 %v130, 44
  %v813 = vpop.permute.xlu0 %812
  %814 = vrot.lane.b32.xlu0 %v131, 44
  %v815 = vpop.permute.xlu0 %814
  %816 = vrot.lane.b32.xlu0 %v132, 44
  %v817 = vpop.permute.xlu0 %816
  %818 = vrot.lane.b32.xlu0 %v133, 44
  %v819 = vpop.permute.xlu0 %818
  %820 = vrot.lane.b32.xlu0 %v134, 44
  %v821 = vpop.permute.xlu0 %820
  %822 = vrot.lane.b32.xlu0 %v135, 44
  %v823 = vpop.permute.xlu0 %822
  %824 = vrot.lane.b32.xlu0 %v136, 44
  %v825 = vpop.permute.xlu0 %824
  %826 = vrot.lane.b32.xlu0 %v137, 44
  %v827 = vpop.permute.xlu0 %826
  %828 = vrot.lane.b32.xlu0 %v138, 44
  %v829 = vpop.permute.xlu0 %828
  %830 = vrot.lane.b32.xlu0 %v139, 44
  %v831 = vpop.permute.xlu0 %830
  %832 = vrot.lane.b32.xlu0 %v140, 44
  %v833 = vpop.permute.xlu0 %832
  %834 = vrot.lane.b32.xlu0 %v141, 44
  %v835 = vpop.permute.xlu0 %834
  %836 = vrot.lane.b32.xlu0 %v142, 44
  %v837 = vpop.permute.xlu0 %836
  %838 = vrot.lane.b32.xlu0 %v143, 44
  %v839 = vpop.permute.xlu0 %838
  %840 = vrot.lane.b32.xlu0 %v144, 44
  %v841 = vpop.permute.xlu0 %840
  %842 = vrot.lane.b32.xlu0 %v145, 44
  %v843 = vpop.permute.xlu0 %842
  %844 = vrot.lane.b32.xlu0 %v146, 44
  %v845 = vpop.permute.xlu0 %844
  %846 = vrot.lane.b32.xlu0 %v147, 44
  %v847 = vpop.permute.xlu0 %846
  %848 = vrot.lane.b32.xlu0 %v148, 44
  %v849 = vpop.permute.xlu0 %848
  %850 = vrot.lane.b32.xlu0 %v149, 44
  %v851 = vpop.permute.xlu0 %850
  %852 = vrot.lane.b32.xlu0 %v150, 44
  %v853 = vpop.permute.xlu0 %852
  %854 = vrot.lane.b32.xlu0 %v151, 44
  %v855 = vpop.permute.xlu0 %854
  %856 = vrot.lane.b32.xlu0 %v32, 44
  %v857 = vpop.permute.xlu0 %856
  %858 = vrot.lane.b32.xlu0 %v33, 44
  %v859 = vpop.permute.xlu0 %858
  %860 = vrot.lane.b32.xlu0 %v34, 44
  %v861 = vpop.permute.xlu0 %860
  %862 = vrot.lane.b32.xlu0 %v35, 44
  %v863 = vpop.permute.xlu0 %862
  %864 = vrot.lane.b32.xlu0 %v36, 44
  %v865 = vpop.permute.xlu0 %864
  %866 = vrot.lane.b32.xlu0 %v37, 44
  %v867 = vpop.permute.xlu0 %866
  %868 = vrot.lane.b32.xlu0 %v38, 44
  %v869 = vpop.permute.xlu0 %868
  %870 = vrot.lane.b32.xlu0 %v39, 44
  %v871 = vpop.permute.xlu0 %870
  %vm992 = vcmask 179200
  %v993 = vsel %vm992, %v32, %v273
  %v994 = vsel %vm992, %v33, %v275
  %v995 = vsel %vm992, %v34, %v277
  %v996 = vsel %vm992, %v35, %v279
  %v997 = vsel %vm992, %v36, %v281
  %v998 = vsel %vm992, %v37, %v283
  %v999 = vsel %vm992, %v38, %v285
  %v1000 = vsel %vm992, %v39, %v287
  %v1001 = vsel %vm992, %v40, %v289
  %v1002 = vsel %vm992, %v41, %v291
  %v1003 = vsel %vm992, %v42, %v293
  %v1004 = vsel %vm992, %v43, %v295
  %v1005 = vsel %vm992, %v44, %v297
  %v1006 = vsel %vm992, %v45, %v299
  %v1007 = vsel %vm992, %v46, %v301
  %v1008 = vsel %vm992, %v47, %v303
  %v1009 = vsel %vm992, %v48, %v305
  %v1010 = vsel %vm992, %v49, %v307
  %v1011 = vsel %vm992, %v50, %v309
  %v1012 = vsel %vm992, %v51, %v311
  %v1013 = vsel %vm992, %v52, %v313
  %v1014 = vsel %vm992, %v53, %v315
  %v1015 = vsel %vm992, %v54, %v317
  %v1016 = vsel %vm992, %v55, %v319
  %v1017 = vsel %vm992, %v56, %v321
  %v1018 = vsel %vm992, %v57, %v323
  %v1019 = vsel %vm992, %v58, %v325
  %v1020 = vsel %vm992, %v59, %v327
  %v1021 = vsel %vm992, %v60, %v329
  %v1022 = vsel %vm992, %v61, %v331
  %v1023 = vsel %vm992, %v62, %v333
  %v1024 = vsel %vm992, %v63, %v335
  %v1025 = vsel %vm992, %v64, %v337
  %v1026 = vsel %vm992, %v65, %v339
  %v1027 = vsel %vm992, %v66, %v341
  %v1028 = vsel %vm992, %v67, %v343
  %v1029 = vsel %vm992, %v68, %v345
  %v1030 = vsel %vm992, %v69, %v347
  %v1031 = vsel %vm992, %v70, %v349
  %v1032 = vsel %vm992, %v71, %v351
  %v1033 = vsel %vm992, %v72, %v353
  %v1034 = vsel %vm992, %v73, %v355
  %v1035 = vsel %vm992, %v74, %v357
  %v1036 = vsel %vm992, %v75, %v359
  %v1037 = vsel %vm992, %v76, %v361
  %v1038 = vsel %vm992, %v77, %v363
  %v1039 = vsel %vm992, %v78, %v365
  %v1040 = vsel %vm992, %v79, %v367
  %v1041 = vsel %vm992, %v80, %v369
  %v1042 = vsel %vm992, %v81, %v371
  %v1043 = vsel %vm992, %v82, %v373
  %v1044 = vsel %vm992, %v83, %v375
  %v1045 = vsel %vm992, %v84, %v377
  %v1046 = vsel %vm992, %v85, %v379
  %v1047 = vsel %vm992, %v86, %v381
  %v1048 = vsel %vm992, %v87, %v383
  %v1049 = vsel %vm992, %v88, %v385
  %v1050 = vsel %vm992, %v89, %v387
  %v1051 = vsel %vm992, %v90, %v389
  %v1052 = vsel %vm992, %v91, %v391
  %v1053 = vsel %vm992, %v92, %v393
  %v1054 = vsel %vm992, %v93, %v395
  %v1055 = vsel %vm992, %v94, %v397
  %v1056 = vsel %vm992, %v95, %v399
  %v1057 = vsel %vm992, %v96, %v401
  %v1058 = vsel %vm992, %v97, %v403
  %v1059 = vsel %vm992, %v98, %v405
  %v1060 = vsel %vm992, %v99, %v407
  %v1061 = vsel %vm992, %v100, %v409
  %v1062 = vsel %vm992, %v101, %v411
  %v1063 = vsel %vm992, %v102, %v413
  %v1064 = vsel %vm992, %v103, %v415
  %v1065 = vsel %vm992, %v104, %v417
  %v1066 = vsel %vm992, %v105, %v419
  %v1067 = vsel %vm992, %v106, %v421
  %v1068 = vsel %vm992, %v107, %v423
  %v1069 = vsel %vm992, %v108, %v425
  %v1070 = vsel %vm992, %v109, %v427
  %v1071 = vsel %vm992, %v110, %v429
  %v1072 = vsel %vm992, %v111, %v431
  %v1073 = vsel %vm992, %v112, %v433
  %v1074 = vsel %vm992, %v113, %v435
  %v1075 = vsel %vm992, %v114, %v437
  %v1076 = vsel %vm992, %v115, %v439
  %v1077 = vsel %vm992, %v116, %v441
  %v1078 = vsel %vm992, %v117, %v443
  %v1079 = vsel %vm992, %v118, %v445
  %v1080 = vsel %vm992, %v119, %v447
  %v1081 = vsel %vm992, %v120, %v449
  %v1082 = vsel %vm992, %v121, %v451
  %v1083 = vsel %vm992, %v122, %v453
  %v1084 = vsel %vm992, %v123, %v455
  %v1085 = vsel %vm992, %v124, %v457
  %v1086 = vsel %vm992, %v125, %v459
  %v1087 = vsel %vm992, %v126, %v461
  %v1088 = vsel %vm992, %v127, %v463
  %v1089 = vsel %vm992, %v128, %v465
  %v1090 = vsel %vm992, %v129, %v467
  %v1091 = vsel %vm992, %v130, %v469
  %v1092 = vsel %vm992, %v131, %v471
  %v1093 = vsel %vm992, %v132, %v473
  %v1094 = vsel %vm992, %v133, %v475
  %v1095 = vsel %vm992, %v134, %v477
  %v1096 = vsel %vm992, %v135, %v479
  %v1097 = vsel %vm992, %v136, %v481
  %v1098 = vsel %vm992, %v137, %v483
  %v1099 = vsel %vm992, %v138, %v485
  %v1100 = vsel %vm992, %v139, %v487
  %v1101 = vsel %vm992, %v140, %v489
  %v1102 = vsel %vm992, %v141, %v491
  %v1103 = vsel %vm992, %v142, %v493
  %v1104 = vsel %vm992, %v143, %v495
  %v1105 = vsel %vm992, %v144, %v497
  %v1106 = vsel %vm992, %v145, %v499
  %v1107 = vsel %vm992, %v146, %v501
  %v1108 = vsel %vm992, %v147, %v503
  %v1109 = vsel %vm992, %v148, %v505
  %v1110 = vsel %vm992, %v149, %v507
  %v1111 = vsel %vm992, %v150, %v509
  %v1112 = vsel %vm992, %v151, %v511
  %vm1113 = vcmask 359424
  %v1114 = vsel %vm1113, %v993, %v633
  %v1115 = vsel %vm1113, %v994, %v635
  %v1116 = vsel %vm1113, %v995, %v637
  %v1117 = vsel %vm1113, %v996, %v639
  %v1118 = vsel %vm1113, %v997, %v641
  %v1119 = vsel %vm1113, %v998, %v643
  %v1120 = vsel %vm1113, %v999, %v645
  %v1121 = vsel %vm1113, %v1000, %v647
  %v1122 = vsel %vm1113, %v1001, %v649
  %v1123 = vsel %vm1113, %v1002, %v651
  %v1124 = vsel %vm1113, %v1003, %v653
  %v1125 = vsel %vm1113, %v1004, %v655
  %v1126 = vsel %vm1113, %v1005, %v657
  %v1127 = vsel %vm1113, %v1006, %v659
  %v1128 = vsel %vm1113, %v1007, %v661
  %v1129 = vsel %vm1113, %v1008, %v663
  %v1130 = vsel %vm1113, %v1009, %v665
  %v1131 = vsel %vm1113, %v1010, %v667
  %v1132 = vsel %vm1113, %v1011, %v669
  %v1133 = vsel %vm1113, %v1012, %v671
  %v1134 = vsel %vm1113, %v1013, %v673
  %v1135 = vsel %vm1113, %v1014, %v675
  %v1136 = vsel %vm1113, %v1015, %v677
  %v1137 = vsel %vm1113, %v1016, %v679
  %v1138 = vsel %vm1113, %v1017, %v681
  %v1139 = vsel %vm1113, %v1018, %v683
  %v1140 = vsel %vm1113, %v1019, %v685
  %v1141 = vsel %vm1113, %v1020, %v687
  %v1142 = vsel %vm1113, %v1021, %v689
  %v1143 = vsel %vm1113, %v1022, %v691
  %v1144 = vsel %vm1113, %v1023, %v693
  %v1145 = vsel %vm1113, %v1024, %v695
  %v1146 = vsel %vm1113, %v1025, %v697
  %v1147 = vsel %vm1113, %v1026, %v699
  %v1148 = vsel %vm1113, %v1027, %v701
  %v1149 = vsel %vm1113, %v1028, %v703
  %v1150 = vsel %vm1113, %v1029, %v705
  %v1151 = vsel %vm1113, %v1030, %v707
  %v1152 = vsel %vm1113, %v1031, %v709
  %v1153 = vsel %vm1113, %v1032, %v711
  %v1154 = vsel %vm1113, %v1033, %v713
  %v1155 = vsel %vm1113, %v1034, %v715
  %v1156 = vsel %vm1113, %v1035, %v717
  %v1157 = vsel %vm1113, %v1036, %v719
  %v1158 = vsel %vm1113, %v1037, %v721
  %v1159 = vsel %vm1113, %v1038, %v723
  %v1160 = vsel %vm1113, %v1039, %v725
  %v1161 = vsel %vm1113, %v1040, %v727
  %v1162 = vsel %vm1113, %v1041, %v729
  %v1163 = vsel %vm1113, %v1042, %v731
  %v1164 = vsel %vm1113, %v1043, %v733
  %v1165 = vsel %vm1113, %v1044, %v735
  %v1166 = vsel %vm1113, %v1045, %v737
  %v1167 = vsel %vm1113, %v1046, %v739
  %v1168 = vsel %vm1113, %v1047, %v741
  %v1169 = vsel %vm1113, %v1048, %v743
  %v1170 = vsel %vm1113, %v1049, %v745
  %v1171 = vsel %vm1113, %v1050, %v747
  %v1172 = vsel %vm1113, %v1051, %v749
  %v1173 = vsel %vm1113, %v1052, %v751
  %v1174 = vsel %vm1113, %v1053, %v753
  %v1175 = vsel %vm1113, %v1054, %v755
  %v1176 = vsel %vm1113, %v1055, %v757
  %v1177 = vsel %vm1113, %v1056, %v759
  %v1178 = vsel %vm1113, %v1057, %v761
  %v1179 = vsel %vm1113, %v1058, %v763
  %v1180 = vsel %vm1113, %v1059, %v765
  %v1181 = vsel %vm1113, %v1060, %v767
  %v1182 = vsel %vm1113, %v1061, %v769
  %v1183 = vsel %vm1113, %v1062, %v771
  %v1184 = vsel %vm1113, %v1063, %v773
  %v1185 = vsel %vm1113, %v1064, %v775
  %v1186 = vsel %vm1113, %v1065, %v777
  %v1187 = vsel %vm1113, %v1066, %v779
  %v1188 = vsel %vm1113, %v1067, %v781
  %v1189 = vsel %vm1113, %v1068, %v783
  %v1190 = vsel %vm1113, %v1069, %v785
  %v1191 = vsel %vm1113, %v1070, %v787
  %v1192 = vsel %vm1113, %v1071, %v789
  %v1193 = vsel %vm1113, %v1072, %v791
  %v1194 = vsel %vm1113, %v1073, %v793
  %v1195 = vsel %vm1113, %v1074, %v795
  %v1196 = vsel %vm1113, %v1075, %v797
  %v1197 = vsel %vm1113, %v1076, %v799
  %v1198 = vsel %vm1113, %v1077, %v801
  %v1199 = vsel %vm1113, %v1078, %v803
  %v1200 = vsel %vm1113, %v1079, %v805
  %v1201 = vsel %vm1113, %v1080, %v807
  %v1202 = vsel %vm1113, %v1081, %v809
  %v1203 = vsel %vm1113, %v1082, %v811
  %v1204 = vsel %vm1113, %v1083, %v813
  %v1205 = vsel %vm1113, %v1084, %v815
  %v1206 = vsel %vm1113, %v1085, %v817
  %v1207 = vsel %vm1113, %v1086, %v819
  %v1208 = vsel %vm1113, %v1087, %v821
  %v1209 = vsel %vm1113, %v1088, %v823
  %v1210 = vsel %vm1113, %v1089, %v825
  %v1211 = vsel %vm1113, %v1090, %v827
  %v1212 = vsel %vm1113, %v1091, %v829
  %v1213 = vsel %vm1113, %v1092, %v831
  %v1214 = vsel %vm1113, %v1093, %v833
  %v1215 = vsel %vm1113, %v1094, %v835
  %v1216 = vsel %vm1113, %v1095, %v837
  %v1217 = vsel %vm1113, %v1096, %v839
  %v1218 = vsel %vm1113, %v1097, %v841
  %v1219 = vsel %vm1113, %v1098, %v843
  %v1220 = vsel %vm1113, %v1099, %v845
  %v1221 = vsel %vm1113, %v1100, %v847
  %v1222 = vsel %vm1113, %v1101, %v849
  %v1223 = vsel %vm1113, %v1102, %v851
  %v1224 = vsel %vm1113, %v1103, %v853
  %v1225 = vsel %vm1113, %v1104, %v855
  %v1226 = vsel %vm1113, %v1105, %v857
  %v1227 = vsel %vm1113, %v1106, %v859
  %v1228 = vsel %vm1113, %v1107, %v861
  %v1229 = vsel %vm1113, %v1108, %v863
  %v1230 = vsel %vm1113, %v1109, %v865
  %v1231 = vsel %vm1113, %v1110, %v867
  %v1232 = vsel %vm1113, %v1111, %v869
  %v1233 = vsel %vm1113, %v1112, %v871
  %v1234 = vld [vmem:[%s1] sm:$0xff]
  %v1235 = vld [vmem:[%s1 + $0x8] sm:$0xff]
  %v1236 = vld [vmem:[%s1 + $0x10] sm:$0xff]
  %v1237 = vld [vmem:[%s1 + $0x18] sm:$0xff]
  %v1238 = vld [vmem:[%s1 + $0x20] sm:$0xff]
  %v1239 = vld [vmem:[%s1 + $0x28] sm:$0xff]
  %v1240 = vld [vmem:[%s1 + $0x30] sm:$0xff]
  %v1241 = vld [vmem:[%s1 + $0x38] sm:$0xff]
  %v1242 = vld [vmem:[%s1 + $0x40] sm:$0xff]
  %v1243 = vld [vmem:[%s1 + $0x48] sm:$0xff]
  %v1244 = vld [vmem:[%s1 + $0x50] sm:$0xff]
  %v1245 = vld [vmem:[%s1 + $0x58] sm:$0xff]
  %v1246 = vld [vmem:[%s1 + $0x60] sm:$0xff]
  %v1247 = vld [vmem:[%s1 + $0x68] sm:$0xff]
  %v1248 = vld [vmem:[%s1 + $0x70] sm:$0xff]
  %v1249 = vld [vmem:[%s1 + $0x78] sm:$0xff]
  %v1250 = vld [vmem:[%s1 + $0x80] sm:$0x3]
  %v1251 = vld [vmem:[%s1 + $0x88] sm:$0x3]
  %vm1252 = vcmask 539648
  %v1254 = vsel %vm1252, %v1114, 0
  %v1257 = vsel %vm1252, %v1115, 0
  %v1260 = vsel %vm1252, %v1116, 0
  %v1263 = vsel %vm1252, %v1117, 0
  %v1266 = vsel %vm1252, %v1118, 0
  %v1269 = vsel %vm1252, %v1119, 0
  %v1272 = vsel %vm1252, %v1120, 0
  %v1275 = vsel %vm1252, %v1121, 0
  %v1278 = vsel %vm1252, %v1122, 0
  %v1281 = vsel %vm1252, %v1123, 0
  %v1284 = vsel %vm1252, %v1124, 0
  %v1287 = vsel %vm1252, %v1125, 0
  %v1290 = vsel %vm1252, %v1126, 0
  %v1293 = vsel %vm1252, %v1127, 0
  %v1296 = vsel %vm1252, %v1128, 0
  %v1299 = vsel %vm1252, %v1129, 0
  %v1302 = vsel %vm1252, %v1130, 0
  %v1305 = vsel %vm1252, %v1131, 0
  %v1308 = vsel %vm1252, %v1132, 0
  %v1311 = vsel %vm1252, %v1133, 0
  %v1314 = vsel %vm1252, %v1134, 0
  %v1317 = vsel %vm1252, %v1135, 0
  %v1320 = vsel %vm1252, %v1136, 0
  %v1323 = vsel %vm1252, %v1137, 0
  %v1326 = vsel %vm1252, %v1138, 0
  %v1329 = vsel %vm1252, %v1139, 0
  %v1332 = vsel %vm1252, %v1140, 0
  %v1335 = vsel %vm1252, %v1141, 0
  %v1338 = vsel %vm1252, %v1142, 0
  %v1341 = vsel %vm1252, %v1143, 0
  %v1344 = vsel %vm1252, %v1144, 0
  %v1347 = vsel %vm1252, %v1145, 0
  %v1350 = vsel %vm1252, %v1146, 0
  %v1353 = vsel %vm1252, %v1147, 0
  %v1356 = vsel %vm1252, %v1148, 0
  %v1359 = vsel %vm1252, %v1149, 0
  %v1362 = vsel %vm1252, %v1150, 0
  %v1365 = vsel %vm1252, %v1151, 0
  %v1368 = vsel %vm1252, %v1152, 0
  %v1371 = vsel %vm1252, %v1153, 0
  %v1374 = vsel %vm1252, %v1154, 0
  %v1377 = vsel %vm1252, %v1155, 0
  %v1380 = vsel %vm1252, %v1156, 0
  %v1383 = vsel %vm1252, %v1157, 0
  %v1386 = vsel %vm1252, %v1158, 0
  %v1389 = vsel %vm1252, %v1159, 0
  %v1392 = vsel %vm1252, %v1160, 0
  %v1395 = vsel %vm1252, %v1161, 0
  %v1398 = vsel %vm1252, %v1162, 0
  %v1401 = vsel %vm1252, %v1163, 0
  %v1404 = vsel %vm1252, %v1164, 0
  %v1407 = vsel %vm1252, %v1165, 0
  %v1410 = vsel %vm1252, %v1166, 0
  %v1413 = vsel %vm1252, %v1167, 0
  %v1416 = vsel %vm1252, %v1168, 0
  %v1419 = vsel %vm1252, %v1169, 0
  %v1422 = vsel %vm1252, %v1170, 0
  %v1425 = vsel %vm1252, %v1171, 0
  %v1428 = vsel %vm1252, %v1172, 0
  %v1431 = vsel %vm1252, %v1173, 0
  %v1434 = vsel %vm1252, %v1174, 0
  %v1437 = vsel %vm1252, %v1175, 0
  %v1440 = vsel %vm1252, %v1176, 0
  %v1443 = vsel %vm1252, %v1177, 0
  %v1446 = vsel %vm1252, %v1178, 0
  %v1449 = vsel %vm1252, %v1179, 0
  %v1452 = vsel %vm1252, %v1180, 0
  %v1455 = vsel %vm1252, %v1181, 0
  %v1458 = vsel %vm1252, %v1182, 0
  %v1461 = vsel %vm1252, %v1183, 0
  %v1464 = vsel %vm1252, %v1184, 0
  %v1467 = vsel %vm1252, %v1185, 0
  %v1470 = vsel %vm1252, %v1186, 0
  %v1473 = vsel %vm1252, %v1187, 0
  %v1476 = vsel %vm1252, %v1188, 0
  %v1479 = vsel %vm1252, %v1189, 0
  %v1482 = vsel %vm1252, %v1190, 0
  %v1485 = vsel %vm1252, %v1191, 0
  %v1488 = vsel %vm1252, %v1192, 0
  %v1491 = vsel %vm1252, %v1193, 0
  %v1494 = vsel %vm1252, %v1194, 0
  %v1497 = vsel %vm1252, %v1195, 0
  %v1500 = vsel %vm1252, %v1196, 0
  %v1503 = vsel %vm1252, %v1197, 0
  %v1506 = vsel %vm1252, %v1198, 0
  %v1509 = vsel %vm1252, %v1199, 0
  %v1512 = vsel %vm1252, %v1200, 0
  %v1515 = vsel %vm1252, %v1201, 0
  %v1518 = vsel %vm1252, %v1202, 0
  %v1521 = vsel %vm1252, %v1203, 0
  %v1524 = vsel %vm1252, %v1204, 0
  %v1527 = vsel %vm1252, %v1205, 0
  %v1530 = vsel %vm1252, %v1206, 0
  %v1533 = vsel %vm1252, %v1207, 0
  %v1536 = vsel %vm1252, %v1208, 0
  %v1539 = vsel %vm1252, %v1209, 0
  %v1542 = vsel %vm1252, %v1210, 0
  %v1545 = vsel %vm1252, %v1211, 0
  %v1548 = vsel %vm1252, %v1212, 0
  %v1551 = vsel %vm1252, %v1213, 0
  %v1554 = vsel %vm1252, %v1214, 0
  %v1557 = vsel %vm1252, %v1215, 0
  %v1560 = vsel %vm1252, %v1216, 0
  %v1563 = vsel %vm1252, %v1217, 0
  %v1566 = vsel %vm1252, %v1218, 0
  %v1569 = vsel %vm1252, %v1219, 0
  %v1572 = vsel %vm1252, %v1220, 0
  %v1575 = vsel %vm1252, %v1221, 0
  %v1578 = vsel %vm1252, %v1222, 0
  %v1581 = vsel %vm1252, %v1223, 0
  %v1584 = vsel %vm1252, %v1224, 0
  %v1587 = vsel %vm1252, %v1225, 0
  %v1590 = vsel %vm1252, %v1226, 0
  %v1593 = vsel %vm1252, %v1227, 0
  %v1596 = vsel %vm1252, %v1228, 0
  %v1599 = vsel %vm1252, %v1229, 0
  %v1602 = vsel %vm1252, %v1230, 0
  %v1605 = vsel %vm1252, %v1231, 0
  %v1608 = vsel %vm1252, %v1232, 0
  %v1611 = vsel %vm1252, %v1233, 0
  %vm1613 = vcmask 1041408
  %v1615 = vsel %vm1613, %v1250, 0
  %v1618 = vsel %vm1613, %v1251, 0
  %1620 = vmatprep.subr.mxu0 %v1235
  %1621 = vmatpush1.msra.mxu0 %v1234
  %1622 = vmatprep.subr.mxu0 %v1237
  %1623 = vmatpush1.msra.mxu0 %v1236
  %1624 = vmatprep.subr.mxu0 %v1239
  %1625 = vmatpush1.msra.mxu0 %v1238
  %1626 = vmatprep.subr.mxu0 %v1241
  %1627 = vmatpush1.msra.mxu0 %v1240
  %1628 = vmatprep.subr.mxu0 %v1243
  %1629 = vmatpush1.msra.mxu0 %v1242
  %1630 = vmatprep.subr.mxu0 %v1245
  %1631 = vmatpush1.msra.mxu0 %v1244
  %1632 = vmatprep.subr.mxu0 %v1247
  %1633 = vmatpush1.msra.mxu0 %v1246
  %1634 = vmatprep.subr.mxu0 %v1249
  %1635 = vmatpush1.msra.mxu0 %v1248
  %1636 = vmatprep.subr.mxu0 %v1618
  %1637 = vmatpush1.msra.mxu0 %v1615
  %1638 = vmatprep.subr.mxu0 0.0
  %1639 = vmatpush1.msra.mxu0 0.0
  %1640 = vmatprep.subr.mxu0 0.0
  %1641 = vmatpush1.msra.mxu0 0.0
  %1642 = vmatprep.subr.mxu0 0.0
  %1643 = vmatpush1.msra.mxu0 0.0
  %1644 = vmatprep.subr.mxu0 0.0
  %1645 = vmatpush1.msra.mxu0 0.0
  %1646 = vmatprep.subr.mxu0 0.0
  %1647 = vmatpush1.msra.mxu0 0.0
  %1648 = vmatprep.subr.mxu0 0.0
  %1649 = vmatpush1.msra.mxu0 0.0
  %1650 = vmatprep.subr.mxu0 0.0
  %1651 = vmatpush1.msra.mxu0 0.0
  %1652 = vmatprep.subr.mxu0 0.0
  %1653 = vmatpush1.msra.mxu0 0.0
  %1654 = vmatprep.subr.mxu0 0.0
  %1655 = vmatpush1.msra.mxu0 0.0
  %1656 = vmatprep.subr.mxu0 0.0
  %1657 = vmatpush1.msra.mxu0 0.0
  %1658 = vmatprep.subr.mxu0 0.0
  %1659 = vmatpush1.msra.mxu0 0.0
  %1660 = vmatprep.subr.mxu0 0.0
  %1661 = vmatpush1.msra.mxu0 0.0
  %1662 = vmatprep.subr.mxu0 0.0
  %1663 = vmatpush1.msra.mxu0 0.0
  %1664 = vmatprep.subr.mxu0 0.0
  %1665 = vmatpush1.msra.mxu0 0.0
  %1666 = vmatprep.subr.mxu0 0.0
  %1667 = vmatpush1.msra.mxu0 0.0
  %1668 = vmatprep.subr.mxu0 0.0
  %1669 = vmatpush1.msra.mxu0 0.0
  %1670 = vmatprep.subr.mxu0 0.0
  %1671 = vmatpush1.msra.mxu0 0.0
  %1672 = vmatprep.subr.mxu0 0.0
  %1673 = vmatpush1.msra.mxu0 0.0
  %1674 = vmatprep.subr.mxu0 0.0
  %1675 = vmatpush1.msra.mxu0 0.0
  %1676 = vmatprep.subr.mxu0 0.0
  %1677 = vmatpush1.msra.mxu0 0.0
  %1678 = vmatprep.subr.mxu0 0.0
  %1679 = vmatpush1.msra.mxu0 0.0
  %1680 = vmatprep.subr.mxu0 0.0
  %1681 = vmatpush1.msra.mxu0 0.0
  %1682 = vmatprep.subr.mxu0 0.0
  %1683 = vmatpush1.msra.mxu0 0.0
  %1684 = vmatprep.mubr.f32.mxu0 0.0
  %1685 = vmatmul.mubr.f32.gmra.mrb[0].mxu0 %v1254
  %v1686 = vpop.f32.mrb[0].mxu0
  %v1687 = vadd.f32 0.0, %v1686
  %v1688 = vpop.f32.mrb[0].mxu0
  %v1689 = vadd.f32 0.0, %v1688
  %1690 = vmatprep.mubr.f32.mxu0 0.0
  %1691 = vmatmul.mubr.f32.gmra.mrb[0].mxu0 %v1257
  %v1692 = vpop.f32.mrb[0].mxu0
  %v1693 = vadd.f32 0.0, %v1692
  %v1694 = vpop.f32.mrb[0].mxu0
  %v1695 = vadd.f32 0.0, %v1694
  %1696 = vmatprep.mubr.f32.mxu0 0.0
  %1697 = vmatmul.mubr.f32.gmra.mrb[0].mxu0 %v1260
  %v1698 = vpop.f32.mrb[0].mxu0
  %v1699 = vadd.f32 0.0, %v1698
  %v1700 = vpop.f32.mrb[0].mxu0
  %v1701 = vadd.f32 0.0, %v1700
  %1702 = vmatprep.mubr.f32.mxu0 0.0
  %1703 = vmatmul.mubr.f32.gmra.mrb[0].mxu0 %v1263
  %v1704 = vpop.f32.mrb[0].mxu0
  %v1705 = vadd.f32 0.0, %v1704
  %v1706 = vpop.f32.mrb[0].mxu0
  %v1707 = vadd.f32 0.0, %v1706
  %1708 = vmatprep.mubr.f32.mxu0 0.0
  %1709 = vmatmul.mubr.f32.gmra.mrb[0].mxu0 %v1266
  %v1710 = vpop.f32.mrb[0].mxu0
  %v1711 = vadd.f32 0.0, %v1710
  %v1712 = vpop.f32.mrb[0].mxu0
  %v1713 = vadd.f32 0.0, %v1712
  %1714 = vmatprep.mubr.f32.mxu0 0.0
  %1715 = vmatmul.mubr.f32.gmra.mrb[0].mxu0 %v1269
  %v1716 = vpop.f32.mrb[0].mxu0
  %v1717 = vadd.f32 0.0, %v1716
  %v1718 = vpop.f32.mrb[0].mxu0
  %v1719 = vadd.f32 0.0, %v1718
  %1720 = vmatprep.mubr.f32.mxu0 0.0
  %1721 = vmatmul.mubr.f32.gmra.mrb[0].mxu0 %v1272
  %v1722 = vpop.f32.mrb[0].mxu0
  %v1723 = vadd.f32 0.0, %v1722
  %v1724 = vpop.f32.mrb[0].mxu0
  %v1725 = vadd.f32 0.0, %v1724
  %1726 = vmatprep.mubr.f32.mxu0 0.0
  %1727 = vmatmul.mubr.f32.gmra.mrb[0].mxu0 %v1275
  %v1728 = vpop.f32.mrb[0].mxu0
  %v1729 = vadd.f32 0.0, %v1728
  %v1730 = vpop.f32.mrb[0].mxu0
  %v1731 = vadd.f32 0.0, %v1730
  %1732 = vmatprep.mubr.f32.mxu0 0.0
  %1733 = vmatmul.mubr.f32.gmra.mrb[0].mxu0 %v1278
  %v1734 = vpop.f32.mrb[0].mxu0
  %v1735 = vadd.f32 0.0, %v1734
  %v1736 = vpop.f32.mrb[0].mxu0
  %v1737 = vadd.f32 0.0, %v1736
  %1738 = vmatprep.mubr.f32.mxu0 0.0
  %1739 = vmatmul.mubr.f32.gmra.mrb[0].mxu0 %v1281
  %v1740 = vpop.f32.mrb[0].mxu0
  %v1741 = vadd.f32 0.0, %v1740
  %v1742 = vpop.f32.mrb[0].mxu0
  %v1743 = vadd.f32 0.0, %v1742
  %1744 = vmatprep.mubr.f32.mxu0 0.0
  %1745 = vmatmul.mubr.f32.gmra.mrb[0].mxu0 %v1284
  %v1746 = vpop.f32.mrb[0].mxu0
  %v1747 = vadd.f32 0.0, %v1746
  %v1748 = vpop.f32.mrb[0].mxu0
  %v1749 = vadd.f32 0.0, %v1748
  %1750 = vmatprep.mubr.f32.mxu0 0.0
  %1751 = vmatmul.mubr.f32.gmra.mrb[0].mxu0 %v1287
  %v1752 = vpop.f32.mrb[0].mxu0
  %v1753 = vadd.f32 0.0, %v1752
  %v1754 = vpop.f32.mrb[0].mxu0
  %v1755 = vadd.f32 0.0, %v1754
  %1756 = vmatprep.mubr.f32.mxu0 0.0
  %1757 = vmatmul.mubr.f32.gmra.mrb[0].mxu0 %v1290
  %v1758 = vpop.f32.mrb[0].mxu0
  %v1759 = vadd.f32 0.0, %v1758
  %v1760 = vpop.f32.mrb[0].mxu0
  %v1761 = vadd.f32 0.0, %v1760
  %1762 = vmatprep.mubr.f32.mxu0 0.0
  %1763 = vmatmul.mubr.f32.gmra.mrb[0].mxu0 %v1293
  %v1764 = vpop.f32.mrb[0].mxu0
  %v1765 = vadd.f32 0.0, %v1764
  %v1766 = vpop.f32.mrb[0].mxu0
  %v1767 = vadd.f32 0.0, %v1766
  %1768 = vmatprep.mubr.f32.mxu0 0.0
  %1769 = vmatmul.mubr.f32.gmra.mrb[0].mxu0 %v1296
  %v1770 = vpop.f32.mrb[0].mxu0
  %v1771 = vadd.f32 0.0, %v1770
  %v1772 = vpop.f32.mrb[0].mxu0
  %v1773 = vadd.f32 0.0, %v1772
  %1774 = vmatprep.mubr.f32.mxu0 0.0
  %1775 = vmatmul.mubr.f32.gmra.mrb[0].mxu0 %v1299
  %v1776 = vpop.f32.mrb[0].mxu0
  %v1777 = vadd.f32 0.0, %v1776
  %v1778 = vpop.f32.mrb[0].mxu0
  %v1779 = vadd.f32 0.0, %v1778
  %1780 = vmatprep.mubr.f32.mxu0 0.0
  %1781 = vmatmul.mubr.f32.gmra.mrb[0].mxu0 %v1302
  %v1782 = vpop.f32.mrb[0].mxu0
  %v1783 = vadd.f32 0.0, %v1782
  %v1784 = vpop.f32.mrb[0].mxu0
  %v1785 = vadd.f32 0.0, %v1784
  %1786 = vmatprep.mubr.f32.mxu0 0.0
  %1787 = vmatmul.mubr.f32.gmra.mrb[0].mxu0 %v1305
  %v1788 = vpop.f32.mrb[0].mxu0
  %v1789 = vadd.f32 0.0, %v1788
  %v1790 = vpop.f32.mrb[0].mxu0
  %v1791 = vadd.f32 0.0, %v1790
  %1792 = vmatprep.mubr.f32.mxu0 0.0
  %1793 = vmatmul.mubr.f32.gmra.mrb[0].mxu0 %v1308
  %v1794 = vpop.f32.mrb[0].mxu0
  %v1795 = vadd.f32 0.0, %v1794
  %v1796 = vpop.f32.mrb[0].mxu0
  %v1797 = vadd.f32 0.0, %v1796
  %1798 = vmatprep.mubr.f32.mxu0 0.0
  %1799 = vmatmul.mubr.f32.gmra.mrb[0].mxu0 %v1311
  %v1800 = vpop.f32.mrb[0].mxu0
  %v1801 = vadd.f32 0.0, %v1800
  %v1802 = vpop.f32.mrb[0].mxu0
  %v1803 = vadd.f32 0.0, %v1802
  %1804 = vmatprep.mubr.f32.mxu0 0.0
  %1805 = vmatmul.mubr.f32.gmra.mrb[0].mxu0 %v1314
  %v1806 = vpop.f32.mrb[0].mxu0
  %v1807 = vadd.f32 0.0, %v1806
  %v1808 = vpop.f32.mrb[0].mxu0
  %v1809 = vadd.f32 0.0, %v1808
  %1810 = vmatprep.mubr.f32.mxu0 0.0
  %1811 = vmatmul.mubr.f32.gmra.mrb[0].mxu0 %v1317
  %v1812 = vpop.f32.mrb[0].mxu0
  %v1813 = vadd.f32 0.0, %v1812
  %v1814 = vpop.f32.mrb[0].mxu0
  %v1815 = vadd.f32 0.0, %v1814
  %1816 = vmatprep.mubr.f32.mxu0 0.0
  %1817 = vmatmul.mubr.f32.gmra.mrb[0].mxu0 %v1320
  %v1818 = vpop.f32.mrb[0].mxu0
  %v1819 = vadd.f32 0.0, %v1818
  %v1820 = vpop.f32.mrb[0].mxu0
  %v1821 = vadd.f32 0.0, %v1820
  %1822 = vmatprep.mubr.f32.mxu0 0.0
  %1823 = vmatmul.mubr.f32.gmra.mrb[0].mxu0 %v1323
  %v1824 = vpop.f32.mrb[0].mxu0
  %v1825 = vadd.f32 0.0, %v1824
  %v1826 = vpop.f32.mrb[0].mxu0
  %v1827 = vadd.f32 0.0, %v1826
  %1828 = vmatprep.mubr.f32.mxu0 0.0
  %1829 = vmatmul.mubr.f32.gmra.mrb[0].mxu0 %v1326
  %v1830 = vpop.f32.mrb[0].mxu0
  %v1831 = vadd.f32 0.0, %v1830
  %v1832 = vpop.f32.mrb[0].mxu0
  %v1833 = vadd.f32 0.0, %v1832
  %1834 = vmatprep.mubr.f32.mxu0 0.0
  %1835 = vmatmul.mubr.f32.gmra.mrb[0].mxu0 %v1329
  %v1836 = vpop.f32.mrb[0].mxu0
  %v1837 = vadd.f32 0.0, %v1836
  %v1838 = vpop.f32.mrb[0].mxu0
  %v1839 = vadd.f32 0.0, %v1838
  %1840 = vmatprep.mubr.f32.mxu0 0.0
  %1841 = vmatmul.mubr.f32.gmra.mrb[0].mxu0 %v1332
  %v1842 = vpop.f32.mrb[0].mxu0
  %v1843 = vadd.f32 0.0, %v1842
  %v1844 = vpop.f32.mrb[0].mxu0
  %v1845 = vadd.f32 0.0, %v1844
  %1846 = vmatprep.mubr.f32.mxu0 0.0
  %1847 = vmatmul.mubr.f32.gmra.mrb[0].mxu0 %v1335
  %v1848 = vpop.f32.mrb[0].mxu0
  %v1849 = vadd.f32 0.0, %v1848
  %v1850 = vpop.f32.mrb[0].mxu0
  %v1851 = vadd.f32 0.0, %v1850
  %1852 = vmatprep.mubr.f32.mxu0 0.0
  %1853 = vmatmul.mubr.f32.gmra.mrb[0].mxu0 %v1338
  %v1854 = vpop.f32.mrb[0].mxu0
  %v1855 = vadd.f32 0.0, %v1854
  %v1856 = vpop.f32.mrb[0].mxu0
  %v1857 = vadd.f32 0.0, %v1856
  %1858 = vmatprep.mubr.f32.mxu0 0.0
  %1859 = vmatmul.mubr.f32.gmra.mrb[0].mxu0 %v1341
  %v1860 = vpop.f32.mrb[0].mxu0
  %v1861 = vadd.f32 0.0, %v1860
  %v1862 = vpop.f32.mrb[0].mxu0
  %v1863 = vadd.f32 0.0, %v1862
  %1864 = vmatprep.mubr.f32.mxu0 0.0
  %1865 = vmatmul.mubr.f32.gmra.mrb[0].mxu0 %v1344
  %v1866 = vpop.f32.mrb[0].mxu0
  %v1867 = vadd.f32 0.0, %v1866
  %v1868 = vpop.f32.mrb[0].mxu0
  %v1869 = vadd.f32 0.0, %v1868
  %1870 = vmatprep.mubr.f32.mxu0 0.0
  %1871 = vmatmul.mubr.f32.gmra.mrb[0].mxu0 %v1347
  %v1872 = vpop.f32.mrb[0].mxu0
  %v1873 = vadd.f32 0.0, %v1872
  %v1874 = vpop.f32.mrb[0].mxu0
  %v1875 = vadd.f32 0.0, %v1874
  %1876 = vmatprep.mubr.f32.mxu0 0.0
  %1877 = vmatmul.mubr.f32.gmra.mrb[0].mxu0 %v1350
  %v1878 = vpop.f32.mrb[0].mxu0
  %v1879 = vadd.f32 0.0, %v1878
  %v1880 = vpop.f32.mrb[0].mxu0
  %v1881 = vadd.f32 0.0, %v1880
  %1882 = vmatprep.mubr.f32.mxu0 0.0
  %1883 = vmatmul.mubr.f32.gmra.mrb[0].mxu0 %v1353
  %v1884 = vpop.f32.mrb[0].mxu0
  %v1885 = vadd.f32 0.0, %v1884
  %v1886 = vpop.f32.mrb[0].mxu0
  %v1887 = vadd.f32 0.0, %v1886
  %1888 = vmatprep.mubr.f32.mxu0 0.0
  %1889 = vmatmul.mubr.f32.gmra.mrb[0].mxu0 %v1356
  %v1890 = vpop.f32.mrb[0].mxu0
  %v1891 = vadd.f32 0.0, %v1890
  %v1892 = vpop.f32.mrb[0].mxu0
  %v1893 = vadd.f32 0.0, %v1892
  %1894 = vmatprep.mubr.f32.mxu0 0.0
  %1895 = vmatmul.mubr.f32.gmra.mrb[0].mxu0 %v1359
  %v1896 = vpop.f32.mrb[0].mxu0
  %v1897 = vadd.f32 0.0, %v1896
  %v1898 = vpop.f32.mrb[0].mxu0
  %v1899 = vadd.f32 0.0, %v1898
  %1900 = vmatprep.mubr.f32.mxu0 0.0
  %1901 = vmatmul.mubr.f32.gmra.mrb[0].mxu0 %v1362
  %v1902 = vpop.f32.mrb[0].mxu0
  %v1903 = vadd.f32 0.0, %v1902
  %v1904 = vpop.f32.mrb[0].mxu0
  %v1905 = vadd.f32 0.0, %v1904
  %1906 = vmatprep.mubr.f32.mxu0 0.0
  %1907 = vmatmul.mubr.f32.gmra.mrb[0].mxu0 %v1365
  %v1908 = vpop.f32.mrb[0].mxu0
  %v1909 = vadd.f32 0.0, %v1908
  %v1910 = vpop.f32.mrb[0].mxu0
  %v1911 = vadd.f32 0.0, %v1910
  %1912 = vmatprep.mubr.f32.mxu0 0.0
  %1913 = vmatmul.mubr.f32.gmra.mrb[0].mxu0 %v1368
  %v1914 = vpop.f32.mrb[0].mxu0
  %v1915 = vadd.f32 0.0, %v1914
  %v1916 = vpop.f32.mrb[0].mxu0
  %v1917 = vadd.f32 0.0, %v1916
  %1918 = vmatprep.mubr.f32.mxu0 0.0
  %1919 = vmatmul.mubr.f32.gmra.mrb[0].mxu0 %v1371
  %v1920 = vpop.f32.mrb[0].mxu0
  %v1921 = vadd.f32 0.0, %v1920
  %v1922 = vpop.f32.mrb[0].mxu0
  %v1923 = vadd.f32 0.0, %v1922
  %1924 = vmatprep.mubr.f32.mxu0 0.0
  %1925 = vmatmul.mubr.f32.gmra.mrb[0].mxu0 %v1374
  %v1926 = vpop.f32.mrb[0].mxu0
  %v1927 = vadd.f32 0.0, %v1926
  %v1928 = vpop.f32.mrb[0].mxu0
  %v1929 = vadd.f32 0.0, %v1928
  %1930 = vmatprep.mubr.f32.mxu0 0.0
  %1931 = vmatmul.mubr.f32.gmra.mrb[0].mxu0 %v1377
  %v1932 = vpop.f32.mrb[0].mxu0
  %v1933 = vadd.f32 0.0, %v1932
  %v1934 = vpop.f32.mrb[0].mxu0
  %v1935 = vadd.f32 0.0, %v1934
  %1936 = vmatprep.mubr.f32.mxu0 0.0
  %1937 = vmatmul.mubr.f32.gmra.mrb[0].mxu0 %v1380
  %v1938 = vpop.f32.mrb[0].mxu0
  %v1939 = vadd.f32 0.0, %v1938
  %v1940 = vpop.f32.mrb[0].mxu0
  %v1941 = vadd.f32 0.0, %v1940
  %1942 = vmatprep.mubr.f32.mxu0 0.0
  %1943 = vmatmul.mubr.f32.gmra.mrb[0].mxu0 %v1383
  %v1944 = vpop.f32.mrb[0].mxu0
  %v1945 = vadd.f32 0.0, %v1944
  %v1946 = vpop.f32.mrb[0].mxu0
  %v1947 = vadd.f32 0.0, %v1946
  %1948 = vmatprep.mubr.f32.mxu0 0.0
  %1949 = vmatmul.mubr.f32.gmra.mrb[0].mxu0 %v1386
  %v1950 = vpop.f32.mrb[0].mxu0
  %v1951 = vadd.f32 0.0, %v1950
  %v1952 = vpop.f32.mrb[0].mxu0
  %v1953 = vadd.f32 0.0, %v1952
  %1954 = vmatprep.mubr.f32.mxu0 0.0
  %1955 = vmatmul.mubr.f32.gmra.mrb[0].mxu0 %v1389
  %v1956 = vpop.f32.mrb[0].mxu0
  %v1957 = vadd.f32 0.0, %v1956
  %v1958 = vpop.f32.mrb[0].mxu0
  %v1959 = vadd.f32 0.0, %v1958
  %1960 = vmatprep.mubr.f32.mxu0 0.0
  %1961 = vmatmul.mubr.f32.gmra.mrb[0].mxu0 %v1392
  %v1962 = vpop.f32.mrb[0].mxu0
  %v1963 = vadd.f32 0.0, %v1962
  %v1964 = vpop.f32.mrb[0].mxu0
  %v1965 = vadd.f32 0.0, %v1964
  %1966 = vmatprep.mubr.f32.mxu0 0.0
  %1967 = vmatmul.mubr.f32.gmra.mrb[0].mxu0 %v1395
  %v1968 = vpop.f32.mrb[0].mxu0
  %v1969 = vadd.f32 0.0, %v1968
  %v1970 = vpop.f32.mrb[0].mxu0
  %v1971 = vadd.f32 0.0, %v1970
  %1972 = vmatprep.mubr.f32.mxu0 0.0
  %1973 = vmatmul.mubr.f32.gmra.mrb[0].mxu0 %v1398
  %v1974 = vpop.f32.mrb[0].mxu0
  %v1975 = vadd.f32 0.0, %v1974
  %v1976 = vpop.f32.mrb[0].mxu0
  %v1977 = vadd.f32 0.0, %v1976
  %1978 = vmatprep.mubr.f32.mxu0 0.0
  %1979 = vmatmul.mubr.f32.gmra.mrb[0].mxu0 %v1401
  %v1980 = vpop.f32.mrb[0].mxu0
  %v1981 = vadd.f32 0.0, %v1980
  %v1982 = vpop.f32.mrb[0].mxu0
  %v1983 = vadd.f32 0.0, %v1982
  %1984 = vmatprep.mubr.f32.mxu0 0.0
  %1985 = vmatmul.mubr.f32.gmra.mrb[0].mxu0 %v1404
  %v1986 = vpop.f32.mrb[0].mxu0
  %v1987 = vadd.f32 0.0, %v1986
  %v1988 = vpop.f32.mrb[0].mxu0
  %v1989 = vadd.f32 0.0, %v1988
  %1990 = vmatprep.mubr.f32.mxu0 0.0
  %1991 = vmatmul.mubr.f32.gmra.mrb[0].mxu0 %v1407
  %v1992 = vpop.f32.mrb[0].mxu0
  %v1993 = vadd.f32 0.0, %v1992
  %v1994 = vpop.f32.mrb[0].mxu0
  %v1995 = vadd.f32 0.0, %v1994
  %1996 = vmatprep.mubr.f32.mxu0 0.0
  %1997 = vmatmul.mubr.f32.gmra.mrb[0].mxu0 %v1410
  %v1998 = vpop.f32.mrb[0].mxu0
  %v1999 = vadd.f32 0.0, %v1998
  %v2000 = vpop.f32.mrb[0].mxu0
  %v2001 = vadd.f32 0.0, %v2000
  %2002 = vmatprep.mubr.f32.mxu0 0.0
  %2003 = vmatmul.mubr.f32.gmra.mrb[0].mxu0 %v1413
  %v2004 = vpop.f32.mrb[0].mxu0
  %v2005 = vadd.f32 0.0, %v2004
  %v2006 = vpop.f32.mrb[0].mxu0
  %v2007 = vadd.f32 0.0, %v2006
  %2008 = vmatprep.mubr.f32.mxu0 0.0
  %2009 = vmatmul.mubr.f32.gmra.mrb[0].mxu0 %v1416
  %v2010 = vpop.f32.mrb[0].mxu0
  %v2011 = vadd.f32 0.0, %v2010
  %v2012 = vpop.f32.mrb[0].mxu0
  %v2013 = vadd.f32 0.0, %v2012
  %2014 = vmatprep.mubr.f32.mxu0 0.0
  %2015 = vmatmul.mubr.f32.gmra.mrb[0].mxu0 %v1419
  %v2016 = vpop.f32.mrb[0].mxu0
  %v2017 = vadd.f32 0.0, %v2016
  %v2018 = vpop.f32.mrb[0].mxu0
  %v2019 = vadd.f32 0.0, %v2018
  %2020 = vmatprep.mubr.f32.mxu0 0.0
  %2021 = vmatmul.mubr.f32.gmra.mrb[0].mxu0 %v1422
  %v2022 = vpop.f32.mrb[0].mxu0
  %v2023 = vadd.f32 0.0, %v2022
  %v2024 = vpop.f32.mrb[0].mxu0
  %v2025 = vadd.f32 0.0, %v2024
  %2026 = vmatprep.mubr.f32.mxu0 0.0
  %2027 = vmatmul.mubr.f32.gmra.mrb[0].mxu0 %v1425
  %v2028 = vpop.f32.mrb[0].mxu0
  %v2029 = vadd.f32 0.0, %v2028
  %v2030 = vpop.f32.mrb[0].mxu0
  %v2031 = vadd.f32 0.0, %v2030
  %2032 = vmatprep.mubr.f32.mxu0 0.0
  %2033 = vmatmul.mubr.f32.gmra.mrb[0].mxu0 %v1428
  %v2034 = vpop.f32.mrb[0].mxu0
  %v2035 = vadd.f32 0.0, %v2034
  %v2036 = vpop.f32.mrb[0].mxu0
  %v2037 = vadd.f32 0.0, %v2036
  %2038 = vmatprep.mubr.f32.mxu0 0.0
  %2039 = vmatmul.mubr.f32.gmra.mrb[0].mxu0 %v1431
  %v2040 = vpop.f32.mrb[0].mxu0
  %v2041 = vadd.f32 0.0, %v2040
  %v2042 = vpop.f32.mrb[0].mxu0
  %v2043 = vadd.f32 0.0, %v2042
  %2044 = vmatprep.mubr.f32.mxu0 0.0
  %2045 = vmatmul.mubr.f32.gmra.mrb[0].mxu0 %v1434
  %v2046 = vpop.f32.mrb[0].mxu0
  %v2047 = vadd.f32 0.0, %v2046
  %v2048 = vpop.f32.mrb[0].mxu0
  %v2049 = vadd.f32 0.0, %v2048
  %2050 = vmatprep.mubr.f32.mxu0 0.0
  %2051 = vmatmul.mubr.f32.gmra.mrb[0].mxu0 %v1437
  %v2052 = vpop.f32.mrb[0].mxu0
  %v2053 = vadd.f32 0.0, %v2052
  %v2054 = vpop.f32.mrb[0].mxu0
  %v2055 = vadd.f32 0.0, %v2054
  %2056 = vmatprep.mubr.f32.mxu0 0.0
  %2057 = vmatmul.mubr.f32.gmra.mrb[0].mxu0 %v1440
  %v2058 = vpop.f32.mrb[0].mxu0
  %v2059 = vadd.f32 0.0, %v2058
  %v2060 = vpop.f32.mrb[0].mxu0
  %v2061 = vadd.f32 0.0, %v2060
  %2062 = vmatprep.mubr.f32.mxu0 0.0
  %2063 = vmatmul.mubr.f32.gmra.mrb[0].mxu0 %v1443
  %v2064 = vpop.f32.mrb[0].mxu0
  %v2065 = vadd.f32 0.0, %v2064
  %v2066 = vpop.f32.mrb[0].mxu0
  %v2067 = vadd.f32 0.0, %v2066
  %2068 = vmatprep.mubr.f32.mxu0 0.0
  %2069 = vmatmul.mubr.f32.gmra.mrb[0].mxu0 %v1446
  %v2070 = vpop.f32.mrb[0].mxu0
  %v2071 = vadd.f32 0.0, %v2070
  %v2072 = vpop.f32.mrb[0].mxu0
  %v2073 = vadd.f32 0.0, %v2072
  %2074 = vmatprep.mubr.f32.mxu0 0.0
  %2075 = vmatmul.mubr.f32.gmra.mrb[0].mxu0 %v1449
  %v2076 = vpop.f32.mrb[0].mxu0
  %v2077 = vadd.f32 0.0, %v2076
  %v2078 = vpop.f32.mrb[0].mxu0
  %v2079 = vadd.f32 0.0, %v2078
  %2080 = vmatprep.mubr.f32.mxu0 0.0
  %2081 = vmatmul.mubr.f32.gmra.mrb[0].mxu0 %v1452
  %v2082 = vpop.f32.mrb[0].mxu0
  %v2083 = vadd.f32 0.0, %v2082
  %v2084 = vpop.f32.mrb[0].mxu0
  %v2085 = vadd.f32 0.0, %v2084
  %2086 = vmatprep.mubr.f32.mxu0 0.0
  %2087 = vmatmul.mubr.f32.gmra.mrb[0].mxu0 %v1455
  %v2088 = vpop.f32.mrb[0].mxu0
  %v2089 = vadd.f32 0.0, %v2088
  %v2090 = vpop.f32.mrb[0].mxu0
  %v2091 = vadd.f32 0.0, %v2090
  %2092 = vmatprep.mubr.f32.mxu0 0.0
  %2093 = vmatmul.mubr.f32.gmra.mrb[0].mxu0 %v1458
  %v2094 = vpop.f32.mrb[0].mxu0
  %v2095 = vadd.f32 0.0, %v2094
  %v2096 = vpop.f32.mrb[0].mxu0
  %v2097 = vadd.f32 0.0, %v2096
  %2098 = vmatprep.mubr.f32.mxu0 0.0
  %2099 = vmatmul.mubr.f32.gmra.mrb[0].mxu0 %v1461
  %v2100 = vpop.f32.mrb[0].mxu0
  %v2101 = vadd.f32 0.0, %v2100
  %v2102 = vpop.f32.mrb[0].mxu0
  %v2103 = vadd.f32 0.0, %v2102
  %2104 = vmatprep.mubr.f32.mxu0 0.0
  %2105 = vmatmul.mubr.f32.gmra.mrb[0].mxu0 %v1464
  %v2106 = vpop.f32.mrb[0].mxu0
  %v2107 = vadd.f32 0.0, %v2106
  %v2108 = vpop.f32.mrb[0].mxu0
  %v2109 = vadd.f32 0.0, %v2108
  %2110 = vmatprep.mubr.f32.mxu0 0.0
  %2111 = vmatmul.mubr.f32.gmra.mrb[0].mxu0 %v1467
  %v2112 = vpop.f32.mrb[0].mxu0
  %v2113 = vadd.f32 0.0, %v2112
  %v2114 = vpop.f32.mrb[0].mxu0
  %v2115 = vadd.f32 0.0, %v2114
  %2116 = vmatprep.mubr.f32.mxu0 0.0
  %2117 = vmatmul.mubr.f32.gmra.mrb[0].mxu0 %v1470
  %v2118 = vpop.f32.mrb[0].mxu0
  %v2119 = vadd.f32 0.0, %v2118
  %v2120 = vpop.f32.mrb[0].mxu0
  %v2121 = vadd.f32 0.0, %v2120
  %2122 = vmatprep.mubr.f32.mxu0 0.0
  %2123 = vmatmul.mubr.f32.gmra.mrb[0].mxu0 %v1473
  %v2124 = vpop.f32.mrb[0].mxu0
  %v2125 = vadd.f32 0.0, %v2124
  %v2126 = vpop.f32.mrb[0].mxu0
  %v2127 = vadd.f32 0.0, %v2126
  %2128 = vmatprep.mubr.f32.mxu0 0.0
  %2129 = vmatmul.mubr.f32.gmra.mrb[0].mxu0 %v1476
  %v2130 = vpop.f32.mrb[0].mxu0
  %v2131 = vadd.f32 0.0, %v2130
  %v2132 = vpop.f32.mrb[0].mxu0
  %v2133 = vadd.f32 0.0, %v2132
  %2134 = vmatprep.mubr.f32.mxu0 0.0
  %2135 = vmatmul.mubr.f32.gmra.mrb[0].mxu0 %v1479
  %v2136 = vpop.f32.mrb[0].mxu0
  %v2137 = vadd.f32 0.0, %v2136
  %v2138 = vpop.f32.mrb[0].mxu0
  %v2139 = vadd.f32 0.0, %v2138
  %2140 = vmatprep.mubr.f32.mxu0 0.0
  %2141 = vmatmul.mubr.f32.gmra.mrb[0].mxu0 %v1482
  %v2142 = vpop.f32.mrb[0].mxu0
  %v2143 = vadd.f32 0.0, %v2142
  %v2144 = vpop.f32.mrb[0].mxu0
  %v2145 = vadd.f32 0.0, %v2144
  %2146 = vmatprep.mubr.f32.mxu0 0.0
  %2147 = vmatmul.mubr.f32.gmra.mrb[0].mxu0 %v1485
  %v2148 = vpop.f32.mrb[0].mxu0
  %v2149 = vadd.f32 0.0, %v2148
  %v2150 = vpop.f32.mrb[0].mxu0
  %v2151 = vadd.f32 0.0, %v2150
  %2152 = vmatprep.mubr.f32.mxu0 0.0
  %2153 = vmatmul.mubr.f32.gmra.mrb[0].mxu0 %v1488
  %v2154 = vpop.f32.mrb[0].mxu0
  %v2155 = vadd.f32 0.0, %v2154
  %v2156 = vpop.f32.mrb[0].mxu0
  %v2157 = vadd.f32 0.0, %v2156
  %2158 = vmatprep.mubr.f32.mxu0 0.0
  %2159 = vmatmul.mubr.f32.gmra.mrb[0].mxu0 %v1491
  %v2160 = vpop.f32.mrb[0].mxu0
  %v2161 = vadd.f32 0.0, %v2160
  %v2162 = vpop.f32.mrb[0].mxu0
  %v2163 = vadd.f32 0.0, %v2162
  %2164 = vmatprep.mubr.f32.mxu0 0.0
  %2165 = vmatmul.mubr.f32.gmra.mrb[0].mxu0 %v1494
  %v2166 = vpop.f32.mrb[0].mxu0
  %v2167 = vadd.f32 0.0, %v2166
  %v2168 = vpop.f32.mrb[0].mxu0
  %v2169 = vadd.f32 0.0, %v2168
  %2170 = vmatprep.mubr.f32.mxu0 0.0
  %2171 = vmatmul.mubr.f32.gmra.mrb[0].mxu0 %v1497
  %v2172 = vpop.f32.mrb[0].mxu0
  %v2173 = vadd.f32 0.0, %v2172
  %v2174 = vpop.f32.mrb[0].mxu0
  %v2175 = vadd.f32 0.0, %v2174
  %2176 = vmatprep.mubr.f32.mxu0 0.0
  %2177 = vmatmul.mubr.f32.gmra.mrb[0].mxu0 %v1500
  %v2178 = vpop.f32.mrb[0].mxu0
  %v2179 = vadd.f32 0.0, %v2178
  %v2180 = vpop.f32.mrb[0].mxu0
  %v2181 = vadd.f32 0.0, %v2180
  %2182 = vmatprep.mubr.f32.mxu0 0.0
  %2183 = vmatmul.mubr.f32.gmra.mrb[0].mxu0 %v1503
  %v2184 = vpop.f32.mrb[0].mxu0
  %v2185 = vadd.f32 0.0, %v2184
  %v2186 = vpop.f32.mrb[0].mxu0
  %v2187 = vadd.f32 0.0, %v2186
  %2188 = vmatprep.mubr.f32.mxu0 0.0
  %2189 = vmatmul.mubr.f32.gmra.mrb[0].mxu0 %v1506
  %v2190 = vpop.f32.mrb[0].mxu0
  %v2191 = vadd.f32 0.0, %v2190
  %v2192 = vpop.f32.mrb[0].mxu0
  %v2193 = vadd.f32 0.0, %v2192
  %2194 = vmatprep.mubr.f32.mxu0 0.0
  %2195 = vmatmul.mubr.f32.gmra.mrb[0].mxu0 %v1509
  %v2196 = vpop.f32.mrb[0].mxu0
  %v2197 = vadd.f32 0.0, %v2196
  %v2198 = vpop.f32.mrb[0].mxu0
  %v2199 = vadd.f32 0.0, %v2198
  %2200 = vmatprep.mubr.f32.mxu0 0.0
  %2201 = vmatmul.mubr.f32.gmra.mrb[0].mxu0 %v1512
  %v2202 = vpop.f32.mrb[0].mxu0
  %v2203 = vadd.f32 0.0, %v2202
  %v2204 = vpop.f32.mrb[0].mxu0
  %v2205 = vadd.f32 0.0, %v2204
  %2206 = vmatprep.mubr.f32.mxu0 0.0
  %2207 = vmatmul.mubr.f32.gmra.mrb[0].mxu0 %v1515
  %v2208 = vpop.f32.mrb[0].mxu0
  %v2209 = vadd.f32 0.0, %v2208
  %v2210 = vpop.f32.mrb[0].mxu0
  %v2211 = vadd.f32 0.0, %v2210
  %2212 = vmatprep.mubr.f32.mxu0 0.0
  %2213 = vmatmul.mubr.f32.gmra.mrb[0].mxu0 %v1518
  %v2214 = vpop.f32.mrb[0].mxu0
  %v2215 = vadd.f32 0.0, %v2214
  %v2216 = vpop.f32.mrb[0].mxu0
  %v2217 = vadd.f32 0.0, %v2216
  %2218 = vmatprep.mubr.f32.mxu0 0.0
  %2219 = vmatmul.mubr.f32.gmra.mrb[0].mxu0 %v1521
  %v2220 = vpop.f32.mrb[0].mxu0
  %v2221 = vadd.f32 0.0, %v2220
  %v2222 = vpop.f32.mrb[0].mxu0
  %v2223 = vadd.f32 0.0, %v2222
  %2224 = vmatprep.mubr.f32.mxu0 0.0
  %2225 = vmatmul.mubr.f32.gmra.mrb[0].mxu0 %v1524
  %v2226 = vpop.f32.mrb[0].mxu0
  %v2227 = vadd.f32 0.0, %v2226
  %v2228 = vpop.f32.mrb[0].mxu0
  %v2229 = vadd.f32 0.0, %v2228
  %2230 = vmatprep.mubr.f32.mxu0 0.0
  %2231 = vmatmul.mubr.f32.gmra.mrb[0].mxu0 %v1527
  %v2232 = vpop.f32.mrb[0].mxu0
  %v2233 = vadd.f32 0.0, %v2232
  %v2234 = vpop.f32.mrb[0].mxu0
  %v2235 = vadd.f32 0.0, %v2234
  %2236 = vmatprep.mubr.f32.mxu0 0.0
  %2237 = vmatmul.mubr.f32.gmra.mrb[0].mxu0 %v1530
  %v2238 = vpop.f32.mrb[0].mxu0
  %v2239 = vadd.f32 0.0, %v2238
  %v2240 = vpop.f32.mrb[0].mxu0
  %v2241 = vadd.f32 0.0, %v2240
  %2242 = vmatprep.mubr.f32.mxu0 0.0
  %2243 = vmatmul.mubr.f32.gmra.mrb[0].mxu0 %v1533
  %v2244 = vpop.f32.mrb[0].mxu0
  %v2245 = vadd.f32 0.0, %v2244
  %v2246 = vpop.f32.mrb[0].mxu0
  %v2247 = vadd.f32 0.0, %v2246
  %2248 = vmatprep.mubr.f32.mxu0 0.0
  %2249 = vmatmul.mubr.f32.gmra.mrb[0].mxu0 %v1536
  %v2250 = vpop.f32.mrb[0].mxu0
  %v2251 = vadd.f32 0.0, %v2250
  %v2252 = vpop.f32.mrb[0].mxu0
  %v2253 = vadd.f32 0.0, %v2252
  %2254 = vmatprep.mubr.f32.mxu0 0.0
  %2255 = vmatmul.mubr.f32.gmra.mrb[0].mxu0 %v1539
  %v2256 = vpop.f32.mrb[0].mxu0
  %v2257 = vadd.f32 0.0, %v2256
  %v2258 = vpop.f32.mrb[0].mxu0
  %v2259 = vadd.f32 0.0, %v2258
  %2260 = vmatprep.mubr.f32.mxu0 0.0
  %2261 = vmatmul.mubr.f32.gmra.mrb[0].mxu0 %v1542
  %v2262 = vpop.f32.mrb[0].mxu0
  %v2263 = vadd.f32 0.0, %v2262
  %v2264 = vpop.f32.mrb[0].mxu0
  %v2265 = vadd.f32 0.0, %v2264
  %2266 = vmatprep.mubr.f32.mxu0 0.0
  %2267 = vmatmul.mubr.f32.gmra.mrb[0].mxu0 %v1545
  %v2268 = vpop.f32.mrb[0].mxu0
  %v2269 = vadd.f32 0.0, %v2268
  %v2270 = vpop.f32.mrb[0].mxu0
  %v2271 = vadd.f32 0.0, %v2270
  %2272 = vmatprep.mubr.f32.mxu0 0.0
  %2273 = vmatmul.mubr.f32.gmra.mrb[0].mxu0 %v1548
  %v2274 = vpop.f32.mrb[0].mxu0
  %v2275 = vadd.f32 0.0, %v2274
  %v2276 = vpop.f32.mrb[0].mxu0
  %v2277 = vadd.f32 0.0, %v2276
  %2278 = vmatprep.mubr.f32.mxu0 0.0
  %2279 = vmatmul.mubr.f32.gmra.mrb[0].mxu0 %v1551
  %v2280 = vpop.f32.mrb[0].mxu0
  %v2281 = vadd.f32 0.0, %v2280
  %v2282 = vpop.f32.mrb[0].mxu0
  %v2283 = vadd.f32 0.0, %v2282
  %2284 = vmatprep.mubr.f32.mxu0 0.0
  %2285 = vmatmul.mubr.f32.gmra.mrb[0].mxu0 %v1554
  %v2286 = vpop.f32.mrb[0].mxu0
  %v2287 = vadd.f32 0.0, %v2286
  %v2288 = vpop.f32.mrb[0].mxu0
  %v2289 = vadd.f32 0.0, %v2288
  %2290 = vmatprep.mubr.f32.mxu0 0.0
  %2291 = vmatmul.mubr.f32.gmra.mrb[0].mxu0 %v1557
  %v2292 = vpop.f32.mrb[0].mxu0
  %v2293 = vadd.f32 0.0, %v2292
  %v2294 = vpop.f32.mrb[0].mxu0
  %v2295 = vadd.f32 0.0, %v2294
  %2296 = vmatprep.mubr.f32.mxu0 0.0
  %2297 = vmatmul.mubr.f32.gmra.mrb[0].mxu0 %v1560
  %v2298 = vpop.f32.mrb[0].mxu0
  %v2299 = vadd.f32 0.0, %v2298
  %v2300 = vpop.f32.mrb[0].mxu0
  %v2301 = vadd.f32 0.0, %v2300
  %2302 = vmatprep.mubr.f32.mxu0 0.0
  %2303 = vmatmul.mubr.f32.gmra.mrb[0].mxu0 %v1563
  %v2304 = vpop.f32.mrb[0].mxu0
  %v2305 = vadd.f32 0.0, %v2304
  %v2306 = vpop.f32.mrb[0].mxu0
  %v2307 = vadd.f32 0.0, %v2306
  %2308 = vmatprep.mubr.f32.mxu0 0.0
  %2309 = vmatmul.mubr.f32.gmra.mrb[0].mxu0 %v1566
  %v2310 = vpop.f32.mrb[0].mxu0
  %v2311 = vadd.f32 0.0, %v2310
  %v2312 = vpop.f32.mrb[0].mxu0
  %v2313 = vadd.f32 0.0, %v2312
  %2314 = vmatprep.mubr.f32.mxu0 0.0
  %2315 = vmatmul.mubr.f32.gmra.mrb[0].mxu0 %v1569
  %v2316 = vpop.f32.mrb[0].mxu0
  %v2317 = vadd.f32 0.0, %v2316
  %v2318 = vpop.f32.mrb[0].mxu0
  %v2319 = vadd.f32 0.0, %v2318
  %2320 = vmatprep.mubr.f32.mxu0 0.0
  %2321 = vmatmul.mubr.f32.gmra.mrb[0].mxu0 %v1572
  %v2322 = vpop.f32.mrb[0].mxu0
  %v2323 = vadd.f32 0.0, %v2322
  %v2324 = vpop.f32.mrb[0].mxu0
  %v2325 = vadd.f32 0.0, %v2324
  %2326 = vmatprep.mubr.f32.mxu0 0.0
  %2327 = vmatmul.mubr.f32.gmra.mrb[0].mxu0 %v1575
  %v2328 = vpop.f32.mrb[0].mxu0
  %v2329 = vadd.f32 0.0, %v2328
  %v2330 = vpop.f32.mrb[0].mxu0
  %v2331 = vadd.f32 0.0, %v2330
  %2332 = vmatprep.mubr.f32.mxu0 0.0
  %2333 = vmatmul.mubr.f32.gmra.mrb[0].mxu0 %v1578
  %v2334 = vpop.f32.mrb[0].mxu0
  %v2335 = vadd.f32 0.0, %v2334
  %v2336 = vpop.f32.mrb[0].mxu0
  %v2337 = vadd.f32 0.0, %v2336
  %2338 = vmatprep.mubr.f32.mxu0 0.0
  %2339 = vmatmul.mubr.f32.gmra.mrb[0].mxu0 %v1581
  %v2340 = vpop.f32.mrb[0].mxu0
  %v2341 = vadd.f32 0.0, %v2340
  %v2342 = vpop.f32.mrb[0].mxu0
  %v2343 = vadd.f32 0.0, %v2342
  %2344 = vmatprep.mubr.f32.mxu0 0.0
  %2345 = vmatmul.mubr.f32.gmra.mrb[0].mxu0 %v1584
  %v2346 = vpop.f32.mrb[0].mxu0
  %v2347 = vadd.f32 0.0, %v2346
  %v2348 = vpop.f32.mrb[0].mxu0
  %v2349 = vadd.f32 0.0, %v2348
  %2350 = vmatprep.mubr.f32.mxu0 0.0
  %2351 = vmatmul.mubr.f32.gmra.mrb[0].mxu0 %v1587
  %v2352 = vpop.f32.mrb[0].mxu0
  %v2353 = vadd.f32 0.0, %v2352
  %v2354 = vpop.f32.mrb[0].mxu0
  %v2355 = vadd.f32 0.0, %v2354
  %2356 = vmatprep.mubr.f32.mxu0 0.0
  %2357 = vmatmul.mubr.f32.gmra.mrb[0].mxu0 %v1590
  %v2358 = vpop.f32.mrb[0].mxu0
  %v2359 = vadd.f32 0.0, %v2358
  %v2360 = vpop.f32.mrb[0].mxu0
  %v2361 = vadd.f32 0.0, %v2360
  %2362 = vmatprep.mubr.f32.mxu0 0.0
  %2363 = vmatmul.mubr.f32.gmra.mrb[0].mxu0 %v1593
  %v2364 = vpop.f32.mrb[0].mxu0
  %v2365 = vadd.f32 0.0, %v2364
  %v2366 = vpop.f32.mrb[0].mxu0
  %v2367 = vadd.f32 0.0, %v2366
  %2368 = vmatprep.mubr.f32.mxu0 0.0
  %2369 = vmatmul.mubr.f32.gmra.mrb[0].mxu0 %v1596
  %v2370 = vpop.f32.mrb[0].mxu0
  %v2371 = vadd.f32 0.0, %v2370
  %v2372 = vpop.f32.mrb[0].mxu0
  %v2373 = vadd.f32 0.0, %v2372
  %2374 = vmatprep.mubr.f32.mxu0 0.0
  %2375 = vmatmul.mubr.f32.gmra.mrb[0].mxu0 %v1599
  %v2376 = vpop.f32.mrb[0].mxu0
  %v2377 = vadd.f32 0.0, %v2376
  %v2378 = vpop.f32.mrb[0].mxu0
  %v2379 = vadd.f32 0.0, %v2378
  %2380 = vmatprep.mubr.f32.mxu0 0.0
  %2381 = vmatmul.mubr.f32.gmra.mrb[0].mxu0 %v1602
  %v2382 = vpop.f32.mrb[0].mxu0
  %v2383 = vadd.f32 0.0, %v2382
  %v2384 = vpop.f32.mrb[0].mxu0
  %v2385 = vadd.f32 0.0, %v2384
  %2386 = vmatprep.mubr.f32.mxu0 0.0
  %2387 = vmatmul.mubr.f32.gmra.mrb[0].mxu0 %v1605
  %v2388 = vpop.f32.mrb[0].mxu0
  %v2389 = vadd.f32 0.0, %v2388
  %v2390 = vpop.f32.mrb[0].mxu0
  %v2391 = vadd.f32 0.0, %v2390
  %2392 = vmatprep.mubr.f32.mxu0 0.0
  %2393 = vmatmul.mubr.f32.gmra.mrb[0].mxu0 %v1608
  %v2394 = vpop.f32.mrb[0].mxu0
  %v2395 = vadd.f32 0.0, %v2394
  %v2396 = vpop.f32.mrb[0].mxu0
  %v2397 = vadd.f32 0.0, %v2396
  %2398 = vmatprep.mubr.f32.mxu0 0.0
  %2399 = vmatmul.mubr.f32.gmra.mrb[0].mxu0 %v1611
  %v2400 = vpop.f32.mrb[0].mxu0
  %v2401 = vadd.f32 0.0, %v2400
  %v2402 = vpop.f32.mrb[0].mxu0
  %v2403 = vadd.f32 0.0, %v2402
  %2404 = vdwg.mxu0
  %s2405 = scalar_lea.vmem %s1, 144
  %v2406 = vld [vmem:[%s2405] sm:$0xff]
  %v2407 = vld [vmem:[%s2405 + $0x8] sm:$0xff]
  %v2408 = vld [vmem:[%s2405 + $0x10] sm:$0xff]
  %v2409 = vld [vmem:[%s2405 + $0x18] sm:$0xff]
  %v2410 = vld [vmem:[%s2405 + $0x20] sm:$0xff]
  %v2411 = vld [vmem:[%s2405 + $0x28] sm:$0xff]
  %v2412 = vld [vmem:[%s2405 + $0x30] sm:$0xff]
  %v2413 = vld [vmem:[%s2405 + $0x38] sm:$0xff]
  %v2414 = vld [vmem:[%s2405 + $0x40] sm:$0xff]
  %v2415 = vld [vmem:[%s2405 + $0x48] sm:$0xff]
  %v2416 = vld [vmem:[%s2405 + $0x50] sm:$0xff]
  %v2417 = vld [vmem:[%s2405 + $0x58] sm:$0xff]
  %v2418 = vld [vmem:[%s2405 + $0x60] sm:$0xff]
  %v2419 = vld [vmem:[%s2405 + $0x68] sm:$0xff]
  %v2420 = vld [vmem:[%s2405 + $0x70] sm:$0xff]
  %v2421 = vld [vmem:[%s2405 + $0x78] sm:$0xff]
  %v2422 = vld [vmem:[%s2405 + $0x80] sm:$0x3]
  %v2423 = vld [vmem:[%s2405 + $0x88] sm:$0x3]
  %v2425 = vsel %vm1613, %v2422, 0
  %v2428 = vsel %vm1613, %v2423, 0
  %2430 = vmatprep.subr.mxu0 %v2407
  %2431 = vmatpush1.msra.mxu0 %v2406
  %2432 = vmatprep.subr.mxu0 %v2409
  %2433 = vmatpush1.msra.mxu0 %v2408
  %2434 = vmatprep.subr.mxu0 %v2411
  %2435 = vmatpush1.msra.mxu0 %v2410
  %2436 = vmatprep.subr.mxu0 %v2413
  %2437 = vmatpush1.msra.mxu0 %v2412
  %2438 = vmatprep.subr.mxu0 %v2415
  %2439 = vmatpush1.msra.mxu0 %v2414
  %2440 = vmatprep.subr.mxu0 %v2417
  %2441 = vmatpush1.msra.mxu0 %v2416
  %2442 = vmatprep.subr.mxu0 %v2419
  %2443 = vmatpush1.msra.mxu0 %v2418
  %2444 = vmatprep.subr.mxu0 %v2421
  %2445 = vmatpush1.msra.mxu0 %v2420
  %2446 = vmatprep.subr.mxu0 %v2428
  %2447 = vmatpush1.msra.mxu0 %v2425
  %2448 = vmatprep.subr.mxu0 0.0
  %2449 = vmatpush1.msra.mxu0 0.0
  %2450 = vmatprep.subr.mxu0 0.0
  %2451 = vmatpush1.msra.mxu0 0.0
  %2452 = vmatprep.subr.mxu0 0.0
  %2453 = vmatpush1.msra.mxu0 0.0
  %2454 = vmatprep.subr.mxu0 0.0
  %2455 = vmatpush1.msra.mxu0 0.0
  %2456 = vmatprep.subr.mxu0 0.0
  %2457 = vmatpush1.msra.mxu0 0.0
  %2458 = vmatprep.subr.mxu0 0.0
  %2459 = vmatpush1.msra.mxu0 0.0
  %2460 = vmatprep.subr.mxu0 0.0
  %2461 = vmatpush1.msra.mxu0 0.0
  %2462 = vmatprep.subr.mxu0 0.0
  %2463 = vmatpush1.msra.mxu0 0.0
  %2464 = vmatprep.subr.mxu0 0.0
  %2465 = vmatpush1.msra.mxu0 0.0
  %2466 = vmatprep.subr.mxu0 0.0
  %2467 = vmatpush1.msra.mxu0 0.0
  %2468 = vmatprep.subr.mxu0 0.0
  %2469 = vmatpush1.msra.mxu0 0.0
  %2470 = vmatprep.subr.mxu0 0.0
  %2471 = vmatpush1.msra.mxu0 0.0
  %2472 = vmatprep.subr.mxu0 0.0
  %2473 = vmatpush1.msra.mxu0 0.0
  %2474 = vmatprep.subr.mxu0 0.0
  %2475 = vmatpush1.msra.mxu0 0.0
  %2476 = vmatprep.subr.mxu0 0.0
  %2477 = vmatpush1.msra.mxu0 0.0
  %2478 = vmatprep.subr.mxu0 0.0
  %2479 = vmatpush1.msra.mxu0 0.0
  %2480 = vmatprep.subr.mxu0 0.0
  %2481 = vmatpush1.msra.mxu0 0.0
  %2482 = vmatprep.subr.mxu0 0.0
  %2483 = vmatpush1.msra.mxu0 0.0
  %2484 = vmatprep.subr.mxu0 0.0
  %2485 = vmatpush1.msra.mxu0 0.0
  %2486 = vmatprep.subr.mxu0 0.0
  %2487 = vmatpush1.msra.mxu0 0.0
  %2488 = vmatprep.subr.mxu0 0.0
  %2489 = vmatpush1.msra.mxu0 0.0
  %2490 = vmatprep.subr.mxu0 0.0
  %2491 = vmatpush1.msra.mxu0 0.0
  %2492 = vmatprep.subr.mxu0 0.0
  %2493 = vmatpush1.msra.mxu0 0.0
  %2494 = vmatprep.mubr.f32.mxu0 0.0
  %2495 = vmatmul.mubr.f32.gmra.mrb[0].mxu0 %v1254
  %v2496 = vpop.f32.mrb[0].mxu0
  %v2497 = vadd.f32 0.0, %v2496
  %v2498 = vpop.f32.mrb[0].mxu0
  %v2499 = vadd.f32 0.0, %v2498
  %2500 = vmatprep.mubr.f32.mxu0 0.0
  %2501 = vmatmul.mubr.f32.gmra.mrb[0].mxu0 %v1257
  %v2502 = vpop.f32.mrb[0].mxu0
  %v2503 = vadd.f32 0.0, %v2502
  %v2504 = vpop.f32.mrb[0].mxu0
  %v2505 = vadd.f32 0.0, %v2504
  %2506 = vmatprep.mubr.f32.mxu0 0.0
  %2507 = vmatmul.mubr.f32.gmra.mrb[0].mxu0 %v1260
  %v2508 = vpop.f32.mrb[0].mxu0
  %v2509 = vadd.f32 0.0, %v2508
  %v2510 = vpop.f32.mrb[0].mxu0
  %v2511 = vadd.f32 0.0, %v2510
  %2512 = vmatprep.mubr.f32.mxu0 0.0
  %2513 = vmatmul.mubr.f32.gmra.mrb[0].mxu0 %v1263
  %v2514 = vpop.f32.mrb[0].mxu0
  %v2515 = vadd.f32 0.0, %v2514
  %v2516 = vpop.f32.mrb[0].mxu0
  %v2517 = vadd.f32 0.0, %v2516
  %2518 = vmatprep.mubr.f32.mxu0 0.0
  %2519 = vmatmul.mubr.f32.gmra.mrb[0].mxu0 %v1266
  %v2520 = vpop.f32.mrb[0].mxu0
  %v2521 = vadd.f32 0.0, %v2520
  %v2522 = vpop.f32.mrb[0].mxu0
  %v2523 = vadd.f32 0.0, %v2522
  %2524 = vmatprep.mubr.f32.mxu0 0.0
  %2525 = vmatmul.mubr.f32.gmra.mrb[0].mxu0 %v1269
  %v2526 = vpop.f32.mrb[0].mxu0
  %v2527 = vadd.f32 0.0, %v2526
  %v2528 = vpop.f32.mrb[0].mxu0
  %v2529 = vadd.f32 0.0, %v2528
  %2530 = vmatprep.mubr.f32.mxu0 0.0
  %2531 = vmatmul.mubr.f32.gmra.mrb[0].mxu0 %v1272
  %v2532 = vpop.f32.mrb[0].mxu0
  %v2533 = vadd.f32 0.0, %v2532
  %v2534 = vpop.f32.mrb[0].mxu0
  %v2535 = vadd.f32 0.0, %v2534
  %2536 = vmatprep.mubr.f32.mxu0 0.0
  %2537 = vmatmul.mubr.f32.gmra.mrb[0].mxu0 %v1275
  %v2538 = vpop.f32.mrb[0].mxu0
  %v2539 = vadd.f32 0.0, %v2538
  %v2540 = vpop.f32.mrb[0].mxu0
  %v2541 = vadd.f32 0.0, %v2540
  %2542 = vmatprep.mubr.f32.mxu0 0.0
  %2543 = vmatmul.mubr.f32.gmra.mrb[0].mxu0 %v1278
  %v2544 = vpop.f32.mrb[0].mxu0
  %v2545 = vadd.f32 0.0, %v2544
  %v2546 = vpop.f32.mrb[0].mxu0
  %v2547 = vadd.f32 0.0, %v2546
  %2548 = vmatprep.mubr.f32.mxu0 0.0
  %2549 = vmatmul.mubr.f32.gmra.mrb[0].mxu0 %v1281
  %v2550 = vpop.f32.mrb[0].mxu0
  %v2551 = vadd.f32 0.0, %v2550
  %v2552 = vpop.f32.mrb[0].mxu0
  %v2553 = vadd.f32 0.0, %v2552
  %2554 = vmatprep.mubr.f32.mxu0 0.0
  %2555 = vmatmul.mubr.f32.gmra.mrb[0].mxu0 %v1284
  %v2556 = vpop.f32.mrb[0].mxu0
  %v2557 = vadd.f32 0.0, %v2556
  %v2558 = vpop.f32.mrb[0].mxu0
  %v2559 = vadd.f32 0.0, %v2558
  %2560 = vmatprep.mubr.f32.mxu0 0.0
  %2561 = vmatmul.mubr.f32.gmra.mrb[0].mxu0 %v1287
  %v2562 = vpop.f32.mrb[0].mxu0
  %v2563 = vadd.f32 0.0, %v2562
  %v2564 = vpop.f32.mrb[0].mxu0
  %v2565 = vadd.f32 0.0, %v2564
  %2566 = vmatprep.mubr.f32.mxu0 0.0
  %2567 = vmatmul.mubr.f32.gmra.mrb[0].mxu0 %v1290
  %v2568 = vpop.f32.mrb[0].mxu0
  %v2569 = vadd.f32 0.0, %v2568
  %v2570 = vpop.f32.mrb[0].mxu0
  %v2571 = vadd.f32 0.0, %v2570
  %2572 = vmatprep.mubr.f32.mxu0 0.0
  %2573 = vmatmul.mubr.f32.gmra.mrb[0].mxu0 %v1293
  %v2574 = vpop.f32.mrb[0].mxu0
  %v2575 = vadd.f32 0.0, %v2574
  %v2576 = vpop.f32.mrb[0].mxu0
  %v2577 = vadd.f32 0.0, %v2576
  %2578 = vmatprep.mubr.f32.mxu0 0.0
  %2579 = vmatmul.mubr.f32.gmra.mrb[0].mxu0 %v1296
  %v2580 = vpop.f32.mrb[0].mxu0
  %v2581 = vadd.f32 0.0, %v2580
  %v2582 = vpop.f32.mrb[0].mxu0
  %v2583 = vadd.f32 0.0, %v2582
  %2584 = vmatprep.mubr.f32.mxu0 0.0
  %2585 = vmatmul.mubr.f32.gmra.mrb[0].mxu0 %v1299
  %v2586 = vpop.f32.mrb[0].mxu0
  %v2587 = vadd.f32 0.0, %v2586
  %v2588 = vpop.f32.mrb[0].mxu0
  %v2589 = vadd.f32 0.0, %v2588
  %2590 = vmatprep.mubr.f32.mxu0 0.0
  %2591 = vmatmul.mubr.f32.gmra.mrb[0].mxu0 %v1302
  %v2592 = vpop.f32.mrb[0].mxu0
  %v2593 = vadd.f32 0.0, %v2592
  %v2594 = vpop.f32.mrb[0].mxu0
  %v2595 = vadd.f32 0.0, %v2594
  %2596 = vmatprep.mubr.f32.mxu0 0.0
  %2597 = vmatmul.mubr.f32.gmra.mrb[0].mxu0 %v1305
  %v2598 = vpop.f32.mrb[0].mxu0
  %v2599 = vadd.f32 0.0, %v2598
  %v2600 = vpop.f32.mrb[0].mxu0
  %v2601 = vadd.f32 0.0, %v2600
  %2602 = vmatprep.mubr.f32.mxu0 0.0
  %2603 = vmatmul.mubr.f32.gmra.mrb[0].mxu0 %v1308
  %v2604 = vpop.f32.mrb[0].mxu0
  %v2605 = vadd.f32 0.0, %v2604
  %v2606 = vpop.f32.mrb[0].mxu0
  %v2607 = vadd.f32 0.0, %v2606
  %2608 = vmatprep.mubr.f32.mxu0 0.0
  %2609 = vmatmul.mubr.f32.gmra.mrb[0].mxu0 %v1311
  %v2610 = vpop.f32.mrb[0].mxu0
  %v2611 = vadd.f32 0.0, %v2610
  %v2612 = vpop.f32.mrb[0].mxu0
  %v2613 = vadd.f32 0.0, %v2612
  %2614 = vmatprep.mubr.f32.mxu0 0.0
  %2615 = vmatmul.mubr.f32.gmra.mrb[0].mxu0 %v1314
  %v2616 = vpop.f32.mrb[0].mxu0
  %v2617 = vadd.f32 0.0, %v2616
  %v2618 = vpop.f32.mrb[0].mxu0
  %v2619 = vadd.f32 0.0, %v2618
  %2620 = vmatprep.mubr.f32.mxu0 0.0
  %2621 = vmatmul.mubr.f32.gmra.mrb[0].mxu0 %v1317
  %v2622 = vpop.f32.mrb[0].mxu0
  %v2623 = vadd.f32 0.0, %v2622
  %v2624 = vpop.f32.mrb[0].mxu0
  %v2625 = vadd.f32 0.0, %v2624
  %2626 = vmatprep.mubr.f32.mxu0 0.0
  %2627 = vmatmul.mubr.f32.gmra.mrb[0].mxu0 %v1320
  %v2628 = vpop.f32.mrb[0].mxu0
  %v2629 = vadd.f32 0.0, %v2628
  %v2630 = vpop.f32.mrb[0].mxu0
  %v2631 = vadd.f32 0.0, %v2630
  %2632 = vmatprep.mubr.f32.mxu0 0.0
  %2633 = vmatmul.mubr.f32.gmra.mrb[0].mxu0 %v1323
  %v2634 = vpop.f32.mrb[0].mxu0
  %v2635 = vadd.f32 0.0, %v2634
  %v2636 = vpop.f32.mrb[0].mxu0
  %v2637 = vadd.f32 0.0, %v2636
  %2638 = vmatprep.mubr.f32.mxu0 0.0
  %2639 = vmatmul.mubr.f32.gmra.mrb[0].mxu0 %v1326
  %v2640 = vpop.f32.mrb[0].mxu0
  %v2641 = vadd.f32 0.0, %v2640
  %v2642 = vpop.f32.mrb[0].mxu0
  %v2643 = vadd.f32 0.0, %v2642
  %2644 = vmatprep.mubr.f32.mxu0 0.0
  %2645 = vmatmul.mubr.f32.gmra.mrb[0].mxu0 %v1329
  %v2646 = vpop.f32.mrb[0].mxu0
  %v2647 = vadd.f32 0.0, %v2646
  %v2648 = vpop.f32.mrb[0].mxu0
  %v2649 = vadd.f32 0.0, %v2648
  %2650 = vmatprep.mubr.f32.mxu0 0.0
  %2651 = vmatmul.mubr.f32.gmra.mrb[0].mxu0 %v1332
  %v2652 = vpop.f32.mrb[0].mxu0
  %v2653 = vadd.f32 0.0, %v2652
  %v2654 = vpop.f32.mrb[0].mxu0
  %v2655 = vadd.f32 0.0, %v2654
  %2656 = vmatprep.mubr.f32.mxu0 0.0
  %2657 = vmatmul.mubr.f32.gmra.mrb[0].mxu0 %v1335
  %v2658 = vpop.f32.mrb[0].mxu0
  %v2659 = vadd.f32 0.0, %v2658
  %v2660 = vpop.f32.mrb[0].mxu0
  %v2661 = vadd.f32 0.0, %v2660
  %2662 = vmatprep.mubr.f32.mxu0 0.0
  %2663 = vmatmul.mubr.f32.gmra.mrb[0].mxu0 %v1338
  %v2664 = vpop.f32.mrb[0].mxu0
  %v2665 = vadd.f32 0.0, %v2664
  %v2666 = vpop.f32.mrb[0].mxu0
  %v2667 = vadd.f32 0.0, %v2666
  %2668 = vmatprep.mubr.f32.mxu0 0.0
  %2669 = vmatmul.mubr.f32.gmra.mrb[0].mxu0 %v1341
  %v2670 = vpop.f32.mrb[0].mxu0
  %v2671 = vadd.f32 0.0, %v2670
  %v2672 = vpop.f32.mrb[0].mxu0
  %v2673 = vadd.f32 0.0, %v2672
  %2674 = vmatprep.mubr.f32.mxu0 0.0
  %2675 = vmatmul.mubr.f32.gmra.mrb[0].mxu0 %v1344
  %v2676 = vpop.f32.mrb[0].mxu0
  %v2677 = vadd.f32 0.0, %v2676
  %v2678 = vpop.f32.mrb[0].mxu0
  %v2679 = vadd.f32 0.0, %v2678
  %2680 = vmatprep.mubr.f32.mxu0 0.0
  %2681 = vmatmul.mubr.f32.gmra.mrb[0].mxu0 %v1347
  %v2682 = vpop.f32.mrb[0].mxu0
  %v2683 = vadd.f32 0.0, %v2682
  %v2684 = vpop.f32.mrb[0].mxu0
  %v2685 = vadd.f32 0.0, %v2684
  %2686 = vmatprep.mubr.f32.mxu0 0.0
  %2687 = vmatmul.mubr.f32.gmra.mrb[0].mxu0 %v1350
  %v2688 = vpop.f32.mrb[0].mxu0
  %v2689 = vadd.f32 0.0, %v2688
  %v2690 = vpop.f32.mrb[0].mxu0
  %v2691 = vadd.f32 0.0, %v2690
  %2692 = vmatprep.mubr.f32.mxu0 0.0
  %2693 = vmatmul.mubr.f32.gmra.mrb[0].mxu0 %v1353
  %v2694 = vpop.f32.mrb[0].mxu0
  %v2695 = vadd.f32 0.0, %v2694
  %v2696 = vpop.f32.mrb[0].mxu0
  %v2697 = vadd.f32 0.0, %v2696
  %2698 = vmatprep.mubr.f32.mxu0 0.0
  %2699 = vmatmul.mubr.f32.gmra.mrb[0].mxu0 %v1356
  %v2700 = vpop.f32.mrb[0].mxu0
  %v2701 = vadd.f32 0.0, %v2700
  %v2702 = vpop.f32.mrb[0].mxu0
  %v2703 = vadd.f32 0.0, %v2702
  %2704 = vmatprep.mubr.f32.mxu0 0.0
  %2705 = vmatmul.mubr.f32.gmra.mrb[0].mxu0 %v1359
  %v2706 = vpop.f32.mrb[0].mxu0
  %v2707 = vadd.f32 0.0, %v2706
  %v2708 = vpop.f32.mrb[0].mxu0
  %v2709 = vadd.f32 0.0, %v2708
  %2710 = vmatprep.mubr.f32.mxu0 0.0
  %2711 = vmatmul.mubr.f32.gmra.mrb[0].mxu0 %v1362
  %v2712 = vpop.f32.mrb[0].mxu0
  %v2713 = vadd.f32 0.0, %v2712
  %v2714 = vpop.f32.mrb[0].mxu0
  %v2715 = vadd.f32 0.0, %v2714
  %2716 = vmatprep.mubr.f32.mxu0 0.0
  %2717 = vmatmul.mubr.f32.gmra.mrb[0].mxu0 %v1365
  %v2718 = vpop.f32.mrb[0].mxu0
  %v2719 = vadd.f32 0.0, %v2718
  %v2720 = vpop.f32.mrb[0].mxu0
  %v2721 = vadd.f32 0.0, %v2720
  %2722 = vmatprep.mubr.f32.mxu0 0.0
  %2723 = vmatmul.mubr.f32.gmra.mrb[0].mxu0 %v1368
  %v2724 = vpop.f32.mrb[0].mxu0
  %v2725 = vadd.f32 0.0, %v2724
  %v2726 = vpop.f32.mrb[0].mxu0
  %v2727 = vadd.f32 0.0, %v2726
  %2728 = vmatprep.mubr.f32.mxu0 0.0
  %2729 = vmatmul.mubr.f32.gmra.mrb[0].mxu0 %v1371
  %v2730 = vpop.f32.mrb[0].mxu0
  %v2731 = vadd.f32 0.0, %v2730
  %v2732 = vpop.f32.mrb[0].mxu0
  %v2733 = vadd.f32 0.0, %v2732
  %2734 = vmatprep.mubr.f32.mxu0 0.0
  %2735 = vmatmul.mubr.f32.gmra.mrb[0].mxu0 %v1374
  %v2736 = vpop.f32.mrb[0].mxu0
  %v2737 = vadd.f32 0.0, %v2736
  %v2738 = vpop.f32.mrb[0].mxu0
  %v2739 = vadd.f32 0.0, %v2738
  %2740 = vmatprep.mubr.f32.mxu0 0.0
  %2741 = vmatmul.mubr.f32.gmra.mrb[0].mxu0 %v1377
  %v2742 = vpop.f32.mrb[0].mxu0
  %v2743 = vadd.f32 0.0, %v2742
  %v2744 = vpop.f32.mrb[0].mxu0
  %v2745 = vadd.f32 0.0, %v2744
  %2746 = vmatprep.mubr.f32.mxu0 0.0
  %2747 = vmatmul.mubr.f32.gmra.mrb[0].mxu0 %v1380
  %v2748 = vpop.f32.mrb[0].mxu0
  %v2749 = vadd.f32 0.0, %v2748
  %v2750 = vpop.f32.mrb[0].mxu0
  %v2751 = vadd.f32 0.0, %v2750
  %2752 = vmatprep.mubr.f32.mxu0 0.0
  %2753 = vmatmul.mubr.f32.gmra.mrb[0].mxu0 %v1383
  %v2754 = vpop.f32.mrb[0].mxu0
  %v2755 = vadd.f32 0.0, %v2754
  %v2756 = vpop.f32.mrb[0].mxu0
  %v2757 = vadd.f32 0.0, %v2756
  %2758 = vmatprep.mubr.f32.mxu0 0.0
  %2759 = vmatmul.mubr.f32.gmra.mrb[0].mxu0 %v1386
  %v2760 = vpop.f32.mrb[0].mxu0
  %v2761 = vadd.f32 0.0, %v2760
  %v2762 = vpop.f32.mrb[0].mxu0
  %v2763 = vadd.f32 0.0, %v2762
  %2764 = vmatprep.mubr.f32.mxu0 0.0
  %2765 = vmatmul.mubr.f32.gmra.mrb[0].mxu0 %v1389
  %v2766 = vpop.f32.mrb[0].mxu0
  %v2767 = vadd.f32 0.0, %v2766
  %v2768 = vpop.f32.mrb[0].mxu0
  %v2769 = vadd.f32 0.0, %v2768
  %2770 = vmatprep.mubr.f32.mxu0 0.0
  %2771 = vmatmul.mubr.f32.gmra.mrb[0].mxu0 %v1392
  %v2772 = vpop.f32.mrb[0].mxu0
  %v2773 = vadd.f32 0.0, %v2772
  %v2774 = vpop.f32.mrb[0].mxu0
  %v2775 = vadd.f32 0.0, %v2774
  %2776 = vmatprep.mubr.f32.mxu0 0.0
  %2777 = vmatmul.mubr.f32.gmra.mrb[0].mxu0 %v1395
  %v2778 = vpop.f32.mrb[0].mxu0
  %v2779 = vadd.f32 0.0, %v2778
  %v2780 = vpop.f32.mrb[0].mxu0
  %v2781 = vadd.f32 0.0, %v2780
  %2782 = vmatprep.mubr.f32.mxu0 0.0
  %2783 = vmatmul.mubr.f32.gmra.mrb[0].mxu0 %v1398
  %v2784 = vpop.f32.mrb[0].mxu0
  %v2785 = vadd.f32 0.0, %v2784
  %v2786 = vpop.f32.mrb[0].mxu0
  %v2787 = vadd.f32 0.0, %v2786
  %2788 = vmatprep.mubr.f32.mxu0 0.0
  %2789 = vmatmul.mubr.f32.gmra.mrb[0].mxu0 %v1401
  %v2790 = vpop.f32.mrb[0].mxu0
  %v2791 = vadd.f32 0.0, %v2790
  %v2792 = vpop.f32.mrb[0].mxu0
  %v2793 = vadd.f32 0.0, %v2792
  %2794 = vmatprep.mubr.f32.mxu0 0.0
  %2795 = vmatmul.mubr.f32.gmra.mrb[0].mxu0 %v1404
  %v2796 = vpop.f32.mrb[0].mxu0
  %v2797 = vadd.f32 0.0, %v2796
  %v2798 = vpop.f32.mrb[0].mxu0
  %v2799 = vadd.f32 0.0, %v2798
  %2800 = vmatprep.mubr.f32.mxu0 0.0
  %2801 = vmatmul.mubr.f32.gmra.mrb[0].mxu0 %v1407
  %v2802 = vpop.f32.mrb[0].mxu0
  %v2803 = vadd.f32 0.0, %v2802
  %v2804 = vpop.f32.mrb[0].mxu0
  %v2805 = vadd.f32 0.0, %v2804
  %2806 = vmatprep.mubr.f32.mxu0 0.0
  %2807 = vmatmul.mubr.f32.gmra.mrb[0].mxu0 %v1410
  %v2808 = vpop.f32.mrb[0].mxu0
  %v2809 = vadd.f32 0.0, %v2808
  %v2810 = vpop.f32.mrb[0].mxu0
  %v2811 = vadd.f32 0.0, %v2810
  %2812 = vmatprep.mubr.f32.mxu0 0.0
  %2813 = vmatmul.mubr.f32.gmra.mrb[0].mxu0 %v1413
  %v2814 = vpop.f32.mrb[0].mxu0
  %v2815 = vadd.f32 0.0, %v2814
  %v2816 = vpop.f32.mrb[0].mxu0
  %v2817 = vadd.f32 0.0, %v2816
  %2818 = vmatprep.mubr.f32.mxu0 0.0
  %2819 = vmatmul.mubr.f32.gmra.mrb[0].mxu0 %v1416
  %v2820 = vpop.f32.mrb[0].mxu0
  %v2821 = vadd.f32 0.0, %v2820
  %v2822 = vpop.f32.mrb[0].mxu0
  %v2823 = vadd.f32 0.0, %v2822
  %2824 = vmatprep.mubr.f32.mxu0 0.0
  %2825 = vmatmul.mubr.f32.gmra.mrb[0].mxu0 %v1419
  %v2826 = vpop.f32.mrb[0].mxu0
  %v2827 = vadd.f32 0.0, %v2826
  %v2828 = vpop.f32.mrb[0].mxu0
  %v2829 = vadd.f32 0.0, %v2828
  %2830 = vmatprep.mubr.f32.mxu0 0.0
  %2831 = vmatmul.mubr.f32.gmra.mrb[0].mxu0 %v1422
  %v2832 = vpop.f32.mrb[0].mxu0
  %v2833 = vadd.f32 0.0, %v2832
  %v2834 = vpop.f32.mrb[0].mxu0
  %v2835 = vadd.f32 0.0, %v2834
  %2836 = vmatprep.mubr.f32.mxu0 0.0
  %2837 = vmatmul.mubr.f32.gmra.mrb[0].mxu0 %v1425
  %v2838 = vpop.f32.mrb[0].mxu0
  %v2839 = vadd.f32 0.0, %v2838
  %v2840 = vpop.f32.mrb[0].mxu0
  %v2841 = vadd.f32 0.0, %v2840
  %2842 = vmatprep.mubr.f32.mxu0 0.0
  %2843 = vmatmul.mubr.f32.gmra.mrb[0].mxu0 %v1428
  %v2844 = vpop.f32.mrb[0].mxu0
  %v2845 = vadd.f32 0.0, %v2844
  %v2846 = vpop.f32.mrb[0].mxu0
  %v2847 = vadd.f32 0.0, %v2846
  %2848 = vmatprep.mubr.f32.mxu0 0.0
  %2849 = vmatmul.mubr.f32.gmra.mrb[0].mxu0 %v1431
  %v2850 = vpop.f32.mrb[0].mxu0
  %v2851 = vadd.f32 0.0, %v2850
  %v2852 = vpop.f32.mrb[0].mxu0
  %v2853 = vadd.f32 0.0, %v2852
  %2854 = vmatprep.mubr.f32.mxu0 0.0
  %2855 = vmatmul.mubr.f32.gmra.mrb[0].mxu0 %v1434
  %v2856 = vpop.f32.mrb[0].mxu0
  %v2857 = vadd.f32 0.0, %v2856
  %v2858 = vpop.f32.mrb[0].mxu0
  %v2859 = vadd.f32 0.0, %v2858
  %2860 = vmatprep.mubr.f32.mxu0 0.0
  %2861 = vmatmul.mubr.f32.gmra.mrb[0].mxu0 %v1437
  %v2862 = vpop.f32.mrb[0].mxu0
  %v2863 = vadd.f32 0.0, %v2862
  %v2864 = vpop.f32.mrb[0].mxu0
  %v2865 = vadd.f32 0.0, %v2864
  %2866 = vmatprep.mubr.f32.mxu0 0.0
  %2867 = vmatmul.mubr.f32.gmra.mrb[0].mxu0 %v1440
  %v2868 = vpop.f32.mrb[0].mxu0
  %v2869 = vadd.f32 0.0, %v2868
  %v2870 = vpop.f32.mrb[0].mxu0
  %v2871 = vadd.f32 0.0, %v2870
  %2872 = vmatprep.mubr.f32.mxu0 0.0
  %2873 = vmatmul.mubr.f32.gmra.mrb[0].mxu0 %v1443
  %v2874 = vpop.f32.mrb[0].mxu0
  %v2875 = vadd.f32 0.0, %v2874
  %v2876 = vpop.f32.mrb[0].mxu0
  %v2877 = vadd.f32 0.0, %v2876
  %2878 = vmatprep.mubr.f32.mxu0 0.0
  %2879 = vmatmul.mubr.f32.gmra.mrb[0].mxu0 %v1446
  %v2880 = vpop.f32.mrb[0].mxu0
  %v2881 = vadd.f32 0.0, %v2880
  %v2882 = vpop.f32.mrb[0].mxu0
  %v2883 = vadd.f32 0.0, %v2882
  %2884 = vmatprep.mubr.f32.mxu0 0.0
  %2885 = vmatmul.mubr.f32.gmra.mrb[0].mxu0 %v1449
  %v2886 = vpop.f32.mrb[0].mxu0
  %v2887 = vadd.f32 0.0, %v2886
  %v2888 = vpop.f32.mrb[0].mxu0
  %v2889 = vadd.f32 0.0, %v2888
  %2890 = vmatprep.mubr.f32.mxu0 0.0
  %2891 = vmatmul.mubr.f32.gmra.mrb[0].mxu0 %v1452
  %v2892 = vpop.f32.mrb[0].mxu0
  %v2893 = vadd.f32 0.0, %v2892
  %v2894 = vpop.f32.mrb[0].mxu0
  %v2895 = vadd.f32 0.0, %v2894
  %2896 = vmatprep.mubr.f32.mxu0 0.0
  %2897 = vmatmul.mubr.f32.gmra.mrb[0].mxu0 %v1455
  %v2898 = vpop.f32.mrb[0].mxu0
  %v2899 = vadd.f32 0.0, %v2898
  %v2900 = vpop.f32.mrb[0].mxu0
  %v2901 = vadd.f32 0.0, %v2900
  %2902 = vmatprep.mubr.f32.mxu0 0.0
  %2903 = vmatmul.mubr.f32.gmra.mrb[0].mxu0 %v1458
  %v2904 = vpop.f32.mrb[0].mxu0
  %v2905 = vadd.f32 0.0, %v2904
  %v2906 = vpop.f32.mrb[0].mxu0
  %v2907 = vadd.f32 0.0, %v2906
  %2908 = vmatprep.mubr.f32.mxu0 0.0
  %2909 = vmatmul.mubr.f32.gmra.mrb[0].mxu0 %v1461
  %v2910 = vpop.f32.mrb[0].mxu0
  %v2911 = vadd.f32 0.0, %v2910
  %v2912 = vpop.f32.mrb[0].mxu0
  %v2913 = vadd.f32 0.0, %v2912
  %2914 = vmatprep.mubr.f32.mxu0 0.0
  %2915 = vmatmul.mubr.f32.gmra.mrb[0].mxu0 %v1464
  %v2916 = vpop.f32.mrb[0].mxu0
  %v2917 = vadd.f32 0.0, %v2916
  %v2918 = vpop.f32.mrb[0].mxu0
  %v2919 = vadd.f32 0.0, %v2918
  %2920 = vmatprep.mubr.f32.mxu0 0.0
  %2921 = vmatmul.mubr.f32.gmra.mrb[0].mxu0 %v1467
  %v2922 = vpop.f32.mrb[0].mxu0
  %v2923 = vadd.f32 0.0, %v2922
  %v2924 = vpop.f32.mrb[0].mxu0
  %v2925 = vadd.f32 0.0, %v2924
  %2926 = vmatprep.mubr.f32.mxu0 0.0
  %2927 = vmatmul.mubr.f32.gmra.mrb[0].mxu0 %v1470
  %v2928 = vpop.f32.mrb[0].mxu0
  %v2929 = vadd.f32 0.0, %v2928
  %v2930 = vpop.f32.mrb[0].mxu0
  %v2931 = vadd.f32 0.0, %v2930
  %2932 = vmatprep.mubr.f32.mxu0 0.0
  %2933 = vmatmul.mubr.f32.gmra.mrb[0].mxu0 %v1473
  %v2934 = vpop.f32.mrb[0].mxu0
  %v2935 = vadd.f32 0.0, %v2934
  %v2936 = vpop.f32.mrb[0].mxu0
  %v2937 = vadd.f32 0.0, %v2936
  %2938 = vmatprep.mubr.f32.mxu0 0.0
  %2939 = vmatmul.mubr.f32.gmra.mrb[0].mxu0 %v1476
  %v2940 = vpop.f32.mrb[0].mxu0
  %v2941 = vadd.f32 0.0, %v2940
  %v2942 = vpop.f32.mrb[0].mxu0
  %v2943 = vadd.f32 0.0, %v2942
  %2944 = vmatprep.mubr.f32.mxu0 0.0
  %2945 = vmatmul.mubr.f32.gmra.mrb[0].mxu0 %v1479
  %v2946 = vpop.f32.mrb[0].mxu0
  %v2947 = vadd.f32 0.0, %v2946
  %v2948 = vpop.f32.mrb[0].mxu0
  %v2949 = vadd.f32 0.0, %v2948
  %2950 = vmatprep.mubr.f32.mxu0 0.0
  %2951 = vmatmul.mubr.f32.gmra.mrb[0].mxu0 %v1482
  %v2952 = vpop.f32.mrb[0].mxu0
  %v2953 = vadd.f32 0.0, %v2952
  %v2954 = vpop.f32.mrb[0].mxu0
  %v2955 = vadd.f32 0.0, %v2954
  %2956 = vmatprep.mubr.f32.mxu0 0.0
  %2957 = vmatmul.mubr.f32.gmra.mrb[0].mxu0 %v1485
  %v2958 = vpop.f32.mrb[0].mxu0
  %v2959 = vadd.f32 0.0, %v2958
  %v2960 = vpop.f32.mrb[0].mxu0
  %v2961 = vadd.f32 0.0, %v2960
  %2962 = vmatprep.mubr.f32.mxu0 0.0
  %2963 = vmatmul.mubr.f32.gmra.mrb[0].mxu0 %v1488
  %v2964 = vpop.f32.mrb[0].mxu0
  %v2965 = vadd.f32 0.0, %v2964
  %v2966 = vpop.f32.mrb[0].mxu0
  %v2967 = vadd.f32 0.0, %v2966
  %2968 = vmatprep.mubr.f32.mxu0 0.0
  %2969 = vmatmul.mubr.f32.gmra.mrb[0].mxu0 %v1491
  %v2970 = vpop.f32.mrb[0].mxu0
  %v2971 = vadd.f32 0.0, %v2970
  %v2972 = vpop.f32.mrb[0].mxu0
  %v2973 = vadd.f32 0.0, %v2972
  %2974 = vmatprep.mubr.f32.mxu0 0.0
  %2975 = vmatmul.mubr.f32.gmra.mrb[0].mxu0 %v1494
  %v2976 = vpop.f32.mrb[0].mxu0
  %v2977 = vadd.f32 0.0, %v2976
  %v2978 = vpop.f32.mrb[0].mxu0
  %v2979 = vadd.f32 0.0, %v2978
  %2980 = vmatprep.mubr.f32.mxu0 0.0
  %2981 = vmatmul.mubr.f32.gmra.mrb[0].mxu0 %v1497
  %v2982 = vpop.f32.mrb[0].mxu0
  %v2983 = vadd.f32 0.0, %v2982
  %v2984 = vpop.f32.mrb[0].mxu0
  %v2985 = vadd.f32 0.0, %v2984
  %2986 = vmatprep.mubr.f32.mxu0 0.0
  %2987 = vmatmul.mubr.f32.gmra.mrb[0].mxu0 %v1500
  %v2988 = vpop.f32.mrb[0].mxu0
  %v2989 = vadd.f32 0.0, %v2988
  %v2990 = vpop.f32.mrb[0].mxu0
  %v2991 = vadd.f32 0.0, %v2990
  %2992 = vmatprep.mubr.f32.mxu0 0.0
  %2993 = vmatmul.mubr.f32.gmra.mrb[0].mxu0 %v1503
  %v2994 = vpop.f32.mrb[0].mxu0
  %v2995 = vadd.f32 0.0, %v2994
  %v2996 = vpop.f32.mrb[0].mxu0
  %v2997 = vadd.f32 0.0, %v2996
  %2998 = vmatprep.mubr.f32.mxu0 0.0
  %2999 = vmatmul.mubr.f32.gmra.mrb[0].mxu0 %v1506
  %v3000 = vpop.f32.mrb[0].mxu0
  %v3001 = vadd.f32 0.0, %v3000
  %v3002 = vpop.f32.mrb[0].mxu0
  %v3003 = vadd.f32 0.0, %v3002
  %3004 = vmatprep.mubr.f32.mxu0 0.0
  %3005 = vmatmul.mubr.f32.gmra.mrb[0].mxu0 %v1509
  %v3006 = vpop.f32.mrb[0].mxu0
  %v3007 = vadd.f32 0.0, %v3006
  %v3008 = vpop.f32.mrb[0].mxu0
  %v3009 = vadd.f32 0.0, %v3008
  %3010 = vmatprep.mubr.f32.mxu0 0.0
  %3011 = vmatmul.mubr.f32.gmra.mrb[0].mxu0 %v1512
  %v3012 = vpop.f32.mrb[0].mxu0
  %v3013 = vadd.f32 0.0, %v3012
  %v3014 = vpop.f32.mrb[0].mxu0
  %v3015 = vadd.f32 0.0, %v3014
  %3016 = vmatprep.mubr.f32.mxu0 0.0
  %3017 = vmatmul.mubr.f32.gmra.mrb[0].mxu0 %v1515
  %v3018 = vpop.f32.mrb[0].mxu0
  %v3019 = vadd.f32 0.0, %v3018
  %v3020 = vpop.f32.mrb[0].mxu0
  %v3021 = vadd.f32 0.0, %v3020
  %3022 = vmatprep.mubr.f32.mxu0 0.0
  %3023 = vmatmul.mubr.f32.gmra.mrb[0].mxu0 %v1518
  %v3024 = vpop.f32.mrb[0].mxu0
  %v3025 = vadd.f32 0.0, %v3024
  %v3026 = vpop.f32.mrb[0].mxu0
  %v3027 = vadd.f32 0.0, %v3026
  %3028 = vmatprep.mubr.f32.mxu0 0.0
  %3029 = vmatmul.mubr.f32.gmra.mrb[0].mxu0 %v1521
  %v3030 = vpop.f32.mrb[0].mxu0
  %v3031 = vadd.f32 0.0, %v3030
  %v3032 = vpop.f32.mrb[0].mxu0
  %v3033 = vadd.f32 0.0, %v3032
  %3034 = vmatprep.mubr.f32.mxu0 0.0
  %3035 = vmatmul.mubr.f32.gmra.mrb[0].mxu0 %v1524
  %v3036 = vpop.f32.mrb[0].mxu0
  %v3037 = vadd.f32 0.0, %v3036
  %v3038 = vpop.f32.mrb[0].mxu0
  %v3039 = vadd.f32 0.0, %v3038
  %3040 = vmatprep.mubr.f32.mxu0 0.0
  %3041 = vmatmul.mubr.f32.gmra.mrb[0].mxu0 %v1527
  %v3042 = vpop.f32.mrb[0].mxu0
  %v3043 = vadd.f32 0.0, %v3042
  %v3044 = vpop.f32.mrb[0].mxu0
  %v3045 = vadd.f32 0.0, %v3044
  %3046 = vmatprep.mubr.f32.mxu0 0.0
  %3047 = vmatmul.mubr.f32.gmra.mrb[0].mxu0 %v1530
  %v3048 = vpop.f32.mrb[0].mxu0
  %v3049 = vadd.f32 0.0, %v3048
  %v3050 = vpop.f32.mrb[0].mxu0
  %v3051 = vadd.f32 0.0, %v3050
  %3052 = vmatprep.mubr.f32.mxu0 0.0
  %3053 = vmatmul.mubr.f32.gmra.mrb[0].mxu0 %v1533
  %v3054 = vpop.f32.mrb[0].mxu0
  %v3055 = vadd.f32 0.0, %v3054
  %v3056 = vpop.f32.mrb[0].mxu0
  %v3057 = vadd.f32 0.0, %v3056
  %3058 = vmatprep.mubr.f32.mxu0 0.0
  %3059 = vmatmul.mubr.f32.gmra.mrb[0].mxu0 %v1536
  %v3060 = vpop.f32.mrb[0].mxu0
  %v3061 = vadd.f32 0.0, %v3060
  %v3062 = vpop.f32.mrb[0].mxu0
  %v3063 = vadd.f32 0.0, %v3062
  %3064 = vmatprep.mubr.f32.mxu0 0.0
  %3065 = vmatmul.mubr.f32.gmra.mrb[0].mxu0 %v1539
  %v3066 = vpop.f32.mrb[0].mxu0
  %v3067 = vadd.f32 0.0, %v3066
  %v3068 = vpop.f32.mrb[0].mxu0
  %v3069 = vadd.f32 0.0, %v3068
  %3070 = vmatprep.mubr.f32.mxu0 0.0
  %3071 = vmatmul.mubr.f32.gmra.mrb[0].mxu0 %v1542
  %v3072 = vpop.f32.mrb[0].mxu0
  %v3073 = vadd.f32 0.0, %v3072
  %v3074 = vpop.f32.mrb[0].mxu0
  %v3075 = vadd.f32 0.0, %v3074
  %3076 = vmatprep.mubr.f32.mxu0 0.0
  %3077 = vmatmul.mubr.f32.gmra.mrb[0].mxu0 %v1545
  %v3078 = vpop.f32.mrb[0].mxu0
  %v3079 = vadd.f32 0.0, %v3078
  %v3080 = vpop.f32.mrb[0].mxu0
  %v3081 = vadd.f32 0.0, %v3080
  %3082 = vmatprep.mubr.f32.mxu0 0.0
  %3083 = vmatmul.mubr.f32.gmra.mrb[0].mxu0 %v1548
  %v3084 = vpop.f32.mrb[0].mxu0
  %v3085 = vadd.f32 0.0, %v3084
  %v3086 = vpop.f32.mrb[0].mxu0
  %v3087 = vadd.f32 0.0, %v3086
  %3088 = vmatprep.mubr.f32.mxu0 0.0
  %3089 = vmatmul.mubr.f32.gmra.mrb[0].mxu0 %v1551
  %v3090 = vpop.f32.mrb[0].mxu0
  %v3091 = vadd.f32 0.0, %v3090
  %v3092 = vpop.f32.mrb[0].mxu0
  %v3093 = vadd.f32 0.0, %v3092
  %3094 = vmatprep.mubr.f32.mxu0 0.0
  %3095 = vmatmul.mubr.f32.gmra.mrb[0].mxu0 %v1554
  %v3096 = vpop.f32.mrb[0].mxu0
  %v3097 = vadd.f32 0.0, %v3096
  %v3098 = vpop.f32.mrb[0].mxu0
  %v3099 = vadd.f32 0.0, %v3098
  %3100 = vmatprep.mubr.f32.mxu0 0.0
  %3101 = vmatmul.mubr.f32.gmra.mrb[0].mxu0 %v1557
  %v3102 = vpop.f32.mrb[0].mxu0
  %v3103 = vadd.f32 0.0, %v3102
  %v3104 = vpop.f32.mrb[0].mxu0
  %v3105 = vadd.f32 0.0, %v3104
  %3106 = vmatprep.mubr.f32.mxu0 0.0
  %3107 = vmatmul.mubr.f32.gmra.mrb[0].mxu0 %v1560
  %v3108 = vpop.f32.mrb[0].mxu0
  %v3109 = vadd.f32 0.0, %v3108
  %v3110 = vpop.f32.mrb[0].mxu0
  %v3111 = vadd.f32 0.0, %v3110
  %3112 = vmatprep.mubr.f32.mxu0 0.0
  %3113 = vmatmul.mubr.f32.gmra.mrb[0].mxu0 %v1563
  %v3114 = vpop.f32.mrb[0].mxu0
  %v3115 = vadd.f32 0.0, %v3114
  %v3116 = vpop.f32.mrb[0].mxu0
  %v3117 = vadd.f32 0.0, %v3116
  %3118 = vmatprep.mubr.f32.mxu0 0.0
  %3119 = vmatmul.mubr.f32.gmra.mrb[0].mxu0 %v1566
  %v3120 = vpop.f32.mrb[0].mxu0
  %v3121 = vadd.f32 0.0, %v3120
  %v3122 = vpop.f32.mrb[0].mxu0
  %v3123 = vadd.f32 0.0, %v3122
  %3124 = vmatprep.mubr.f32.mxu0 0.0
  %3125 = vmatmul.mubr.f32.gmra.mrb[0].mxu0 %v1569
  %v3126 = vpop.f32.mrb[0].mxu0
  %v3127 = vadd.f32 0.0, %v3126
  %v3128 = vpop.f32.mrb[0].mxu0
  %v3129 = vadd.f32 0.0, %v3128
  %3130 = vmatprep.mubr.f32.mxu0 0.0
  %3131 = vmatmul.mubr.f32.gmra.mrb[0].mxu0 %v1572
  %v3132 = vpop.f32.mrb[0].mxu0
  %v3133 = vadd.f32 0.0, %v3132
  %v3134 = vpop.f32.mrb[0].mxu0
  %v3135 = vadd.f32 0.0, %v3134
  %3136 = vmatprep.mubr.f32.mxu0 0.0
  %3137 = vmatmul.mubr.f32.gmra.mrb[0].mxu0 %v1575
  %v3138 = vpop.f32.mrb[0].mxu0
  %v3139 = vadd.f32 0.0, %v3138
  %v3140 = vpop.f32.mrb[0].mxu0
  %v3141 = vadd.f32 0.0, %v3140
  %3142 = vmatprep.mubr.f32.mxu0 0.0
  %3143 = vmatmul.mubr.f32.gmra.mrb[0].mxu0 %v1578
  %v3144 = vpop.f32.mrb[0].mxu0
  %v3145 = vadd.f32 0.0, %v3144
  %v3146 = vpop.f32.mrb[0].mxu0
  %v3147 = vadd.f32 0.0, %v3146
  %3148 = vmatprep.mubr.f32.mxu0 0.0
  %3149 = vmatmul.mubr.f32.gmra.mrb[0].mxu0 %v1581
  %v3150 = vpop.f32.mrb[0].mxu0
  %v3151 = vadd.f32 0.0, %v3150
  %v3152 = vpop.f32.mrb[0].mxu0
  %v3153 = vadd.f32 0.0, %v3152
  %3154 = vmatprep.mubr.f32.mxu0 0.0
  %3155 = vmatmul.mubr.f32.gmra.mrb[0].mxu0 %v1584
  %v3156 = vpop.f32.mrb[0].mxu0
  %v3157 = vadd.f32 0.0, %v3156
  %v3158 = vpop.f32.mrb[0].mxu0
  %v3159 = vadd.f32 0.0, %v3158
  %3160 = vmatprep.mubr.f32.mxu0 0.0
  %3161 = vmatmul.mubr.f32.gmra.mrb[0].mxu0 %v1587
  %v3162 = vpop.f32.mrb[0].mxu0
  %v3163 = vadd.f32 0.0, %v3162
  %v3164 = vpop.f32.mrb[0].mxu0
  %v3165 = vadd.f32 0.0, %v3164
  %3166 = vmatprep.mubr.f32.mxu0 0.0
  %3167 = vmatmul.mubr.f32.gmra.mrb[0].mxu0 %v1590
  %v3168 = vpop.f32.mrb[0].mxu0
  %v3169 = vadd.f32 0.0, %v3168
  %v3170 = vpop.f32.mrb[0].mxu0
  %v3171 = vadd.f32 0.0, %v3170
  %3172 = vmatprep.mubr.f32.mxu0 0.0
  %3173 = vmatmul.mubr.f32.gmra.mrb[0].mxu0 %v1593
  %v3174 = vpop.f32.mrb[0].mxu0
  %v3175 = vadd.f32 0.0, %v3174
  %v3176 = vpop.f32.mrb[0].mxu0
  %v3177 = vadd.f32 0.0, %v3176
  %3178 = vmatprep.mubr.f32.mxu0 0.0
  %3179 = vmatmul.mubr.f32.gmra.mrb[0].mxu0 %v1596
  %v3180 = vpop.f32.mrb[0].mxu0
  %v3181 = vadd.f32 0.0, %v3180
  %v3182 = vpop.f32.mrb[0].mxu0
  %v3183 = vadd.f32 0.0, %v3182
  %3184 = vmatprep.mubr.f32.mxu0 0.0
  %3185 = vmatmul.mubr.f32.gmra.mrb[0].mxu0 %v1599
  %v3186 = vpop.f32.mrb[0].mxu0
  %v3187 = vadd.f32 0.0, %v3186
  %v3188 = vpop.f32.mrb[0].mxu0
  %v3189 = vadd.f32 0.0, %v3188
  %3190 = vmatprep.mubr.f32.mxu0 0.0
  %3191 = vmatmul.mubr.f32.gmra.mrb[0].mxu0 %v1602
  %v3192 = vpop.f32.mrb[0].mxu0
  %v3193 = vadd.f32 0.0, %v3192
  %v3194 = vpop.f32.mrb[0].mxu0
  %v3195 = vadd.f32 0.0, %v3194
  %3196 = vmatprep.mubr.f32.mxu0 0.0
  %3197 = vmatmul.mubr.f32.gmra.mrb[0].mxu0 %v1605
  %v3198 = vpop.f32.mrb[0].mxu0
  %v3199 = vadd.f32 0.0, %v3198
  %v3200 = vpop.f32.mrb[0].mxu0
  %v3201 = vadd.f32 0.0, %v3200
  %3202 = vmatprep.mubr.f32.mxu0 0.0
  %3203 = vmatmul.mubr.f32.gmra.mrb[0].mxu0 %v1608
  %v3204 = vpop.f32.mrb[0].mxu0
  %v3205 = vadd.f32 0.0, %v3204
  %v3206 = vpop.f32.mrb[0].mxu0
  %v3207 = vadd.f32 0.0, %v3206
  %3208 = vmatprep.mubr.f32.mxu0 0.0
  %3209 = vmatmul.mubr.f32.gmra.mrb[0].mxu0 %v1611
  %v3210 = vpop.f32.mrb[0].mxu0
  %v3211 = vadd.f32 0.0, %v3210
  %v3212 = vpop.f32.mrb[0].mxu0
  %v3213 = vadd.f32 0.0, %v3212
  %3214 = vdwg.mxu0
  %v3215 = vmax.f32 %v1687, %v2497
  %v3216 = vmax.f32 %v1689, %v2499
  %v3217 = vmax.f32 %v1693, %v2503
  %v3218 = vmax.f32 %v1695, %v2505
  %v3219 = vmax.f32 %v1699, %v2509
  %v3220 = vmax.f32 %v1701, %v2511
  %v3221 = vmax.f32 %v1705, %v2515
  %v3222 = vmax.f32 %v1707, %v2517
  %v3223 = vmax.f32 %v1711, %v2521
  %v3224 = vmax.f32 %v1713, %v2523
  %v3225 = vmax.f32 %v1717, %v2527
  %v3226 = vmax.f32 %v1719, %v2529
  %v3227 = vmax.f32 %v1723, %v2533
  %v3228 = vmax.f32 %v1725, %v2535
  %v3229 = vmax.f32 %v1729, %v2539
  %v3230 = vmax.f32 %v1731, %v2541
  %v3231 = vmax.f32 %v1735, %v2545
  %v3232 = vmax.f32 %v1737, %v2547
  %v3233 = vmax.f32 %v1741, %v2551
  %v3234 = vmax.f32 %v1743, %v2553
  %v3235 = vmax.f32 %v1747, %v2557
  %v3236 = vmax.f32 %v1749, %v2559
  %v3237 = vmax.f32 %v1753, %v2563
  %v3238 = vmax.f32 %v1755, %v2565
  %v3239 = vmax.f32 %v1759, %v2569
  %v3240 = vmax.f32 %v1761, %v2571
  %v3241 = vmax.f32 %v1765, %v2575
  %v3242 = vmax.f32 %v1767, %v2577
  %v3243 = vmax.f32 %v1771, %v2581
  %v3244 = vmax.f32 %v1773, %v2583
  %v3245 = vmax.f32 %v1777, %v2587
  %v3246 = vmax.f32 %v1779, %v2589
  %v3247 = vmax.f32 %v1783, %v2593
  %v3248 = vmax.f32 %v1785, %v2595
  %v3249 = vmax.f32 %v1789, %v2599
  %v3250 = vmax.f32 %v1791, %v2601
  %v3251 = vmax.f32 %v1795, %v2605
  %v3252 = vmax.f32 %v1797, %v2607
  %v3253 = vmax.f32 %v1801, %v2611
  %v3254 = vmax.f32 %v1803, %v2613
  %v3255 = vmax.f32 %v1807, %v2617
  %v3256 = vmax.f32 %v1809, %v2619
  %v3257 = vmax.f32 %v1813, %v2623
  %v3258 = vmax.f32 %v1815, %v2625
  %v3259 = vmax.f32 %v1819, %v2629
  %v3260 = vmax.f32 %v1821, %v2631
  %v3261 = vmax.f32 %v1825, %v2635
  %v3262 = vmax.f32 %v1827, %v2637
  %v3263 = vmax.f32 %v1831, %v2641
  %v3264 = vmax.f32 %v1833, %v2643
  %v3265 = vmax.f32 %v1837, %v2647
  %v3266 = vmax.f32 %v1839, %v2649
  %v3267 = vmax.f32 %v1843, %v2653
  %v3268 = vmax.f32 %v1845, %v2655
  %v3269 = vmax.f32 %v1849, %v2659
  %v3270 = vmax.f32 %v1851, %v2661
  %v3271 = vmax.f32 %v1855, %v2665
  %v3272 = vmax.f32 %v1857, %v2667
  %v3273 = vmax.f32 %v1861, %v2671
  %v3274 = vmax.f32 %v1863, %v2673
  %v3275 = vmax.f32 %v1867, %v2677
  %v3276 = vmax.f32 %v1869, %v2679
  %v3277 = vmax.f32 %v1873, %v2683
  %v3278 = vmax.f32 %v1875, %v2685
  %v3279 = vmax.f32 %v1879, %v2689
  %v3280 = vmax.f32 %v1881, %v2691
  %v3281 = vmax.f32 %v1885, %v2695
  %v3282 = vmax.f32 %v1887, %v2697
  %v3283 = vmax.f32 %v1891, %v2701
  %v3284 = vmax.f32 %v1893, %v2703
  %v3285 = vmax.f32 %v1897, %v2707
  %v3286 = vmax.f32 %v1899, %v2709
  %v3287 = vmax.f32 %v1903, %v2713
  %v3288 = vmax.f32 %v1905, %v2715
  %v3289 = vmax.f32 %v1909, %v2719
  %v3290 = vmax.f32 %v1911, %v2721
  %v3291 = vmax.f32 %v1915, %v2725
  %v3292 = vmax.f32 %v1917, %v2727
  %v3293 = vmax.f32 %v1921, %v2731
  %v3294 = vmax.f32 %v1923, %v2733
  %v3295 = vmax.f32 %v1927, %v2737
  %v3296 = vmax.f32 %v1929, %v2739
  %v3297 = vmax.f32 %v1933, %v2743
  %v3298 = vmax.f32 %v1935, %v2745
  %v3299 = vmax.f32 %v1939, %v2749
  %v3300 = vmax.f32 %v1941, %v2751
  %v3301 = vmax.f32 %v1945, %v2755
  %v3302 = vmax.f32 %v1947, %v2757
  %v3303 = vmax.f32 %v1951, %v2761
  %v3304 = vmax.f32 %v1953, %v2763
  %v3305 = vmax.f32 %v1957, %v2767
  %v3306 = vmax.f32 %v1959, %v2769
  %v3307 = vmax.f32 %v1963, %v2773
  %v3308 = vmax.f32 %v1965, %v2775
  %v3309 = vmax.f32 %v1969, %v2779
  %v3310 = vmax.f32 %v1971, %v2781
  %v3311 = vmax.f32 %v1975, %v2785
  %v3312 = vmax.f32 %v1977, %v2787
  %v3313 = vmax.f32 %v1981, %v2791
  %v3314 = vmax.f32 %v1983, %v2793
  %v3315 = vmax.f32 %v1987, %v2797
  %v3316 = vmax.f32 %v1989, %v2799
  %v3317 = vmax.f32 %v1993, %v2803
  %v3318 = vmax.f32 %v1995, %v2805
  %v3319 = vmax.f32 %v1999, %v2809
  %v3320 = vmax.f32 %v2001, %v2811
  %v3321 = vmax.f32 %v2005, %v2815
  %v3322 = vmax.f32 %v2007, %v2817
  %v3323 = vmax.f32 %v2011, %v2821
  %v3324 = vmax.f32 %v2013, %v2823
  %v3325 = vmax.f32 %v2017, %v2827
  %v3326 = vmax.f32 %v2019, %v2829
  %v3327 = vmax.f32 %v2023, %v2833
  %v3328 = vmax.f32 %v2025, %v2835
  %v3329 = vmax.f32 %v2029, %v2839
  %v3330 = vmax.f32 %v2031, %v2841
  %v3331 = vmax.f32 %v2035, %v2845
  %v3332 = vmax.f32 %v2037, %v2847
  %v3333 = vmax.f32 %v2041, %v2851
  %v3334 = vmax.f32 %v2043, %v2853
  %v3335 = vmax.f32 %v2047, %v2857
  %v3336 = vmax.f32 %v2049, %v2859
  %v3337 = vmax.f32 %v2053, %v2863
  %v3338 = vmax.f32 %v2055, %v2865
  %v3339 = vmax.f32 %v2059, %v2869
  %v3340 = vmax.f32 %v2061, %v2871
  %v3341 = vmax.f32 %v2065, %v2875
  %v3342 = vmax.f32 %v2067, %v2877
  %v3343 = vmax.f32 %v2071, %v2881
  %v3344 = vmax.f32 %v2073, %v2883
  %v3345 = vmax.f32 %v2077, %v2887
  %v3346 = vmax.f32 %v2079, %v2889
  %v3347 = vmax.f32 %v2083, %v2893
  %v3348 = vmax.f32 %v2085, %v2895
  %v3349 = vmax.f32 %v2089, %v2899
  %v3350 = vmax.f32 %v2091, %v2901
  %v3351 = vmax.f32 %v2095, %v2905
  %v3352 = vmax.f32 %v2097, %v2907
  %v3353 = vmax.f32 %v2101, %v2911
  %v3354 = vmax.f32 %v2103, %v2913
  %v3355 = vmax.f32 %v2107, %v2917
  %v3356 = vmax.f32 %v2109, %v2919
  %v3357 = vmax.f32 %v2113, %v2923
  %v3358 = vmax.f32 %v2115, %v2925
  %v3359 = vmax.f32 %v2119, %v2929
  %v3360 = vmax.f32 %v2121, %v2931
  %v3361 = vmax.f32 %v2125, %v2935
  %v3362 = vmax.f32 %v2127, %v2937
  %v3363 = vmax.f32 %v2131, %v2941
  %v3364 = vmax.f32 %v2133, %v2943
  %v3365 = vmax.f32 %v2137, %v2947
  %v3366 = vmax.f32 %v2139, %v2949
  %v3367 = vmax.f32 %v2143, %v2953
  %v3368 = vmax.f32 %v2145, %v2955
  %v3369 = vmax.f32 %v2149, %v2959
  %v3370 = vmax.f32 %v2151, %v2961
  %v3371 = vmax.f32 %v2155, %v2965
  %v3372 = vmax.f32 %v2157, %v2967
  %v3373 = vmax.f32 %v2161, %v2971
  %v3374 = vmax.f32 %v2163, %v2973
  %v3375 = vmax.f32 %v2167, %v2977
  %v3376 = vmax.f32 %v2169, %v2979
  %v3377 = vmax.f32 %v2173, %v2983
  %v3378 = vmax.f32 %v2175, %v2985
  %v3379 = vmax.f32 %v2179, %v2989
  %v3380 = vmax.f32 %v2181, %v2991
  %v3381 = vmax.f32 %v2185, %v2995
  %v3382 = vmax.f32 %v2187, %v2997
  %v3383 = vmax.f32 %v2191, %v3001
  %v3384 = vmax.f32 %v2193, %v3003
  %v3385 = vmax.f32 %v2197, %v3007
  %v3386 = vmax.f32 %v2199, %v3009
  %v3387 = vmax.f32 %v2203, %v3013
  %v3388 = vmax.f32 %v2205, %v3015
  %v3389 = vmax.f32 %v2209, %v3019
  %v3390 = vmax.f32 %v2211, %v3021
  %v3391 = vmax.f32 %v2215, %v3025
  %v3392 = vmax.f32 %v2217, %v3027
  %v3393 = vmax.f32 %v2221, %v3031
  %v3394 = vmax.f32 %v2223, %v3033
  %v3395 = vmax.f32 %v2227, %v3037
  %v3396 = vmax.f32 %v2229, %v3039
  %v3397 = vmax.f32 %v2233, %v3043
  %v3398 = vmax.f32 %v2235, %v3045
  %v3399 = vmax.f32 %v2239, %v3049
  %v3400 = vmax.f32 %v2241, %v3051
  %v3401 = vmax.f32 %v2245, %v3055
  %v3402 = vmax.f32 %v2247, %v3057
  %v3403 = vmax.f32 %v2251, %v3061
  %v3404 = vmax.f32 %v2253, %v3063
  %v3405 = vmax.f32 %v2257, %v3067
  %v3406 = vmax.f32 %v2259, %v3069
  %v3407 = vmax.f32 %v2263, %v3073
  %v3408 = vmax.f32 %v2265, %v3075
  %v3409 = vmax.f32 %v2269, %v3079
  %v3410 = vmax.f32 %v2271, %v3081
  %v3411 = vmax.f32 %v2275, %v3085
  %v3412 = vmax.f32 %v2277, %v3087
  %v3413 = vmax.f32 %v2281, %v3091
  %v3414 = vmax.f32 %v2283, %v3093
  %v3415 = vmax.f32 %v2287, %v3097
  %v3416 = vmax.f32 %v2289, %v3099
  %v3417 = vmax.f32 %v2293, %v3103
  %v3418 = vmax.f32 %v2295, %v3105
  %v3419 = vmax.f32 %v2299, %v3109
  %v3420 = vmax.f32 %v2301, %v3111
  %v3421 = vmax.f32 %v2305, %v3115
  %v3422 = vmax.f32 %v2307, %v3117
  %v3423 = vmax.f32 %v2311, %v3121
  %v3424 = vmax.f32 %v2313, %v3123
  %v3425 = vmax.f32 %v2317, %v3127
  %v3426 = vmax.f32 %v2319, %v3129
  %v3427 = vmax.f32 %v2323, %v3133
  %v3428 = vmax.f32 %v2325, %v3135
  %v3429 = vmax.f32 %v2329, %v3139
  %v3430 = vmax.f32 %v2331, %v3141
  %v3431 = vmax.f32 %v2335, %v3145
  %v3432 = vmax.f32 %v2337, %v3147
  %v3433 = vmax.f32 %v2341, %v3151
  %v3434 = vmax.f32 %v2343, %v3153
  %v3435 = vmax.f32 %v2347, %v3157
  %v3436 = vmax.f32 %v2349, %v3159
  %v3437 = vmax.f32 %v2353, %v3163
  %v3438 = vmax.f32 %v2355, %v3165
  %v3439 = vmax.f32 %v2359, %v3169
  %v3440 = vmax.f32 %v2361, %v3171
  %v3441 = vmax.f32 %v2365, %v3175
  %v3442 = vmax.f32 %v2367, %v3177
  %v3443 = vmax.f32 %v2371, %v3181
  %v3444 = vmax.f32 %v2373, %v3183
  %v3445 = vmax.f32 %v2377, %v3187
  %v3446 = vmax.f32 %v2379, %v3189
  %v3447 = vmax.f32 %v2383, %v3193
  %v3448 = vmax.f32 %v2385, %v3195
  %v3449 = vmax.f32 %v2389, %v3199
  %v3450 = vmax.f32 %v2391, %v3201
  %v3451 = vmax.f32 %v2395, %v3205
  %v3452 = vmax.f32 %v2397, %v3207
  %v3453 = vmax.f32 %v2401, %v3211
  %v3454 = vmax.f32 %v2403, %v3213
  %v3455 = vmax.f32 %v3215, %v3223
  %v3456 = vmax.f32 %v3216, %v3224
  %v3457 = vmax.f32 %v3217, %v3225
  %v3458 = vmax.f32 %v3218, %v3226
  %v3459 = vmax.f32 %v3219, %v3227
  %v3460 = vmax.f32 %v3220, %v3228
  %v3461 = vmax.f32 %v3221, %v3229
  %v3462 = vmax.f32 %v3222, %v3230
  %v3463 = vmax.f32 %v3223, %v3231
  %v3464 = vmax.f32 %v3224, %v3232
  %v3465 = vmax.f32 %v3225, %v3233
  %v3466 = vmax.f32 %v3226, %v3234
  %v3467 = vmax.f32 %v3227, %v3235
  %v3468 = vmax.f32 %v3228, %v3236
  %v3469 = vmax.f32 %v3229, %v3237
  %v3470 = vmax.f32 %v3230, %v3238
  %v3471 = vmax.f32 %v3231, %v3239
  %v3472 = vmax.f32 %v3232, %v3240
  %v3473 = vmax.f32 %v3233, %v3241
  %v3474 = vmax.f32 %v3234, %v3242
  %v3475 = vmax.f32 %v3235, %v3243
  %v3476 = vmax.f32 %v3236, %v3244
  %v3477 = vmax.f32 %v3237, %v3245
  %v3478 = vmax.f32 %v3238, %v3246
  %v3479 = vmax.f32 %v3239, %v3247
  %v3480 = vmax.f32 %v3240, %v3248
  %v3481 = vmax.f32 %v3241, %v3249
  %v3482 = vmax.f32 %v3242, %v3250
  %v3483 = vmax.f32 %v3243, %v3251
  %v3484 = vmax.f32 %v3244, %v3252
  %v3485 = vmax.f32 %v3245, %v3253
  %v3486 = vmax.f32 %v3246, %v3254
  %v3487 = vmax.f32 %v3247, %v3255
  %v3488 = vmax.f32 %v3248, %v3256
  %v3489 = vmax.f32 %v3249, %v3257
  %v3490 = vmax.f32 %v3250, %v3258
  %v3491 = vmax.f32 %v3251, %v3259
  %v3492 = vmax.f32 %v3252, %v3260
  %v3493 = vmax.f32 %v3253, %v3261
  %v3494 = vmax.f32 %v3254, %v3262
  %v3495 = vmax.f32 %v3255, %v3263
  %v3496 = vmax.f32 %v3256, %v3264
  %v3497 = vmax.f32 %v3257, %v3265
  %v3498 = vmax.f32 %v3258, %v3266
  %v3499 = vmax.f32 %v3259, %v3267
  %v3500 = vmax.f32 %v3260, %v3268
  %v3501 = vmax.f32 %v3261, %v3269
  %v3502 = vmax.f32 %v3262, %v3270
  %v3503 = vmax.f32 %v3263, %v3271
  %v3504 = vmax.f32 %v3264, %v3272
  %v3505 = vmax.f32 %v3265, %v3273
  %v3506 = vmax.f32 %v3266, %v3274
  %v3507 = vmax.f32 %v3267, %v3275
  %v3508 = vmax.f32 %v3268, %v3276
  %v3509 = vmax.f32 %v3269, %v3277
  %v3510 = vmax.f32 %v3270, %v3278
  %v3511 = vmax.f32 %v3271, %v3279
  %v3512 = vmax.f32 %v3272, %v3280
  %v3513 = vmax.f32 %v3273, %v3281
  %v3514 = vmax.f32 %v3274, %v3282
  %v3515 = vmax.f32 %v3275, %v3283
  %v3516 = vmax.f32 %v3276, %v3284
  %v3517 = vmax.f32 %v3277, %v3285
  %v3518 = vmax.f32 %v3278, %v3286
  %v3519 = vmax.f32 %v3279, %v3287
  %v3520 = vmax.f32 %v3280, %v3288
  %v3521 = vmax.f32 %v3281, %v3289
  %v3522 = vmax.f32 %v3282, %v3290
  %v3523 = vmax.f32 %v3283, %v3291
  %v3524 = vmax.f32 %v3284, %v3292
  %v3525 = vmax.f32 %v3285, %v3293
  %v3526 = vmax.f32 %v3286, %v3294
  %v3527 = vmax.f32 %v3287, %v3295
  %v3528 = vmax.f32 %v3288, %v3296
  %v3529 = vmax.f32 %v3289, %v3297
  %v3530 = vmax.f32 %v3290, %v3298
  %v3531 = vmax.f32 %v3291, %v3299
  %v3532 = vmax.f32 %v3292, %v3300
  %v3533 = vmax.f32 %v3293, %v3301
  %v3534 = vmax.f32 %v3294, %v3302
  %v3535 = vmax.f32 %v3295, %v3303
  %v3536 = vmax.f32 %v3296, %v3304
  %v3537 = vmax.f32 %v3297, %v3305
  %v3538 = vmax.f32 %v3298, %v3306
  %v3539 = vmax.f32 %v3299, %v3307
  %v3540 = vmax.f32 %v3300, %v3308
  %v3541 = vmax.f32 %v3301, %v3309
  %v3542 = vmax.f32 %v3302, %v3310
  %v3543 = vmax.f32 %v3303, %v3311
  %v3544 = vmax.f32 %v3304, %v3312
  %v3545 = vmax.f32 %v3305, %v3313
  %v3546 = vmax.f32 %v3306, %v3314
  %v3547 = vmax.f32 %v3307, %v3315
  %v3548 = vmax.f32 %v3308, %v3316
  %v3549 = vmax.f32 %v3309, %v3317
  %v3550 = vmax.f32 %v3310, %v3318
  %v3551 = vmax.f32 %v3311, %v3319
  %v3552 = vmax.f32 %v3312, %v3320
  %v3553 = vmax.f32 %v3313, %v3321
  %v3554 = vmax.f32 %v3314, %v3322
  %v3555 = vmax.f32 %v3315, %v3323
  %v3556 = vmax.f32 %v3316, %v3324
  %v3557 = vmax.f32 %v3317, %v3325
  %v3558 = vmax.f32 %v3318, %v3326
  %v3559 = vmax.f32 %v3319, %v3327
  %v3560 = vmax.f32 %v3320, %v3328
  %v3561 = vmax.f32 %v3321, %v3329
  %v3562 = vmax.f32 %v3322, %v3330
  %v3563 = vmax.f32 %v3323, %v3331
  %v3564 = vmax.f32 %v3324, %v3332
  %v3565 = vmax.f32 %v3325, %v3333
  %v3566 = vmax.f32 %v3326, %v3334
  %v3567 = vmax.f32 %v3327, %v3335
  %v3568 = vmax.f32 %v3328, %v3336
  %v3569 = vmax.f32 %v3329, %v3337
  %v3570 = vmax.f32 %v3330, %v3338
  %v3571 = vmax.f32 %v3331, %v3339
  %v3572 = vmax.f32 %v3332, %v3340
  %v3573 = vmax.f32 %v3333, %v3341
  %v3574 = vmax.f32 %v3334, %v3342
  %v3575 = vmax.f32 %v3335, %v3343
  %v3576 = vmax.f32 %v3336, %v3344
  %v3577 = vmax.f32 %v3337, %v3345
  %v3578 = vmax.f32 %v3338, %v3346
  %v3579 = vmax.f32 %v3339, %v3347
  %v3580 = vmax.f32 %v3340, %v3348
  %v3581 = vmax.f32 %v3341, %v3349
  %v3582 = vmax.f32 %v3342, %v3350
  %v3583 = vmax.f32 %v3343, %v3351
  %v3584 = vmax.f32 %v3344, %v3352
  %v3585 = vmax.f32 %v3345, %v3353
  %v3586 = vmax.f32 %v3346, %v3354
  %v3587 = vmax.f32 %v3347, %v3355
  %v3588 = vmax.f32 %v3348, %v3356
  %v3589 = vmax.f32 %v3349, %v3357
  %v3590 = vmax.f32 %v3350, %v3358
  %v3591 = vmax.f32 %v3351, %v3359
  %v3592 = vmax.f32 %v3352, %v3360
  %v3593 = vmax.f32 %v3353, %v3361
  %v3594 = vmax.f32 %v3354, %v3362
  %v3595 = vmax.f32 %v3355, %v3363
  %v3596 = vmax.f32 %v3356, %v3364
  %v3597 = vmax.f32 %v3357, %v3365
  %v3598 = vmax.f32 %v3358, %v3366
  %v3599 = vmax.f32 %v3359, %v3367
  %v3600 = vmax.f32 %v3360, %v3368
  %v3601 = vmax.f32 %v3361, %v3369
  %v3602 = vmax.f32 %v3362, %v3370
  %v3603 = vmax.f32 %v3363, %v3371
  %v3604 = vmax.f32 %v3364, %v3372
  %v3605 = vmax.f32 %v3365, %v3373
  %v3606 = vmax.f32 %v3366, %v3374
  %v3607 = vmax.f32 %v3367, %v3375
  %v3608 = vmax.f32 %v3368, %v3376
  %v3609 = vmax.f32 %v3369, %v3377
  %v3610 = vmax.f32 %v3370, %v3378
  %v3611 = vmax.f32 %v3371, %v3379
  %v3612 = vmax.f32 %v3372, %v3380
  %v3613 = vmax.f32 %v3373, %v3381
  %v3614 = vmax.f32 %v3374, %v3382
  %v3615 = vmax.f32 %v3375, %v3383
  %v3616 = vmax.f32 %v3376, %v3384
  %v3617 = vmax.f32 %v3377, %v3385
  %v3618 = vmax.f32 %v3378, %v3386
  %v3619 = vmax.f32 %v3379, %v3387
  %v3620 = vmax.f32 %v3380, %v3388
  %v3621 = vmax.f32 %v3381, %v3389
  %v3622 = vmax.f32 %v3382, %v3390
  %v3623 = vmax.f32 %v3383, %v3391
  %v3624 = vmax.f32 %v3384, %v3392
  %v3625 = vmax.f32 %v3385, %v3393
  %v3626 = vmax.f32 %v3386, %v3394
  %v3627 = vmax.f32 %v3387, %v3395
  %v3628 = vmax.f32 %v3388, %v3396
  %v3629 = vmax.f32 %v3389, %v3397
  %v3630 = vmax.f32 %v3390, %v3398
  %v3631 = vmax.f32 %v3391, %v3399
  %v3632 = vmax.f32 %v3392, %v3400
  %v3633 = vmax.f32 %v3393, %v3401
  %v3634 = vmax.f32 %v3394, %v3402
  %v3635 = vmax.f32 %v3395, %v3403
  %v3636 = vmax.f32 %v3396, %v3404
  %v3637 = vmax.f32 %v3397, %v3405
  %v3638 = vmax.f32 %v3398, %v3406
  %v3639 = vmax.f32 %v3399, %v3407
  %v3640 = vmax.f32 %v3400, %v3408
  %v3641 = vmax.f32 %v3401, %v3409
  %v3642 = vmax.f32 %v3402, %v3410
  %v3643 = vmax.f32 %v3403, %v3411
  %v3644 = vmax.f32 %v3404, %v3412
  %v3645 = vmax.f32 %v3405, %v3413
  %v3646 = vmax.f32 %v3406, %v3414
  %v3647 = vmax.f32 %v3407, %v3415
  %v3648 = vmax.f32 %v3408, %v3416
  %v3649 = vmax.f32 %v3409, %v3417
  %v3650 = vmax.f32 %v3410, %v3418
  %v3651 = vmax.f32 %v3411, %v3419
  %v3652 = vmax.f32 %v3412, %v3420
  %v3653 = vmax.f32 %v3413, %v3421
  %v3654 = vmax.f32 %v3414, %v3422
  %v3655 = vmax.f32 %v3415, %v3423
  %v3656 = vmax.f32 %v3416, %v3424
  %v3657 = vmax.f32 %v3417, %v3425
  %v3658 = vmax.f32 %v3418, %v3426
  %v3659 = vmax.f32 %v3419, %v3427
  %v3660 = vmax.f32 %v3420, %v3428
  %v3661 = vmax.f32 %v3421, %v3429
  %v3662 = vmax.f32 %v3422, %v3430
  %v3663 = vmax.f32 %v3423, %v3431
  %v3664 = vmax.f32 %v3424, %v3432
  %v3665 = vmax.f32 %v3425, %v3433
  %v3666 = vmax.f32 %v3426, %v3434
  %v3667 = vmax.f32 %v3427, %v3435
  %v3668 = vmax.f32 %v3428, %v3436
  %v3669 = vmax.f32 %v3429, %v3437
  %v3670 = vmax.f32 %v3430, %v3438
  %v3671 = vmax.f32 %v3431, %v3439
  %v3672 = vmax.f32 %v3432, %v3440
  %v3673 = vmax.f32 %v3433, %v3441
  %v3674 = vmax.f32 %v3434, %v3442
  %v3675 = vmax.f32 %v3435, %v3443
  %v3676 = vmax.f32 %v3436, %v3444
  %v3677 = vmax.f32 %v3437, %v3445
  %v3678 = vmax.f32 %v3438, %v3446
  %v3679 = vmax.f32 %v3439, %v3447
  %v3680 = vmax.f32 %v3440, %v3448
  %v3681 = vmax.f32 %v3441, %v3449
  %v3682 = vmax.f32 %v3442, %v3450
  %v3683 = vmax.f32 %v3443, %v3451
  %v3684 = vmax.f32 %v3444, %v3452
  %v3685 = vmax.f32 %v3445, %v3453
  %v3686 = vmax.f32 %v3446, %v3454
  %v3687 = vmax.f32 %v3447, %v3215
  %v3688 = vmax.f32 %v3448, %v3216
  %v3689 = vmax.f32 %v3449, %v3217
  %v3690 = vmax.f32 %v3450, %v3218
  %v3691 = vmax.f32 %v3451, %v3219
  %v3692 = vmax.f32 %v3452, %v3220
  %v3693 = vmax.f32 %v3453, %v3221
  %v3694 = vmax.f32 %v3454, %v3222
  %v3695 = vld [vmem:[%s2] sm:$0x3]
  %v3697 = vlaneseq
  %v3698 = vshrl.u32 %v3697, 7
  %v3699 = vsub.s32 0, %v3698
  %v3700 = vrot.slane %v3695, %v3699
  %v3701 = vlaneseq
  %v3702 = vshrl.u32 %v3701, 7
  %v3703 = vsub.s32 1, %v3702
  %v3704 = vrot.slane %v3695, %v3703
  %v3707 = vadd.f32 %v3455, %v3700
  %v3708 = vadd.f32 %v3456, %v3704
  %v3709 = vadd.f32 %v3457, %v3700
  %v3710 = vadd.f32 %v3458, %v3704
  %v3711 = vadd.f32 %v3459, %v3700
  %v3712 = vadd.f32 %v3460, %v3704
  %v3713 = vadd.f32 %v3461, %v3700
  %v3714 = vadd.f32 %v3462, %v3704
  %v3715 = vadd.f32 %v3463, %v3700
  %v3716 = vadd.f32 %v3464, %v3704
  %v3717 = vadd.f32 %v3465, %v3700
  %v3718 = vadd.f32 %v3466, %v3704
  %v3719 = vadd.f32 %v3467, %v3700
  %v3720 = vadd.f32 %v3468, %v3704
  %v3721 = vadd.f32 %v3469, %v3700
  %v3722 = vadd.f32 %v3470, %v3704
  %v3723 = vadd.f32 %v3471, %v3700
  %v3724 = vadd.f32 %v3472, %v3704
  %v3725 = vadd.f32 %v3473, %v3700
  %v3726 = vadd.f32 %v3474, %v3704
  %v3727 = vadd.f32 %v3475, %v3700
  %v3728 = vadd.f32 %v3476, %v3704
  %v3729 = vadd.f32 %v3477, %v3700
  %v3730 = vadd.f32 %v3478, %v3704
  %v3731 = vadd.f32 %v3479, %v3700
  %v3732 = vadd.f32 %v3480, %v3704
  %v3733 = vadd.f32 %v3481, %v3700
  %v3734 = vadd.f32 %v3482, %v3704
  %v3735 = vadd.f32 %v3483, %v3700
  %v3736 = vadd.f32 %v3484, %v3704
  %v3737 = vadd.f32 %v3485, %v3700
  %v3738 = vadd.f32 %v3486, %v3704
  %v3739 = vadd.f32 %v3487, %v3700
  %v3740 = vadd.f32 %v3488, %v3704
  %v3741 = vadd.f32 %v3489, %v3700
  %v3742 = vadd.f32 %v3490, %v3704
  %v3743 = vadd.f32 %v3491, %v3700
  %v3744 = vadd.f32 %v3492, %v3704
  %v3745 = vadd.f32 %v3493, %v3700
  %v3746 = vadd.f32 %v3494, %v3704
  %v3747 = vadd.f32 %v3495, %v3700
  %v3748 = vadd.f32 %v3496, %v3704
  %v3749 = vadd.f32 %v3497, %v3700
  %v3750 = vadd.f32 %v3498, %v3704
  %v3751 = vadd.f32 %v3499, %v3700
  %v3752 = vadd.f32 %v3500, %v3704
  %v3753 = vadd.f32 %v3501, %v3700
  %v3754 = vadd.f32 %v3502, %v3704
  %v3755 = vadd.f32 %v3503, %v3700
  %v3756 = vadd.f32 %v3504, %v3704
  %v3757 = vadd.f32 %v3505, %v3700
  %v3758 = vadd.f32 %v3506, %v3704
  %v3759 = vadd.f32 %v3507, %v3700
  %v3760 = vadd.f32 %v3508, %v3704
  %v3761 = vadd.f32 %v3509, %v3700
  %v3762 = vadd.f32 %v3510, %v3704
  %v3763 = vadd.f32 %v3511, %v3700
  %v3764 = vadd.f32 %v3512, %v3704
  %v3765 = vadd.f32 %v3513, %v3700
  %v3766 = vadd.f32 %v3514, %v3704
  %v3767 = vadd.f32 %v3515, %v3700
  %v3768 = vadd.f32 %v3516, %v3704
  %v3769 = vadd.f32 %v3517, %v3700
  %v3770 = vadd.f32 %v3518, %v3704
  %v3771 = vadd.f32 %v3519, %v3700
  %v3772 = vadd.f32 %v3520, %v3704
  %v3773 = vadd.f32 %v3521, %v3700
  %v3774 = vadd.f32 %v3522, %v3704
  %v3775 = vadd.f32 %v3523, %v3700
  %v3776 = vadd.f32 %v3524, %v3704
  %v3777 = vadd.f32 %v3525, %v3700
  %v3778 = vadd.f32 %v3526, %v3704
  %v3779 = vadd.f32 %v3527, %v3700
  %v3780 = vadd.f32 %v3528, %v3704
  %v3781 = vadd.f32 %v3529, %v3700
  %v3782 = vadd.f32 %v3530, %v3704
  %v3783 = vadd.f32 %v3531, %v3700
  %v3784 = vadd.f32 %v3532, %v3704
  %v3785 = vadd.f32 %v3533, %v3700
  %v3786 = vadd.f32 %v3534, %v3704
  %v3787 = vadd.f32 %v3535, %v3700
  %v3788 = vadd.f32 %v3536, %v3704
  %v3789 = vadd.f32 %v3537, %v3700
  %v3790 = vadd.f32 %v3538, %v3704
  %v3791 = vadd.f32 %v3539, %v3700
  %v3792 = vadd.f32 %v3540, %v3704
  %v3793 = vadd.f32 %v3541, %v3700
  %v3794 = vadd.f32 %v3542, %v3704
  %v3795 = vadd.f32 %v3543, %v3700
  %v3796 = vadd.f32 %v3544, %v3704
  %v3797 = vadd.f32 %v3545, %v3700
  %v3798 = vadd.f32 %v3546, %v3704
  %v3799 = vadd.f32 %v3547, %v3700
  %v3800 = vadd.f32 %v3548, %v3704
  %v3801 = vadd.f32 %v3549, %v3700
  %v3802 = vadd.f32 %v3550, %v3704
  %v3803 = vadd.f32 %v3551, %v3700
  %v3804 = vadd.f32 %v3552, %v3704
  %v3805 = vadd.f32 %v3553, %v3700
  %v3806 = vadd.f32 %v3554, %v3704
  %v3807 = vadd.f32 %v3555, %v3700
  %v3808 = vadd.f32 %v3556, %v3704
  %v3809 = vadd.f32 %v3557, %v3700
  %v3810 = vadd.f32 %v3558, %v3704
  %v3811 = vadd.f32 %v3559, %v3700
  %v3812 = vadd.f32 %v3560, %v3704
  %v3813 = vadd.f32 %v3561, %v3700
  %v3814 = vadd.f32 %v3562, %v3704
  %v3815 = vadd.f32 %v3563, %v3700
  %v3816 = vadd.f32 %v3564, %v3704
  %v3817 = vadd.f32 %v3565, %v3700
  %v3818 = vadd.f32 %v3566, %v3704
  %v3819 = vadd.f32 %v3567, %v3700
  %v3820 = vadd.f32 %v3568, %v3704
  %v3821 = vadd.f32 %v3569, %v3700
  %v3822 = vadd.f32 %v3570, %v3704
  %v3823 = vadd.f32 %v3571, %v3700
  %v3824 = vadd.f32 %v3572, %v3704
  %v3825 = vadd.f32 %v3573, %v3700
  %v3826 = vadd.f32 %v3574, %v3704
  %v3827 = vadd.f32 %v3575, %v3700
  %v3828 = vadd.f32 %v3576, %v3704
  %v3829 = vadd.f32 %v3577, %v3700
  %v3830 = vadd.f32 %v3578, %v3704
  %v3831 = vadd.f32 %v3579, %v3700
  %v3832 = vadd.f32 %v3580, %v3704
  %v3833 = vadd.f32 %v3581, %v3700
  %v3834 = vadd.f32 %v3582, %v3704
  %v3835 = vadd.f32 %v3583, %v3700
  %v3836 = vadd.f32 %v3584, %v3704
  %v3837 = vadd.f32 %v3585, %v3700
  %v3838 = vadd.f32 %v3586, %v3704
  %v3839 = vadd.f32 %v3587, %v3700
  %v3840 = vadd.f32 %v3588, %v3704
  %v3841 = vadd.f32 %v3589, %v3700
  %v3842 = vadd.f32 %v3590, %v3704
  %v3843 = vadd.f32 %v3591, %v3700
  %v3844 = vadd.f32 %v3592, %v3704
  %v3845 = vadd.f32 %v3593, %v3700
  %v3846 = vadd.f32 %v3594, %v3704
  %v3847 = vadd.f32 %v3595, %v3700
  %v3848 = vadd.f32 %v3596, %v3704
  %v3849 = vadd.f32 %v3597, %v3700
  %v3850 = vadd.f32 %v3598, %v3704
  %v3851 = vadd.f32 %v3599, %v3700
  %v3852 = vadd.f32 %v3600, %v3704
  %v3853 = vadd.f32 %v3601, %v3700
  %v3854 = vadd.f32 %v3602, %v3704
  %v3855 = vadd.f32 %v3603, %v3700
  %v3856 = vadd.f32 %v3604, %v3704
  %v3857 = vadd.f32 %v3605, %v3700
  %v3858 = vadd.f32 %v3606, %v3704
  %v3859 = vadd.f32 %v3607, %v3700
  %v3860 = vadd.f32 %v3608, %v3704
  %v3861 = vadd.f32 %v3609, %v3700
  %v3862 = vadd.f32 %v3610, %v3704
  %v3863 = vadd.f32 %v3611, %v3700
  %v3864 = vadd.f32 %v3612, %v3704
  %v3865 = vadd.f32 %v3613, %v3700
  %v3866 = vadd.f32 %v3614, %v3704
  %v3867 = vadd.f32 %v3615, %v3700
  %v3868 = vadd.f32 %v3616, %v3704
  %v3869 = vadd.f32 %v3617, %v3700
  %v3870 = vadd.f32 %v3618, %v3704
  %v3871 = vadd.f32 %v3619, %v3700
  %v3872 = vadd.f32 %v3620, %v3704
  %v3873 = vadd.f32 %v3621, %v3700
  %v3874 = vadd.f32 %v3622, %v3704
  %v3875 = vadd.f32 %v3623, %v3700
  %v3876 = vadd.f32 %v3624, %v3704
  %v3877 = vadd.f32 %v3625, %v3700
  %v3878 = vadd.f32 %v3626, %v3704
  %v3879 = vadd.f32 %v3627, %v3700
  %v3880 = vadd.f32 %v3628, %v3704
  %v3881 = vadd.f32 %v3629, %v3700
  %v3882 = vadd.f32 %v3630, %v3704
  %v3883 = vadd.f32 %v3631, %v3700
  %v3884 = vadd.f32 %v3632, %v3704
  %v3885 = vadd.f32 %v3633, %v3700
  %v3886 = vadd.f32 %v3634, %v3704
  %v3887 = vadd.f32 %v3635, %v3700
  %v3888 = vadd.f32 %v3636, %v3704
  %v3889 = vadd.f32 %v3637, %v3700
  %v3890 = vadd.f32 %v3638, %v3704
  %v3891 = vadd.f32 %v3639, %v3700
  %v3892 = vadd.f32 %v3640, %v3704
  %v3893 = vadd.f32 %v3641, %v3700
  %v3894 = vadd.f32 %v3642, %v3704
  %v3895 = vadd.f32 %v3643, %v3700
  %v3896 = vadd.f32 %v3644, %v3704
  %v3897 = vadd.f32 %v3645, %v3700
  %v3898 = vadd.f32 %v3646, %v3704
  %v3899 = vadd.f32 %v3647, %v3700
  %v3900 = vadd.f32 %v3648, %v3704
  %v3901 = vadd.f32 %v3649, %v3700
  %v3902 = vadd.f32 %v3650, %v3704
  %v3903 = vadd.f32 %v3651, %v3700
  %v3904 = vadd.f32 %v3652, %v3704
  %v3905 = vadd.f32 %v3653, %v3700
  %v3906 = vadd.f32 %v3654, %v3704
  %v3907 = vadd.f32 %v3655, %v3700
  %v3908 = vadd.f32 %v3656, %v3704
  %v3909 = vadd.f32 %v3657, %v3700
  %v3910 = vadd.f32 %v3658, %v3704
  %v3911 = vadd.f32 %v3659, %v3700
  %v3912 = vadd.f32 %v3660, %v3704
  %v3913 = vadd.f32 %v3661, %v3700
  %v3914 = vadd.f32 %v3662, %v3704
  %v3915 = vadd.f32 %v3663, %v3700
  %v3916 = vadd.f32 %v3664, %v3704
  %v3917 = vadd.f32 %v3665, %v3700
  %v3918 = vadd.f32 %v3666, %v3704
  %v3919 = vadd.f32 %v3667, %v3700
  %v3920 = vadd.f32 %v3668, %v3704
  %v3921 = vadd.f32 %v3669, %v3700
  %v3922 = vadd.f32 %v3670, %v3704
  %v3923 = vadd.f32 %v3671, %v3700
  %v3924 = vadd.f32 %v3672, %v3704
  %v3925 = vadd.f32 %v3673, %v3700
  %v3926 = vadd.f32 %v3674, %v3704
  %v3927 = vadd.f32 %v3675, %v3700
  %v3928 = vadd.f32 %v3676, %v3704
  %v3929 = vadd.f32 %v3677, %v3700
  %v3930 = vadd.f32 %v3678, %v3704
  %v3931 = vadd.f32 %v3679, %v3700
  %v3932 = vadd.f32 %v3680, %v3704
  %v3933 = vadd.f32 %v3681, %v3700
  %v3934 = vadd.f32 %v3682, %v3704
  %v3935 = vadd.f32 %v3683, %v3700
  %v3936 = vadd.f32 %v3684, %v3704
  %v3937 = vadd.f32 %v3685, %v3700
  %v3938 = vadd.f32 %v3686, %v3704
  %v3939 = vadd.f32 %v3687, %v3700
  %v3940 = vadd.f32 %v3688, %v3704
  %v3941 = vadd.f32 %v3689, %v3700
  %v3942 = vadd.f32 %v3690, %v3704
  %v3943 = vadd.f32 %v3691, %v3700
  %v3944 = vadd.f32 %v3692, %v3704
  %v3945 = vadd.f32 %v3693, %v3700
  %v3946 = vadd.f32 %v3694, %v3704
  %v3947 = vmax.f32 %v3707, 0.0
  %v3948 = vmax.f32 %v3708, 0.0
  %v3949 = vmax.f32 %v3709, 0.0
  %v3950 = vmax.f32 %v3710, 0.0
  %v3951 = vmax.f32 %v3711, 0.0
  %v3952 = vmax.f32 %v3712, 0.0
  %v3953 = vmax.f32 %v3713, 0.0
  %v3954 = vmax.f32 %v3714, 0.0
  %v3955 = vmax.f32 %v3715, 0.0
  %v3956 = vmax.f32 %v3716, 0.0
  %v3957 = vmax.f32 %v3717, 0.0
  %v3958 = vmax.f32 %v3718, 0.0
  %v3959 = vmax.f32 %v3719, 0.0
  %v3960 = vmax.f32 %v3720, 0.0
  %v3961 = vmax.f32 %v3721, 0.0
  %v3962 = vmax.f32 %v3722, 0.0
  %v3963 = vmax.f32 %v3723, 0.0
  %v3964 = vmax.f32 %v3724, 0.0
  %v3965 = vmax.f32 %v3725, 0.0
  %v3966 = vmax.f32 %v3726, 0.0
  %v3967 = vmax.f32 %v3727, 0.0
  %v3968 = vmax.f32 %v3728, 0.0
  %v3969 = vmax.f32 %v3729, 0.0
  %v3970 = vmax.f32 %v3730, 0.0
  %v3971 = vmax.f32 %v3731, 0.0
  %v3972 = vmax.f32 %v3732, 0.0
  %v3973 = vmax.f32 %v3733, 0.0
  %v3974 = vmax.f32 %v3734, 0.0
  %v3975 = vmax.f32 %v3735, 0.0
  %v3976 = vmax.f32 %v3736, 0.0
  %v3977 = vmax.f32 %v3737, 0.0
  %v3978 = vmax.f32 %v3738, 0.0
  %v3979 = vmax.f32 %v3739, 0.0
  %v3980 = vmax.f32 %v3740, 0.0
  %v3981 = vmax.f32 %v3741, 0.0
  %v3982 = vmax.f32 %v3742, 0.0
  %v3983 = vmax.f32 %v3743, 0.0
  %v3984 = vmax.f32 %v3744, 0.0
  %v3985 = vmax.f32 %v3745, 0.0
  %v3986 = vmax.f32 %v3746, 0.0
  %v3987 = vmax.f32 %v3747, 0.0
  %v3988 = vmax.f32 %v3748, 0.0
  %v3989 = vmax.f32 %v3749, 0.0
  %v3990 = vmax.f32 %v3750, 0.0
  %v3991 = vmax.f32 %v3751, 0.0
  %v3992 = vmax.f32 %v3752, 0.0
  %v3993 = vmax.f32 %v3753, 0.0
  %v3994 = vmax.f32 %v3754, 0.0
  %v3995 = vmax.f32 %v3755, 0.0
  %v3996 = vmax.f32 %v3756, 0.0
  %v3997 = vmax.f32 %v3757, 0.0
  %v3998 = vmax.f32 %v3758, 0.0
  %v3999 = vmax.f32 %v3759, 0.0
  %v4000 = vmax.f32 %v3760, 0.0
  %v4001 = vmax.f32 %v3761, 0.0
  %v4002 = vmax.f32 %v3762, 0.0
  %v4003 = vmax.f32 %v3763, 0.0
  %v4004 = vmax.f32 %v3764, 0.0
  %v4005 = vmax.f32 %v3765, 0.0
  %v4006 = vmax.f32 %v3766, 0.0
  %v4007 = vmax.f32 %v3767, 0.0
  %v4008 = vmax.f32 %v3768, 0.0
  %v4009 = vmax.f32 %v3769, 0.0
  %v4010 = vmax.f32 %v3770, 0.0
  %v4011 = vmax.f32 %v3771, 0.0
  %v4012 = vmax.f32 %v3772, 0.0
  %v4013 = vmax.f32 %v3773, 0.0
  %v4014 = vmax.f32 %v3774, 0.0
  %v4015 = vmax.f32 %v3775, 0.0
  %v4016 = vmax.f32 %v3776, 0.0
  %v4017 = vmax.f32 %v3777, 0.0
  %v4018 = vmax.f32 %v3778, 0.0
  %v4019 = vmax.f32 %v3779, 0.0
  %v4020 = vmax.f32 %v3780, 0.0
  %v4021 = vmax.f32 %v3781, 0.0
  %v4022 = vmax.f32 %v3782, 0.0
  %v4023 = vmax.f32 %v3783, 0.0
  %v4024 = vmax.f32 %v3784, 0.0
  %v4025 = vmax.f32 %v3785, 0.0
  %v4026 = vmax.f32 %v3786, 0.0
  %v4027 = vmax.f32 %v3787, 0.0
  %v4028 = vmax.f32 %v3788, 0.0
  %v4029 = vmax.f32 %v3789, 0.0
  %v4030 = vmax.f32 %v3790, 0.0
  %v4031 = vmax.f32 %v3791, 0.0
  %v4032 = vmax.f32 %v3792, 0.0
  %v4033 = vmax.f32 %v3793, 0.0
  %v4034 = vmax.f32 %v3794, 0.0
  %v4035 = vmax.f32 %v3795, 0.0
  %v4036 = vmax.f32 %v3796, 0.0
  %v4037 = vmax.f32 %v3797, 0.0
  %v4038 = vmax.f32 %v3798, 0.0
  %v4039 = vmax.f32 %v3799, 0.0
  %v4040 = vmax.f32 %v3800, 0.0
  %v4041 = vmax.f32 %v3801, 0.0
  %v4042 = vmax.f32 %v3802, 0.0
  %v4043 = vmax.f32 %v3803, 0.0
  %v4044 = vmax.f32 %v3804, 0.0
  %v4045 = vmax.f32 %v3805, 0.0
  %v4046 = vmax.f32 %v3806, 0.0
  %v4047 = vmax.f32 %v3807, 0.0
  %v4048 = vmax.f32 %v3808, 0.0
  %v4049 = vmax.f32 %v3809, 0.0
  %v4050 = vmax.f32 %v3810, 0.0
  %v4051 = vmax.f32 %v3811, 0.0
  %v4052 = vmax.f32 %v3812, 0.0
  %v4053 = vmax.f32 %v3813, 0.0
  %v4054 = vmax.f32 %v3814, 0.0
  %v4055 = vmax.f32 %v3815, 0.0
  %v4056 = vmax.f32 %v3816, 0.0
  %v4057 = vmax.f32 %v3817, 0.0
  %v4058 = vmax.f32 %v3818, 0.0
  %v4059 = vmax.f32 %v3819, 0.0
  %v4060 = vmax.f32 %v3820, 0.0
  %v4061 = vmax.f32 %v3821, 0.0
  %v4062 = vmax.f32 %v3822, 0.0
  %v4063 = vmax.f32 %v3823, 0.0
  %v4064 = vmax.f32 %v3824, 0.0
  %v4065 = vmax.f32 %v3825, 0.0
  %v4066 = vmax.f32 %v3826, 0.0
  %v4067 = vmax.f32 %v3827, 0.0
  %v4068 = vmax.f32 %v3828, 0.0
  %v4069 = vmax.f32 %v3829, 0.0
  %v4070 = vmax.f32 %v3830, 0.0
  %v4071 = vmax.f32 %v3831, 0.0
  %v4072 = vmax.f32 %v3832, 0.0
  %v4073 = vmax.f32 %v3833, 0.0
  %v4074 = vmax.f32 %v3834, 0.0
  %v4075 = vmax.f32 %v3835, 0.0
  %v4076 = vmax.f32 %v3836, 0.0
  %v4077 = vmax.f32 %v3837, 0.0
  %v4078 = vmax.f32 %v3838, 0.0
  %v4079 = vmax.f32 %v3839, 0.0
  %v4080 = vmax.f32 %v3840, 0.0
  %v4081 = vmax.f32 %v3841, 0.0
  %v4082 = vmax.f32 %v3842, 0.0
  %v4083 = vmax.f32 %v3843, 0.0
  %v4084 = vmax.f32 %v3844, 0.0
  %v4085 = vmax.f32 %v3845, 0.0
  %v4086 = vmax.f32 %v3846, 0.0
  %v4087 = vmax.f32 %v3847, 0.0
  %v4088 = vmax.f32 %v3848, 0.0
  %v4089 = vmax.f32 %v3849, 0.0
  %v4090 = vmax.f32 %v3850, 0.0
  %v4091 = vmax.f32 %v3851, 0.0
  %v4092 = vmax.f32 %v3852, 0.0
  %v4093 = vmax.f32 %v3853, 0.0
  %v4094 = vmax.f32 %v3854, 0.0
  %v4095 = vmax.f32 %v3855, 0.0
  %v4096 = vmax.f32 %v3856, 0.0
  %v4097 = vmax.f32 %v3857, 0.0
  %v4098 = vmax.f32 %v3858, 0.0
  %v4099 = vmax.f32 %v3859, 0.0
  %v4100 = vmax.f32 %v3860, 0.0
  %v4101 = vmax.f32 %v3861, 0.0
  %v4102 = vmax.f32 %v3862, 0.0
  %v4103 = vmax.f32 %v3863, 0.0
  %v4104 = vmax.f32 %v3864, 0.0
  %v4105 = vmax.f32 %v3865, 0.0
  %v4106 = vmax.f32 %v3866, 0.0
  %v4107 = vmax.f32 %v3867, 0.0
  %v4108 = vmax.f32 %v3868, 0.0
  %v4109 = vmax.f32 %v3869, 0.0
  %v4110 = vmax.f32 %v3870, 0.0
  %v4111 = vmax.f32 %v3871, 0.0
  %v4112 = vmax.f32 %v3872, 0.0
  %v4113 = vmax.f32 %v3873, 0.0
  %v4114 = vmax.f32 %v3874, 0.0
  %v4115 = vmax.f32 %v3875, 0.0
  %v4116 = vmax.f32 %v3876, 0.0
  %v4117 = vmax.f32 %v3877, 0.0
  %v4118 = vmax.f32 %v3878, 0.0
  %v4119 = vmax.f32 %v3879, 0.0
  %v4120 = vmax.f32 %v3880, 0.0
  %v4121 = vmax.f32 %v3881, 0.0
  %v4122 = vmax.f32 %v3882, 0.0
  %v4123 = vmax.f32 %v3883, 0.0
  %v4124 = vmax.f32 %v3884, 0.0
  %v4125 = vmax.f32 %v3885, 0.0
  %v4126 = vmax.f32 %v3886, 0.0
  %v4127 = vmax.f32 %v3887, 0.0
  %v4128 = vmax.f32 %v3888, 0.0
  %v4129 = vmax.f32 %v3889, 0.0
  %v4130 = vmax.f32 %v3890, 0.0
  %v4131 = vmax.f32 %v3891, 0.0
  %v4132 = vmax.f32 %v3892, 0.0
  %v4133 = vmax.f32 %v3893, 0.0
  %v4134 = vmax.f32 %v3894, 0.0
  %v4135 = vmax.f32 %v3895, 0.0
  %v4136 = vmax.f32 %v3896, 0.0
  %v4137 = vmax.f32 %v3897, 0.0
  %v4138 = vmax.f32 %v3898, 0.0
  %v4139 = vmax.f32 %v3899, 0.0
  %v4140 = vmax.f32 %v3900, 0.0
  %v4141 = vmax.f32 %v3901, 0.0
  %v4142 = vmax.f32 %v3902, 0.0
  %v4143 = vmax.f32 %v3903, 0.0
  %v4144 = vmax.f32 %v3904, 0.0
  %v4145 = vmax.f32 %v3905, 0.0
  %v4146 = vmax.f32 %v3906, 0.0
  %v4147 = vmax.f32 %v3907, 0.0
  %v4148 = vmax.f32 %v3908, 0.0
  %v4149 = vmax.f32 %v3909, 0.0
  %v4150 = vmax.f32 %v3910, 0.0
  %v4151 = vmax.f32 %v3911, 0.0
  %v4152 = vmax.f32 %v3912, 0.0
  %v4153 = vmax.f32 %v3913, 0.0
  %v4154 = vmax.f32 %v3914, 0.0
  %v4155 = vmax.f32 %v3915, 0.0
  %v4156 = vmax.f32 %v3916, 0.0
  %v4157 = vmax.f32 %v3917, 0.0
  %v4158 = vmax.f32 %v3918, 0.0
  %v4159 = vmax.f32 %v3919, 0.0
  %v4160 = vmax.f32 %v3920, 0.0
  %v4161 = vmax.f32 %v3921, 0.0
  %v4162 = vmax.f32 %v3922, 0.0
  %v4163 = vmax.f32 %v3923, 0.0
  %v4164 = vmax.f32 %v3924, 0.0
  %v4165 = vmax.f32 %v3925, 0.0
  %v4166 = vmax.f32 %v3926, 0.0
  %v4167 = vmax.f32 %v3927, 0.0
  %v4168 = vmax.f32 %v3928, 0.0
  %v4169 = vmax.f32 %v3929, 0.0
  %v4170 = vmax.f32 %v3930, 0.0
  %v4171 = vmax.f32 %v3931, 0.0
  %v4172 = vmax.f32 %v3932, 0.0
  %v4173 = vmax.f32 %v3933, 0.0
  %v4174 = vmax.f32 %v3934, 0.0
  %v4175 = vmax.f32 %v3935, 0.0
  %v4176 = vmax.f32 %v3936, 0.0
  %v4177 = vmax.f32 %v3937, 0.0
  %v4178 = vmax.f32 %v3938, 0.0
  %v4179 = vmax.f32 %v3939, 0.0
  %v4180 = vmax.f32 %v3940, 0.0
  %v4181 = vmax.f32 %v3941, 0.0
  %v4182 = vmax.f32 %v3942, 0.0
  %v4183 = vmax.f32 %v3943, 0.0
  %v4184 = vmax.f32 %v3944, 0.0
  %v4185 = vmax.f32 %v3945, 0.0
  %v4186 = vmax.f32 %v3946, 0.0
  %4427 = vrot.lane.b32.xlu0 %v3963, 72
  %v4428 = vpop.permute.xlu0 %4427
  %4429 = vrot.lane.b32.xlu0 %v3964, 72
  %v4430 = vpop.permute.xlu0 %4429
  %4431 = vrot.lane.b32.xlu0 %v3965, 72
  %v4432 = vpop.permute.xlu0 %4431
  %4433 = vrot.lane.b32.xlu0 %v3966, 72
  %v4434 = vpop.permute.xlu0 %4433
  %4435 = vrot.lane.b32.xlu0 %v3967, 72
  %v4436 = vpop.permute.xlu0 %4435
  %4437 = vrot.lane.b32.xlu0 %v3968, 72
  %v4438 = vpop.permute.xlu0 %4437
  %4439 = vrot.lane.b32.xlu0 %v3969, 72
  %v4440 = vpop.permute.xlu0 %4439
  %4441 = vrot.lane.b32.xlu0 %v3970, 72
  %v4442 = vpop.permute.xlu0 %4441
  %4443 = vrot.lane.b32.xlu0 %v3971, 72
  %v4444 = vpop.permute.xlu0 %4443
  %4445 = vrot.lane.b32.xlu0 %v3972, 72
  %v4446 = vpop.permute.xlu0 %4445
  %4447 = vrot.lane.b32.xlu0 %v3973, 72
  %v4448 = vpop.permute.xlu0 %4447
  %4449 = vrot.lane.b32.xlu0 %v3974, 72
  %v4450 = vpop.permute.xlu0 %4449
  %4451 = vrot.lane.b32.xlu0 %v3975, 72
  %v4452 = vpop.permute.xlu0 %4451
  %4453 = vrot.lane.b32.xlu0 %v3976, 72
  %v4454 = vpop.permute.xlu0 %4453
  %4455 = vrot.lane.b32.xlu0 %v3977, 72
  %v4456 = vpop.permute.xlu0 %4455
  %4457 = vrot.lane.b32.xlu0 %v3978, 72
  %v4458 = vpop.permute.xlu0 %4457
  %4459 = vrot.lane.b32.xlu0 %v3979, 72
  %v4460 = vpop.permute.xlu0 %4459
  %4461 = vrot.lane.b32.xlu0 %v3980, 72
  %v4462 = vpop.permute.xlu0 %4461
  %4463 = vrot.lane.b32.xlu0 %v3981, 72
  %v4464 = vpop.permute.xlu0 %4463
  %4465 = vrot.lane.b32.xlu0 %v3982, 72
  %v4466 = vpop.permute.xlu0 %4465
  %4467 = vrot.lane.b32.xlu0 %v3983, 72
  %v4468 = vpop.permute.xlu0 %4467
  %4469 = vrot.lane.b32.xlu0 %v3984, 72
  %v4470 = vpop.permute.xlu0 %4469
  %4471 = vrot.lane.b32.xlu0 %v3985, 72
  %v4472 = vpop.permute.xlu0 %4471
  %4473 = vrot.lane.b32.xlu0 %v3986, 72
  %v4474 = vpop.permute.xlu0 %4473
  %4475 = vrot.lane.b32.xlu0 %v3987, 72
  %v4476 = vpop.permute.xlu0 %4475
  %4477 = vrot.lane.b32.xlu0 %v3988, 72
  %v4478 = vpop.permute.xlu0 %4477
  %4479 = vrot.lane.b32.xlu0 %v3989, 72
  %v4480 = vpop.permute.xlu0 %4479
  %4481 = vrot.lane.b32.xlu0 %v3990, 72
  %v4482 = vpop.permute.xlu0 %4481
  %4483 = vrot.lane.b32.xlu0 %v3991, 72
  %v4484 = vpop.permute.xlu0 %4483
  %4485 = vrot.lane.b32.xlu0 %v3992, 72
  %v4486 = vpop.permute.xlu0 %4485
  %4487 = vrot.lane.b32.xlu0 %v3993, 72
  %v4488 = vpop.permute.xlu0 %4487
  %4489 = vrot.lane.b32.xlu0 %v3994, 72
  %v4490 = vpop.permute.xlu0 %4489
  %4491 = vrot.lane.b32.xlu0 %v3995, 72
  %v4492 = vpop.permute.xlu0 %4491
  %4493 = vrot.lane.b32.xlu0 %v3996, 72
  %v4494 = vpop.permute.xlu0 %4493
  %4495 = vrot.lane.b32.xlu0 %v3997, 72
  %v4496 = vpop.permute.xlu0 %4495
  %4497 = vrot.lane.b32.xlu0 %v3998, 72
  %v4498 = vpop.permute.xlu0 %4497
  %4499 = vrot.lane.b32.xlu0 %v3999, 72
  %v4500 = vpop.permute.xlu0 %4499
  %4501 = vrot.lane.b32.xlu0 %v4000, 72
  %v4502 = vpop.permute.xlu0 %4501
  %4503 = vrot.lane.b32.xlu0 %v4001, 72
  %v4504 = vpop.permute.xlu0 %4503
  %4505 = vrot.lane.b32.xlu0 %v4002, 72
  %v4506 = vpop.permute.xlu0 %4505
  %4507 = vrot.lane.b32.xlu0 %v4003, 72
  %v4508 = vpop.permute.xlu0 %4507
  %4509 = vrot.lane.b32.xlu0 %v4004, 72
  %v4510 = vpop.permute.xlu0 %4509
  %4511 = vrot.lane.b32.xlu0 %v4005, 72
  %v4512 = vpop.permute.xlu0 %4511
  %4513 = vrot.lane.b32.xlu0 %v4006, 72
  %v4514 = vpop.permute.xlu0 %4513
  %4515 = vrot.lane.b32.xlu0 %v4007, 72
  %v4516 = vpop.permute.xlu0 %4515
  %4517 = vrot.lane.b32.xlu0 %v4008, 72
  %v4518 = vpop.permute.xlu0 %4517
  %4519 = vrot.lane.b32.xlu0 %v4009, 72
  %v4520 = vpop.permute.xlu0 %4519
  %4521 = vrot.lane.b32.xlu0 %v4010, 72
  %v4522 = vpop.permute.xlu0 %4521
  %4523 = vrot.lane.b32.xlu0 %v4011, 72
  %v4524 = vpop.permute.xlu0 %4523
  %4525 = vrot.lane.b32.xlu0 %v4012, 72
  %v4526 = vpop.permute.xlu0 %4525
  %4527 = vrot.lane.b32.xlu0 %v4013, 72
  %v4528 = vpop.permute.xlu0 %4527
  %4529 = vrot.lane.b32.xlu0 %v4014, 72
  %v4530 = vpop.permute.xlu0 %4529
  %4531 = vrot.lane.b32.xlu0 %v4015, 72
  %v4532 = vpop.permute.xlu0 %4531
  %4533 = vrot.lane.b32.xlu0 %v4016, 72
  %v4534 = vpop.permute.xlu0 %4533
  %4535 = vrot.lane.b32.xlu0 %v4017, 72
  %v4536 = vpop.permute.xlu0 %4535
  %4537 = vrot.lane.b32.xlu0 %v4018, 72
  %v4538 = vpop.permute.xlu0 %4537
  %4539 = vrot.lane.b32.xlu0 %v4019, 72
  %v4540 = vpop.permute.xlu0 %4539
  %4541 = vrot.lane.b32.xlu0 %v4020, 72
  %v4542 = vpop.permute.xlu0 %4541
  %4543 = vrot.lane.b32.xlu0 %v4021, 72
  %v4544 = vpop.permute.xlu0 %4543
  %4545 = vrot.lane.b32.xlu0 %v4022, 72
  %v4546 = vpop.permute.xlu0 %4545
  %4547 = vrot.lane.b32.xlu0 %v4023, 72
  %v4548 = vpop.permute.xlu0 %4547
  %4549 = vrot.lane.b32.xlu0 %v4024, 72
  %v4550 = vpop.permute.xlu0 %4549
  %4551 = vrot.lane.b32.xlu0 %v4025, 72
  %v4552 = vpop.permute.xlu0 %4551
  %4553 = vrot.lane.b32.xlu0 %v4026, 72
  %v4554 = vpop.permute.xlu0 %4553
  %4555 = vrot.lane.b32.xlu0 %v4027, 72
  %v4556 = vpop.permute.xlu0 %4555
  %4557 = vrot.lane.b32.xlu0 %v4028, 72
  %v4558 = vpop.permute.xlu0 %4557
  %4559 = vrot.lane.b32.xlu0 %v4029, 72
  %v4560 = vpop.permute.xlu0 %4559
  %4561 = vrot.lane.b32.xlu0 %v4030, 72
  %v4562 = vpop.permute.xlu0 %4561
  %4563 = vrot.lane.b32.xlu0 %v4031, 72
  %v4564 = vpop.permute.xlu0 %4563
  %4565 = vrot.lane.b32.xlu0 %v4032, 72
  %v4566 = vpop.permute.xlu0 %4565
  %4567 = vrot.lane.b32.xlu0 %v4033, 72
  %v4568 = vpop.permute.xlu0 %4567
  %4569 = vrot.lane.b32.xlu0 %v4034, 72
  %v4570 = vpop.permute.xlu0 %4569
  %4571 = vrot.lane.b32.xlu0 %v4035, 72
  %v4572 = vpop.permute.xlu0 %4571
  %4573 = vrot.lane.b32.xlu0 %v4036, 72
  %v4574 = vpop.permute.xlu0 %4573
  %4575 = vrot.lane.b32.xlu0 %v4037, 72
  %v4576 = vpop.permute.xlu0 %4575
  %4577 = vrot.lane.b32.xlu0 %v4038, 72
  %v4578 = vpop.permute.xlu0 %4577
  %4579 = vrot.lane.b32.xlu0 %v4039, 72
  %v4580 = vpop.permute.xlu0 %4579
  %4581 = vrot.lane.b32.xlu0 %v4040, 72
  %v4582 = vpop.permute.xlu0 %4581
  %4583 = vrot.lane.b32.xlu0 %v4041, 72
  %v4584 = vpop.permute.xlu0 %4583
  %4585 = vrot.lane.b32.xlu0 %v4042, 72
  %v4586 = vpop.permute.xlu0 %4585
  %4587 = vrot.lane.b32.xlu0 %v4043, 72
  %v4588 = vpop.permute.xlu0 %4587
  %4589 = vrot.lane.b32.xlu0 %v4044, 72
  %v4590 = vpop.permute.xlu0 %4589
  %4591 = vrot.lane.b32.xlu0 %v4045, 72
  %v4592 = vpop.permute.xlu0 %4591
  %4593 = vrot.lane.b32.xlu0 %v4046, 72
  %v4594 = vpop.permute.xlu0 %4593
  %4595 = vrot.lane.b32.xlu0 %v4047, 72
  %v4596 = vpop.permute.xlu0 %4595
  %4597 = vrot.lane.b32.xlu0 %v4048, 72
  %v4598 = vpop.permute.xlu0 %4597
  %4599 = vrot.lane.b32.xlu0 %v4049, 72
  %v4600 = vpop.permute.xlu0 %4599
  %4601 = vrot.lane.b32.xlu0 %v4050, 72
  %v4602 = vpop.permute.xlu0 %4601
  %4603 = vrot.lane.b32.xlu0 %v4051, 72
  %v4604 = vpop.permute.xlu0 %4603
  %4605 = vrot.lane.b32.xlu0 %v4052, 72
  %v4606 = vpop.permute.xlu0 %4605
  %4607 = vrot.lane.b32.xlu0 %v4053, 72
  %v4608 = vpop.permute.xlu0 %4607
  %4609 = vrot.lane.b32.xlu0 %v4054, 72
  %v4610 = vpop.permute.xlu0 %4609
  %4611 = vrot.lane.b32.xlu0 %v4055, 72
  %v4612 = vpop.permute.xlu0 %4611
  %4613 = vrot.lane.b32.xlu0 %v4056, 72
  %v4614 = vpop.permute.xlu0 %4613
  %4615 = vrot.lane.b32.xlu0 %v4057, 72
  %v4616 = vpop.permute.xlu0 %4615
  %4617 = vrot.lane.b32.xlu0 %v4058, 72
  %v4618 = vpop.permute.xlu0 %4617
  %4619 = vrot.lane.b32.xlu0 %v4059, 72
  %v4620 = vpop.permute.xlu0 %4619
  %4621 = vrot.lane.b32.xlu0 %v4060, 72
  %v4622 = vpop.permute.xlu0 %4621
  %4623 = vrot.lane.b32.xlu0 %v4061, 72
  %v4624 = vpop.permute.xlu0 %4623
  %4625 = vrot.lane.b32.xlu0 %v4062, 72
  %v4626 = vpop.permute.xlu0 %4625
  %4627 = vrot.lane.b32.xlu0 %v4063, 72
  %v4628 = vpop.permute.xlu0 %4627
  %4629 = vrot.lane.b32.xlu0 %v4064, 72
  %v4630 = vpop.permute.xlu0 %4629
  %4631 = vrot.lane.b32.xlu0 %v4065, 72
  %v4632 = vpop.permute.xlu0 %4631
  %4633 = vrot.lane.b32.xlu0 %v4066, 72
  %v4634 = vpop.permute.xlu0 %4633
  %4635 = vrot.lane.b32.xlu0 %v4067, 72
  %v4636 = vpop.permute.xlu0 %4635
  %4637 = vrot.lane.b32.xlu0 %v4068, 72
  %v4638 = vpop.permute.xlu0 %4637
  %4639 = vrot.lane.b32.xlu0 %v4069, 72
  %v4640 = vpop.permute.xlu0 %4639
  %4641 = vrot.lane.b32.xlu0 %v4070, 72
  %v4642 = vpop.permute.xlu0 %4641
  %4643 = vrot.lane.b32.xlu0 %v4071, 72
  %v4644 = vpop.permute.xlu0 %4643
  %4645 = vrot.lane.b32.xlu0 %v4072, 72
  %v4646 = vpop.permute.xlu0 %4645
  %4647 = vrot.lane.b32.xlu0 %v4073, 72
  %v4648 = vpop.permute.xlu0 %4647
  %4649 = vrot.lane.b32.xlu0 %v4074, 72
  %v4650 = vpop.permute.xlu0 %4649
  %4651 = vrot.lane.b32.xlu0 %v4075, 72
  %v4652 = vpop.permute.xlu0 %4651
  %4653 = vrot.lane.b32.xlu0 %v4076, 72
  %v4654 = vpop.permute.xlu0 %4653
  %4655 = vrot.lane.b32.xlu0 %v4077, 72
  %v4656 = vpop.permute.xlu0 %4655
  %4657 = vrot.lane.b32.xlu0 %v4078, 72
  %v4658 = vpop.permute.xlu0 %4657
  %4659 = vrot.lane.b32.xlu0 %v4079, 72
  %v4660 = vpop.permute.xlu0 %4659
  %4661 = vrot.lane.b32.xlu0 %v4080, 72
  %v4662 = vpop.permute.xlu0 %4661
  %4663 = vrot.lane.b32.xlu0 %v4081, 72
  %v4664 = vpop.permute.xlu0 %4663
  %4665 = vrot.lane.b32.xlu0 %v4082, 72
  %v4666 = vpop.permute.xlu0 %4665
  %4667 = vrot.lane.b32.xlu0 %v4083, 72
  %v4668 = vpop.permute.xlu0 %4667
  %4669 = vrot.lane.b32.xlu0 %v4084, 72
  %v4670 = vpop.permute.xlu0 %4669
  %4671 = vrot.lane.b32.xlu0 %v4085, 72
  %v4672 = vpop.permute.xlu0 %4671
  %4673 = vrot.lane.b32.xlu0 %v4086, 72
  %v4674 = vpop.permute.xlu0 %4673
  %4675 = vrot.lane.b32.xlu0 %v4087, 72
  %v4676 = vpop.permute.xlu0 %4675
  %4677 = vrot.lane.b32.xlu0 %v4088, 72
  %v4678 = vpop.permute.xlu0 %4677
  %4679 = vrot.lane.b32.xlu0 %v4089, 72
  %v4680 = vpop.permute.xlu0 %4679
  %4681 = vrot.lane.b32.xlu0 %v4090, 72
  %v4682 = vpop.permute.xlu0 %4681
  %4683 = vrot.lane.b32.xlu0 %v4091, 72
  %v4684 = vpop.permute.xlu0 %4683
  %4685 = vrot.lane.b32.xlu0 %v4092, 72
  %v4686 = vpop.permute.xlu0 %4685
  %4687 = vrot.lane.b32.xlu0 %v4093, 72
  %v4688 = vpop.permute.xlu0 %4687
  %4689 = vrot.lane.b32.xlu0 %v4094, 72
  %v4690 = vpop.permute.xlu0 %4689
  %4691 = vrot.lane.b32.xlu0 %v4095, 72
  %v4692 = vpop.permute.xlu0 %4691
  %4693 = vrot.lane.b32.xlu0 %v4096, 72
  %v4694 = vpop.permute.xlu0 %4693
  %4695 = vrot.lane.b32.xlu0 %v4097, 72
  %v4696 = vpop.permute.xlu0 %4695
  %4697 = vrot.lane.b32.xlu0 %v4098, 72
  %v4698 = vpop.permute.xlu0 %4697
  %4699 = vrot.lane.b32.xlu0 %v4099, 72
  %v4700 = vpop.permute.xlu0 %4699
  %4701 = vrot.lane.b32.xlu0 %v4100, 72
  %v4702 = vpop.permute.xlu0 %4701
  %4703 = vrot.lane.b32.xlu0 %v4101, 72
  %v4704 = vpop.permute.xlu0 %4703
  %4705 = vrot.lane.b32.xlu0 %v4102, 72
  %v4706 = vpop.permute.xlu0 %4705
  %4707 = vrot.lane.b32.xlu0 %v4103, 72
  %v4708 = vpop.permute.xlu0 %4707
  %4709 = vrot.lane.b32.xlu0 %v4104, 72
  %v4710 = vpop.permute.xlu0 %4709
  %4711 = vrot.lane.b32.xlu0 %v4105, 72
  %v4712 = vpop.permute.xlu0 %4711
  %4713 = vrot.lane.b32.xlu0 %v4106, 72
  %v4714 = vpop.permute.xlu0 %4713
  %4715 = vrot.lane.b32.xlu0 %v4107, 72
  %v4716 = vpop.permute.xlu0 %4715
  %4717 = vrot.lane.b32.xlu0 %v4108, 72
  %v4718 = vpop.permute.xlu0 %4717
  %4719 = vrot.lane.b32.xlu0 %v4109, 72
  %v4720 = vpop.permute.xlu0 %4719
  %4721 = vrot.lane.b32.xlu0 %v4110, 72
  %v4722 = vpop.permute.xlu0 %4721
  %4723 = vrot.lane.b32.xlu0 %v4111, 72
  %v4724 = vpop.permute.xlu0 %4723
  %4725 = vrot.lane.b32.xlu0 %v4112, 72
  %v4726 = vpop.permute.xlu0 %4725
  %4727 = vrot.lane.b32.xlu0 %v4113, 72
  %v4728 = vpop.permute.xlu0 %4727
  %4729 = vrot.lane.b32.xlu0 %v4114, 72
  %v4730 = vpop.permute.xlu0 %4729
  %4731 = vrot.lane.b32.xlu0 %v4115, 72
  %v4732 = vpop.permute.xlu0 %4731
  %4733 = vrot.lane.b32.xlu0 %v4116, 72
  %v4734 = vpop.permute.xlu0 %4733
  %4735 = vrot.lane.b32.xlu0 %v4117, 72
  %v4736 = vpop.permute.xlu0 %4735
  %4737 = vrot.lane.b32.xlu0 %v4118, 72
  %v4738 = vpop.permute.xlu0 %4737
  %4739 = vrot.lane.b32.xlu0 %v4119, 72
  %v4740 = vpop.permute.xlu0 %4739
  %4741 = vrot.lane.b32.xlu0 %v4120, 72
  %v4742 = vpop.permute.xlu0 %4741
  %4743 = vrot.lane.b32.xlu0 %v4121, 72
  %v4744 = vpop.permute.xlu0 %4743
  %4745 = vrot.lane.b32.xlu0 %v4122, 72
  %v4746 = vpop.permute.xlu0 %4745
  %4747 = vrot.lane.b32.xlu0 %v4123, 72
  %v4748 = vpop.permute.xlu0 %4747
  %4749 = vrot.lane.b32.xlu0 %v4124, 72
  %v4750 = vpop.permute.xlu0 %4749
  %4751 = vrot.lane.b32.xlu0 %v4125, 72
  %v4752 = vpop.permute.xlu0 %4751
  %4753 = vrot.lane.b32.xlu0 %v4126, 72
  %v4754 = vpop.permute.xlu0 %4753
  %4755 = vrot.lane.b32.xlu0 %v4127, 72
  %v4756 = vpop.permute.xlu0 %4755
  %4757 = vrot.lane.b32.xlu0 %v4128, 72
  %v4758 = vpop.permute.xlu0 %4757
  %4759 = vrot.lane.b32.xlu0 %v4129, 72
  %v4760 = vpop.permute.xlu0 %4759
  %4761 = vrot.lane.b32.xlu0 %v4130, 72
  %v4762 = vpop.permute.xlu0 %4761
  %4763 = vrot.lane.b32.xlu0 %v4131, 72
  %v4764 = vpop.permute.xlu0 %4763
  %4765 = vrot.lane.b32.xlu0 %v4132, 72
  %v4766 = vpop.permute.xlu0 %4765
  %4767 = vrot.lane.b32.xlu0 %v4133, 72
  %v4768 = vpop.permute.xlu0 %4767
  %4769 = vrot.lane.b32.xlu0 %v4134, 72
  %v4770 = vpop.permute.xlu0 %4769
  %4771 = vrot.lane.b32.xlu0 %v4135, 72
  %v4772 = vpop.permute.xlu0 %4771
  %4773 = vrot.lane.b32.xlu0 %v4136, 72
  %v4774 = vpop.permute.xlu0 %4773
  %4775 = vrot.lane.b32.xlu0 %v4137, 72
  %v4776 = vpop.permute.xlu0 %4775
  %4777 = vrot.lane.b32.xlu0 %v4138, 72
  %v4778 = vpop.permute.xlu0 %4777
  %4779 = vrot.lane.b32.xlu0 %v4139, 72
  %v4780 = vpop.permute.xlu0 %4779
  %4781 = vrot.lane.b32.xlu0 %v4140, 72
  %v4782 = vpop.permute.xlu0 %4781
  %4783 = vrot.lane.b32.xlu0 %v4141, 72
  %v4784 = vpop.permute.xlu0 %4783
  %4785 = vrot.lane.b32.xlu0 %v4142, 72
  %v4786 = vpop.permute.xlu0 %4785
  %4787 = vrot.lane.b32.xlu0 %v4143, 72
  %v4788 = vpop.permute.xlu0 %4787
  %4789 = vrot.lane.b32.xlu0 %v4144, 72
  %v4790 = vpop.permute.xlu0 %4789
  %4791 = vrot.lane.b32.xlu0 %v4145, 72
  %v4792 = vpop.permute.xlu0 %4791
  %4793 = vrot.lane.b32.xlu0 %v4146, 72
  %v4794 = vpop.permute.xlu0 %4793
  %4795 = vrot.lane.b32.xlu0 %v4147, 72
  %v4796 = vpop.permute.xlu0 %4795
  %4797 = vrot.lane.b32.xlu0 %v4148, 72
  %v4798 = vpop.permute.xlu0 %4797
  %4799 = vrot.lane.b32.xlu0 %v4149, 72
  %v4800 = vpop.permute.xlu0 %4799
  %4801 = vrot.lane.b32.xlu0 %v4150, 72
  %v4802 = vpop.permute.xlu0 %4801
  %4803 = vrot.lane.b32.xlu0 %v4151, 72
  %v4804 = vpop.permute.xlu0 %4803
  %4805 = vrot.lane.b32.xlu0 %v4152, 72
  %v4806 = vpop.permute.xlu0 %4805
  %4807 = vrot.lane.b32.xlu0 %v4153, 72
  %v4808 = vpop.permute.xlu0 %4807
  %4809 = vrot.lane.b32.xlu0 %v4154, 72
  %v4810 = vpop.permute.xlu0 %4809
  %4811 = vrot.lane.b32.xlu0 %v4155, 72
  %v4812 = vpop.permute.xlu0 %4811
  %4813 = vrot.lane.b32.xlu0 %v4156, 72
  %v4814 = vpop.permute.xlu0 %4813
  %4815 = vrot.lane.b32.xlu0 %v4157, 72
  %v4816 = vpop.permute.xlu0 %4815
  %4817 = vrot.lane.b32.xlu0 %v4158, 72
  %v4818 = vpop.permute.xlu0 %4817
  %4819 = vrot.lane.b32.xlu0 %v4159, 72
  %v4820 = vpop.permute.xlu0 %4819
  %4821 = vrot.lane.b32.xlu0 %v4160, 72
  %v4822 = vpop.permute.xlu0 %4821
  %4823 = vrot.lane.b32.xlu0 %v4161, 72
  %v4824 = vpop.permute.xlu0 %4823
  %4825 = vrot.lane.b32.xlu0 %v4162, 72
  %v4826 = vpop.permute.xlu0 %4825
  %4827 = vrot.lane.b32.xlu0 %v4163, 72
  %v4828 = vpop.permute.xlu0 %4827
  %4829 = vrot.lane.b32.xlu0 %v4164, 72
  %v4830 = vpop.permute.xlu0 %4829
  %4831 = vrot.lane.b32.xlu0 %v4165, 72
  %v4832 = vpop.permute.xlu0 %4831
  %4833 = vrot.lane.b32.xlu0 %v4166, 72
  %v4834 = vpop.permute.xlu0 %4833
  %4835 = vrot.lane.b32.xlu0 %v4167, 72
  %v4836 = vpop.permute.xlu0 %4835
  %4837 = vrot.lane.b32.xlu0 %v4168, 72
  %v4838 = vpop.permute.xlu0 %4837
  %4839 = vrot.lane.b32.xlu0 %v4169, 72
  %v4840 = vpop.permute.xlu0 %4839
  %4841 = vrot.lane.b32.xlu0 %v4170, 72
  %v4842 = vpop.permute.xlu0 %4841
  %4843 = vrot.lane.b32.xlu0 %v4171, 72
  %v4844 = vpop.permute.xlu0 %4843
  %4845 = vrot.lane.b32.xlu0 %v4172, 72
  %v4846 = vpop.permute.xlu0 %4845
  %4847 = vrot.lane.b32.xlu0 %v4173, 72
  %v4848 = vpop.permute.xlu0 %4847
  %4849 = vrot.lane.b32.xlu0 %v4174, 72
  %v4850 = vpop.permute.xlu0 %4849
  %4851 = vrot.lane.b32.xlu0 %v4175, 72
  %v4852 = vpop.permute.xlu0 %4851
  %4853 = vrot.lane.b32.xlu0 %v4176, 72
  %v4854 = vpop.permute.xlu0 %4853
  %4855 = vrot.lane.b32.xlu0 %v4177, 72
  %v4856 = vpop.permute.xlu0 %4855
  %4857 = vrot.lane.b32.xlu0 %v4178, 72
  %v4858 = vpop.permute.xlu0 %4857
  %4859 = vrot.lane.b32.xlu0 %v4179, 72
  %v4860 = vpop.permute.xlu0 %4859
  %4861 = vrot.lane.b32.xlu0 %v4180, 72
  %v4862 = vpop.permute.xlu0 %4861
  %4863 = vrot.lane.b32.xlu0 %v4181, 72
  %v4864 = vpop.permute.xlu0 %4863
  %4865 = vrot.lane.b32.xlu0 %v4182, 72
  %v4866 = vpop.permute.xlu0 %4865
  %4867 = vrot.lane.b32.xlu0 %v4183, 72
  %v4868 = vpop.permute.xlu0 %4867
  %4869 = vrot.lane.b32.xlu0 %v4184, 72
  %v4870 = vpop.permute.xlu0 %4869
  %4871 = vrot.lane.b32.xlu0 %v4185, 72
  %v4872 = vpop.permute.xlu0 %4871
  %4873 = vrot.lane.b32.xlu0 %v4186, 72
  %v4874 = vpop.permute.xlu0 %4873
  %4875 = vrot.lane.b32.xlu0 %v3947, 72
  %v4876 = vpop.permute.xlu0 %4875
  %4877 = vrot.lane.b32.xlu0 %v3948, 72
  %v4878 = vpop.permute.xlu0 %4877
  %4879 = vrot.lane.b32.xlu0 %v3949, 72
  %v4880 = vpop.permute.xlu0 %4879
  %4881 = vrot.lane.b32.xlu0 %v3950, 72
  %v4882 = vpop.permute.xlu0 %4881
  %4883 = vrot.lane.b32.xlu0 %v3951, 72
  %v4884 = vpop.permute.xlu0 %4883
  %4885 = vrot.lane.b32.xlu0 %v3952, 72
  %v4886 = vpop.permute.xlu0 %4885
  %4887 = vrot.lane.b32.xlu0 %v3953, 72
  %v4888 = vpop.permute.xlu0 %4887
  %4889 = vrot.lane.b32.xlu0 %v3954, 72
  %v4890 = vpop.permute.xlu0 %4889
  %4891 = vrot.lane.b32.xlu0 %v3955, 72
  %v4892 = vpop.permute.xlu0 %4891
  %4893 = vrot.lane.b32.xlu0 %v3956, 72
  %v4894 = vpop.permute.xlu0 %4893
  %4895 = vrot.lane.b32.xlu0 %v3957, 72
  %v4896 = vpop.permute.xlu0 %4895
  %4897 = vrot.lane.b32.xlu0 %v3958, 72
  %v4898 = vpop.permute.xlu0 %4897
  %4899 = vrot.lane.b32.xlu0 %v3959, 72
  %v4900 = vpop.permute.xlu0 %4899
  %4901 = vrot.lane.b32.xlu0 %v3960, 72
  %v4902 = vpop.permute.xlu0 %4901
  %4903 = vrot.lane.b32.xlu0 %v3961, 72
  %v4904 = vpop.permute.xlu0 %4903
  %4905 = vrot.lane.b32.xlu0 %v3962, 72
  %v4906 = vpop.permute.xlu0 %4905
  %vm4907 = vcmask 588800
  %v4908 = vsel %vm4907, %v4428, %v4430
  %v4909 = vsel %vm4907, %v4432, %v4434
  %v4910 = vsel %vm4907, %v4436, %v4438
  %v4911 = vsel %vm4907, %v4440, %v4442
  %v4912 = vsel %vm4907, %v4444, %v4446
  %v4913 = vsel %vm4907, %v4448, %v4450
  %v4914 = vsel %vm4907, %v4452, %v4454
  %v4915 = vsel %vm4907, %v4456, %v4458
  %v4916 = vsel %vm4907, %v4460, %v4462
  %v4917 = vsel %vm4907, %v4464, %v4466
  %v4918 = vsel %vm4907, %v4468, %v4470
  %v4919 = vsel %vm4907, %v4472, %v4474
  %v4920 = vsel %vm4907, %v4476, %v4478
  %v4921 = vsel %vm4907, %v4480, %v4482
  %v4922 = vsel %vm4907, %v4484, %v4486
  %v4923 = vsel %vm4907, %v4488, %v4490
  %v4924 = vsel %vm4907, %v4492, %v4494
  %v4925 = vsel %vm4907, %v4496, %v4498
  %v4926 = vsel %vm4907, %v4500, %v4502
  %v4927 = vsel %vm4907, %v4504, %v4506
  %v4928 = vsel %vm4907, %v4508, %v4510
  %v4929 = vsel %vm4907, %v4512, %v4514
  %v4930 = vsel %vm4907, %v4516, %v4518
  %v4931 = vsel %vm4907, %v4520, %v4522
  %v4932 = vsel %vm4907, %v4524, %v4526
  %v4933 = vsel %vm4907, %v4528, %v4530
  %v4934 = vsel %vm4907, %v4532, %v4534
  %v4935 = vsel %vm4907, %v4536, %v4538
  %v4936 = vsel %vm4907, %v4540, %v4542
  %v4937 = vsel %vm4907, %v4544, %v4546
  %v4938 = vsel %vm4907, %v4548, %v4550
  %v4939 = vsel %vm4907, %v4552, %v4554
  %v4940 = vsel %vm4907, %v4556, %v4558
  %v4941 = vsel %vm4907, %v4560, %v4562
  %v4942 = vsel %vm4907, %v4564, %v4566
  %v4943 = vsel %vm4907, %v4568, %v4570
  %v4944 = vsel %vm4907, %v4572, %v4574
  %v4945 = vsel %vm4907, %v4576, %v4578
  %v4946 = vsel %vm4907, %v4580, %v4582
  %v4947 = vsel %vm4907, %v4584, %v4586
  %v4948 = vsel %vm4907, %v4588, %v4590
  %v4949 = vsel %vm4907, %v4592, %v4594
  %v4950 = vsel %vm4907, %v4596, %v4598
  %v4951 = vsel %vm4907, %v4600, %v4602
  %v4952 = vsel %vm4907, %v4604, %v4606
  %v4953 = vsel %vm4907, %v4608, %v4610
  %v4954 = vsel %vm4907, %v4612, %v4614
  %v4955 = vsel %vm4907, %v4616, %v4618
  %v4956 = vsel %vm4907, %v4620, %v4622
  %v4957 = vsel %vm4907, %v4624, %v4626
  %v4958 = vsel %vm4907, %v4628, %v4630
  %v4959 = vsel %vm4907, %v4632, %v4634
  %v4960 = vsel %vm4907, %v4636, %v4638
  %v4961 = vsel %vm4907, %v4640, %v4642
  %v4962 = vsel %vm4907, %v4644, %v4646
  %v4963 = vsel %vm4907, %v4648, %v4650
  %v4964 = vsel %vm4907, %v4652, %v4654
  %v4965 = vsel %vm4907, %v4656, %v4658
  %v4966 = vsel %vm4907, %v4660, %v4662
  %v4967 = vsel %vm4907, %v4664, %v4666
  %v4968 = vsel %vm4907, %v4668, %v4670
  %v4969 = vsel %vm4907, %v4672, %v4674
  %v4970 = vsel %vm4907, %v4676, %v4678
  %v4971 = vsel %vm4907, %v4680, %v4682
  %v4972 = vsel %vm4907, %v4684, %v4686
  %v4973 = vsel %vm4907, %v4688, %v4690
  %v4974 = vsel %vm4907, %v4692, %v4694
  %v4975 = vsel %vm4907, %v4696, %v4698
  %v4976 = vsel %vm4907, %v4700, %v4702
  %v4977 = vsel %vm4907, %v4704, %v4706
  %v4978 = vsel %vm4907, %v4708, %v4710
  %v4979 = vsel %vm4907, %v4712, %v4714
  %v4980 = vsel %vm4907, %v4716, %v4718
  %v4981 = vsel %vm4907, %v4720, %v4722
  %v4982 = vsel %vm4907, %v4724, %v4726
  %v4983 = vsel %vm4907, %v4728, %v4730
  %v4984 = vsel %vm4907, %v4732, %v4734
  %v4985 = vsel %vm4907, %v4736, %v4738
  %v4986 = vsel %vm4907, %v4740, %v4742
  %v4987 = vsel %vm4907, %v4744, %v4746
  %v4988 = vsel %vm4907, %v4748, %v4750
  %v4989 = vsel %vm4907, %v4752, %v4754
  %v4990 = vsel %vm4907, %v4756, %v4758
  %v4991 = vsel %vm4907, %v4760, %v4762
  %v4992 = vsel %vm4907, %v4764, %v4766
  %v4993 = vsel %vm4907, %v4768, %v4770
  %v4994 = vsel %vm4907, %v4772, %v4774
  %v4995 = vsel %vm4907, %v4776, %v4778
  %v4996 = vsel %vm4907, %v4780, %v4782
  %v4997 = vsel %vm4907, %v4784, %v4786
  %v4998 = vsel %vm4907, %v4788, %v4790
  %v4999 = vsel %vm4907, %v4792, %v4794
  %v5000 = vsel %vm4907, %v4796, %v4798
  %v5001 = vsel %vm4907, %v4800, %v4802
  %v5002 = vsel %vm4907, %v4804, %v4806
  %v5003 = vsel %vm4907, %v4808, %v4810
  %v5004 = vsel %vm4907, %v4812, %v4814
  %v5005 = vsel %vm4907, %v4816, %v4818
  %v5006 = vsel %vm4907, %v4820, %v4822
  %v5007 = vsel %vm4907, %v4824, %v4826
  %v5008 = vsel %vm4907, %v4828, %v4830
  %v5009 = vsel %vm4907, %v4832, %v4834
  %v5010 = vsel %vm4907, %v4836, %v4838
  %v5011 = vsel %vm4907, %v4840, %v4842
  %v5012 = vsel %vm4907, %v4844, %v4846
  %v5013 = vsel %vm4907, %v4848, %v4850
  %v5014 = vsel %vm4907, %v4852, %v4854
  %v5015 = vsel %vm4907, %v4856, %v4858
  %v5016 = vsel %vm4907, %v4860, %v4862
  %v5017 = vsel %vm4907, %v4864, %v4866
  %v5018 = vsel %vm4907, %v4868, %v4870
  %v5019 = vsel %vm4907, %v4872, %v4874
  %v5020 = vsel %vm4907, %v4876, %v4878
  %v5021 = vsel %vm4907, %v4880, %v4882
  %v5022 = vsel %vm4907, %v4884, %v4886
  %v5023 = vsel %vm4907, %v4888, %v4890
  %v5024 = vsel %vm4907, %v4892, %v4894
  %v5025 = vsel %vm4907, %v4896, %v4898
  %v5026 = vsel %vm4907, %v4900, %v4902
  %v5027 = vsel %vm4907, %v4904, %v4906
  %5388 = vrot.lane.b32.xlu0 %v3979, 16
  %v5389 = vpop.permute.xlu0 %5388
  %5390 = vrot.lane.b32.xlu0 %v3980, 16
  %v5391 = vpop.permute.xlu0 %5390
  %5392 = vrot.lane.b32.xlu0 %v3981, 16
  %v5393 = vpop.permute.xlu0 %5392
  %5394 = vrot.lane.b32.xlu0 %v3982, 16
  %v5395 = vpop.permute.xlu0 %5394
  %5396 = vrot.lane.b32.xlu0 %v3983, 16
  %v5397 = vpop.permute.xlu0 %5396
  %5398 = vrot.lane.b32.xlu0 %v3984, 16
  %v5399 = vpop.permute.xlu0 %5398
  %5400 = vrot.lane.b32.xlu0 %v3985, 16
  %v5401 = vpop.permute.xlu0 %5400
  %5402 = vrot.lane.b32.xlu0 %v3986, 16
  %v5403 = vpop.permute.xlu0 %5402
  %5404 = vrot.lane.b32.xlu0 %v3987, 16
  %v5405 = vpop.permute.xlu0 %5404
  %5406 = vrot.lane.b32.xlu0 %v3988, 16
  %v5407 = vpop.permute.xlu0 %5406
  %5408 = vrot.lane.b32.xlu0 %v3989, 16
  %v5409 = vpop.permute.xlu0 %5408
  %5410 = vrot.lane.b32.xlu0 %v3990, 16
  %v5411 = vpop.permute.xlu0 %5410
  %5412 = vrot.lane.b32.xlu0 %v3991, 16
  %v5413 = vpop.permute.xlu0 %5412
  %5414 = vrot.lane.b32.xlu0 %v3992, 16
  %v5415 = vpop.permute.xlu0 %5414
  %5416 = vrot.lane.b32.xlu0 %v3993, 16
  %v5417 = vpop.permute.xlu0 %5416
  %5418 = vrot.lane.b32.xlu0 %v3994, 16
  %v5419 = vpop.permute.xlu0 %5418
  %5420 = vrot.lane.b32.xlu0 %v3995, 16
  %v5421 = vpop.permute.xlu0 %5420
  %5422 = vrot.lane.b32.xlu0 %v3996, 16
  %v5423 = vpop.permute.xlu0 %5422
  %5424 = vrot.lane.b32.xlu0 %v3997, 16
  %v5425 = vpop.permute.xlu0 %5424
  %5426 = vrot.lane.b32.xlu0 %v3998, 16
  %v5427 = vpop.permute.xlu0 %5426
  %5428 = vrot.lane.b32.xlu0 %v3999, 16
  %v5429 = vpop.permute.xlu0 %5428
  %5430 = vrot.lane.b32.xlu0 %v4000, 16
  %v5431 = vpop.permute.xlu0 %5430
  %5432 = vrot.lane.b32.xlu0 %v4001, 16
  %v5433 = vpop.permute.xlu0 %5432
  %5434 = vrot.lane.b32.xlu0 %v4002, 16
  %v5435 = vpop.permute.xlu0 %5434
  %5436 = vrot.lane.b32.xlu0 %v4003, 16
  %v5437 = vpop.permute.xlu0 %5436
  %5438 = vrot.lane.b32.xlu0 %v4004, 16
  %v5439 = vpop.permute.xlu0 %5438
  %5440 = vrot.lane.b32.xlu0 %v4005, 16
  %v5441 = vpop.permute.xlu0 %5440
  %5442 = vrot.lane.b32.xlu0 %v4006, 16
  %v5443 = vpop.permute.xlu0 %5442
  %5444 = vrot.lane.b32.xlu0 %v4007, 16
  %v5445 = vpop.permute.xlu0 %5444
  %5446 = vrot.lane.b32.xlu0 %v4008, 16
  %v5447 = vpop.permute.xlu0 %5446
  %5448 = vrot.lane.b32.xlu0 %v4009, 16
  %v5449 = vpop.permute.xlu0 %5448
  %5450 = vrot.lane.b32.xlu0 %v4010, 16
  %v5451 = vpop.permute.xlu0 %5450
  %5452 = vrot.lane.b32.xlu0 %v4011, 16
  %v5453 = vpop.permute.xlu0 %5452
  %5454 = vrot.lane.b32.xlu0 %v4012, 16
  %v5455 = vpop.permute.xlu0 %5454
  %5456 = vrot.lane.b32.xlu0 %v4013, 16
  %v5457 = vpop.permute.xlu0 %5456
  %5458 = vrot.lane.b32.xlu0 %v4014, 16
  %v5459 = vpop.permute.xlu0 %5458
  %5460 = vrot.lane.b32.xlu0 %v4015, 16
  %v5461 = vpop.permute.xlu0 %5460
  %5462 = vrot.lane.b32.xlu0 %v4016, 16
  %v5463 = vpop.permute.xlu0 %5462
  %5464 = vrot.lane.b32.xlu0 %v4017, 16
  %v5465 = vpop.permute.xlu0 %5464
  %5466 = vrot.lane.b32.xlu0 %v4018, 16
  %v5467 = vpop.permute.xlu0 %5466
  %5468 = vrot.lane.b32.xlu0 %v4019, 16
  %v5469 = vpop.permute.xlu0 %5468
  %5470 = vrot.lane.b32.xlu0 %v4020, 16
  %v5471 = vpop.permute.xlu0 %5470
  %5472 = vrot.lane.b32.xlu0 %v4021, 16
  %v5473 = vpop.permute.xlu0 %5472
  %5474 = vrot.lane.b32.xlu0 %v4022, 16
  %v5475 = vpop.permute.xlu0 %5474
  %5476 = vrot.lane.b32.xlu0 %v4023, 16
  %v5477 = vpop.permute.xlu0 %5476
  %5478 = vrot.lane.b32.xlu0 %v4024, 16
  %v5479 = vpop.permute.xlu0 %5478
  %5480 = vrot.lane.b32.xlu0 %v4025, 16
  %v5481 = vpop.permute.xlu0 %5480
  %5482 = vrot.lane.b32.xlu0 %v4026, 16
  %v5483 = vpop.permute.xlu0 %5482
  %5484 = vrot.lane.b32.xlu0 %v4027, 16
  %v5485 = vpop.permute.xlu0 %5484
  %5486 = vrot.lane.b32.xlu0 %v4028, 16
  %v5487 = vpop.permute.xlu0 %5486
  %5488 = vrot.lane.b32.xlu0 %v4029, 16
  %v5489 = vpop.permute.xlu0 %5488
  %5490 = vrot.lane.b32.xlu0 %v4030, 16
  %v5491 = vpop.permute.xlu0 %5490
  %5492 = vrot.lane.b32.xlu0 %v4031, 16
  %v5493 = vpop.permute.xlu0 %5492
  %5494 = vrot.lane.b32.xlu0 %v4032, 16
  %v5495 = vpop.permute.xlu0 %5494
  %5496 = vrot.lane.b32.xlu0 %v4033, 16
  %v5497 = vpop.permute.xlu0 %5496
  %5498 = vrot.lane.b32.xlu0 %v4034, 16
  %v5499 = vpop.permute.xlu0 %5498
  %5500 = vrot.lane.b32.xlu0 %v4035, 16
  %v5501 = vpop.permute.xlu0 %5500
  %5502 = vrot.lane.b32.xlu0 %v4036, 16
  %v5503 = vpop.permute.xlu0 %5502
  %5504 = vrot.lane.b32.xlu0 %v4037, 16
  %v5505 = vpop.permute.xlu0 %5504
  %5506 = vrot.lane.b32.xlu0 %v4038, 16
  %v5507 = vpop.permute.xlu0 %5506
  %5508 = vrot.lane.b32.xlu0 %v4039, 16
  %v5509 = vpop.permute.xlu0 %5508
  %5510 = vrot.lane.b32.xlu0 %v4040, 16
  %v5511 = vpop.permute.xlu0 %5510
  %5512 = vrot.lane.b32.xlu0 %v4041, 16
  %v5513 = vpop.permute.xlu0 %5512
  %5514 = vrot.lane.b32.xlu0 %v4042, 16
  %v5515 = vpop.permute.xlu0 %5514
  %5516 = vrot.lane.b32.xlu0 %v4043, 16
  %v5517 = vpop.permute.xlu0 %5516
  %5518 = vrot.lane.b32.xlu0 %v4044, 16
  %v5519 = vpop.permute.xlu0 %5518
  %5520 = vrot.lane.b32.xlu0 %v4045, 16
  %v5521 = vpop.permute.xlu0 %5520
  %5522 = vrot.lane.b32.xlu0 %v4046, 16
  %v5523 = vpop.permute.xlu0 %5522
  %5524 = vrot.lane.b32.xlu0 %v4047, 16
  %v5525 = vpop.permute.xlu0 %5524
  %5526 = vrot.lane.b32.xlu0 %v4048, 16
  %v5527 = vpop.permute.xlu0 %5526
  %5528 = vrot.lane.b32.xlu0 %v4049, 16
  %v5529 = vpop.permute.xlu0 %5528
  %5530 = vrot.lane.b32.xlu0 %v4050, 16
  %v5531 = vpop.permute.xlu0 %5530
  %5532 = vrot.lane.b32.xlu0 %v4051, 16
  %v5533 = vpop.permute.xlu0 %5532
  %5534 = vrot.lane.b32.xlu0 %v4052, 16
  %v5535 = vpop.permute.xlu0 %5534
  %5536 = vrot.lane.b32.xlu0 %v4053, 16
  %v5537 = vpop.permute.xlu0 %5536
  %5538 = vrot.lane.b32.xlu0 %v4054, 16
  %v5539 = vpop.permute.xlu0 %5538
  %5540 = vrot.lane.b32.xlu0 %v4055, 16
  %v5541 = vpop.permute.xlu0 %5540
  %5542 = vrot.lane.b32.xlu0 %v4056, 16
  %v5543 = vpop.permute.xlu0 %5542
  %5544 = vrot.lane.b32.xlu0 %v4057, 16
  %v5545 = vpop.permute.xlu0 %5544
  %5546 = vrot.lane.b32.xlu0 %v4058, 16
  %v5547 = vpop.permute.xlu0 %5546
  %5548 = vrot.lane.b32.xlu0 %v4059, 16
  %v5549 = vpop.permute.xlu0 %5548
  %5550 = vrot.lane.b32.xlu0 %v4060, 16
  %v5551 = vpop.permute.xlu0 %5550
  %5552 = vrot.lane.b32.xlu0 %v4061, 16
  %v5553 = vpop.permute.xlu0 %5552
  %5554 = vrot.lane.b32.xlu0 %v4062, 16
  %v5555 = vpop.permute.xlu0 %5554
  %5556 = vrot.lane.b32.xlu0 %v4063, 16
  %v5557 = vpop.permute.xlu0 %5556
  %5558 = vrot.lane.b32.xlu0 %v4064, 16
  %v5559 = vpop.permute.xlu0 %5558
  %5560 = vrot.lane.b32.xlu0 %v4065, 16
  %v5561 = vpop.permute.xlu0 %5560
  %5562 = vrot.lane.b32.xlu0 %v4066, 16
  %v5563 = vpop.permute.xlu0 %5562
  %5564 = vrot.lane.b32.xlu0 %v4067, 16
  %v5565 = vpop.permute.xlu0 %5564
  %5566 = vrot.lane.b32.xlu0 %v4068, 16
  %v5567 = vpop.permute.xlu0 %5566
  %5568 = vrot.lane.b32.xlu0 %v4069, 16
  %v5569 = vpop.permute.xlu0 %5568
  %5570 = vrot.lane.b32.xlu0 %v4070, 16
  %v5571 = vpop.permute.xlu0 %5570
  %5572 = vrot.lane.b32.xlu0 %v4071, 16
  %v5573 = vpop.permute.xlu0 %5572
  %5574 = vrot.lane.b32.xlu0 %v4072, 16
  %v5575 = vpop.permute.xlu0 %5574
  %5576 = vrot.lane.b32.xlu0 %v4073, 16
  %v5577 = vpop.permute.xlu0 %5576
  %5578 = vrot.lane.b32.xlu0 %v4074, 16
  %v5579 = vpop.permute.xlu0 %5578
  %5580 = vrot.lane.b32.xlu0 %v4075, 16
  %v5581 = vpop.permute.xlu0 %5580
  %5582 = vrot.lane.b32.xlu0 %v4076, 16
  %v5583 = vpop.permute.xlu0 %5582
  %5584 = vrot.lane.b32.xlu0 %v4077, 16
  %v5585 = vpop.permute.xlu0 %5584
  %5586 = vrot.lane.b32.xlu0 %v4078, 16
  %v5587 = vpop.permute.xlu0 %5586
  %5588 = vrot.lane.b32.xlu0 %v4079, 16
  %v5589 = vpop.permute.xlu0 %5588
  %5590 = vrot.lane.b32.xlu0 %v4080, 16
  %v5591 = vpop.permute.xlu0 %5590
  %5592 = vrot.lane.b32.xlu0 %v4081, 16
  %v5593 = vpop.permute.xlu0 %5592
  %5594 = vrot.lane.b32.xlu0 %v4082, 16
  %v5595 = vpop.permute.xlu0 %5594
  %5596 = vrot.lane.b32.xlu0 %v4083, 16
  %v5597 = vpop.permute.xlu0 %5596
  %5598 = vrot.lane.b32.xlu0 %v4084, 16
  %v5599 = vpop.permute.xlu0 %5598
  %5600 = vrot.lane.b32.xlu0 %v4085, 16
  %v5601 = vpop.permute.xlu0 %5600
  %5602 = vrot.lane.b32.xlu0 %v4086, 16
  %v5603 = vpop.permute.xlu0 %5602
  %5604 = vrot.lane.b32.xlu0 %v4087, 16
  %v5605 = vpop.permute.xlu0 %5604
  %5606 = vrot.lane.b32.xlu0 %v4088, 16
  %v5607 = vpop.permute.xlu0 %5606
  %5608 = vrot.lane.b32.xlu0 %v4089, 16
  %v5609 = vpop.permute.xlu0 %5608
  %5610 = vrot.lane.b32.xlu0 %v4090, 16
  %v5611 = vpop.permute.xlu0 %5610
  %5612 = vrot.lane.b32.xlu0 %v4091, 16
  %v5613 = vpop.permute.xlu0 %5612
  %5614 = vrot.lane.b32.xlu0 %v4092, 16
  %v5615 = vpop.permute.xlu0 %5614
  %5616 = vrot.lane.b32.xlu0 %v4093, 16
  %v5617 = vpop.permute.xlu0 %5616
  %5618 = vrot.lane.b32.xlu0 %v4094, 16
  %v5619 = vpop.permute.xlu0 %5618
  %5620 = vrot.lane.b32.xlu0 %v4095, 16
  %v5621 = vpop.permute.xlu0 %5620
  %5622 = vrot.lane.b32.xlu0 %v4096, 16
  %v5623 = vpop.permute.xlu0 %5622
  %5624 = vrot.lane.b32.xlu0 %v4097, 16
  %v5625 = vpop.permute.xlu0 %5624
  %5626 = vrot.lane.b32.xlu0 %v4098, 16
  %v5627 = vpop.permute.xlu0 %5626
  %5628 = vrot.lane.b32.xlu0 %v4099, 16
  %v5629 = vpop.permute.xlu0 %5628
  %5630 = vrot.lane.b32.xlu0 %v4100, 16
  %v5631 = vpop.permute.xlu0 %5630
  %5632 = vrot.lane.b32.xlu0 %v4101, 16
  %v5633 = vpop.permute.xlu0 %5632
  %5634 = vrot.lane.b32.xlu0 %v4102, 16
  %v5635 = vpop.permute.xlu0 %5634
  %5636 = vrot.lane.b32.xlu0 %v4103, 16
  %v5637 = vpop.permute.xlu0 %5636
  %5638 = vrot.lane.b32.xlu0 %v4104, 16
  %v5639 = vpop.permute.xlu0 %5638
  %5640 = vrot.lane.b32.xlu0 %v4105, 16
  %v5641 = vpop.permute.xlu0 %5640
  %5642 = vrot.lane.b32.xlu0 %v4106, 16
  %v5643 = vpop.permute.xlu0 %5642
  %5644 = vrot.lane.b32.xlu0 %v4107, 16
  %v5645 = vpop.permute.xlu0 %5644
  %5646 = vrot.lane.b32.xlu0 %v4108, 16
  %v5647 = vpop.permute.xlu0 %5646
  %5648 = vrot.lane.b32.xlu0 %v4109, 16
  %v5649 = vpop.permute.xlu0 %5648
  %5650 = vrot.lane.b32.xlu0 %v4110, 16
  %v5651 = vpop.permute.xlu0 %5650
  %5652 = vrot.lane.b32.xlu0 %v4111, 16
  %v5653 = vpop.permute.xlu0 %5652
  %5654 = vrot.lane.b32.xlu0 %v4112, 16
  %v5655 = vpop.permute.xlu0 %5654
  %5656 = vrot.lane.b32.xlu0 %v4113, 16
  %v5657 = vpop.permute.xlu0 %5656
  %5658 = vrot.lane.b32.xlu0 %v4114, 16
  %v5659 = vpop.permute.xlu0 %5658
  %5660 = vrot.lane.b32.xlu0 %v4115, 16
  %v5661 = vpop.permute.xlu0 %5660
  %5662 = vrot.lane.b32.xlu0 %v4116, 16
  %v5663 = vpop.permute.xlu0 %5662
  %5664 = vrot.lane.b32.xlu0 %v4117, 16
  %v5665 = vpop.permute.xlu0 %5664
  %5666 = vrot.lane.b32.xlu0 %v4118, 16
  %v5667 = vpop.permute.xlu0 %5666
  %5668 = vrot.lane.b32.xlu0 %v4119, 16
  %v5669 = vpop.permute.xlu0 %5668
  %5670 = vrot.lane.b32.xlu0 %v4120, 16
  %v5671 = vpop.permute.xlu0 %5670
  %5672 = vrot.lane.b32.xlu0 %v4121, 16
  %v5673 = vpop.permute.xlu0 %5672
  %5674 = vrot.lane.b32.xlu0 %v4122, 16
  %v5675 = vpop.permute.xlu0 %5674
  %5676 = vrot.lane.b32.xlu0 %v4123, 16
  %v5677 = vpop.permute.xlu0 %5676
  %5678 = vrot.lane.b32.xlu0 %v4124, 16
  %v5679 = vpop.permute.xlu0 %5678
  %5680 = vrot.lane.b32.xlu0 %v4125, 16
  %v5681 = vpop.permute.xlu0 %5680
  %5682 = vrot.lane.b32.xlu0 %v4126, 16
  %v5683 = vpop.permute.xlu0 %5682
  %5684 = vrot.lane.b32.xlu0 %v4127, 16
  %v5685 = vpop.permute.xlu0 %5684
  %5686 = vrot.lane.b32.xlu0 %v4128, 16
  %v5687 = vpop.permute.xlu0 %5686
  %5688 = vrot.lane.b32.xlu0 %v4129, 16
  %v5689 = vpop.permute.xlu0 %5688
  %5690 = vrot.lane.b32.xlu0 %v4130, 16
  %v5691 = vpop.permute.xlu0 %5690
  %5692 = vrot.lane.b32.xlu0 %v4131, 16
  %v5693 = vpop.permute.xlu0 %5692
  %5694 = vrot.lane.b32.xlu0 %v4132, 16
  %v5695 = vpop.permute.xlu0 %5694
  %5696 = vrot.lane.b32.xlu0 %v4133, 16
  %v5697 = vpop.permute.xlu0 %5696
  %5698 = vrot.lane.b32.xlu0 %v4134, 16
  %v5699 = vpop.permute.xlu0 %5698
  %5700 = vrot.lane.b32.xlu0 %v4135, 16
  %v5701 = vpop.permute.xlu0 %5700
  %5702 = vrot.lane.b32.xlu0 %v4136, 16
  %v5703 = vpop.permute.xlu0 %5702
  %5704 = vrot.lane.b32.xlu0 %v4137, 16
  %v5705 = vpop.permute.xlu0 %5704
  %5706 = vrot.lane.b32.xlu0 %v4138, 16
  %v5707 = vpop.permute.xlu0 %5706
  %5708 = vrot.lane.b32.xlu0 %v4139, 16
  %v5709 = vpop.permute.xlu0 %5708
  %5710 = vrot.lane.b32.xlu0 %v4140, 16
  %v5711 = vpop.permute.xlu0 %5710
  %5712 = vrot.lane.b32.xlu0 %v4141, 16
  %v5713 = vpop.permute.xlu0 %5712
  %5714 = vrot.lane.b32.xlu0 %v4142, 16
  %v5715 = vpop.permute.xlu0 %5714
  %5716 = vrot.lane.b32.xlu0 %v4143, 16
  %v5717 = vpop.permute.xlu0 %5716
  %5718 = vrot.lane.b32.xlu0 %v4144, 16
  %v5719 = vpop.permute.xlu0 %5718
  %5720 = vrot.lane.b32.xlu0 %v4145, 16
  %v5721 = vpop.permute.xlu0 %5720
  %5722 = vrot.lane.b32.xlu0 %v4146, 16
  %v5723 = vpop.permute.xlu0 %5722
  %5724 = vrot.lane.b32.xlu0 %v4147, 16
  %v5725 = vpop.permute.xlu0 %5724
  %5726 = vrot.lane.b32.xlu0 %v4148, 16
  %v5727 = vpop.permute.xlu0 %5726
  %5728 = vrot.lane.b32.xlu0 %v4149, 16
  %v5729 = vpop.permute.xlu0 %5728
  %5730 = vrot.lane.b32.xlu0 %v4150, 16
  %v5731 = vpop.permute.xlu0 %5730
  %5732 = vrot.lane.b32.xlu0 %v4151, 16
  %v5733 = vpop.permute.xlu0 %5732
  %5734 = vrot.lane.b32.xlu0 %v4152, 16
  %v5735 = vpop.permute.xlu0 %5734
  %5736 = vrot.lane.b32.xlu0 %v4153, 16
  %v5737 = vpop.permute.xlu0 %5736
  %5738 = vrot.lane.b32.xlu0 %v4154, 16
  %v5739 = vpop.permute.xlu0 %5738
  %5740 = vrot.lane.b32.xlu0 %v4155, 16
  %v5741 = vpop.permute.xlu0 %5740
  %5742 = vrot.lane.b32.xlu0 %v4156, 16
  %v5743 = vpop.permute.xlu0 %5742
  %5744 = vrot.lane.b32.xlu0 %v4157, 16
  %v5745 = vpop.permute.xlu0 %5744
  %5746 = vrot.lane.b32.xlu0 %v4158, 16
  %v5747 = vpop.permute.xlu0 %5746
  %5748 = vrot.lane.b32.xlu0 %v4159, 16
  %v5749 = vpop.permute.xlu0 %5748
  %5750 = vrot.lane.b32.xlu0 %v4160, 16
  %v5751 = vpop.permute.xlu0 %5750
  %5752 = vrot.lane.b32.xlu0 %v4161, 16
  %v5753 = vpop.permute.xlu0 %5752
  %5754 = vrot.lane.b32.xlu0 %v4162, 16
  %v5755 = vpop.permute.xlu0 %5754
  %5756 = vrot.lane.b32.xlu0 %v4163, 16
  %v5757 = vpop.permute.xlu0 %5756
  %5758 = vrot.lane.b32.xlu0 %v4164, 16
  %v5759 = vpop.permute.xlu0 %5758
  %5760 = vrot.lane.b32.xlu0 %v4165, 16
  %v5761 = vpop.permute.xlu0 %5760
  %5762 = vrot.lane.b32.xlu0 %v4166, 16
  %v5763 = vpop.permute.xlu0 %5762
  %5764 = vrot.lane.b32.xlu0 %v4167, 16
  %v5765 = vpop.permute.xlu0 %5764
  %5766 = vrot.lane.b32.xlu0 %v4168, 16
  %v5767 = vpop.permute.xlu0 %5766
  %5768 = vrot.lane.b32.xlu0 %v4169, 16
  %v5769 = vpop.permute.xlu0 %5768
  %5770 = vrot.lane.b32.xlu0 %v4170, 16
  %v5771 = vpop.permute.xlu0 %5770
  %5772 = vrot.lane.b32.xlu0 %v4171, 16
  %v5773 = vpop.permute.xlu0 %5772
  %5774 = vrot.lane.b32.xlu0 %v4172, 16
  %v5775 = vpop.permute.xlu0 %5774
  %5776 = vrot.lane.b32.xlu0 %v4173, 16
  %v5777 = vpop.permute.xlu0 %5776
  %5778 = vrot.lane.b32.xlu0 %v4174, 16
  %v5779 = vpop.permute.xlu0 %5778
  %5780 = vrot.lane.b32.xlu0 %v4175, 16
  %v5781 = vpop.permute.xlu0 %5780
  %5782 = vrot.lane.b32.xlu0 %v4176, 16
  %v5783 = vpop.permute.xlu0 %5782
  %5784 = vrot.lane.b32.xlu0 %v4177, 16
  %v5785 = vpop.permute.xlu0 %5784
  %5786 = vrot.lane.b32.xlu0 %v4178, 16
  %v5787 = vpop.permute.xlu0 %5786
  %5788 = vrot.lane.b32.xlu0 %v4179, 16
  %v5789 = vpop.permute.xlu0 %5788
  %5790 = vrot.lane.b32.xlu0 %v4180, 16
  %v5791 = vpop.permute.xlu0 %5790
  %5792 = vrot.lane.b32.xlu0 %v4181, 16
  %v5793 = vpop.permute.xlu0 %5792
  %5794 = vrot.lane.b32.xlu0 %v4182, 16
  %v5795 = vpop.permute.xlu0 %5794
  %5796 = vrot.lane.b32.xlu0 %v4183, 16
  %v5797 = vpop.permute.xlu0 %5796
  %5798 = vrot.lane.b32.xlu0 %v4184, 16
  %v5799 = vpop.permute.xlu0 %5798
  %5800 = vrot.lane.b32.xlu0 %v4185, 16
  %v5801 = vpop.permute.xlu0 %5800
  %5802 = vrot.lane.b32.xlu0 %v4186, 16
  %v5803 = vpop.permute.xlu0 %5802
  %5804 = vrot.lane.b32.xlu0 %v3947, 16
  %v5805 = vpop.permute.xlu0 %5804
  %5806 = vrot.lane.b32.xlu0 %v3948, 16
  %v5807 = vpop.permute.xlu0 %5806
  %5808 = vrot.lane.b32.xlu0 %v3949, 16
  %v5809 = vpop.permute.xlu0 %5808
  %5810 = vrot.lane.b32.xlu0 %v3950, 16
  %v5811 = vpop.permute.xlu0 %5810
  %5812 = vrot.lane.b32.xlu0 %v3951, 16
  %v5813 = vpop.permute.xlu0 %5812
  %5814 = vrot.lane.b32.xlu0 %v3952, 16
  %v5815 = vpop.permute.xlu0 %5814
  %5816 = vrot.lane.b32.xlu0 %v3953, 16
  %v5817 = vpop.permute.xlu0 %5816
  %5818 = vrot.lane.b32.xlu0 %v3954, 16
  %v5819 = vpop.permute.xlu0 %5818
  %5820 = vrot.lane.b32.xlu0 %v3955, 16
  %v5821 = vpop.permute.xlu0 %5820
  %5822 = vrot.lane.b32.xlu0 %v3956, 16
  %v5823 = vpop.permute.xlu0 %5822
  %5824 = vrot.lane.b32.xlu0 %v3957, 16
  %v5825 = vpop.permute.xlu0 %5824
  %5826 = vrot.lane.b32.xlu0 %v3958, 16
  %v5827 = vpop.permute.xlu0 %5826
  %5828 = vrot.lane.b32.xlu0 %v3959, 16
  %v5829 = vpop.permute.xlu0 %5828
  %5830 = vrot.lane.b32.xlu0 %v3960, 16
  %v5831 = vpop.permute.xlu0 %5830
  %5832 = vrot.lane.b32.xlu0 %v3961, 16
  %v5833 = vpop.permute.xlu0 %5832
  %5834 = vrot.lane.b32.xlu0 %v3962, 16
  %v5835 = vpop.permute.xlu0 %5834
  %5836 = vrot.lane.b32.xlu0 %v3963, 16
  %v5837 = vpop.permute.xlu0 %5836
  %5838 = vrot.lane.b32.xlu0 %v3964, 16
  %v5839 = vpop.permute.xlu0 %5838
  %5840 = vrot.lane.b32.xlu0 %v3965, 16
  %v5841 = vpop.permute.xlu0 %5840
  %5842 = vrot.lane.b32.xlu0 %v3966, 16
  %v5843 = vpop.permute.xlu0 %5842
  %5844 = vrot.lane.b32.xlu0 %v3967, 16
  %v5845 = vpop.permute.xlu0 %5844
  %5846 = vrot.lane.b32.xlu0 %v3968, 16
  %v5847 = vpop.permute.xlu0 %5846
  %5848 = vrot.lane.b32.xlu0 %v3969, 16
  %v5849 = vpop.permute.xlu0 %5848
  %5850 = vrot.lane.b32.xlu0 %v3970, 16
  %v5851 = vpop.permute.xlu0 %5850
  %5852 = vrot.lane.b32.xlu0 %v3971, 16
  %v5853 = vpop.permute.xlu0 %5852
  %5854 = vrot.lane.b32.xlu0 %v3972, 16
  %v5855 = vpop.permute.xlu0 %5854
  %5856 = vrot.lane.b32.xlu0 %v3973, 16
  %v5857 = vpop.permute.xlu0 %5856
  %5858 = vrot.lane.b32.xlu0 %v3974, 16
  %v5859 = vpop.permute.xlu0 %5858
  %5860 = vrot.lane.b32.xlu0 %v3975, 16
  %v5861 = vpop.permute.xlu0 %5860
  %5862 = vrot.lane.b32.xlu0 %v3976, 16
  %v5863 = vpop.permute.xlu0 %5862
  %5864 = vrot.lane.b32.xlu0 %v3977, 16
  %v5865 = vpop.permute.xlu0 %5864
  %5866 = vrot.lane.b32.xlu0 %v3978, 16
  %v5867 = vpop.permute.xlu0 %5866
  %vm5868 = vcmask 130048
  %v5869 = vsel %vm5868, %v5389, %v5391
  %v5870 = vsel %vm5868, %v5393, %v5395
  %v5871 = vsel %vm5868, %v5397, %v5399
  %v5872 = vsel %vm5868, %v5401, %v5403
  %v5873 = vsel %vm5868, %v5405, %v5407
  %v5874 = vsel %vm5868, %v5409, %v5411
  %v5875 = vsel %vm5868, %v5413, %v5415
  %v5876 = vsel %vm5868, %v5417, %v5419
  %v5877 = vsel %vm5868, %v5421, %v5423
  %v5878 = vsel %vm5868, %v5425, %v5427
  %v5879 = vsel %vm5868, %v5429, %v5431
  %v5880 = vsel %vm5868, %v5433, %v5435
  %v5881 = vsel %vm5868, %v5437, %v5439
  %v5882 = vsel %vm5868, %v5441, %v5443
  %v5883 = vsel %vm5868, %v5445, %v5447
  %v5884 = vsel %vm5868, %v5449, %v5451
  %v5885 = vsel %vm5868, %v5453, %v5455
  %v5886 = vsel %vm5868, %v5457, %v5459
  %v5887 = vsel %vm5868, %v5461, %v5463
  %v5888 = vsel %vm5868, %v5465, %v5467
  %v5889 = vsel %vm5868, %v5469, %v5471
  %v5890 = vsel %vm5868, %v5473, %v5475
  %v5891 = vsel %vm5868, %v5477, %v5479
  %v5892 = vsel %vm5868, %v5481, %v5483
  %v5893 = vsel %vm5868, %v5485, %v5487
  %v5894 = vsel %vm5868, %v5489, %v5491
  %v5895 = vsel %vm5868, %v5493, %v5495
  %v5896 = vsel %vm5868, %v5497, %v5499
  %v5897 = vsel %vm5868, %v5501, %v5503
  %v5898 = vsel %vm5868, %v5505, %v5507
  %v5899 = vsel %vm5868, %v5509, %v5511
  %v5900 = vsel %vm5868, %v5513, %v5515
  %v5901 = vsel %vm5868, %v5517, %v5519
  %v5902 = vsel %vm5868, %v5521, %v5523
  %v5903 = vsel %vm5868, %v5525, %v5527
  %v5904 = vsel %vm5868, %v5529, %v5531
  %v5905 = vsel %vm5868, %v5533, %v5535
  %v5906 = vsel %vm5868, %v5537, %v5539
  %v5907 = vsel %vm5868, %v5541, %v5543
  %v5908 = vsel %vm5868, %v5545, %v5547
  %v5909 = vsel %vm5868, %v5549, %v5551
  %v5910 = vsel %vm5868, %v5553, %v5555
  %v5911 = vsel %vm5868, %v5557, %v5559
  %v5912 = vsel %vm5868, %v5561, %v5563
  %v5913 = vsel %vm5868, %v5565, %v5567
  %v5914 = vsel %vm5868, %v5569, %v5571
  %v5915 = vsel %vm5868, %v5573, %v5575
  %v5916 = vsel %vm5868, %v5577, %v5579
  %v5917 = vsel %vm5868, %v5581, %v5583
  %v5918 = vsel %vm5868, %v5585, %v5587
  %v5919 = vsel %vm5868, %v5589, %v5591
  %v5920 = vsel %vm5868, %v5593, %v5595
  %v5921 = vsel %vm5868, %v5597, %v5599
  %v5922 = vsel %vm5868, %v5601, %v5603
  %v5923 = vsel %vm5868, %v5605, %v5607
  %v5924 = vsel %vm5868, %v5609, %v5611
  %v5925 = vsel %vm5868, %v5613, %v5615
  %v5926 = vsel %vm5868, %v5617, %v5619
  %v5927 = vsel %vm5868, %v5621, %v5623
  %v5928 = vsel %vm5868, %v5625, %v5627
  %v5929 = vsel %vm5868, %v5629, %v5631
  %v5930 = vsel %vm5868, %v5633, %v5635
  %v5931 = vsel %vm5868, %v5637, %v5639
  %v5932 = vsel %vm5868, %v5641, %v5643
  %v5933 = vsel %vm5868, %v5645, %v5647
  %v5934 = vsel %vm5868, %v5649, %v5651
  %v5935 = vsel %vm5868, %v5653, %v5655
  %v5936 = vsel %vm5868, %v5657, %v5659
  %v5937 = vsel %vm5868, %v5661, %v5663
  %v5938 = vsel %vm5868, %v5665, %v5667
  %v5939 = vsel %vm5868, %v5669, %v5671
  %v5940 = vsel %vm5868, %v5673, %v5675
  %v5941 = vsel %vm5868, %v5677, %v5679
  %v5942 = vsel %vm5868, %v5681, %v5683
  %v5943 = vsel %vm5868, %v5685, %v5687
  %v5944 = vsel %vm5868, %v5689, %v5691
  %v5945 = vsel %vm5868, %v5693, %v5695
  %v5946 = vsel %vm5868, %v5697, %v5699
  %v5947 = vsel %vm5868, %v5701, %v5703
  %v5948 = vsel %vm5868, %v5705, %v5707
  %v5949 = vsel %vm5868, %v5709, %v5711
  %v5950 = vsel %vm5868, %v5713, %v5715
  %v5951 = vsel %vm5868, %v5717, %v5719
  %v5952 = vsel %vm5868, %v5721, %v5723
  %v5953 = vsel %vm5868, %v5725, %v5727
  %v5954 = vsel %vm5868, %v5729, %v5731
  %v5955 = vsel %vm5868, %v5733, %v5735
  %v5956 = vsel %vm5868, %v5737, %v5739
  %v5957 = vsel %vm5868, %v5741, %v5743
  %v5958 = vsel %vm5868, %v5745, %v5747
  %v5959 = vsel %vm5868, %v5749, %v5751
  %v5960 = vsel %vm5868, %v5753, %v5755
  %v5961 = vsel %vm5868, %v5757, %v5759
  %v5962 = vsel %vm5868, %v5761, %v5763
  %v5963 = vsel %vm5868, %v5765, %v5767
  %v5964 = vsel %vm5868, %v5769, %v5771
  %v5965 = vsel %vm5868, %v5773, %v5775
  %v5966 = vsel %vm5868, %v5777, %v5779
  %v5967 = vsel %vm5868, %v5781, %v5783
  %v5968 = vsel %vm5868, %v5785, %v5787
  %v5969 = vsel %vm5868, %v5789, %v5791
  %v5970 = vsel %vm5868, %v5793, %v5795
  %v5971 = vsel %vm5868, %v5797, %v5799
  %v5972 = vsel %vm5868, %v5801, %v5803
  %v5973 = vsel %vm5868, %v5805, %v5807
  %v5974 = vsel %vm5868, %v5809, %v5811
  %v5975 = vsel %vm5868, %v5813, %v5815
  %v5976 = vsel %vm5868, %v5817, %v5819
  %v5977 = vsel %vm5868, %v5821, %v5823
  %v5978 = vsel %vm5868, %v5825, %v5827
  %v5979 = vsel %vm5868, %v5829, %v5831
  %v5980 = vsel %vm5868, %v5833, %v5835
  %v5981 = vsel %vm5868, %v5837, %v5839
  %v5982 = vsel %vm5868, %v5841, %v5843
  %v5983 = vsel %vm5868, %v5845, %v5847
  %v5984 = vsel %vm5868, %v5849, %v5851
  %v5985 = vsel %vm5868, %v5853, %v5855
  %v5986 = vsel %vm5868, %v5857, %v5859
  %v5987 = vsel %vm5868, %v5861, %v5863
  %v5988 = vsel %vm5868, %v5865, %v5867
  %v6109 = vsel %vm4907, %v3948, %v4428
  %v6110 = vsel %vm4907, %v3950, %v4432
  %v6111 = vsel %vm4907, %v3952, %v4436
  %v6112 = vsel %vm4907, %v3954, %v4440
  %v6113 = vsel %vm4907, %v3956, %v4444
  %v6114 = vsel %vm4907, %v3958, %v4448
  %v6115 = vsel %vm4907, %v3960, %v4452
  %v6116 = vsel %vm4907, %v3962, %v4456
  %v6117 = vsel %vm4907, %v3964, %v4460
  %v6118 = vsel %vm4907, %v3966, %v4464
  %v6119 = vsel %vm4907, %v3968, %v4468
  %v6120 = vsel %vm4907, %v3970, %v4472
  %v6121 = vsel %vm4907, %v3972, %v4476
  %v6122 = vsel %vm4907, %v3974, %v4480
  %v6123 = vsel %vm4907, %v3976, %v4484
  %v6124 = vsel %vm4907, %v3978, %v4488
  %v6125 = vsel %vm4907, %v3980, %v4492
  %v6126 = vsel %vm4907, %v3982, %v4496
  %v6127 = vsel %vm4907, %v3984, %v4500
  %v6128 = vsel %vm4907, %v3986, %v4504
  %v6129 = vsel %vm4907, %v3988, %v4508
  %v6130 = vsel %vm4907, %v3990, %v4512
  %v6131 = vsel %vm4907, %v3992, %v4516
  %v6132 = vsel %vm4907, %v3994, %v4520
  %v6133 = vsel %vm4907, %v3996, %v4524
  %v6134 = vsel %vm4907, %v3998, %v4528
  %v6135 = vsel %vm4907, %v4000, %v4532
  %v6136 = vsel %vm4907, %v4002, %v4536
  %v6137 = vsel %vm4907, %v4004, %v4540
  %v6138 = vsel %vm4907, %v4006, %v4544
  %v6139 = vsel %vm4907, %v4008, %v4548
  %v6140 = vsel %vm4907, %v4010, %v4552
  %v6141 = vsel %vm4907, %v4012, %v4556
  %v6142 = vsel %vm4907, %v4014, %v4560
  %v6143 = vsel %vm4907, %v4016, %v4564
  %v6144 = vsel %vm4907, %v4018, %v4568
  %v6145 = vsel %vm4907, %v4020, %v4572
  %v6146 = vsel %vm4907, %v4022, %v4576
  %v6147 = vsel %vm4907, %v4024, %v4580
  %v6148 = vsel %vm4907, %v4026, %v4584
  %v6149 = vsel %vm4907, %v4028, %v4588
  %v6150 = vsel %vm4907, %v4030, %v4592
  %v6151 = vsel %vm4907, %v4032, %v4596
  %v6152 = vsel %vm4907, %v4034, %v4600
  %v6153 = vsel %vm4907, %v4036, %v4604
  %v6154 = vsel %vm4907, %v4038, %v4608
  %v6155 = vsel %vm4907, %v4040, %v4612
  %v6156 = vsel %vm4907, %v4042, %v4616
  %v6157 = vsel %vm4907, %v4044, %v4620
  %v6158 = vsel %vm4907, %v4046, %v4624
  %v6159 = vsel %vm4907, %v4048, %v4628
  %v6160 = vsel %vm4907, %v4050, %v4632
  %v6161 = vsel %vm4907, %v4052, %v4636
  %v6162 = vsel %vm4907, %v4054, %v4640
  %v6163 = vsel %vm4907, %v4056, %v4644
  %v6164 = vsel %vm4907, %v4058, %v4648
  %v6165 = vsel %vm4907, %v4060, %v4652
  %v6166 = vsel %vm4907, %v4062, %v4656
  %v6167 = vsel %vm4907, %v4064, %v4660
  %v6168 = vsel %vm4907, %v4066, %v4664
  %v6169 = vsel %vm4907, %v4068, %v4668
  %v6170 = vsel %vm4907, %v4070, %v4672
  %v6171 = vsel %vm4907, %v4072, %v4676
  %v6172 = vsel %vm4907, %v4074, %v4680
  %v6173 = vsel %vm4907, %v4076, %v4684
  %v6174 = vsel %vm4907, %v4078, %v4688
  %v6175 = vsel %vm4907, %v4080, %v4692
  %v6176 = vsel %vm4907, %v4082, %v4696
  %v6177 = vsel %vm4907, %v4084, %v4700
  %v6178 = vsel %vm4907, %v4086, %v4704
  %v6179 = vsel %vm4907, %v4088, %v4708
  %v6180 = vsel %vm4907, %v4090, %v4712
  %v6181 = vsel %vm4907, %v4092, %v4716
  %v6182 = vsel %vm4907, %v4094, %v4720
  %v6183 = vsel %vm4907, %v4096, %v4724
  %v6184 = vsel %vm4907, %v4098, %v4728
  %v6185 = vsel %vm4907, %v4100, %v4732
  %v6186 = vsel %vm4907, %v4102, %v4736
  %v6187 = vsel %vm4907, %v4104, %v4740
  %v6188 = vsel %vm4907, %v4106, %v4744
  %v6189 = vsel %vm4907, %v4108, %v4748
  %v6190 = vsel %vm4907, %v4110, %v4752
  %v6191 = vsel %vm4907, %v4112, %v4756
  %v6192 = vsel %vm4907, %v4114, %v4760
  %v6193 = vsel %vm4907, %v4116, %v4764
  %v6194 = vsel %vm4907, %v4118, %v4768
  %v6195 = vsel %vm4907, %v4120, %v4772
  %v6196 = vsel %vm4907, %v4122, %v4776
  %v6197 = vsel %vm4907, %v4124, %v4780
  %v6198 = vsel %vm4907, %v4126, %v4784
  %v6199 = vsel %vm4907, %v4128, %v4788
  %v6200 = vsel %vm4907, %v4130, %v4792
  %v6201 = vsel %vm4907, %v4132, %v4796
  %v6202 = vsel %vm4907, %v4134, %v4800
  %v6203 = vsel %vm4907, %v4136, %v4804
  %v6204 = vsel %vm4907, %v4138, %v4808
  %v6205 = vsel %vm4907, %v4140, %v4812
  %v6206 = vsel %vm4907, %v4142, %v4816
  %v6207 = vsel %vm4907, %v4144, %v4820
  %v6208 = vsel %vm4907, %v4146, %v4824
  %v6209 = vsel %vm4907, %v4148, %v4828
  %v6210 = vsel %vm4907, %v4150, %v4832
  %v6211 = vsel %vm4907, %v4152, %v4836
  %v6212 = vsel %vm4907, %v4154, %v4840
  %v6213 = vsel %vm4907, %v4156, %v4844
  %v6214 = vsel %vm4907, %v4158, %v4848
  %v6215 = vsel %vm4907, %v4160, %v4852
  %v6216 = vsel %vm4907, %v4162, %v4856
  %v6217 = vsel %vm4907, %v4164, %v4860
  %v6218 = vsel %vm4907, %v4166, %v4864
  %v6219 = vsel %vm4907, %v4168, %v4868
  %v6220 = vsel %vm4907, %v4170, %v4872
  %v6221 = vsel %vm4907, %v4172, %v4876
  %v6222 = vsel %vm4907, %v4174, %v4880
  %v6223 = vsel %vm4907, %v4176, %v4884
  %v6224 = vsel %vm4907, %v4178, %v4888
  %v6225 = vsel %vm4907, %v4180, %v4892
  %v6226 = vsel %vm4907, %v4182, %v4896
  %v6227 = vsel %vm4907, %v4184, %v4900
  %v6228 = vsel %vm4907, %v4186, %v4904
  %v6229 = vsel %vm5868, %v4430, %v5389
  %v6230 = vsel %vm5868, %v4434, %v5393
  %v6231 = vsel %vm5868, %v4438, %v5397
  %v6232 = vsel %vm5868, %v4442, %v5401
  %v6233 = vsel %vm5868, %v4446, %v5405
  %v6234 = vsel %vm5868, %v4450, %v5409
  %v6235 = vsel %vm5868, %v4454, %v5413
  %v6236 = vsel %vm5868, %v4458, %v5417
  %v6237 = vsel %vm5868, %v4462, %v5421
  %v6238 = vsel %vm5868, %v4466, %v5425
  %v6239 = vsel %vm5868, %v4470, %v5429
  %v6240 = vsel %vm5868, %v4474, %v5433
  %v6241 = vsel %vm5868, %v4478, %v5437
  %v6242 = vsel %vm5868, %v4482, %v5441
  %v6243 = vsel %vm5868, %v4486, %v5445
  %v6244 = vsel %vm5868, %v4490, %v5449
  %v6245 = vsel %vm5868, %v4494, %v5453
  %v6246 = vsel %vm5868, %v4498, %v5457
  %v6247 = vsel %vm5868, %v4502, %v5461
  %v6248 = vsel %vm5868, %v4506, %v5465
  %v6249 = vsel %vm5868, %v4510, %v5469
  %v6250 = vsel %vm5868, %v4514, %v5473
  %v6251 = vsel %vm5868, %v4518, %v5477
  %v6252 = vsel %vm5868, %v4522, %v5481
  %v6253 = vsel %vm5868, %v4526, %v5485
  %v6254 = vsel %vm5868, %v4530, %v5489
  %v6255 = vsel %vm5868, %v4534, %v5493
  %v6256 = vsel %vm5868, %v4538, %v5497
  %v6257 = vsel %vm5868, %v4542, %v5501
  %v6258 = vsel %vm5868, %v4546, %v5505
  %v6259 = vsel %vm5868, %v4550, %v5509
  %v6260 = vsel %vm5868, %v4554, %v5513
  %v6261 = vsel %vm5868, %v4558, %v5517
  %v6262 = vsel %vm5868, %v4562, %v5521
  %v6263 = vsel %vm5868, %v4566, %v5525
  %v6264 = vsel %vm5868, %v4570, %v5529
  %v6265 = vsel %vm5868, %v4574, %v5533
  %v6266 = vsel %vm5868, %v4578, %v5537
  %v6267 = vsel %vm5868, %v4582, %v5541
  %v6268 = vsel %vm5868, %v4586, %v5545
  %v6269 = vsel %vm5868, %v4590, %v5549
  %v6270 = vsel %vm5868, %v4594, %v5553
  %v6271 = vsel %vm5868, %v4598, %v5557
  %v6272 = vsel %vm5868, %v4602, %v5561
  %v6273 = vsel %vm5868, %v4606, %v5565
  %v6274 = vsel %vm5868, %v4610, %v5569
  %v6275 = vsel %vm5868, %v4614, %v5573
  %v6276 = vsel %vm5868, %v4618, %v5577
  %v6277 = vsel %vm5868, %v4622, %v5581
  %v6278 = vsel %vm5868, %v4626, %v5585
  %v6279 = vsel %vm5868, %v4630, %v5589
  %v6280 = vsel %vm5868, %v4634, %v5593
  %v6281 = vsel %vm5868, %v4638, %v5597
  %v6282 = vsel %vm5868, %v4642, %v5601
  %v6283 = vsel %vm5868, %v4646, %v5605
  %v6284 = vsel %vm5868, %v4650, %v5609
  %v6285 = vsel %vm5868, %v4654, %v5613
  %v6286 = vsel %vm5868, %v4658, %v5617
  %v6287 = vsel %vm5868, %v4662, %v5621
  %v6288 = vsel %vm5868, %v4666, %v5625
  %v6289 = vsel %vm5868, %v4670, %v5629
  %v6290 = vsel %vm5868, %v4674, %v5633
  %v6291 = vsel %vm5868, %v4678, %v5637
  %v6292 = vsel %vm5868, %v4682, %v5641
  %v6293 = vsel %vm5868, %v4686, %v5645
  %v6294 = vsel %vm5868, %v4690, %v5649
  %v6295 = vsel %vm5868, %v4694, %v5653
  %v6296 = vsel %vm5868, %v4698, %v5657
  %v6297 = vsel %vm5868, %v4702, %v5661
  %v6298 = vsel %vm5868, %v4706, %v5665
  %v6299 = vsel %vm5868, %v4710, %v5669
  %v6300 = vsel %vm5868, %v4714, %v5673
  %v6301 = vsel %vm5868, %v4718, %v5677
  %v6302 = vsel %vm5868, %v4722, %v5681
  %v6303 = vsel %vm5868, %v4726, %v5685
  %v6304 = vsel %vm5868, %v4730, %v5689
  %v6305 = vsel %vm5868, %v4734, %v5693
  %v6306 = vsel %vm5868, %v4738, %v5697
  %v6307 = vsel %vm5868, %v4742, %v5701
  %v6308 = vsel %vm5868, %v4746, %v5705
  %v6309 = vsel %vm5868, %v4750, %v5709
  %v6310 = vsel %vm5868, %v4754, %v5713
  %v6311 = vsel %vm5868, %v4758, %v5717
  %v6312 = vsel %vm5868, %v4762, %v5721
  %v6313 = vsel %vm5868, %v4766, %v5725
  %v6314 = vsel %vm5868, %v4770, %v5729
  %v6315 = vsel %vm5868, %v4774, %v5733
  %v6316 = vsel %vm5868, %v4778, %v5737
  %v6317 = vsel %vm5868, %v4782, %v5741
  %v6318 = vsel %vm5868, %v4786, %v5745
  %v6319 = vsel %vm5868, %v4790, %v5749
  %v6320 = vsel %vm5868, %v4794, %v5753
  %v6321 = vsel %vm5868, %v4798, %v5757
  %v6322 = vsel %vm5868, %v4802, %v5761
  %v6323 = vsel %vm5868, %v4806, %v5765
  %v6324 = vsel %vm5868, %v4810, %v5769
  %v6325 = vsel %vm5868, %v4814, %v5773
  %v6326 = vsel %vm5868, %v4818, %v5777
  %v6327 = vsel %vm5868, %v4822, %v5781
  %v6328 = vsel %vm5868, %v4826, %v5785
  %v6329 = vsel %vm5868, %v4830, %v5789
  %v6330 = vsel %vm5868, %v4834, %v5793
  %v6331 = vsel %vm5868, %v4838, %v5797
  %v6332 = vsel %vm5868, %v4842, %v5801
  %v6333 = vsel %vm5868, %v4846, %v5805
  %v6334 = vsel %vm5868, %v4850, %v5809
  %v6335 = vsel %vm5868, %v4854, %v5813
  %v6336 = vsel %vm5868, %v4858, %v5817
  %v6337 = vsel %vm5868, %v4862, %v5821
  %v6338 = vsel %vm5868, %v4866, %v5825
  %v6339 = vsel %vm5868, %v4870, %v5829
  %v6340 = vsel %vm5868, %v4874, %v5833
  %v6341 = vsel %vm5868, %v4878, %v5837
  %v6342 = vsel %vm5868, %v4882, %v5841
  %v6343 = vsel %vm5868, %v4886, %v5845
  %v6344 = vsel %vm5868, %v4890, %v5849
  %v6345 = vsel %vm5868, %v4894, %v5853
  %v6346 = vsel %vm5868, %v4898, %v5857
  %v6347 = vsel %vm5868, %v4902, %v5861
  %v6348 = vsel %vm5868, %v4906, %v5865
  %v6349 = vld [vmem:[%s3] sm:$0xff]
  %v6350 = vld [vmem:[%s3 + $0x8] sm:$0xff]
  %v6351 = vld [vmem:[%s3 + $0x10] sm:$0xff]
  %v6352 = vld [vmem:[%s3 + $0x18] sm:$0xff]
  %v6353 = vld [vmem:[%s3 + $0x20] sm:$0xff]
  %v6354 = vld [vmem:[%s3 + $0x28] sm:$0xff]
  %v6355 = vld [vmem:[%s3 + $0x30] sm:$0xff]
  %v6356 = vld [vmem:[%s3 + $0x38] sm:$0xff]
  %v6357 = vld [vmem:[%s3 + $0x40] sm:$0xff]
  %v6358 = vld [vmem:[%s3 + $0x48] sm:$0xff]
  %v6359 = vld [vmem:[%s3 + $0x50] sm:$0xff]
  %v6360 = vld [vmem:[%s3 + $0x58] sm:$0xff]
  %v6361 = vld [vmem:[%s3 + $0x60] sm:$0xff]
  %v6362 = vld [vmem:[%s3 + $0x68] sm:$0xff]
  %v6363 = vld [vmem:[%s3 + $0x70] sm:$0xff]
  %v6364 = vld [vmem:[%s3 + $0x78] sm:$0xff]
  %v6365 = vld [vmem:[%s3 + $0x80] sm:$0xff]
  %v6366 = vld [vmem:[%s3 + $0x88] sm:$0xff]
  %v6367 = vld [vmem:[%s3 + $0x90] sm:$0xff]
  %v6368 = vld [vmem:[%s3 + $0x98] sm:$0xff]
  %v6369 = vld [vmem:[%s3 + $0xa0] sm:$0xff]
  %v6370 = vld [vmem:[%s3 + $0xa8] sm:$0xff]
  %v6371 = vld [vmem:[%s3 + $0xb0] sm:$0xff]
  %v6372 = vld [vmem:[%s3 + $0xb8] sm:$0xff]
  %v6373 = vld [vmem:[%s3 + $0xc0] sm:$0xff]
  %v6374 = vld [vmem:[%s3 + $0xc8] sm:$0xff]
  %v6375 = vld [vmem:[%s3 + $0xd0] sm:$0xff]
  %v6376 = vld [vmem:[%s3 + $0xd8] sm:$0xff]
  %v6377 = vld [vmem:[%s3 + $0xe0] sm:$0xff]
  %v6378 = vld [vmem:[%s3 + $0xe8] sm:$0xff]
  %v6379 = vld [vmem:[%s3 + $0xf0] sm:$0xff]
  %v6380 = vld [vmem:[%s3 + $0xf8] sm:$0xff]
  %v6381 = vld [vmem:[%s3 + $0x100] sm:$0xff]
  %v6382 = vld [vmem:[%s3 + $0x108] sm:$0xff]
  %v6383 = vld [vmem:[%s3 + $0x110] sm:$0xff]
  %v6384 = vld [vmem:[%s3 + $0x118] sm:$0xff]
  %v6385 = vld [vmem:[%s3 + $0x120] sm:$0xff]
  %v6386 = vld [vmem:[%s3 + $0x128] sm:$0xff]
  %v6387 = vld [vmem:[%s3 + $0x130] sm:$0xff]
  %v6388 = vld [vmem:[%s3 + $0x138] sm:$0xff]
  %v6389 = vld [vmem:[%s3 + $0x140] sm:$0xff]
  %v6390 = vld [vmem:[%s3 + $0x148] sm:$0xff]
  %v6391 = vld [vmem:[%s3 + $0x150] sm:$0xff]
  %v6392 = vld [vmem:[%s3 + $0x158] sm:$0xff]
  %v6393 = vld [vmem:[%s3 + $0x160] sm:$0xff]
  %v6394 = vld [vmem:[%s3 + $0x168] sm:$0xff]
  %v6395 = vld [vmem:[%s3 + $0x170] sm:$0xff]
  %v6396 = vld [vmem:[%s3 + $0x178] sm:$0xff]
  %v6397 = vld [vmem:[%s3 + $0x180] sm:$0xff]
  %v6398 = vld [vmem:[%s3 + $0x188] sm:$0xff]
  %v6399 = vld [vmem:[%s3 + $0x190] sm:$0xff]
  %v6400 = vld [vmem:[%s3 + $0x198] sm:$0xff]
  %v6401 = vld [vmem:[%s3 + $0x1a0] sm:$0xff]
  %v6402 = vld [vmem:[%s3 + $0x1a8] sm:$0xff]
  %v6403 = vld [vmem:[%s3 + $0x1b0] sm:$0xff]
  %v6404 = vld [vmem:[%s3 + $0x1b8] sm:$0xff]
  %v6405 = vld [vmem:[%s3 + $0x1c0] sm:$0xff]
  %v6406 = vld [vmem:[%s3 + $0x1c8] sm:$0xff]
  %v6407 = vld [vmem:[%s3 + $0x1d0] sm:$0xff]
  %v6408 = vld [vmem:[%s3 + $0x1d8] sm:$0xff]
  %v6409 = vld [vmem:[%s3 + $0x1e0] sm:$0xff]
  %v6410 = vld [vmem:[%s3 + $0x1e8] sm:$0xff]
  %v6411 = vld [vmem:[%s3 + $0x1f0] sm:$0xff]
  %v6412 = vld [vmem:[%s3 + $0x1f8] sm:$0xff]
  %v6413 = vld [vmem:[%s3 + $0x200] sm:$0xff]
  %v6414 = vld [vmem:[%s3 + $0x208] sm:$0xff]
  %v6415 = vld [vmem:[%s3 + $0x210] sm:$0xff]
  %v6416 = vld [vmem:[%s3 + $0x218] sm:$0xff]
  %v6417 = vld [vmem:[%s3 + $0x220] sm:$0xff]
  %v6418 = vld [vmem:[%s3 + $0x228] sm:$0xff]
  %v6419 = vld [vmem:[%s3 + $0x230] sm:$0xff]
  %v6420 = vld [vmem:[%s3 + $0x238] sm:$0xff]
  %v6421 = vld [vmem:[%s3 + $0x240] sm:$0xff]
  %v6422 = vld [vmem:[%s3 + $0x248] sm:$0xff]
  %v6423 = vld [vmem:[%s3 + $0x250] sm:$0xff]
  %v6424 = vld [vmem:[%s3 + $0x258] sm:$0xff]
  %v6425 = vld [vmem:[%s3 + $0x260] sm:$0xff]
  %v6426 = vld [vmem:[%s3 + $0x268] sm:$0xff]
  %v6427 = vld [vmem:[%s3 + $0x270] sm:$0xff]
  %v6428 = vld [vmem:[%s3 + $0x278] sm:$0xff]
  %v6429 = vld [vmem:[%s3 + $0x280] sm:$0xff]
  %v6430 = vld [vmem:[%s3 + $0x288] sm:$0xff]
  %v6431 = vld [vmem:[%s3 + $0x290] sm:$0xff]
  %v6432 = vld [vmem:[%s3 + $0x298] sm:$0xff]
  %v6433 = vld [vmem:[%s3 + $0x2a0] sm:$0xff]
  %v6434 = vld [vmem:[%s3 + $0x2a8] sm:$0xff]
  %v6435 = vld [vmem:[%s3 + $0x2b0] sm:$0xff]
  %v6436 = vld [vmem:[%s3 + $0x2b8] sm:$0xff]
  %v6437 = vld [vmem:[%s3 + $0x2c0] sm:$0xff]
  %v6438 = vld [vmem:[%s3 + $0x2c8] sm:$0xff]
  %v6439 = vld [vmem:[%s3 + $0x2d0] sm:$0xff]
  %v6440 = vld [vmem:[%s3 + $0x2d8] sm:$0xff]
  %v6441 = vld [vmem:[%s3 + $0x2e0] sm:$0xff]
  %v6442 = vld [vmem:[%s3 + $0x2e8] sm:$0xff]
  %v6443 = vld [vmem:[%s3 + $0x2f0] sm:$0xff]
  %v6444 = vld [vmem:[%s3 + $0x2f8] sm:$0xff]
  %v6445 = vld [vmem:[%s3 + $0x300] sm:$0xff]
  %v6446 = vld [vmem:[%s3 + $0x308] sm:$0xff]
  %v6447 = vld [vmem:[%s3 + $0x310] sm:$0xff]
  %v6448 = vld [vmem:[%s3 + $0x318] sm:$0xff]
  %v6449 = vld [vmem:[%s3 + $0x320] sm:$0xff]
  %v6450 = vld [vmem:[%s3 + $0x328] sm:$0xff]
  %v6451 = vld [vmem:[%s3 + $0x330] sm:$0xff]
  %v6452 = vld [vmem:[%s3 + $0x338] sm:$0xff]
  %v6453 = vld [vmem:[%s3 + $0x340] sm:$0xff]
  %v6454 = vld [vmem:[%s3 + $0x348] sm:$0xff]
  %v6455 = vld [vmem:[%s3 + $0x350] sm:$0xff]
  %v6456 = vld [vmem:[%s3 + $0x358] sm:$0xff]
  %v6457 = vld [vmem:[%s3 + $0x360] sm:$0xff]
  %v6458 = vld [vmem:[%s3 + $0x368] sm:$0xff]
  %v6459 = vld [vmem:[%s3 + $0x370] sm:$0xff]
  %v6460 = vld [vmem:[%s3 + $0x378] sm:$0xff]
  %v6461 = vld [vmem:[%s3 + $0x380] sm:$0xff]
  %v6462 = vld [vmem:[%s3 + $0x388] sm:$0xff]
  %v6463 = vld [vmem:[%s3 + $0x390] sm:$0xff]
  %v6464 = vld [vmem:[%s3 + $0x398] sm:$0xff]
  %v6465 = vld [vmem:[%s3 + $0x3a0] sm:$0xff]
  %v6466 = vld [vmem:[%s3 + $0x3a8] sm:$0xff]
  %v6467 = vld [vmem:[%s3 + $0x3b0] sm:$0xff]
  %v6468 = vld [vmem:[%s3 + $0x3b8] sm:$0xff]
  %v6469 = vld [vmem:[%s3 + $0x3c0] sm:$0xff]
  %v6470 = vld [vmem:[%s3 + $0x3c8] sm:$0xff]
  %v6471 = vld [vmem:[%s3 + $0x3d0] sm:$0xff]
  %v6472 = vld [vmem:[%s3 + $0x3d8] sm:$0xff]
  %v6473 = vld [vmem:[%s3 + $0x3e0] sm:$0xff]
  %v6474 = vld [vmem:[%s3 + $0x3e8] sm:$0xff]
  %v6475 = vld [vmem:[%s3 + $0x3f0] sm:$0xff]
  %v6476 = vld [vmem:[%s3 + $0x3f8] sm:$0xff]
  %v6477 = vld [vmem:[%s3 + $0x400] sm:$0xff]
  %v6478 = vld [vmem:[%s3 + $0x408] sm:$0xff]
  %v6479 = vld [vmem:[%s3 + $0x410] sm:$0xff]
  %v6480 = vld [vmem:[%s3 + $0x418] sm:$0xff]
  %v6481 = vld [vmem:[%s3 + $0x420] sm:$0xff]
  %v6482 = vld [vmem:[%s3 + $0x428] sm:$0xff]
  %v6483 = vld [vmem:[%s3 + $0x430] sm:$0xff]
  %v6484 = vld [vmem:[%s3 + $0x438] sm:$0xff]
  %v6485 = vld [vmem:[%s3 + $0x440] sm:$0xff]
  %v6486 = vld [vmem:[%s3 + $0x448] sm:$0xff]
  %v6487 = vld [vmem:[%s3 + $0x450] sm:$0xff]
  %v6488 = vld [vmem:[%s3 + $0x458] sm:$0xff]
  %v6489 = vld [vmem:[%s3 + $0x460] sm:$0xff]
  %v6490 = vld [vmem:[%s3 + $0x468] sm:$0xff]
  %v6491 = vld [vmem:[%s3 + $0x470] sm:$0xff]
  %v6492 = vld [vmem:[%s3 + $0x478] sm:$0xff]
  %v6493 = vld [vmem:[%s3 + $0x480] sm:$0xff]
  %v6494 = vld [vmem:[%s3 + $0x488] sm:$0xff]
  %v6495 = vld [vmem:[%s3 + $0x490] sm:$0xff]
  %v6496 = vld [vmem:[%s3 + $0x498] sm:$0xff]
  %v6497 = vld [vmem:[%s3 + $0x4a0] sm:$0xff]
  %v6498 = vld [vmem:[%s3 + $0x4a8] sm:$0xff]
  %vm6499 = vcmask 719872
  %v6500 = vsel %vm6499, %v5869, 0
  %v6502 = vsel %vm6499, %v5870, 0
  %v6504 = vsel %vm6499, %v5871, 0
  %v6506 = vsel %vm6499, %v5872, 0
  %v6508 = vsel %vm6499, %v5873, 0
  %v6510 = vsel %vm6499, %v5874, 0
  %v6512 = vsel %vm6499, %v5875, 0
  %v6514 = vsel %vm6499, %v5876, 0
  %v6516 = vsel %vm6499, %v5877, 0
  %v6518 = vsel %vm6499, %v5878, 0
  %v6520 = vsel %vm6499, %v5879, 0
  %v6522 = vsel %vm6499, %v5880, 0
  %v6524 = vsel %vm6499, %v5881, 0
  %v6526 = vsel %vm6499, %v5882, 0
  %v6528 = vsel %vm6499, %v5883, 0
  %v6530 = vsel %vm6499, %v5884, 0
  %v6532 = vsel %vm6499, %v5885, 0
  %v6534 = vsel %vm6499, %v5886, 0
  %v6536 = vsel %vm6499, %v5887, 0
  %v6538 = vsel %vm6499, %v5888, 0
  %v6540 = vsel %vm6499, %v5889, 0
  %v6542 = vsel %vm6499, %v5890, 0
  %v6544 = vsel %vm6499, %v5891, 0
  %v6546 = vsel %vm6499, %v5892, 0
  %v6548 = vsel %vm6499, %v5893, 0
  %v6550 = vsel %vm6499, %v5894, 0
  %v6552 = vsel %vm6499, %v5895, 0
  %v6554 = vsel %vm6499, %v5896, 0
  %v6556 = vsel %vm6499, %v5897, 0
  %v6558 = vsel %vm6499, %v5898, 0
  %v6560 = vsel %vm6499, %v5899, 0
  %v6562 = vsel %vm6499, %v5900, 0
  %v6564 = vsel %vm6499, %v5901, 0
  %v6566 = vsel %vm6499, %v5902, 0
  %v6568 = vsel %vm6499, %v5903, 0
  %v6570 = vsel %vm6499, %v5904, 0
  %v6572 = vsel %vm6499, %v5905, 0
  %v6574 = vsel %vm6499, %v5906, 0
  %v6576 = vsel %vm6499, %v5907, 0
  %v6578 = vsel %vm6499, %v5908, 0
  %v6580 = vsel %vm6499, %v5909, 0
  %v6582 = vsel %vm6499, %v5910, 0
  %v6584 = vsel %vm6499, %v5911, 0
  %v6586 = vsel %vm6499, %v5912, 0
  %v6588 = vsel %vm6499, %v5913, 0
  %v6590 = vsel %vm6499, %v5914, 0
  %v6592 = vsel %vm6499, %v5915, 0
  %v6594 = vsel %vm6499, %v5916, 0
  %v6596 = vsel %vm6499, %v5917, 0
  %v6598 = vsel %vm6499, %v5918, 0
  %v6600 = vsel %vm6499, %v5919, 0
  %v6602 = vsel %vm6499, %v5920, 0
  %v6604 = vsel %vm6499, %v5921, 0
  %v6606 = vsel %vm6499, %v5922, 0
  %v6608 = vsel %vm6499, %v5923, 0
  %v6610 = vsel %vm6499, %v5924, 0
  %v6612 = vsel %vm6499, %v5925, 0
  %v6614 = vsel %vm6499, %v5926, 0
  %v6616 = vsel %vm6499, %v5927, 0
  %v6618 = vsel %vm6499, %v5928, 0
  %v6620 = vsel %vm6499, %v5929, 0
  %v6622 = vsel %vm6499, %v5930, 0
  %v6624 = vsel %vm6499, %v5931, 0
  %v6626 = vsel %vm6499, %v5932, 0
  %v6628 = vsel %vm6499, %v5933, 0
  %v6630 = vsel %vm6499, %v5934, 0
  %v6632 = vsel %vm6499, %v5935, 0
  %v6634 = vsel %vm6499, %v5936, 0
  %v6636 = vsel %vm6499, %v5937, 0
  %v6638 = vsel %vm6499, %v5938, 0
  %v6640 = vsel %vm6499, %v5939, 0
  %v6642 = vsel %vm6499, %v5940, 0
  %v6644 = vsel %vm6499, %v5941, 0
  %v6646 = vsel %vm6499, %v5942, 0
  %v6648 = vsel %vm6499, %v5943, 0
  %v6650 = vsel %vm6499, %v5944, 0
  %v6652 = vsel %vm6499, %v5945, 0
  %v6654 = vsel %vm6499, %v5946, 0
  %v6656 = vsel %vm6499, %v5947, 0
  %v6658 = vsel %vm6499, %v5948, 0
  %v6660 = vsel %vm6499, %v5949, 0
  %v6662 = vsel %vm6499, %v5950, 0
  %v6664 = vsel %vm6499, %v5951, 0
  %v6666 = vsel %vm6499, %v5952, 0
  %v6668 = vsel %vm6499, %v5953, 0
  %v6670 = vsel %vm6499, %v5954, 0
  %v6672 = vsel %vm6499, %v5955, 0
  %v6674 = vsel %vm6499, %v5956, 0
  %v6676 = vsel %vm6499, %v5957, 0
  %v6678 = vsel %vm6499, %v5958, 0
  %v6680 = vsel %vm6499, %v5959, 0
  %v6682 = vsel %vm6499, %v5960, 0
  %v6684 = vsel %vm6499, %v5961, 0
  %v6686 = vsel %vm6499, %v5962, 0
  %v6688 = vsel %vm6499, %v5963, 0
  %v6690 = vsel %vm6499, %v5964, 0
  %v6692 = vsel %vm6499, %v5965, 0
  %v6694 = vsel %vm6499, %v5966, 0
  %v6696 = vsel %vm6499, %v5967, 0
  %v6698 = vsel %vm6499, %v5968, 0
  %v6700 = vsel %vm6499, %v5969, 0
  %v6702 = vsel %vm6499, %v5970, 0
  %v6704 = vsel %vm6499, %v5971, 0
  %v6706 = vsel %vm6499, %v5972, 0
  %v6708 = vsel %vm6499, %v5973, 0
  %v6710 = vsel %vm6499, %v5974, 0
  %v6712 = vsel %vm6499, %v5975, 0
  %v6714 = vsel %vm6499, %v5976, 0
  %v6716 = vsel %vm6499, %v5977, 0
  %v6718 = vsel %vm6499, %v5978, 0
  %v6720 = vsel %vm6499, %v5979, 0
  %v6722 = vsel %vm6499, %v5980, 0
  %v6724 = vsel %vm6499, %v5981, 0
  %v6726 = vsel %vm6499, %v5982, 0
  %v6728 = vsel %vm6499, %v5983, 0
  %v6730 = vsel %vm6499, %v5984, 0
  %v6732 = vsel %vm6499, %v5985, 0
  %v6734 = vsel %vm6499, %v5986, 0
  %v6736 = vsel %vm6499, %v5987, 0
  %v6738 = vsel %vm6499, %v5988, 0
  %6740 = vmatprep.subr.mxu0 %v6350
  %6741 = vmatpush1.msra.mxu0 %v6349
  %6742 = vmatprep.subr.mxu0 %v6352
  %6743 = vmatpush1.msra.mxu0 %v6351
  %6744 = vmatprep.subr.mxu0 %v6354
  %6745 = vmatpush1.msra.mxu0 %v6353
  %6746 = vmatprep.subr.mxu0 %v6356
  %6747 = vmatpush1.msra.mxu0 %v6355
  %6748 = vmatprep.subr.mxu0 %v6358
  %6749 = vmatpush1.msra.mxu0 %v6357
  %6750 = vmatprep.subr.mxu0 %v6360
  %6751 = vmatpush1.msra.mxu0 %v6359
  %6752 = vmatprep.subr.mxu0 %v6362
  %6753 = vmatpush1.msra.mxu0 %v6361
  %6754 = vmatprep.subr.mxu0 %v6364
  %6755 = vmatpush1.msra.mxu0 %v6363
  %6756 = vmatprep.subr.mxu0 %v6366
  %6757 = vmatpush1.msra.mxu0 %v6365
  %6758 = vmatprep.subr.mxu0 %v6368
  %6759 = vmatpush1.msra.mxu0 %v6367
  %6760 = vmatprep.subr.mxu0 %v6370
  %6761 = vmatpush1.msra.mxu0 %v6369
  %6762 = vmatprep.subr.mxu0 %v6372
  %6763 = vmatpush1.msra.mxu0 %v6371
  %6764 = vmatprep.subr.mxu0 %v6374
  %6765 = vmatpush1.msra.mxu0 %v6373
  %6766 = vmatprep.subr.mxu0 %v6376
  %6767 = vmatpush1.msra.mxu0 %v6375
  %6768 = vmatprep.subr.mxu0 %v6378
  %6769 = vmatpush1.msra.mxu0 %v6377
  %6770 = vmatprep.subr.mxu0 %v6380
  %6771 = vmatpush1.msra.mxu0 %v6379
  %6772 = vmatprep.subr.mxu0 %v6382
  %6773 = vmatpush1.msra.mxu0 %v6381
  %6774 = vmatprep.subr.mxu0 %v6384
  %6775 = vmatpush1.msra.mxu0 %v6383
  %6776 = vmatprep.subr.mxu0 %v6386
  %6777 = vmatpush1.msra.mxu0 %v6385
  %6778 = vmatprep.subr.mxu0 %v6388
  %6779 = vmatpush1.msra.mxu0 %v6387
  %6780 = vmatprep.subr.mxu0 %v6390
  %6781 = vmatpush1.msra.mxu0 %v6389
  %6782 = vmatprep.subr.mxu0 %v6392
  %6783 = vmatpush1.msra.mxu0 %v6391
  %6784 = vmatprep.subr.mxu0 %v6394
  %6785 = vmatpush1.msra.mxu0 %v6393
  %6786 = vmatprep.subr.mxu0 %v6396
  %6787 = vmatpush1.msra.mxu0 %v6395
  %6788 = vmatprep.subr.mxu0 %v6398
  %6789 = vmatpush1.msra.mxu0 %v6397
  %6790 = vmatprep.subr.mxu0 %v6400
  %6791 = vmatpush1.msra.mxu0 %v6399
  %6792 = vmatprep.subr.mxu0 %v6402
  %6793 = vmatpush1.msra.mxu0 %v6401
  %6794 = vmatprep.subr.mxu0 %v6404
  %6795 = vmatpush1.msra.mxu0 %v6403
  %6796 = vmatprep.subr.mxu0 %v6406
  %6797 = vmatpush1.msra.mxu0 %v6405
  %6798 = vmatprep.subr.mxu0 %v6408
  %6799 = vmatpush1.msra.mxu0 %v6407
  %6800 = vmatprep.subr.mxu0 %v6410
  %6801 = vmatpush1.msra.mxu0 %v6409
  %6802 = vmatprep.subr.mxu0 %v6412
  %6803 = vmatpush1.msra.mxu0 %v6411
  %6804 = vmatprep.mubr.f32.mxu0 %v6109
  %6805 = vmatmul.mubr.f32.gmra.mrb[0].mxu0 %v3947
  %v6806 = vpop.f32.mrb[0].mxu0
  %v6807 = vadd.f32 0.0, %v6806
  %v6808 = vpop.f32.mrb[0].mxu0
  %v6809 = vadd.f32 0.0, %v6808
  %6810 = vmatprep.mubr.f32.mxu0 %v6110
  %6811 = vmatmul.mubr.f32.gmra.mrb[0].mxu0 %v3949
  %v6812 = vpop.f32.mrb[0].mxu0
  %v6813 = vadd.f32 0.0, %v6812
  %v6814 = vpop.f32.mrb[0].mxu0
  %v6815 = vadd.f32 0.0, %v6814
  %6816 = vmatprep.mubr.f32.mxu0 %v6111
  %6817 = vmatmul.mubr.f32.gmra.mrb[0].mxu0 %v3951
  %v6818 = vpop.f32.mrb[0].mxu0
  %v6819 = vadd.f32 0.0, %v6818
  %v6820 = vpop.f32.mrb[0].mxu0
  %v6821 = vadd.f32 0.0, %v6820
  %6822 = vmatprep.mubr.f32.mxu0 %v6112
  %6823 = vmatmul.mubr.f32.gmra.mrb[0].mxu0 %v3953
  %v6824 = vpop.f32.mrb[0].mxu0
  %v6825 = vadd.f32 0.0, %v6824
  %v6826 = vpop.f32.mrb[0].mxu0
  %v6827 = vadd.f32 0.0, %v6826
  %6828 = vmatprep.mubr.f32.mxu0 %v6113
  %6829 = vmatmul.mubr.f32.gmra.mrb[0].mxu0 %v3955
  %v6830 = vpop.f32.mrb[0].mxu0
  %v6831 = vpop.f32.mrb[0].mxu0
  %6832 = vmatprep.mubr.f32.mxu0 %v6114
  %6833 = vmatmul.mubr.f32.gmra.mrb[0].mxu0 %v3957
  %v6834 = vpop.f32.mrb[0].mxu0
  %v6835 = vpop.f32.mrb[0].mxu0
  %6836 = vmatprep.mubr.f32.mxu0 %v6115
  %6837 = vmatmul.mubr.f32.gmra.mrb[0].mxu0 %v3959
  %v6838 = vpop.f32.mrb[0].mxu0
  %v6839 = vpop.f32.mrb[0].mxu0
  %6840 = vmatprep.mubr.f32.mxu0 %v6116
  %6841 = vmatmul.mubr.f32.gmra.mrb[0].mxu0 %v3961
  %v6842 = vpop.f32.mrb[0].mxu0
  %v6843 = vpop.f32.mrb[0].mxu0
  %6844 = vmatprep.mubr.f32.mxu0 %v6117
  %6845 = vmatmul.mubr.f32.gmra.mrb[0].mxu0 %v3963
  %v6846 = vpop.f32.mrb[0].mxu0
  %v6847 = vadd.f32 0.0, %v6846
  %v6848 = vpop.f32.mrb[0].mxu0
  %v6849 = vadd.f32 0.0, %v6848
  %6850 = vmatprep.mubr.f32.mxu0 %v6118
  %6851 = vmatmul.mubr.f32.gmra.mrb[0].mxu0 %v3965
  %v6852 = vpop.f32.mrb[0].mxu0
  %v6853 = vadd.f32 0.0, %v6852
  %v6854 = vpop.f32.mrb[0].mxu0
  %v6855 = vadd.f32 0.0, %v6854
  %6856 = vmatprep.mubr.f32.mxu0 %v6119
  %6857 = vmatmul.mubr.f32.gmra.mrb[0].mxu0 %v3967
  %v6858 = vpop.f32.mrb[0].mxu0
  %v6859 = vadd.f32 0.0, %v6858
  %v6860 = vpop.f32.mrb[0].mxu0
  %v6861 = vadd.f32 0.0, %v6860
  %6862 = vmatprep.mubr.f32.mxu0 %v6120
  %6863 = vmatmul.mubr.f32.gmra.mrb[0].mxu0 %v3969
  %v6864 = vpop.f32.mrb[0].mxu0
  %v6865 = vadd.f32 0.0, %v6864
  %v6866 = vpop.f32.mrb[0].mxu0
  %v6867 = vadd.f32 0.0, %v6866
  %6868 = vmatprep.mubr.f32.mxu0 %v6121
  %6869 = vmatmul.mubr.f32.gmra.mrb[0].mxu0 %v3971
  %v6870 = vpop.f32.mrb[0].mxu0
  %v6871 = vpop.f32.mrb[0].mxu0
  %6872 = vmatprep.mubr.f32.mxu0 %v6122
  %6873 = vmatmul.mubr.f32.gmra.mrb[0].mxu0 %v3973
  %v6874 = vpop.f32.mrb[0].mxu0
  %v6875 = vpop.f32.mrb[0].mxu0
  %6876 = vmatprep.mubr.f32.mxu0 %v6123
  %6877 = vmatmul.mubr.f32.gmra.mrb[0].mxu0 %v3975
  %v6878 = vpop.f32.mrb[0].mxu0
  %v6879 = vpop.f32.mrb[0].mxu0
  %6880 = vmatprep.mubr.f32.mxu0 %v6124
  %6881 = vmatmul.mubr.f32.gmra.mrb[0].mxu0 %v3977
  %v6882 = vpop.f32.mrb[0].mxu0
  %v6883 = vpop.f32.mrb[0].mxu0
  %6884 = vmatprep.mubr.f32.mxu0 %v6125
  %6885 = vmatmul.mubr.f32.gmra.mrb[0].mxu0 %v3979
  %v6886 = vpop.f32.mrb[0].mxu0
  %v6887 = vadd.f32 0.0, %v6886
  %v6888 = vpop.f32.mrb[0].mxu0
  %v6889 = vadd.f32 0.0, %v6888
  %6890 = vmatprep.mubr.f32.mxu0 %v6126
  %6891 = vmatmul.mubr.f32.gmra.mrb[0].mxu0 %v3981
  %v6892 = vpop.f32.mrb[0].mxu0
  %v6893 = vadd.f32 0.0, %v6892
  %v6894 = vpop.f32.mrb[0].mxu0
  %v6895 = vadd.f32 0.0, %v6894
  %6896 = vmatprep.mubr.f32.mxu0 %v6127
  %6897 = vmatmul.mubr.f32.gmra.mrb[0].mxu0 %v3983
  %v6898 = vpop.f32.mrb[0].mxu0
  %v6899 = vadd.f32 0.0, %v6898
  %v6900 = vpop.f32.mrb[0].mxu0
  %v6901 = vadd.f32 0.0, %v6900
  %6902 = vmatprep.mubr.f32.mxu0 %v6128
  %6903 = vmatmul.mubr.f32.gmra.mrb[0].mxu0 %v3985
  %v6904 = vpop.f32.mrb[0].mxu0
  %v6905 = vadd.f32 0.0, %v6904
  %v6906 = vpop.f32.mrb[0].mxu0
  %v6907 = vadd.f32 0.0, %v6906
  %6908 = vmatprep.mubr.f32.mxu0 %v6129
  %6909 = vmatmul.mubr.f32.gmra.mrb[0].mxu0 %v3987
  %v6910 = vpop.f32.mrb[0].mxu0
  %v6911 = vpop.f32.mrb[0].mxu0
  %6912 = vmatprep.mubr.f32.mxu0 %v6130
  %6913 = vmatmul.mubr.f32.gmra.mrb[0].mxu0 %v3989
  %v6914 = vpop.f32.mrb[0].mxu0
  %v6915 = vpop.f32.mrb[0].mxu0
  %6916 = vmatprep.mubr.f32.mxu0 %v6131
  %6917 = vmatmul.mubr.f32.gmra.mrb[0].mxu0 %v3991
  %v6918 = vpop.f32.mrb[0].mxu0
  %v6919 = vpop.f32.mrb[0].mxu0
  %6920 = vmatprep.mubr.f32.mxu0 %v6132
  %6921 = vmatmul.mubr.f32.gmra.mrb[0].mxu0 %v3993
  %v6922 = vpop.f32.mrb[0].mxu0
  %v6923 = vpop.f32.mrb[0].mxu0
  %6924 = vmatprep.mubr.f32.mxu0 %v6133
  %6925 = vmatmul.mubr.f32.gmra.mrb[0].mxu0 %v3995
  %v6926 = vpop.f32.mrb[0].mxu0
  %v6927 = vadd.f32 0.0, %v6926
  %v6928 = vpop.f32.mrb[0].mxu0
  %v6929 = vadd.f32 0.0, %v6928
  %6930 = vmatprep.mubr.f32.mxu0 %v6134
  %6931 = vmatmul.mubr.f32.gmra.mrb[0].mxu0 %v3997
  %v6932 = vpop.f32.mrb[0].mxu0
  %v6933 = vadd.f32 0.0, %v6932
  %v6934 = vpop.f32.mrb[0].mxu0
  %v6935 = vadd.f32 0.0, %v6934
  %6936 = vmatprep.mubr.f32.mxu0 %v6135
  %6937 = vmatmul.mubr.f32.gmra.mrb[0].mxu0 %v3999
  %v6938 = vpop.f32.mrb[0].mxu0
  %v6939 = vadd.f32 0.0, %v6938
  %v6940 = vpop.f32.mrb[0].mxu0
  %v6941 = vadd.f32 0.0, %v6940
  %6942 = vmatprep.mubr.f32.mxu0 %v6136
  %6943 = vmatmul.mubr.f32.gmra.mrb[0].mxu0 %v4001
  %v6944 = vpop.f32.mrb[0].mxu0
  %v6945 = vadd.f32 0.0, %v6944
  %v6946 = vpop.f32.mrb[0].mxu0
  %v6947 = vadd.f32 0.0, %v6946
  %6948 = vmatprep.mubr.f32.mxu0 %v6137
  %6949 = vmatmul.mubr.f32.gmra.mrb[0].mxu0 %v4003
  %v6950 = vpop.f32.mrb[0].mxu0
  %v6951 = vpop.f32.mrb[0].mxu0
  %6952 = vmatprep.mubr.f32.mxu0 %v6138
  %6953 = vmatmul.mubr.f32.gmra.mrb[0].mxu0 %v4005
  %v6954 = vpop.f32.mrb[0].mxu0
  %v6955 = vpop.f32.mrb[0].mxu0
  %6956 = vmatprep.mubr.f32.mxu0 %v6139
  %6957 = vmatmul.mubr.f32.gmra.mrb[0].mxu0 %v4007
  %v6958 = vpop.f32.mrb[0].mxu0
  %v6959 = vpop.f32.mrb[0].mxu0
  %6960 = vmatprep.mubr.f32.mxu0 %v6140
  %6961 = vmatmul.mubr.f32.gmra.mrb[0].mxu0 %v4009
  %v6962 = vpop.f32.mrb[0].mxu0
  %v6963 = vpop.f32.mrb[0].mxu0
  %6964 = vmatprep.mubr.f32.mxu0 %v6141
  %6965 = vmatmul.mubr.f32.gmra.mrb[0].mxu0 %v4011
  %v6966 = vpop.f32.mrb[0].mxu0
  %v6967 = vadd.f32 0.0, %v6966
  %v6968 = vpop.f32.mrb[0].mxu0
  %v6969 = vadd.f32 0.0, %v6968
  %6970 = vmatprep.mubr.f32.mxu0 %v6142
  %6971 = vmatmul.mubr.f32.gmra.mrb[0].mxu0 %v4013
  %v6972 = vpop.f32.mrb[0].mxu0
  %v6973 = vadd.f32 0.0, %v6972
  %v6974 = vpop.f32.mrb[0].mxu0
  %v6975 = vadd.f32 0.0, %v6974
  %6976 = vmatprep.mubr.f32.mxu0 %v6143
  %6977 = vmatmul.mubr.f32.gmra.mrb[0].mxu0 %v4015
  %v6978 = vpop.f32.mrb[0].mxu0
  %v6979 = vadd.f32 0.0, %v6978
  %v6980 = vpop.f32.mrb[0].mxu0
  %v6981 = vadd.f32 0.0, %v6980
  %6982 = vmatprep.mubr.f32.mxu0 %v6144
  %6983 = vmatmul.mubr.f32.gmra.mrb[0].mxu0 %v4017
  %v6984 = vpop.f32.mrb[0].mxu0
  %v6985 = vadd.f32 0.0, %v6984
  %v6986 = vpop.f32.mrb[0].mxu0
  %v6987 = vadd.f32 0.0, %v6986
  %6988 = vmatprep.mubr.f32.mxu0 %v6145
  %6989 = vmatmul.mubr.f32.gmra.mrb[0].mxu0 %v4019
  %v6990 = vpop.f32.mrb[0].mxu0
  %v6991 = vpop.f32.mrb[0].mxu0
  %6992 = vmatprep.mubr.f32.mxu0 %v6146
  %6993 = vmatmul.mubr.f32.gmra.mrb[0].mxu0 %v4021
  %v6994 = vpop.f32.mrb[0].mxu0
  %v6995 = vpop.f32.mrb[0].mxu0
  %6996 = vmatprep.mubr.f32.mxu0 %v6147
  %6997 = vmatmul.mubr.f32.gmra.mrb[0].mxu0 %v4023
  %v6998 = vpop.f32.mrb[0].mxu0
  %v6999 = vpop.f32.mrb[0].mxu0
  %7000 = vmatprep.mubr.f32.mxu0 %v6148
  %7001 = vmatmul.mubr.f32.gmra.mrb[0].mxu0 %v4025
  %v7002 = vpop.f32.mrb[0].mxu0
  %v7003 = vpop.f32.mrb[0].mxu0
  %7004 = vmatprep.mubr.f32.mxu0 %v6149
  %7005 = vmatmul.mubr.f32.gmra.mrb[0].mxu0 %v4027
  %v7006 = vpop.f32.mrb[0].mxu0
  %v7007 = vadd.f32 0.0, %v7006
  %v7008 = vpop.f32.mrb[0].mxu0
  %v7009 = vadd.f32 0.0, %v7008
  %7010 = vmatprep.mubr.f32.mxu0 %v6150
  %7011 = vmatmul.mubr.f32.gmra.mrb[0].mxu0 %v4029
  %v7012 = vpop.f32.mrb[0].mxu0
  %v7013 = vadd.f32 0.0, %v7012
  %v7014 = vpop.f32.mrb[0].mxu0
  %v7015 = vadd.f32 0.0, %v7014
  %7016 = vmatprep.mubr.f32.mxu0 %v6151
  %7017 = vmatmul.mubr.f32.gmra.mrb[0].mxu0 %v4031
  %v7018 = vpop.f32.mrb[0].mxu0
  %v7019 = vadd.f32 0.0, %v7018
  %v7020 = vpop.f32.mrb[0].mxu0
  %v7021 = vadd.f32 0.0, %v7020
  %7022 = vmatprep.mubr.f32.mxu0 %v6152
  %7023 = vmatmul.mubr.f32.gmra.mrb[0].mxu0 %v4033
  %v7024 = vpop.f32.mrb[0].mxu0
  %v7025 = vadd.f32 0.0, %v7024
  %v7026 = vpop.f32.mrb[0].mxu0
  %v7027 = vadd.f32 0.0, %v7026
  %7028 = vmatprep.mubr.f32.mxu0 %v6153
  %7029 = vmatmul.mubr.f32.gmra.mrb[0].mxu0 %v4035
  %v7030 = vpop.f32.mrb[0].mxu0
  %v7031 = vpop.f32.mrb[0].mxu0
  %7032 = vmatprep.mubr.f32.mxu0 %v6154
  %7033 = vmatmul.mubr.f32.gmra.mrb[0].mxu0 %v4037
  %v7034 = vpop.f32.mrb[0].mxu0
  %v7035 = vpop.f32.mrb[0].mxu0
  %7036 = vmatprep.mubr.f32.mxu0 %v6155
  %7037 = vmatmul.mubr.f32.gmra.mrb[0].mxu0 %v4039
  %v7038 = vpop.f32.mrb[0].mxu0
  %v7039 = vpop.f32.mrb[0].mxu0
  %7040 = vmatprep.mubr.f32.mxu0 %v6156
  %7041 = vmatmul.mubr.f32.gmra.mrb[0].mxu0 %v4041
  %v7042 = vpop.f32.mrb[0].mxu0
  %v7043 = vpop.f32.mrb[0].mxu0
  %7044 = vmatprep.mubr.f32.mxu0 %v6157
  %7045 = vmatmul.mubr.f32.gmra.mrb[0].mxu0 %v4043
  %v7046 = vpop.f32.mrb[0].mxu0
  %v7047 = vadd.f32 0.0, %v7046
  %v7048 = vpop.f32.mrb[0].mxu0
  %v7049 = vadd.f32 0.0, %v7048
  %7050 = vmatprep.mubr.f32.mxu0 %v6158
  %7051 = vmatmul.mubr.f32.gmra.mrb[0].mxu0 %v4045
  %v7052 = vpop.f32.mrb[0].mxu0
  %v7053 = vadd.f32 0.0, %v7052
  %v7054 = vpop.f32.mrb[0].mxu0
  %v7055 = vadd.f32 0.0, %v7054
  %7056 = vmatprep.mubr.f32.mxu0 %v6159
  %7057 = vmatmul.mubr.f32.gmra.mrb[0].mxu0 %v4047
  %v7058 = vpop.f32.mrb[0].mxu0
  %v7059 = vadd.f32 0.0, %v7058
  %v7060 = vpop.f32.mrb[0].mxu0
  %v7061 = vadd.f32 0.0, %v7060
  %7062 = vmatprep.mubr.f32.mxu0 %v6160
  %7063 = vmatmul.mubr.f32.gmra.mrb[0].mxu0 %v4049
  %v7064 = vpop.f32.mrb[0].mxu0
  %v7065 = vadd.f32 0.0, %v7064
  %v7066 = vpop.f32.mrb[0].mxu0
  %v7067 = vadd.f32 0.0, %v7066
  %7068 = vmatprep.mubr.f32.mxu0 %v6161
  %7069 = vmatmul.mubr.f32.gmra.mrb[0].mxu0 %v4051
  %v7070 = vpop.f32.mrb[0].mxu0
  %v7071 = vpop.f32.mrb[0].mxu0
  %7072 = vmatprep.mubr.f32.mxu0 %v6162
  %7073 = vmatmul.mubr.f32.gmra.mrb[0].mxu0 %v4053
  %v7074 = vpop.f32.mrb[0].mxu0
  %v7075 = vpop.f32.mrb[0].mxu0
  %7076 = vmatprep.mubr.f32.mxu0 %v6163
  %7077 = vmatmul.mubr.f32.gmra.mrb[0].mxu0 %v4055
  %v7078 = vpop.f32.mrb[0].mxu0
  %v7079 = vpop.f32.mrb[0].mxu0
  %7080 = vmatprep.mubr.f32.mxu0 %v6164
  %7081 = vmatmul.mubr.f32.gmra.mrb[0].mxu0 %v4057
  %v7082 = vpop.f32.mrb[0].mxu0
  %v7083 = vpop.f32.mrb[0].mxu0
  %7084 = vmatprep.mubr.f32.mxu0 %v6165
  %7085 = vmatmul.mubr.f32.gmra.mrb[0].mxu0 %v4059
  %v7086 = vpop.f32.mrb[0].mxu0
  %v7087 = vadd.f32 0.0, %v7086
  %v7088 = vpop.f32.mrb[0].mxu0
  %v7089 = vadd.f32 0.0, %v7088
  %7090 = vmatprep.mubr.f32.mxu0 %v6166
  %7091 = vmatmul.mubr.f32.gmra.mrb[0].mxu0 %v4061
  %v7092 = vpop.f32.mrb[0].mxu0
  %v7093 = vadd.f32 0.0, %v7092
  %v7094 = vpop.f32.mrb[0].mxu0
  %v7095 = vadd.f32 0.0, %v7094
  %7096 = vmatprep.mubr.f32.mxu0 %v6167
  %7097 = vmatmul.mubr.f32.gmra.mrb[0].mxu0 %v4063
  %v7098 = vpop.f32.mrb[0].mxu0
  %v7099 = vadd.f32 0.0, %v7098
  %v7100 = vpop.f32.mrb[0].mxu0
  %v7101 = vadd.f32 0.0, %v7100
  %7102 = vmatprep.mubr.f32.mxu0 %v6168
  %7103 = vmatmul.mubr.f32.gmra.mrb[0].mxu0 %v4065
  %v7104 = vpop.f32.mrb[0].mxu0
  %v7105 = vadd.f32 0.0, %v7104
  %v7106 = vpop.f32.mrb[0].mxu0
  %v7107 = vadd.f32 0.0, %v7106
  %7108 = vmatprep.mubr.f32.mxu0 %v6169
  %7109 = vmatmul.mubr.f32.gmra.mrb[0].mxu0 %v4067
  %v7110 = vpop.f32.mrb[0].mxu0
  %v7111 = vpop.f32.mrb[0].mxu0
  %7112 = vmatprep.mubr.f32.mxu0 %v6170
  %7113 = vmatmul.mubr.f32.gmra.mrb[0].mxu0 %v4069
  %v7114 = vpop.f32.mrb[0].mxu0
  %v7115 = vpop.f32.mrb[0].mxu0
  %7116 = vmatprep.mubr.f32.mxu0 %v6171
  %7117 = vmatmul.mubr.f32.gmra.mrb[0].mxu0 %v4071
  %v7118 = vpop.f32.mrb[0].mxu0
  %v7119 = vpop.f32.mrb[0].mxu0
  %7120 = vmatprep.mubr.f32.mxu0 %v6172
  %7121 = vmatmul.mubr.f32.gmra.mrb[0].mxu0 %v4073
  %v7122 = vpop.f32.mrb[0].mxu0
  %v7123 = vpop.f32.mrb[0].mxu0
  %7124 = vmatprep.mubr.f32.mxu0 %v6173
  %7125 = vmatmul.mubr.f32.gmra.mrb[0].mxu0 %v4075
  %v7126 = vpop.f32.mrb[0].mxu0
  %v7127 = vadd.f32 0.0, %v7126
  %v7128 = vpop.f32.mrb[0].mxu0
  %v7129 = vadd.f32 0.0, %v7128
  %7130 = vmatprep.mubr.f32.mxu0 %v6174
  %7131 = vmatmul.mubr.f32.gmra.mrb[0].mxu0 %v4077
  %v7132 = vpop.f32.mrb[0].mxu0
  %v7133 = vadd.f32 0.0, %v7132
  %v7134 = vpop.f32.mrb[0].mxu0
  %v7135 = vadd.f32 0.0, %v7134
  %7136 = vmatprep.mubr.f32.mxu0 %v6175
  %7137 = vmatmul.mubr.f32.gmra.mrb[0].mxu0 %v4079
  %v7138 = vpop.f32.mrb[0].mxu0
  %v7139 = vadd.f32 0.0, %v7138
  %v7140 = vpop.f32.mrb[0].mxu0
  %v7141 = vadd.f32 0.0, %v7140
  %7142 = vmatprep.mubr.f32.mxu0 %v6176
  %7143 = vmatmul.mubr.f32.gmra.mrb[0].mxu0 %v4081
  %v7144 = vpop.f32.mrb[0].mxu0
  %v7145 = vadd.f32 0.0, %v7144
  %v7146 = vpop.f32.mrb[0].mxu0
  %v7147 = vadd.f32 0.0, %v7146
  %7148 = vmatprep.mubr.f32.mxu0 %v6177
  %7149 = vmatmul.mubr.f32.gmra.mrb[0].mxu0 %v4083
  %v7150 = vpop.f32.mrb[0].mxu0
  %v7151 = vpop.f32.mrb[0].mxu0
  %7152 = vmatprep.mubr.f32.mxu0 %v6178
  %7153 = vmatmul.mubr.f32.gmra.mrb[0].mxu0 %v4085
  %v7154 = vpop.f32.mrb[0].mxu0
  %v7155 = vpop.f32.mrb[0].mxu0
  %7156 = vmatprep.mubr.f32.mxu0 %v6179
  %7157 = vmatmul.mubr.f32.gmra.mrb[0].mxu0 %v4087
  %v7158 = vpop.f32.mrb[0].mxu0
  %v7159 = vpop.f32.mrb[0].mxu0
  %7160 = vmatprep.mubr.f32.mxu0 %v6180
  %7161 = vmatmul.mubr.f32.gmra.mrb[0].mxu0 %v4089
  %v7162 = vpop.f32.mrb[0].mxu0
  %v7163 = vpop.f32.mrb[0].mxu0
  %7164 = vmatprep.mubr.f32.mxu0 %v6181
  %7165 = vmatmul.mubr.f32.gmra.mrb[0].mxu0 %v4091
  %v7166 = vpop.f32.mrb[0].mxu0
  %v7167 = vadd.f32 0.0, %v7166
  %v7168 = vpop.f32.mrb[0].mxu0
  %v7169 = vadd.f32 0.0, %v7168
  %7170 = vmatprep.mubr.f32.mxu0 %v6182
  %7171 = vmatmul.mubr.f32.gmra.mrb[0].mxu0 %v4093
  %v7172 = vpop.f32.mrb[0].mxu0
  %v7173 = vadd.f32 0.0, %v7172
  %v7174 = vpop.f32.mrb[0].mxu0
  %v7175 = vadd.f32 0.0, %v7174
  %7176 = vmatprep.mubr.f32.mxu0 %v6183
  %7177 = vmatmul.mubr.f32.gmra.mrb[0].mxu0 %v4095
  %v7178 = vpop.f32.mrb[0].mxu0
  %v7179 = vadd.f32 0.0, %v7178
  %v7180 = vpop.f32.mrb[0].mxu0
  %v7181 = vadd.f32 0.0, %v7180
  %7182 = vmatprep.mubr.f32.mxu0 %v6184
  %7183 = vmatmul.mubr.f32.gmra.mrb[0].mxu0 %v4097
  %v7184 = vpop.f32.mrb[0].mxu0
  %v7185 = vadd.f32 0.0, %v7184
  %v7186 = vpop.f32.mrb[0].mxu0
  %v7187 = vadd.f32 0.0, %v7186
  %7188 = vmatprep.mubr.f32.mxu0 %v6185
  %7189 = vmatmul.mubr.f32.gmra.mrb[0].mxu0 %v4099
  %v7190 = vpop.f32.mrb[0].mxu0
  %v7191 = vpop.f32.mrb[0].mxu0
  %7192 = vmatprep.mubr.f32.mxu0 %v6186
  %7193 = vmatmul.mubr.f32.gmra.mrb[0].mxu0 %v4101
  %v7194 = vpop.f32.mrb[0].mxu0
  %v7195 = vpop.f32.mrb[0].mxu0
  %7196 = vmatprep.mubr.f32.mxu0 %v6187
  %7197 = vmatmul.mubr.f32.gmra.mrb[0].mxu0 %v4103
  %v7198 = vpop.f32.mrb[0].mxu0
  %v7199 = vpop.f32.mrb[0].mxu0
  %7200 = vmatprep.mubr.f32.mxu0 %v6188
  %7201 = vmatmul.mubr.f32.gmra.mrb[0].mxu0 %v4105
  %v7202 = vpop.f32.mrb[0].mxu0
  %v7203 = vpop.f32.mrb[0].mxu0
  %7204 = vmatprep.mubr.f32.mxu0 %v6189
  %7205 = vmatmul.mubr.f32.gmra.mrb[0].mxu0 %v4107
  %v7206 = vpop.f32.mrb[0].mxu0
  %v7207 = vadd.f32 0.0, %v7206
  %v7208 = vpop.f32.mrb[0].mxu0
  %v7209 = vadd.f32 0.0, %v7208
  %7210 = vmatprep.mubr.f32.mxu0 %v6190
  %7211 = vmatmul.mubr.f32.gmra.mrb[0].mxu0 %v4109
  %v7212 = vpop.f32.mrb[0].mxu0
  %v7213 = vadd.f32 0.0, %v7212
  %v7214 = vpop.f32.mrb[0].mxu0
  %v7215 = vadd.f32 0.0, %v7214
  %7216 = vmatprep.mubr.f32.mxu0 %v6191
  %7217 = vmatmul.mubr.f32.gmra.mrb[0].mxu0 %v4111
  %v7218 = vpop.f32.mrb[0].mxu0
  %v7219 = vadd.f32 0.0, %v7218
  %v7220 = vpop.f32.mrb[0].mxu0
  %v7221 = vadd.f32 0.0, %v7220
  %7222 = vmatprep.mubr.f32.mxu0 %v6192
  %7223 = vmatmul.mubr.f32.gmra.mrb[0].mxu0 %v4113
  %v7224 = vpop.f32.mrb[0].mxu0
  %v7225 = vadd.f32 0.0, %v7224
  %v7226 = vpop.f32.mrb[0].mxu0
  %v7227 = vadd.f32 0.0, %v7226
  %7228 = vmatprep.mubr.f32.mxu0 %v6193
  %7229 = vmatmul.mubr.f32.gmra.mrb[0].mxu0 %v4115
  %v7230 = vpop.f32.mrb[0].mxu0
  %v7231 = vpop.f32.mrb[0].mxu0
  %7232 = vmatprep.mubr.f32.mxu0 %v6194
  %7233 = vmatmul.mubr.f32.gmra.mrb[0].mxu0 %v4117
  %v7234 = vpop.f32.mrb[0].mxu0
  %v7235 = vpop.f32.mrb[0].mxu0
  %7236 = vmatprep.mubr.f32.mxu0 %v6195
  %7237 = vmatmul.mubr.f32.gmra.mrb[0].mxu0 %v4119
  %v7238 = vpop.f32.mrb[0].mxu0
  %v7239 = vpop.f32.mrb[0].mxu0
  %7240 = vmatprep.mubr.f32.mxu0 %v6196
  %7241 = vmatmul.mubr.f32.gmra.mrb[0].mxu0 %v4121
  %v7242 = vpop.f32.mrb[0].mxu0
  %v7243 = vpop.f32.mrb[0].mxu0
  %7244 = vmatprep.mubr.f32.mxu0 %v6197
  %7245 = vmatmul.mubr.f32.gmra.mrb[0].mxu0 %v4123
  %v7246 = vpop.f32.mrb[0].mxu0
  %v7247 = vadd.f32 0.0, %v7246
  %v7248 = vpop.f32.mrb[0].mxu0
  %v7249 = vadd.f32 0.0, %v7248
  %7250 = vmatprep.mubr.f32.mxu0 %v6198
  %7251 = vmatmul.mubr.f32.gmra.mrb[0].mxu0 %v4125
  %v7252 = vpop.f32.mrb[0].mxu0
  %v7253 = vadd.f32 0.0, %v7252
  %v7254 = vpop.f32.mrb[0].mxu0
  %v7255 = vadd.f32 0.0, %v7254
  %7256 = vmatprep.mubr.f32.mxu0 %v6199
  %7257 = vmatmul.mubr.f32.gmra.mrb[0].mxu0 %v4127
  %v7258 = vpop.f32.mrb[0].mxu0
  %v7259 = vadd.f32 0.0, %v7258
  %v7260 = vpop.f32.mrb[0].mxu0
  %v7261 = vadd.f32 0.0, %v7260
  %7262 = vmatprep.mubr.f32.mxu0 %v6200
  %7263 = vmatmul.mubr.f32.gmra.mrb[0].mxu0 %v4129
  %v7264 = vpop.f32.mrb[0].mxu0
  %v7265 = vadd.f32 0.0, %v7264
  %v7266 = vpop.f32.mrb[0].mxu0
  %v7267 = vadd.f32 0.0, %v7266
  %7268 = vmatprep.mubr.f32.mxu0 %v6201
  %7269 = vmatmul.mubr.f32.gmra.mrb[0].mxu0 %v4131
  %v7270 = vpop.f32.mrb[0].mxu0
  %v7271 = vpop.f32.mrb[0].mxu0
  %7272 = vmatprep.mubr.f32.mxu0 %v6202
  %7273 = vmatmul.mubr.f32.gmra.mrb[0].mxu0 %v4133
  %v7274 = vpop.f32.mrb[0].mxu0
  %v7275 = vpop.f32.mrb[0].mxu0
  %7276 = vmatprep.mubr.f32.mxu0 %v6203
  %7277 = vmatmul.mubr.f32.gmra.mrb[0].mxu0 %v4135
  %v7278 = vpop.f32.mrb[0].mxu0
  %v7279 = vpop.f32.mrb[0].mxu0
  %7280 = vmatprep.mubr.f32.mxu0 %v6204
  %7281 = vmatmul.mubr.f32.gmra.mrb[0].mxu0 %v4137
  %v7282 = vpop.f32.mrb[0].mxu0
  %v7283 = vpop.f32.mrb[0].mxu0
  %7284 = vmatprep.mubr.f32.mxu0 %v6205
  %7285 = vmatmul.mubr.f32.gmra.mrb[0].mxu0 %v4139
  %v7286 = vpop.f32.mrb[0].mxu0
  %v7287 = vpop.f32.mrb[0].mxu0
  %7288 = vmatprep.mubr.f32.mxu0 %v6206
  %7289 = vmatmul.mubr.f32.gmra.mrb[0].mxu0 %v4141
  %v7290 = vpop.f32.mrb[0].mxu0
  %v7291 = vpop.f32.mrb[0].mxu0
  %7292 = vmatprep.mubr.f32.mxu0 %v6207
  %7293 = vmatmul.mubr.f32.gmra.mrb[0].mxu0 %v4143
  %v7294 = vpop.f32.mrb[0].mxu0
  %v7295 = vpop.f32.mrb[0].mxu0
  %7296 = vmatprep.mubr.f32.mxu0 %v6208
  %7297 = vmatmul.mubr.f32.gmra.mrb[0].mxu0 %v4145
  %v7298 = vpop.f32.mrb[0].mxu0
  %v7299 = vpop.f32.mrb[0].mxu0
  %7300 = vmatprep.mubr.f32.mxu0 %v6209
  %7301 = vmatmul.mubr.f32.gmra.mrb[0].mxu0 %v4147
  %v7302 = vpop.f32.mrb[0].mxu0
  %v7303 = vpop.f32.mrb[0].mxu0
  %7304 = vmatprep.mubr.f32.mxu0 %v6210
  %7305 = vmatmul.mubr.f32.gmra.mrb[0].mxu0 %v4149
  %v7306 = vpop.f32.mrb[0].mxu0
  %v7307 = vpop.f32.mrb[0].mxu0
  %7308 = vmatprep.mubr.f32.mxu0 %v6211
  %7309 = vmatmul.mubr.f32.gmra.mrb[0].mxu0 %v4151
  %v7310 = vpop.f32.mrb[0].mxu0
  %v7311 = vpop.f32.mrb[0].mxu0
  %7312 = vmatprep.mubr.f32.mxu0 %v6212
  %7313 = vmatmul.mubr.f32.gmra.mrb[0].mxu0 %v4153
  %v7314 = vpop.f32.mrb[0].mxu0
  %v7315 = vpop.f32.mrb[0].mxu0
  %7316 = vmatprep.mubr.f32.mxu0 %v6213
  %7317 = vmatmul.mubr.f32.gmra.mrb[0].mxu0 %v4155
  %v7318 = vpop.f32.mrb[0].mxu0
  %v7319 = vpop.f32.mrb[0].mxu0
  %7320 = vmatprep.mubr.f32.mxu0 %v6214
  %7321 = vmatmul.mubr.f32.gmra.mrb[0].mxu0 %v4157
  %v7322 = vpop.f32.mrb[0].mxu0
  %v7323 = vpop.f32.mrb[0].mxu0
  %7324 = vmatprep.mubr.f32.mxu0 %v6215
  %7325 = vmatmul.mubr.f32.gmra.mrb[0].mxu0 %v4159
  %v7326 = vpop.f32.mrb[0].mxu0
  %v7327 = vpop.f32.mrb[0].mxu0
  %7328 = vmatprep.mubr.f32.mxu0 %v6216
  %7329 = vmatmul.mubr.f32.gmra.mrb[0].mxu0 %v4161
  %v7330 = vpop.f32.mrb[0].mxu0
  %v7331 = vpop.f32.mrb[0].mxu0
  %7332 = vmatprep.mubr.f32.mxu0 %v6217
  %7333 = vmatmul.mubr.f32.gmra.mrb[0].mxu0 %v4163
  %v7334 = vpop.f32.mrb[0].mxu0
  %v7335 = vpop.f32.mrb[0].mxu0
  %7336 = vmatprep.mubr.f32.mxu0 %v6218
  %7337 = vmatmul.mubr.f32.gmra.mrb[0].mxu0 %v4165
  %v7338 = vpop.f32.mrb[0].mxu0
  %v7339 = vpop.f32.mrb[0].mxu0
  %7340 = vmatprep.mubr.f32.mxu0 %v6219
  %7341 = vmatmul.mubr.f32.gmra.mrb[0].mxu0 %v4167
  %v7342 = vpop.f32.mrb[0].mxu0
  %v7343 = vpop.f32.mrb[0].mxu0
  %7344 = vmatprep.mubr.f32.mxu0 %v6220
  %7345 = vmatmul.mubr.f32.gmra.mrb[0].mxu0 %v4169
  %v7346 = vpop.f32.mrb[0].mxu0
  %v7347 = vpop.f32.mrb[0].mxu0
  %7348 = vmatprep.mubr.f32.mxu0 %v6221
  %7349 = vmatmul.mubr.f32.gmra.mrb[0].mxu0 %v4171
  %v7350 = vpop.f32.mrb[0].mxu0
  %v7351 = vpop.f32.mrb[0].mxu0
  %7352 = vmatprep.mubr.f32.mxu0 %v6222
  %7353 = vmatmul.mubr.f32.gmra.mrb[0].mxu0 %v4173
  %v7354 = vpop.f32.mrb[0].mxu0
  %v7355 = vpop.f32.mrb[0].mxu0
  %7356 = vmatprep.mubr.f32.mxu0 %v6223
  %7357 = vmatmul.mubr.f32.gmra.mrb[0].mxu0 %v4175
  %v7358 = vpop.f32.mrb[0].mxu0
  %v7359 = vpop.f32.mrb[0].mxu0
  %7360 = vmatprep.mubr.f32.mxu0 %v6224
  %7361 = vmatmul.mubr.f32.gmra.mrb[0].mxu0 %v4177
  %v7362 = vpop.f32.mrb[0].mxu0
  %v7363 = vpop.f32.mrb[0].mxu0
  %7364 = vmatprep.mubr.f32.mxu0 %v6225
  %7365 = vmatmul.mubr.f32.gmra.mrb[0].mxu0 %v4179
  %v7366 = vpop.f32.mrb[0].mxu0
  %v7367 = vpop.f32.mrb[0].mxu0
  %7368 = vmatprep.mubr.f32.mxu0 %v6226
  %7369 = vmatmul.mubr.f32.gmra.mrb[0].mxu0 %v4181
  %v7370 = vpop.f32.mrb[0].mxu0
  %v7371 = vpop.f32.mrb[0].mxu0
  %7372 = vmatprep.mubr.f32.mxu0 %v6227
  %7373 = vmatmul.mubr.f32.gmra.mrb[0].mxu0 %v4183
  %v7374 = vpop.f32.mrb[0].mxu0
  %v7375 = vpop.f32.mrb[0].mxu0
  %7376 = vmatprep.mubr.f32.mxu0 %v6228
  %7377 = vmatmul.mubr.f32.gmra.mrb[0].mxu0 %v4185
  %v7378 = vpop.f32.mrb[0].mxu0
  %v7379 = vpop.f32.mrb[0].mxu0
  %7380 = vdwg.mxu0
  %7381 = vmatprep.subr.mxu0 %v6414
  %7382 = vmatpush1.msra.mxu0 %v6413
  %7383 = vmatprep.subr.mxu0 %v6416
  %7384 = vmatpush1.msra.mxu0 %v6415
  %7385 = vmatprep.subr.mxu0 %v6418
  %7386 = vmatpush1.msra.mxu0 %v6417
  %7387 = vmatprep.subr.mxu0 %v6420
  %7388 = vmatpush1.msra.mxu0 %v6419
  %7389 = vmatprep.subr.mxu0 %v6422
  %7390 = vmatpush1.msra.mxu0 %v6421
  %7391 = vmatprep.subr.mxu0 %v6424
  %7392 = vmatpush1.msra.mxu0 %v6423
  %7393 = vmatprep.subr.mxu0 %v6426
  %7394 = vmatpush1.msra.mxu0 %v6425
  %7395 = vmatprep.subr.mxu0 %v6428
  %7396 = vmatpush1.msra.mxu0 %v6427
  %7397 = vmatprep.subr.mxu0 %v6430
  %7398 = vmatpush1.msra.mxu0 %v6429
  %7399 = vmatprep.subr.mxu0 %v6432
  %7400 = vmatpush1.msra.mxu0 %v6431
  %7401 = vmatprep.subr.mxu0 %v6434
  %7402 = vmatpush1.msra.mxu0 %v6433
  %7403 = vmatprep.subr.mxu0 %v6436
  %7404 = vmatpush1.msra.mxu0 %v6435
  %7405 = vmatprep.subr.mxu0 %v6438
  %7406 = vmatpush1.msra.mxu0 %v6437
  %7407 = vmatprep.subr.mxu0 %v6440
  %7408 = vmatpush1.msra.mxu0 %v6439
  %7409 = vmatprep.subr.mxu0 %v6442
  %7410 = vmatpush1.msra.mxu0 %v6441
  %7411 = vmatprep.subr.mxu0 %v6444
  %7412 = vmatpush1.msra.mxu0 %v6443
  %7413 = vmatprep.subr.mxu0 %v6446
  %7414 = vmatpush1.msra.mxu0 %v6445
  %7415 = vmatprep.subr.mxu0 %v6448
  %7416 = vmatpush1.msra.mxu0 %v6447
  %7417 = vmatprep.subr.mxu0 %v6450
  %7418 = vmatpush1.msra.mxu0 %v6449
  %7419 = vmatprep.subr.mxu0 %v6452
  %7420 = vmatpush1.msra.mxu0 %v6451
  %7421 = vmatprep.subr.mxu0 %v6454
  %7422 = vmatpush1.msra.mxu0 %v6453
  %7423 = vmatprep.subr.mxu0 %v6456
  %7424 = vmatpush1.msra.mxu0 %v6455
  %7425 = vmatprep.subr.mxu0 %v6458
  %7426 = vmatpush1.msra.mxu0 %v6457
  %7427 = vmatprep.subr.mxu0 %v6460
  %7428 = vmatpush1.msra.mxu0 %v6459
  %7429 = vmatprep.subr.mxu0 %v6462
  %7430 = vmatpush1.msra.mxu0 %v6461
  %7431 = vmatprep.subr.mxu0 %v6464
  %7432 = vmatpush1.msra.mxu0 %v6463
  %7433 = vmatprep.subr.mxu0 %v6466
  %7434 = vmatpush1.msra.mxu0 %v6465
  %7435 = vmatprep.subr.mxu0 %v6468
  %7436 = vmatpush1.msra.mxu0 %v6467
  %7437 = vmatprep.subr.mxu0 %v6470
  %7438 = vmatpush1.msra.mxu0 %v6469
  %7439 = vmatprep.subr.mxu0 %v6472
  %7440 = vmatpush1.msra.mxu0 %v6471
  %7441 = vmatprep.subr.mxu0 %v6474
  %7442 = vmatpush1.msra.mxu0 %v6473
  %7443 = vmatprep.subr.mxu0 %v6476
  %7444 = vmatpush1.msra.mxu0 %v6475
  %7445 = vmatprep.mubr.f32.mxu0 %v6229
  %7446 = vmatmul.mubr.f32.gmra.mrb[0].mxu0 %v4908
  %v7447 = vpop.f32.mrb[0].mxu0
  %v7448 = vadd.f32 %v6807, %v7447
  %v7449 = vpop.f32.mrb[0].mxu0
  %v7450 = vadd.f32 %v6809, %v7449
  %7451 = vmatprep.mubr.f32.mxu0 %v6230
  %7452 = vmatmul.mubr.f32.gmra.mrb[0].mxu0 %v4909
  %v7453 = vpop.f32.mrb[0].mxu0
  %v7454 = vadd.f32 %v6813, %v7453
  %v7455 = vpop.f32.mrb[0].mxu0
  %v7456 = vadd.f32 %v6815, %v7455
  %7457 = vmatprep.mubr.f32.mxu0 %v6231
  %7458 = vmatmul.mubr.f32.gmra.mrb[0].mxu0 %v4910
  %v7459 = vpop.f32.mrb[0].mxu0
  %v7460 = vadd.f32 %v6819, %v7459
  %v7461 = vpop.f32.mrb[0].mxu0
  %v7462 = vadd.f32 %v6821, %v7461
  %7463 = vmatprep.mubr.f32.mxu0 %v6232
  %7464 = vmatmul.mubr.f32.gmra.mrb[0].mxu0 %v4911
  %v7465 = vpop.f32.mrb[0].mxu0
  %v7466 = vadd.f32 %v6825, %v7465
  %v7467 = vpop.f32.mrb[0].mxu0
  %v7468 = vadd.f32 %v6827, %v7467
  %7469 = vmatprep.mubr.f32.mxu0 %v6233
  %7470 = vmatmul.mubr.f32.gmra.mrb[0].mxu0 %v4912
  %v7471 = vpop.f32.mrb[0].mxu0
  %v7472 = vpop.f32.mrb[0].mxu0
  %7473 = vmatprep.mubr.f32.mxu0 %v6234
  %7474 = vmatmul.mubr.f32.gmra.mrb[0].mxu0 %v4913
  %v7475 = vpop.f32.mrb[0].mxu0
  %v7476 = vpop.f32.mrb[0].mxu0
  %7477 = vmatprep.mubr.f32.mxu0 %v6235
  %7478 = vmatmul.mubr.f32.gmra.mrb[0].mxu0 %v4914
  %v7479 = vpop.f32.mrb[0].mxu0
  %v7480 = vpop.f32.mrb[0].mxu0
  %7481 = vmatprep.mubr.f32.mxu0 %v6236
  %7482 = vmatmul.mubr.f32.gmra.mrb[0].mxu0 %v4915
  %v7483 = vpop.f32.mrb[0].mxu0
  %v7484 = vpop.f32.mrb[0].mxu0
  %7485 = vmatprep.mubr.f32.mxu0 %v6237
  %7486 = vmatmul.mubr.f32.gmra.mrb[0].mxu0 %v4916
  %v7487 = vpop.f32.mrb[0].mxu0
  %v7488 = vadd.f32 %v6847, %v7487
  %v7489 = vpop.f32.mrb[0].mxu0
  %v7490 = vadd.f32 %v6849, %v7489
  %7491 = vmatprep.mubr.f32.mxu0 %v6238
  %7492 = vmatmul.mubr.f32.gmra.mrb[0].mxu0 %v4917
  %v7493 = vpop.f32.mrb[0].mxu0
  %v7494 = vadd.f32 %v6853, %v7493
  %v7495 = vpop.f32.mrb[0].mxu0
  %v7496 = vadd.f32 %v6855, %v7495
  %7497 = vmatprep.mubr.f32.mxu0 %v6239
  %7498 = vmatmul.mubr.f32.gmra.mrb[0].mxu0 %v4918
  %v7499 = vpop.f32.mrb[0].mxu0
  %v7500 = vadd.f32 %v6859, %v7499
  %v7501 = vpop.f32.mrb[0].mxu0
  %v7502 = vadd.f32 %v6861, %v7501
  %7503 = vmatprep.mubr.f32.mxu0 %v6240
  %7504 = vmatmul.mubr.f32.gmra.mrb[0].mxu0 %v4919
  %v7505 = vpop.f32.mrb[0].mxu0
  %v7506 = vadd.f32 %v6865, %v7505
  %v7507 = vpop.f32.mrb[0].mxu0
  %v7508 = vadd.f32 %v6867, %v7507
  %7509 = vmatprep.mubr.f32.mxu0 %v6241
  %7510 = vmatmul.mubr.f32.gmra.mrb[0].mxu0 %v4920
  %v7511 = vpop.f32.mrb[0].mxu0
  %v7512 = vpop.f32.mrb[0].mxu0
  %7513 = vmatprep.mubr.f32.mxu0 %v6242
  %7514 = vmatmul.mubr.f32.gmra.mrb[0].mxu0 %v4921
  %v7515 = vpop.f32.mrb[0].mxu0
  %v7516 = vpop.f32.mrb[0].mxu0
  %7517 = vmatprep.mubr.f32.mxu0 %v6243
  %7518 = vmatmul.mubr.f32.gmra.mrb[0].mxu0 %v4922
  %v7519 = vpop.f32.mrb[0].mxu0
  %v7520 = vpop.f32.mrb[0].mxu0
  %7521 = vmatprep.mubr.f32.mxu0 %v6244
  %7522 = vmatmul.mubr.f32.gmra.mrb[0].mxu0 %v4923
  %v7523 = vpop.f32.mrb[0].mxu0
  %v7524 = vpop.f32.mrb[0].mxu0
  %7525 = vmatprep.mubr.f32.mxu0 %v6245
  %7526 = vmatmul.mubr.f32.gmra.mrb[0].mxu0 %v4924
  %v7527 = vpop.f32.mrb[0].mxu0
  %v7528 = vadd.f32 %v6887, %v7527
  %v7529 = vpop.f32.mrb[0].mxu0
  %v7530 = vadd.f32 %v6889, %v7529
  %7531 = vmatprep.mubr.f32.mxu0 %v6246
  %7532 = vmatmul.mubr.f32.gmra.mrb[0].mxu0 %v4925
  %v7533 = vpop.f32.mrb[0].mxu0
  %v7534 = vadd.f32 %v6893, %v7533
  %v7535 = vpop.f32.mrb[0].mxu0
  %v7536 = vadd.f32 %v6895, %v7535
  %7537 = vmatprep.mubr.f32.mxu0 %v6247
  %7538 = vmatmul.mubr.f32.gmra.mrb[0].mxu0 %v4926
  %v7539 = vpop.f32.mrb[0].mxu0
  %v7540 = vadd.f32 %v6899, %v7539
  %v7541 = vpop.f32.mrb[0].mxu0
  %v7542 = vadd.f32 %v6901, %v7541
  %7543 = vmatprep.mubr.f32.mxu0 %v6248
  %7544 = vmatmul.mubr.f32.gmra.mrb[0].mxu0 %v4927
  %v7545 = vpop.f32.mrb[0].mxu0
  %v7546 = vadd.f32 %v6905, %v7545
  %v7547 = vpop.f32.mrb[0].mxu0
  %v7548 = vadd.f32 %v6907, %v7547
  %7549 = vmatprep.mubr.f32.mxu0 %v6249
  %7550 = vmatmul.mubr.f32.gmra.mrb[0].mxu0 %v4928
  %v7551 = vpop.f32.mrb[0].mxu0
  %v7552 = vpop.f32.mrb[0].mxu0
  %7553 = vmatprep.mubr.f32.mxu0 %v6250
  %7554 = vmatmul.mubr.f32.gmra.mrb[0].mxu0 %v4929
  %v7555 = vpop.f32.mrb[0].mxu0
  %v7556 = vpop.f32.mrb[0].mxu0
  %7557 = vmatprep.mubr.f32.mxu0 %v6251
  %7558 = vmatmul.mubr.f32.gmra.mrb[0].mxu0 %v4930
  %v7559 = vpop.f32.mrb[0].mxu0
  %v7560 = vpop.f32.mrb[0].mxu0
  %7561 = vmatprep.mubr.f32.mxu0 %v6252
  %7562 = vmatmul.mubr.f32.gmra.mrb[0].mxu0 %v4931
  %v7563 = vpop.f32.mrb[0].mxu0
  %v7564 = vpop.f32.mrb[0].mxu0
  %7565 = vmatprep.mubr.f32.mxu0 %v6253
  %7566 = vmatmul.mubr.f32.gmra.mrb[0].mxu0 %v4932
  %v7567 = vpop.f32.mrb[0].mxu0
  %v7568 = vadd.f32 %v6927, %v7567
  %v7569 = vpop.f32.mrb[0].mxu0
  %v7570 = vadd.f32 %v6929, %v7569
  %7571 = vmatprep.mubr.f32.mxu0 %v6254
  %7572 = vmatmul.mubr.f32.gmra.mrb[0].mxu0 %v4933
  %v7573 = vpop.f32.mrb[0].mxu0
  %v7574 = vadd.f32 %v6933, %v7573
  %v7575 = vpop.f32.mrb[0].mxu0
  %v7576 = vadd.f32 %v6935, %v7575
  %7577 = vmatprep.mubr.f32.mxu0 %v6255
  %7578 = vmatmul.mubr.f32.gmra.mrb[0].mxu0 %v4934
  %v7579 = vpop.f32.mrb[0].mxu0
  %v7580 = vadd.f32 %v6939, %v7579
  %v7581 = vpop.f32.mrb[0].mxu0
  %v7582 = vadd.f32 %v6941, %v7581
  %7583 = vmatprep.mubr.f32.mxu0 %v6256
  %7584 = vmatmul.mubr.f32.gmra.mrb[0].mxu0 %v4935
  %v7585 = vpop.f32.mrb[0].mxu0
  %v7586 = vadd.f32 %v6945, %v7585
  %v7587 = vpop.f32.mrb[0].mxu0
  %v7588 = vadd.f32 %v6947, %v7587
  %7589 = vmatprep.mubr.f32.mxu0 %v6257
  %7590 = vmatmul.mubr.f32.gmra.mrb[0].mxu0 %v4936
  %v7591 = vpop.f32.mrb[0].mxu0
  %v7592 = vpop.f32.mrb[0].mxu0
  %7593 = vmatprep.mubr.f32.mxu0 %v6258
  %7594 = vmatmul.mubr.f32.gmra.mrb[0].mxu0 %v4937
  %v7595 = vpop.f32.mrb[0].mxu0
  %v7596 = vpop.f32.mrb[0].mxu0
  %7597 = vmatprep.mubr.f32.mxu0 %v6259
  %7598 = vmatmul.mubr.f32.gmra.mrb[0].mxu0 %v4938
  %v7599 = vpop.f32.mrb[0].mxu0
  %v7600 = vpop.f32.mrb[0].mxu0
  %7601 = vmatprep.mubr.f32.mxu0 %v6260
  %7602 = vmatmul.mubr.f32.gmra.mrb[0].mxu0 %v4939
  %v7603 = vpop.f32.mrb[0].mxu0
  %v7604 = vpop.f32.mrb[0].mxu0
  %7605 = vmatprep.mubr.f32.mxu0 %v6261
  %7606 = vmatmul.mubr.f32.gmra.mrb[0].mxu0 %v4940
  %v7607 = vpop.f32.mrb[0].mxu0
  %v7608 = vadd.f32 %v6967, %v7607
  %v7609 = vpop.f32.mrb[0].mxu0
  %v7610 = vadd.f32 %v6969, %v7609
  %7611 = vmatprep.mubr.f32.mxu0 %v6262
  %7612 = vmatmul.mubr.f32.gmra.mrb[0].mxu0 %v4941
  %v7613 = vpop.f32.mrb[0].mxu0
  %v7614 = vadd.f32 %v6973, %v7613
  %v7615 = vpop.f32.mrb[0].mxu0
  %v7616 = vadd.f32 %v6975, %v7615
  %7617 = vmatprep.mubr.f32.mxu0 %v6263
  %7618 = vmatmul.mubr.f32.gmra.mrb[0].mxu0 %v4942
  %v7619 = vpop.f32.mrb[0].mxu0
  %v7620 = vadd.f32 %v6979, %v7619
  %v7621 = vpop.f32.mrb[0].mxu0
  %v7622 = vadd.f32 %v6981, %v7621
  %7623 = vmatprep.mubr.f32.mxu0 %v6264
  %7624 = vmatmul.mubr.f32.gmra.mrb[0].mxu0 %v4943
  %v7625 = vpop.f32.mrb[0].mxu0
  %v7626 = vadd.f32 %v6985, %v7625
  %v7627 = vpop.f32.mrb[0].mxu0
  %v7628 = vadd.f32 %v6987, %v7627
  %7629 = vmatprep.mubr.f32.mxu0 %v6265
  %7630 = vmatmul.mubr.f32.gmra.mrb[0].mxu0 %v4944
  %v7631 = vpop.f32.mrb[0].mxu0
  %v7632 = vpop.f32.mrb[0].mxu0
  %7633 = vmatprep.mubr.f32.mxu0 %v6266
  %7634 = vmatmul.mubr.f32.gmra.mrb[0].mxu0 %v4945
  %v7635 = vpop.f32.mrb[0].mxu0
  %v7636 = vpop.f32.mrb[0].mxu0
  %7637 = vmatprep.mubr.f32.mxu0 %v6267
  %7638 = vmatmul.mubr.f32.gmra.mrb[0].mxu0 %v4946
  %v7639 = vpop.f32.mrb[0].mxu0
  %v7640 = vpop.f32.mrb[0].mxu0
  %7641 = vmatprep.mubr.f32.mxu0 %v6268
  %7642 = vmatmul.mubr.f32.gmra.mrb[0].mxu0 %v4947
  %v7643 = vpop.f32.mrb[0].mxu0
  %v7644 = vpop.f32.mrb[0].mxu0
  %7645 = vmatprep.mubr.f32.mxu0 %v6269
  %7646 = vmatmul.mubr.f32.gmra.mrb[0].mxu0 %v4948
  %v7647 = vpop.f32.mrb[0].mxu0
  %v7648 = vadd.f32 %v7007, %v7647
  %v7649 = vpop.f32.mrb[0].mxu0
  %v7650 = vadd.f32 %v7009, %v7649
  %7651 = vmatprep.mubr.f32.mxu0 %v6270
  %7652 = vmatmul.mubr.f32.gmra.mrb[0].mxu0 %v4949
  %v7653 = vpop.f32.mrb[0].mxu0
  %v7654 = vadd.f32 %v7013, %v7653
  %v7655 = vpop.f32.mrb[0].mxu0
  %v7656 = vadd.f32 %v7015, %v7655
  %7657 = vmatprep.mubr.f32.mxu0 %v6271
  %7658 = vmatmul.mubr.f32.gmra.mrb[0].mxu0 %v4950
  %v7659 = vpop.f32.mrb[0].mxu0
  %v7660 = vadd.f32 %v7019, %v7659
  %v7661 = vpop.f32.mrb[0].mxu0
  %v7662 = vadd.f32 %v7021, %v7661
  %7663 = vmatprep.mubr.f32.mxu0 %v6272
  %7664 = vmatmul.mubr.f32.gmra.mrb[0].mxu0 %v4951
  %v7665 = vpop.f32.mrb[0].mxu0
  %v7666 = vadd.f32 %v7025, %v7665
  %v7667 = vpop.f32.mrb[0].mxu0
  %v7668 = vadd.f32 %v7027, %v7667
  %7669 = vmatprep.mubr.f32.mxu0 %v6273
  %7670 = vmatmul.mubr.f32.gmra.mrb[0].mxu0 %v4952
  %v7671 = vpop.f32.mrb[0].mxu0
  %v7672 = vpop.f32.mrb[0].mxu0
  %7673 = vmatprep.mubr.f32.mxu0 %v6274
  %7674 = vmatmul.mubr.f32.gmra.mrb[0].mxu0 %v4953
  %v7675 = vpop.f32.mrb[0].mxu0
  %v7676 = vpop.f32.mrb[0].mxu0
  %7677 = vmatprep.mubr.f32.mxu0 %v6275
  %7678 = vmatmul.mubr.f32.gmra.mrb[0].mxu0 %v4954
  %v7679 = vpop.f32.mrb[0].mxu0
  %v7680 = vpop.f32.mrb[0].mxu0
  %7681 = vmatprep.mubr.f32.mxu0 %v6276
  %7682 = vmatmul.mubr.f32.gmra.mrb[0].mxu0 %v4955
  %v7683 = vpop.f32.mrb[0].mxu0
  %v7684 = vpop.f32.mrb[0].mxu0
  %7685 = vmatprep.mubr.f32.mxu0 %v6277
  %7686 = vmatmul.mubr.f32.gmra.mrb[0].mxu0 %v4956
  %v7687 = vpop.f32.mrb[0].mxu0
  %v7688 = vadd.f32 %v7047, %v7687
  %v7689 = vpop.f32.mrb[0].mxu0
  %v7690 = vadd.f32 %v7049, %v7689
  %7691 = vmatprep.mubr.f32.mxu0 %v6278
  %7692 = vmatmul.mubr.f32.gmra.mrb[0].mxu0 %v4957
  %v7693 = vpop.f32.mrb[0].mxu0
  %v7694 = vadd.f32 %v7053, %v7693
  %v7695 = vpop.f32.mrb[0].mxu0
  %v7696 = vadd.f32 %v7055, %v7695
  %7697 = vmatprep.mubr.f32.mxu0 %v6279
  %7698 = vmatmul.mubr.f32.gmra.mrb[0].mxu0 %v4958
  %v7699 = vpop.f32.mrb[0].mxu0
  %v7700 = vadd.f32 %v7059, %v7699
  %v7701 = vpop.f32.mrb[0].mxu0
  %v7702 = vadd.f32 %v7061, %v7701
  %7703 = vmatprep.mubr.f32.mxu0 %v6280
  %7704 = vmatmul.mubr.f32.gmra.mrb[0].mxu0 %v4959
  %v7705 = vpop.f32.mrb[0].mxu0
  %v7706 = vadd.f32 %v7065, %v7705
  %v7707 = vpop.f32.mrb[0].mxu0
  %v7708 = vadd.f32 %v7067, %v7707
  %7709 = vmatprep.mubr.f32.mxu0 %v6281
  %7710 = vmatmul.mubr.f32.gmra.mrb[0].mxu0 %v4960
  %v7711 = vpop.f32.mrb[0].mxu0
  %v7712 = vpop.f32.mrb[0].mxu0
  %7713 = vmatprep.mubr.f32.mxu0 %v6282
  %7714 = vmatmul.mubr.f32.gmra.mrb[0].mxu0 %v4961
  %v7715 = vpop.f32.mrb[0].mxu0
  %v7716 = vpop.f32.mrb[0].mxu0
  %7717 = vmatprep.mubr.f32.mxu0 %v6283
  %7718 = vmatmul.mubr.f32.gmra.mrb[0].mxu0 %v4962
  %v7719 = vpop.f32.mrb[0].mxu0
  %v7720 = vpop.f32.mrb[0].mxu0
  %7721 = vmatprep.mubr.f32.mxu0 %v6284
  %7722 = vmatmul.mubr.f32.gmra.mrb[0].mxu0 %v4963
  %v7723 = vpop.f32.mrb[0].mxu0
  %v7724 = vpop.f32.mrb[0].mxu0
  %7725 = vmatprep.mubr.f32.mxu0 %v6285
  %7726 = vmatmul.mubr.f32.gmra.mrb[0].mxu0 %v4964
  %v7727 = vpop.f32.mrb[0].mxu0
  %v7728 = vadd.f32 %v7087, %v7727
  %v7729 = vpop.f32.mrb[0].mxu0
  %v7730 = vadd.f32 %v7089, %v7729
  %7731 = vmatprep.mubr.f32.mxu0 %v6286
  %7732 = vmatmul.mubr.f32.gmra.mrb[0].mxu0 %v4965
  %v7733 = vpop.f32.mrb[0].mxu0
  %v7734 = vadd.f32 %v7093, %v7733
  %v7735 = vpop.f32.mrb[0].mxu0
  %v7736 = vadd.f32 %v7095, %v7735
  %7737 = vmatprep.mubr.f32.mxu0 %v6287
  %7738 = vmatmul.mubr.f32.gmra.mrb[0].mxu0 %v4966
  %v7739 = vpop.f32.mrb[0].mxu0
  %v7740 = vadd.f32 %v7099, %v7739
  %v7741 = vpop.f32.mrb[0].mxu0
  %v7742 = vadd.f32 %v7101, %v7741
  %7743 = vmatprep.mubr.f32.mxu0 %v6288
  %7744 = vmatmul.mubr.f32.gmra.mrb[0].mxu0 %v4967
  %v7745 = vpop.f32.mrb[0].mxu0
  %v7746 = vadd.f32 %v7105, %v7745
  %v7747 = vpop.f32.mrb[0].mxu0
  %v7748 = vadd.f32 %v7107, %v7747
  %7749 = vmatprep.mubr.f32.mxu0 %v6289
  %7750 = vmatmul.mubr.f32.gmra.mrb[0].mxu0 %v4968
  %v7751 = vpop.f32.mrb[0].mxu0
  %v7752 = vpop.f32.mrb[0].mxu0
  %7753 = vmatprep.mubr.f32.mxu0 %v6290
  %7754 = vmatmul.mubr.f32.gmra.mrb[0].mxu0 %v4969
  %v7755 = vpop.f32.mrb[0].mxu0
  %v7756 = vpop.f32.mrb[0].mxu0
  %7757 = vmatprep.mubr.f32.mxu0 %v6291
  %7758 = vmatmul.mubr.f32.gmra.mrb[0].mxu0 %v4970
  %v7759 = vpop.f32.mrb[0].mxu0
  %v7760 = vpop.f32.mrb[0].mxu0
  %7761 = vmatprep.mubr.f32.mxu0 %v6292
  %7762 = vmatmul.mubr.f32.gmra.mrb[0].mxu0 %v4971
  %v7763 = vpop.f32.mrb[0].mxu0
  %v7764 = vpop.f32.mrb[0].mxu0
  %7765 = vmatprep.mubr.f32.mxu0 %v6293
  %7766 = vmatmul.mubr.f32.gmra.mrb[0].mxu0 %v4972
  %v7767 = vpop.f32.mrb[0].mxu0
  %v7768 = vadd.f32 %v7127, %v7767
  %v7769 = vpop.f32.mrb[0].mxu0
  %v7770 = vadd.f32 %v7129, %v7769
  %7771 = vmatprep.mubr.f32.mxu0 %v6294
  %7772 = vmatmul.mubr.f32.gmra.mrb[0].mxu0 %v4973
  %v7773 = vpop.f32.mrb[0].mxu0
  %v7774 = vadd.f32 %v7133, %v7773
  %v7775 = vpop.f32.mrb[0].mxu0
  %v7776 = vadd.f32 %v7135, %v7775
  %7777 = vmatprep.mubr.f32.mxu0 %v6295
  %7778 = vmatmul.mubr.f32.gmra.mrb[0].mxu0 %v4974
  %v7779 = vpop.f32.mrb[0].mxu0
  %v7780 = vadd.f32 %v7139, %v7779
  %v7781 = vpop.f32.mrb[0].mxu0
  %v7782 = vadd.f32 %v7141, %v7781
  %7783 = vmatprep.mubr.f32.mxu0 %v6296
  %7784 = vmatmul.mubr.f32.gmra.mrb[0].mxu0 %v4975
  %v7785 = vpop.f32.mrb[0].mxu0
  %v7786 = vadd.f32 %v7145, %v7785
  %v7787 = vpop.f32.mrb[0].mxu0
  %v7788 = vadd.f32 %v7147, %v7787
  %7789 = vmatprep.mubr.f32.mxu0 %v6297
  %7790 = vmatmul.mubr.f32.gmra.mrb[0].mxu0 %v4976
  %v7791 = vpop.f32.mrb[0].mxu0
  %v7792 = vpop.f32.mrb[0].mxu0
  %7793 = vmatprep.mubr.f32.mxu0 %v6298
  %7794 = vmatmul.mubr.f32.gmra.mrb[0].mxu0 %v4977
  %v7795 = vpop.f32.mrb[0].mxu0
  %v7796 = vpop.f32.mrb[0].mxu0
  %7797 = vmatprep.mubr.f32.mxu0 %v6299
  %7798 = vmatmul.mubr.f32.gmra.mrb[0].mxu0 %v4978
  %v7799 = vpop.f32.mrb[0].mxu0
  %v7800 = vpop.f32.mrb[0].mxu0
  %7801 = vmatprep.mubr.f32.mxu0 %v6300
  %7802 = vmatmul.mubr.f32.gmra.mrb[0].mxu0 %v4979
  %v7803 = vpop.f32.mrb[0].mxu0
  %v7804 = vpop.f32.mrb[0].mxu0
  %7805 = vmatprep.mubr.f32.mxu0 %v6301
  %7806 = vmatmul.mubr.f32.gmra.mrb[0].mxu0 %v4980
  %v7807 = vpop.f32.mrb[0].mxu0
  %v7808 = vadd.f32 %v7167, %v7807
  %v7809 = vpop.f32.mrb[0].mxu0
  %v7810 = vadd.f32 %v7169, %v7809
  %7811 = vmatprep.mubr.f32.mxu0 %v6302
  %7812 = vmatmul.mubr.f32.gmra.mrb[0].mxu0 %v4981
  %v7813 = vpop.f32.mrb[0].mxu0
  %v7814 = vadd.f32 %v7173, %v7813
  %v7815 = vpop.f32.mrb[0].mxu0
  %v7816 = vadd.f32 %v7175, %v7815
  %7817 = vmatprep.mubr.f32.mxu0 %v6303
  %7818 = vmatmul.mubr.f32.gmra.mrb[0].mxu0 %v4982
  %v7819 = vpop.f32.mrb[0].mxu0
  %v7820 = vadd.f32 %v7179, %v7819
  %v7821 = vpop.f32.mrb[0].mxu0
  %v7822 = vadd.f32 %v7181, %v7821
  %7823 = vmatprep.mubr.f32.mxu0 %v6304
  %7824 = vmatmul.mubr.f32.gmra.mrb[0].mxu0 %v4983
  %v7825 = vpop.f32.mrb[0].mxu0
  %v7826 = vadd.f32 %v7185, %v7825
  %v7827 = vpop.f32.mrb[0].mxu0
  %v7828 = vadd.f32 %v7187, %v7827
  %7829 = vmatprep.mubr.f32.mxu0 %v6305
  %7830 = vmatmul.mubr.f32.gmra.mrb[0].mxu0 %v4984
  %v7831 = vpop.f32.mrb[0].mxu0
  %v7832 = vpop.f32.mrb[0].mxu0
  %7833 = vmatprep.mubr.f32.mxu0 %v6306
  %7834 = vmatmul.mubr.f32.gmra.mrb[0].mxu0 %v4985
  %v7835 = vpop.f32.mrb[0].mxu0
  %v7836 = vpop.f32.mrb[0].mxu0
  %7837 = vmatprep.mubr.f32.mxu0 %v6307
  %7838 = vmatmul.mubr.f32.gmra.mrb[0].mxu0 %v4986
  %v7839 = vpop.f32.mrb[0].mxu0
  %v7840 = vpop.f32.mrb[0].mxu0
  %7841 = vmatprep.mubr.f32.mxu0 %v6308
  %7842 = vmatmul.mubr.f32.gmra.mrb[0].mxu0 %v4987
  %v7843 = vpop.f32.mrb[0].mxu0
  %v7844 = vpop.f32.mrb[0].mxu0
  %7845 = vmatprep.mubr.f32.mxu0 %v6309
  %7846 = vmatmul.mubr.f32.gmra.mrb[0].mxu0 %v4988
  %v7847 = vpop.f32.mrb[0].mxu0
  %v7848 = vadd.f32 %v7207, %v7847
  %v7849 = vpop.f32.mrb[0].mxu0
  %v7850 = vadd.f32 %v7209, %v7849
  %7851 = vmatprep.mubr.f32.mxu0 %v6310
  %7852 = vmatmul.mubr.f32.gmra.mrb[0].mxu0 %v4989
  %v7853 = vpop.f32.mrb[0].mxu0
  %v7854 = vadd.f32 %v7213, %v7853
  %v7855 = vpop.f32.mrb[0].mxu0
  %v7856 = vadd.f32 %v7215, %v7855
  %7857 = vmatprep.mubr.f32.mxu0 %v6311
  %7858 = vmatmul.mubr.f32.gmra.mrb[0].mxu0 %v4990
  %v7859 = vpop.f32.mrb[0].mxu0
  %v7860 = vadd.f32 %v7219, %v7859
  %v7861 = vpop.f32.mrb[0].mxu0
  %v7862 = vadd.f32 %v7221, %v7861
  %7863 = vmatprep.mubr.f32.mxu0 %v6312
  %7864 = vmatmul.mubr.f32.gmra.mrb[0].mxu0 %v4991
  %v7865 = vpop.f32.mrb[0].mxu0
  %v7866 = vadd.f32 %v7225, %v7865
  %v7867 = vpop.f32.mrb[0].mxu0
  %v7868 = vadd.f32 %v7227, %v7867
  %7869 = vmatprep.mubr.f32.mxu0 %v6313
  %7870 = vmatmul.mubr.f32.gmra.mrb[0].mxu0 %v4992
  %v7871 = vpop.f32.mrb[0].mxu0
  %v7872 = vpop.f32.mrb[0].mxu0
  %7873 = vmatprep.mubr.f32.mxu0 %v6314
  %7874 = vmatmul.mubr.f32.gmra.mrb[0].mxu0 %v4993
  %v7875 = vpop.f32.mrb[0].mxu0
  %v7876 = vpop.f32.mrb[0].mxu0
  %7877 = vmatprep.mubr.f32.mxu0 %v6315
  %7878 = vmatmul.mubr.f32.gmra.mrb[0].mxu0 %v4994
  %v7879 = vpop.f32.mrb[0].mxu0
  %v7880 = vpop.f32.mrb[0].mxu0
  %7881 = vmatprep.mubr.f32.mxu0 %v6316
  %7882 = vmatmul.mubr.f32.gmra.mrb[0].mxu0 %v4995
  %v7883 = vpop.f32.mrb[0].mxu0
  %v7884 = vpop.f32.mrb[0].mxu0
  %7885 = vmatprep.mubr.f32.mxu0 %v6317
  %7886 = vmatmul.mubr.f32.gmra.mrb[0].mxu0 %v4996
  %v7887 = vpop.f32.mrb[0].mxu0
  %v7888 = vadd.f32 %v7247, %v7887
  %v7889 = vpop.f32.mrb[0].mxu0
  %v7890 = vadd.f32 %v7249, %v7889
  %7891 = vmatprep.mubr.f32.mxu0 %v6318
  %7892 = vmatmul.mubr.f32.gmra.mrb[0].mxu0 %v4997
  %v7893 = vpop.f32.mrb[0].mxu0
  %v7894 = vadd.f32 %v7253, %v7893
  %v7895 = vpop.f32.mrb[0].mxu0
  %v7896 = vadd.f32 %v7255, %v7895
  %7897 = vmatprep.mubr.f32.mxu0 %v6319
  %7898 = vmatmul.mubr.f32.gmra.mrb[0].mxu0 %v4998
  %v7899 = vpop.f32.mrb[0].mxu0
  %v7900 = vadd.f32 %v7259, %v7899
  %v7901 = vpop.f32.mrb[0].mxu0
  %v7902 = vadd.f32 %v7261, %v7901
  %7903 = vmatprep.mubr.f32.mxu0 %v6320
  %7904 = vmatmul.mubr.f32.gmra.mrb[0].mxu0 %v4999
  %v7905 = vpop.f32.mrb[0].mxu0
  %v7906 = vadd.f32 %v7265, %v7905
  %v7907 = vpop.f32.mrb[0].mxu0
  %v7908 = vadd.f32 %v7267, %v7907
  %7909 = vmatprep.mubr.f32.mxu0 %v6321
  %7910 = vmatmul.mubr.f32.gmra.mrb[0].mxu0 %v5000
  %v7911 = vpop.f32.mrb[0].mxu0
  %v7912 = vpop.f32.mrb[0].mxu0
  %7913 = vmatprep.mubr.f32.mxu0 %v6322
  %7914 = vmatmul.mubr.f32.gmra.mrb[0].mxu0 %v5001
  %v7915 = vpop.f32.mrb[0].mxu0
  %v7916 = vpop.f32.mrb[0].mxu0
  %7917 = vmatprep.mubr.f32.mxu0 %v6323
  %7918 = vmatmul.mubr.f32.gmra.mrb[0].mxu0 %v5002
  %v7919 = vpop.f32.mrb[0].mxu0
  %v7920 = vpop.f32.mrb[0].mxu0
  %7921 = vmatprep.mubr.f32.mxu0 %v6324
  %7922 = vmatmul.mubr.f32.gmra.mrb[0].mxu0 %v5003
  %v7923 = vpop.f32.mrb[0].mxu0
  %v7924 = vpop.f32.mrb[0].mxu0
  %7925 = vmatprep.mubr.f32.mxu0 %v6325
  %7926 = vmatmul.mubr.f32.gmra.mrb[0].mxu0 %v5004
  %v7927 = vpop.f32.mrb[0].mxu0
  %v7928 = vpop.f32.mrb[0].mxu0
  %7929 = vmatprep.mubr.f32.mxu0 %v6326
  %7930 = vmatmul.mubr.f32.gmra.mrb[0].mxu0 %v5005
  %v7931 = vpop.f32.mrb[0].mxu0
  %v7932 = vpop.f32.mrb[0].mxu0
  %7933 = vmatprep.mubr.f32.mxu0 %v6327
  %7934 = vmatmul.mubr.f32.gmra.mrb[0].mxu0 %v5006
  %v7935 = vpop.f32.mrb[0].mxu0
  %v7936 = vpop.f32.mrb[0].mxu0
  %7937 = vmatprep.mubr.f32.mxu0 %v6328
  %7938 = vmatmul.mubr.f32.gmra.mrb[0].mxu0 %v5007
  %v7939 = vpop.f32.mrb[0].mxu0
  %v7940 = vpop.f32.mrb[0].mxu0
  %7941 = vmatprep.mubr.f32.mxu0 %v6329
  %7942 = vmatmul.mubr.f32.gmra.mrb[0].mxu0 %v5008
  %v7943 = vpop.f32.mrb[0].mxu0
  %v7944 = vpop.f32.mrb[0].mxu0
  %7945 = vmatprep.mubr.f32.mxu0 %v6330
  %7946 = vmatmul.mubr.f32.gmra.mrb[0].mxu0 %v5009
  %v7947 = vpop.f32.mrb[0].mxu0
  %v7948 = vpop.f32.mrb[0].mxu0
  %7949 = vmatprep.mubr.f32.mxu0 %v6331
  %7950 = vmatmul.mubr.f32.gmra.mrb[0].mxu0 %v5010
  %v7951 = vpop.f32.mrb[0].mxu0
  %v7952 = vpop.f32.mrb[0].mxu0
  %7953 = vmatprep.mubr.f32.mxu0 %v6332
  %7954 = vmatmul.mubr.f32.gmra.mrb[0].mxu0 %v5011
  %v7955 = vpop.f32.mrb[0].mxu0
  %v7956 = vpop.f32.mrb[0].mxu0
  %7957 = vmatprep.mubr.f32.mxu0 %v6333
  %7958 = vmatmul.mubr.f32.gmra.mrb[0].mxu0 %v5012
  %v7959 = vpop.f32.mrb[0].mxu0
  %v7960 = vpop.f32.mrb[0].mxu0
  %7961 = vmatprep.mubr.f32.mxu0 %v6334
  %7962 = vmatmul.mubr.f32.gmra.mrb[0].mxu0 %v5013
  %v7963 = vpop.f32.mrb[0].mxu0
  %v7964 = vpop.f32.mrb[0].mxu0
  %7965 = vmatprep.mubr.f32.mxu0 %v6335
  %7966 = vmatmul.mubr.f32.gmra.mrb[0].mxu0 %v5014
  %v7967 = vpop.f32.mrb[0].mxu0
  %v7968 = vpop.f32.mrb[0].mxu0
  %7969 = vmatprep.mubr.f32.mxu0 %v6336
  %7970 = vmatmul.mubr.f32.gmra.mrb[0].mxu0 %v5015
  %v7971 = vpop.f32.mrb[0].mxu0
  %v7972 = vpop.f32.mrb[0].mxu0
  %7973 = vmatprep.mubr.f32.mxu0 %v6337
  %7974 = vmatmul.mubr.f32.gmra.mrb[0].mxu0 %v5016
  %v7975 = vpop.f32.mrb[0].mxu0
  %v7976 = vpop.f32.mrb[0].mxu0
  %7977 = vmatprep.mubr.f32.mxu0 %v6338
  %7978 = vmatmul.mubr.f32.gmra.mrb[0].mxu0 %v5017
  %v7979 = vpop.f32.mrb[0].mxu0
  %v7980 = vpop.f32.mrb[0].mxu0
  %7981 = vmatprep.mubr.f32.mxu0 %v6339
  %7982 = vmatmul.mubr.f32.gmra.mrb[0].mxu0 %v5018
  %v7983 = vpop.f32.mrb[0].mxu0
  %v7984 = vpop.f32.mrb[0].mxu0
  %7985 = vmatprep.mubr.f32.mxu0 %v6340
  %7986 = vmatmul.mubr.f32.gmra.mrb[0].mxu0 %v5019
  %v7987 = vpop.f32.mrb[0].mxu0
  %v7988 = vpop.f32.mrb[0].mxu0
  %7989 = vmatprep.mubr.f32.mxu0 %v6341
  %7990 = vmatmul.mubr.f32.gmra.mrb[0].mxu0 %v5020
  %v7991 = vpop.f32.mrb[0].mxu0
  %v7992 = vpop.f32.mrb[0].mxu0
  %7993 = vmatprep.mubr.f32.mxu0 %v6342
  %7994 = vmatmul.mubr.f32.gmra.mrb[0].mxu0 %v5021
  %v7995 = vpop.f32.mrb[0].mxu0
  %v7996 = vpop.f32.mrb[0].mxu0
  %7997 = vmatprep.mubr.f32.mxu0 %v6343
  %7998 = vmatmul.mubr.f32.gmra.mrb[0].mxu0 %v5022
  %v7999 = vpop.f32.mrb[0].mxu0
  %v8000 = vpop.f32.mrb[0].mxu0
  %8001 = vmatprep.mubr.f32.mxu0 %v6344
  %8002 = vmatmul.mubr.f32.gmra.mrb[0].mxu0 %v5023
  %v8003 = vpop.f32.mrb[0].mxu0
  %v8004 = vpop.f32.mrb[0].mxu0
  %8005 = vmatprep.mubr.f32.mxu0 %v6345
  %8006 = vmatmul.mubr.f32.gmra.mrb[0].mxu0 %v5024
  %v8007 = vpop.f32.mrb[0].mxu0
  %v8008 = vpop.f32.mrb[0].mxu0
  %8009 = vmatprep.mubr.f32.mxu0 %v6346
  %8010 = vmatmul.mubr.f32.gmra.mrb[0].mxu0 %v5025
  %v8011 = vpop.f32.mrb[0].mxu0
  %v8012 = vpop.f32.mrb[0].mxu0
  %8013 = vmatprep.mubr.f32.mxu0 %v6347
  %8014 = vmatmul.mubr.f32.gmra.mrb[0].mxu0 %v5026
  %v8015 = vpop.f32.mrb[0].mxu0
  %v8016 = vpop.f32.mrb[0].mxu0
  %8017 = vmatprep.mubr.f32.mxu0 %v6348
  %8018 = vmatmul.mubr.f32.gmra.mrb[0].mxu0 %v5027
  %v8019 = vpop.f32.mrb[0].mxu0
  %v8020 = vpop.f32.mrb[0].mxu0
  %8021 = vdwg.mxu0
  %8022 = vmatprep.subr.mxu0 %v6478
  %8023 = vmatpush1.msra.mxu0 %v6477
  %8024 = vmatprep.subr.mxu0 %v6480
  %8025 = vmatpush1.msra.mxu0 %v6479
  %8026 = vmatprep.subr.mxu0 %v6482
  %8027 = vmatpush1.msra.mxu0 %v6481
  %8028 = vmatprep.subr.mxu0 %v6484
  %8029 = vmatpush1.msra.mxu0 %v6483
  %8030 = vmatprep.subr.mxu0 %v6486
  %8031 = vmatpush1.msra.mxu0 %v6485
  %8032 = vmatprep.subr.mxu0 %v6488
  %8033 = vmatpush1.msra.mxu0 %v6487
  %8034 = vmatprep.subr.mxu0 %v6490
  %8035 = vmatpush1.msra.mxu0 %v6489
  %8036 = vmatprep.subr.mxu0 %v6492
  %8037 = vmatpush1.msra.mxu0 %v6491
  %8038 = vmatprep.subr.mxu0 %v6494
  %8039 = vmatpush1.msra.mxu0 %v6493
  %8040 = vmatprep.subr.mxu0 %v6496
  %8041 = vmatpush1.msra.mxu0 %v6495
  %8042 = vmatprep.subr.mxu0 %v6498
  %8043 = vmatpush1.msra.mxu0 %v6497
  %8044 = vmatprep.subr.mxu0 0.0
  %8045 = vmatpush1.msra.mxu0 0.0
  %8046 = vmatprep.subr.mxu0 0.0
  %8047 = vmatpush1.msra.mxu0 0.0
  %8048 = vmatprep.subr.mxu0 0.0
  %8049 = vmatpush1.msra.mxu0 0.0
  %8050 = vmatprep.subr.mxu0 0.0
  %8051 = vmatpush1.msra.mxu0 0.0
  %8052 = vmatprep.subr.mxu0 0.0
  %8053 = vmatpush1.msra.mxu0 0.0
  %8054 = vmatprep.subr.mxu0 0.0
  %8055 = vmatpush1.msra.mxu0 0.0
  %8056 = vmatprep.subr.mxu0 0.0
  %8057 = vmatpush1.msra.mxu0 0.0
  %8058 = vmatprep.subr.mxu0 0.0
  %8059 = vmatpush1.msra.mxu0 0.0
  %8060 = vmatprep.subr.mxu0 0.0
  %8061 = vmatpush1.msra.mxu0 0.0
  %8062 = vmatprep.subr.mxu0 0.0
  %8063 = vmatpush1.msra.mxu0 0.0
  %8064 = vmatprep.subr.mxu0 0.0
  %8065 = vmatpush1.msra.mxu0 0.0
  %8066 = vmatprep.subr.mxu0 0.0
  %8067 = vmatpush1.msra.mxu0 0.0
  %8068 = vmatprep.subr.mxu0 0.0
  %8069 = vmatpush1.msra.mxu0 0.0
  %8070 = vmatprep.subr.mxu0 0.0
  %8071 = vmatpush1.msra.mxu0 0.0
  %8072 = vmatprep.subr.mxu0 0.0
  %8073 = vmatpush1.msra.mxu0 0.0
  %8074 = vmatprep.subr.mxu0 0.0
  %8075 = vmatpush1.msra.mxu0 0.0
  %8076 = vmatprep.subr.mxu0 0.0
  %8077 = vmatpush1.msra.mxu0 0.0
  %8078 = vmatprep.subr.mxu0 0.0
  %8079 = vmatpush1.msra.mxu0 0.0
  %8080 = vmatprep.subr.mxu0 0.0
  %8081 = vmatpush1.msra.mxu0 0.0
  %8082 = vmatprep.subr.mxu0 0.0
  %8083 = vmatpush1.msra.mxu0 0.0
  %8084 = vmatprep.subr.mxu0 0.0
  %8085 = vmatpush1.msra.mxu0 0.0
  %8086 = vmatprep.mubr.f32.mxu0 0.0
  %8087 = vmatmul.mubr.f32.gmra.mrb[0].mxu0 %v6500
  %v8088 = vpop.f32.mrb[0].mxu0
  %v8089 = vadd.f32 %v7448, %v8088
  %v8090 = vpop.f32.mrb[0].mxu0
  %v8091 = vadd.f32 %v7450, %v8090
  %8092 = vmatprep.mubr.f32.mxu0 0.0
  %8093 = vmatmul.mubr.f32.gmra.mrb[0].mxu0 %v6502
  %v8094 = vpop.f32.mrb[0].mxu0
  %v8095 = vadd.f32 %v7454, %v8094
  %v8096 = vpop.f32.mrb[0].mxu0
  %v8097 = vadd.f32 %v7456, %v8096
  %8098 = vmatprep.mubr.f32.mxu0 0.0
  %8099 = vmatmul.mubr.f32.gmra.mrb[0].mxu0 %v6504
  %v8100 = vpop.f32.mrb[0].mxu0
  %v8101 = vadd.f32 %v7460, %v8100
  %v8102 = vpop.f32.mrb[0].mxu0
  %v8103 = vadd.f32 %v7462, %v8102
  %8104 = vmatprep.mubr.f32.mxu0 0.0
  %8105 = vmatmul.mubr.f32.gmra.mrb[0].mxu0 %v6506
  %v8106 = vpop.f32.mrb[0].mxu0
  %v8107 = vadd.f32 %v7466, %v8106
  %v8108 = vpop.f32.mrb[0].mxu0
  %v8109 = vadd.f32 %v7468, %v8108
  %8110 = vmatprep.mubr.f32.mxu0 0.0
  %8111 = vmatmul.mubr.f32.gmra.mrb[0].mxu0 %v6508
  %v8112 = vpop.f32.mrb[0].mxu0
  %v8113 = vpop.f32.mrb[0].mxu0
  %8114 = vmatprep.mubr.f32.mxu0 0.0
  %8115 = vmatmul.mubr.f32.gmra.mrb[0].mxu0 %v6510
  %v8116 = vpop.f32.mrb[0].mxu0
  %v8117 = vpop.f32.mrb[0].mxu0
  %8118 = vmatprep.mubr.f32.mxu0 0.0
  %8119 = vmatmul.mubr.f32.gmra.mrb[0].mxu0 %v6512
  %v8120 = vpop.f32.mrb[0].mxu0
  %v8121 = vpop.f32.mrb[0].mxu0
  %8122 = vmatprep.mubr.f32.mxu0 0.0
  %8123 = vmatmul.mubr.f32.gmra.mrb[0].mxu0 %v6514
  %v8124 = vpop.f32.mrb[0].mxu0
  %v8125 = vpop.f32.mrb[0].mxu0
  %8126 = vmatprep.mubr.f32.mxu0 0.0
  %8127 = vmatmul.mubr.f32.gmra.mrb[0].mxu0 %v6516
  %v8128 = vpop.f32.mrb[0].mxu0
  %v8129 = vadd.f32 %v7488, %v8128
  %v8130 = vpop.f32.mrb[0].mxu0
  %v8131 = vadd.f32 %v7490, %v8130
  %8132 = vmatprep.mubr.f32.mxu0 0.0
  %8133 = vmatmul.mubr.f32.gmra.mrb[0].mxu0 %v6518
  %v8134 = vpop.f32.mrb[0].mxu0
  %v8135 = vadd.f32 %v7494, %v8134
  %v8136 = vpop.f32.mrb[0].mxu0
  %v8137 = vadd.f32 %v7496, %v8136
  %8138 = vmatprep.mubr.f32.mxu0 0.0
  %8139 = vmatmul.mubr.f32.gmra.mrb[0].mxu0 %v6520
  %v8140 = vpop.f32.mrb[0].mxu0
  %v8141 = vadd.f32 %v7500, %v8140
  %v8142 = vpop.f32.mrb[0].mxu0
  %v8143 = vadd.f32 %v7502, %v8142
  %8144 = vmatprep.mubr.f32.mxu0 0.0
  %8145 = vmatmul.mubr.f32.gmra.mrb[0].mxu0 %v6522
  %v8146 = vpop.f32.mrb[0].mxu0
  %v8147 = vadd.f32 %v7506, %v8146
  %v8148 = vpop.f32.mrb[0].mxu0
  %v8149 = vadd.f32 %v7508, %v8148
  %8150 = vmatprep.mubr.f32.mxu0 0.0
  %8151 = vmatmul.mubr.f32.gmra.mrb[0].mxu0 %v6524
  %v8152 = vpop.f32.mrb[0].mxu0
  %v8153 = vpop.f32.mrb[0].mxu0
  %8154 = vmatprep.mubr.f32.mxu0 0.0
  %8155 = vmatmul.mubr.f32.gmra.mrb[0].mxu0 %v6526
  %v8156 = vpop.f32.mrb[0].mxu0
  %v8157 = vpop.f32.mrb[0].mxu0
  %8158 = vmatprep.mubr.f32.mxu0 0.0
  %8159 = vmatmul.mubr.f32.gmra.mrb[0].mxu0 %v6528
  %v8160 = vpop.f32.mrb[0].mxu0
  %v8161 = vpop.f32.mrb[0].mxu0
  %8162 = vmatprep.mubr.f32.mxu0 0.0
  %8163 = vmatmul.mubr.f32.gmra.mrb[0].mxu0 %v6530
  %v8164 = vpop.f32.mrb[0].mxu0
  %v8165 = vpop.f32.mrb[0].mxu0
  %8166 = vmatprep.mubr.f32.mxu0 0.0
  %8167 = vmatmul.mubr.f32.gmra.mrb[0].mxu0 %v6532
  %v8168 = vpop.f32.mrb[0].mxu0
  %v8169 = vadd.f32 %v7528, %v8168
  %v8170 = vpop.f32.mrb[0].mxu0
  %v8171 = vadd.f32 %v7530, %v8170
  %8172 = vmatprep.mubr.f32.mxu0 0.0
  %8173 = vmatmul.mubr.f32.gmra.mrb[0].mxu0 %v6534
  %v8174 = vpop.f32.mrb[0].mxu0
  %v8175 = vadd.f32 %v7534, %v8174
  %v8176 = vpop.f32.mrb[0].mxu0
  %v8177 = vadd.f32 %v7536, %v8176
  %8178 = vmatprep.mubr.f32.mxu0 0.0
  %8179 = vmatmul.mubr.f32.gmra.mrb[0].mxu0 %v6536
  %v8180 = vpop.f32.mrb[0].mxu0
  %v8181 = vadd.f32 %v7540, %v8180
  %v8182 = vpop.f32.mrb[0].mxu0
  %v8183 = vadd.f32 %v7542, %v8182
  %8184 = vmatprep.mubr.f32.mxu0 0.0
  %8185 = vmatmul.mubr.f32.gmra.mrb[0].mxu0 %v6538
  %v8186 = vpop.f32.mrb[0].mxu0
  %v8187 = vadd.f32 %v7546, %v8186
  %v8188 = vpop.f32.mrb[0].mxu0
  %v8189 = vadd.f32 %v7548, %v8188
  %8190 = vmatprep.mubr.f32.mxu0 0.0
  %8191 = vmatmul.mubr.f32.gmra.mrb[0].mxu0 %v6540
  %v8192 = vpop.f32.mrb[0].mxu0
  %v8193 = vpop.f32.mrb[0].mxu0
  %8194 = vmatprep.mubr.f32.mxu0 0.0
  %8195 = vmatmul.mubr.f32.gmra.mrb[0].mxu0 %v6542
  %v8196 = vpop.f32.mrb[0].mxu0
  %v8197 = vpop.f32.mrb[0].mxu0
  %8198 = vmatprep.mubr.f32.mxu0 0.0
  %8199 = vmatmul.mubr.f32.gmra.mrb[0].mxu0 %v6544
  %v8200 = vpop.f32.mrb[0].mxu0
  %v8201 = vpop.f32.mrb[0].mxu0
  %8202 = vmatprep.mubr.f32.mxu0 0.0
  %8203 = vmatmul.mubr.f32.gmra.mrb[0].mxu0 %v6546
  %v8204 = vpop.f32.mrb[0].mxu0
  %v8205 = vpop.f32.mrb[0].mxu0
  %8206 = vmatprep.mubr.f32.mxu0 0.0
  %8207 = vmatmul.mubr.f32.gmra.mrb[0].mxu0 %v6548
  %v8208 = vpop.f32.mrb[0].mxu0
  %v8209 = vadd.f32 %v7568, %v8208
  %v8210 = vpop.f32.mrb[0].mxu0
  %v8211 = vadd.f32 %v7570, %v8210
  %8212 = vmatprep.mubr.f32.mxu0 0.0
  %8213 = vmatmul.mubr.f32.gmra.mrb[0].mxu0 %v6550
  %v8214 = vpop.f32.mrb[0].mxu0
  %v8215 = vadd.f32 %v7574, %v8214
  %v8216 = vpop.f32.mrb[0].mxu0
  %v8217 = vadd.f32 %v7576, %v8216
  %8218 = vmatprep.mubr.f32.mxu0 0.0
  %8219 = vmatmul.mubr.f32.gmra.mrb[0].mxu0 %v6552
  %v8220 = vpop.f32.mrb[0].mxu0
  %v8221 = vadd.f32 %v7580, %v8220
  %v8222 = vpop.f32.mrb[0].mxu0
  %v8223 = vadd.f32 %v7582, %v8222
  %8224 = vmatprep.mubr.f32.mxu0 0.0
  %8225 = vmatmul.mubr.f32.gmra.mrb[0].mxu0 %v6554
  %v8226 = vpop.f32.mrb[0].mxu0
  %v8227 = vadd.f32 %v7586, %v8226
  %v8228 = vpop.f32.mrb[0].mxu0
  %v8229 = vadd.f32 %v7588, %v8228
  %8230 = vmatprep.mubr.f32.mxu0 0.0
  %8231 = vmatmul.mubr.f32.gmra.mrb[0].mxu0 %v6556
  %v8232 = vpop.f32.mrb[0].mxu0
  %v8233 = vpop.f32.mrb[0].mxu0
  %8234 = vmatprep.mubr.f32.mxu0 0.0
  %8235 = vmatmul.mubr.f32.gmra.mrb[0].mxu0 %v6558
  %v8236 = vpop.f32.mrb[0].mxu0
  %v8237 = vpop.f32.mrb[0].mxu0
  %8238 = vmatprep.mubr.f32.mxu0 0.0
  %8239 = vmatmul.mubr.f32.gmra.mrb[0].mxu0 %v6560
  %v8240 = vpop.f32.mrb[0].mxu0
  %v8241 = vpop.f32.mrb[0].mxu0
  %8242 = vmatprep.mubr.f32.mxu0 0.0
  %8243 = vmatmul.mubr.f32.gmra.mrb[0].mxu0 %v6562
  %v8244 = vpop.f32.mrb[0].mxu0
  %v8245 = vpop.f32.mrb[0].mxu0
  %8246 = vmatprep.mubr.f32.mxu0 0.0
  %8247 = vmatmul.mubr.f32.gmra.mrb[0].mxu0 %v6564
  %v8248 = vpop.f32.mrb[0].mxu0
  %v8249 = vadd.f32 %v7608, %v8248
  %v8250 = vpop.f32.mrb[0].mxu0
  %v8251 = vadd.f32 %v7610, %v8250
  %8252 = vmatprep.mubr.f32.mxu0 0.0
  %8253 = vmatmul.mubr.f32.gmra.mrb[0].mxu0 %v6566
  %v8254 = vpop.f32.mrb[0].mxu0
  %v8255 = vadd.f32 %v7614, %v8254
  %v8256 = vpop.f32.mrb[0].mxu0
  %v8257 = vadd.f32 %v7616, %v8256
  %8258 = vmatprep.mubr.f32.mxu0 0.0
  %8259 = vmatmul.mubr.f32.gmra.mrb[0].mxu0 %v6568
  %v8260 = vpop.f32.mrb[0].mxu0
  %v8261 = vadd.f32 %v7620, %v8260
  %v8262 = vpop.f32.mrb[0].mxu0
  %v8263 = vadd.f32 %v7622, %v8262
  %8264 = vmatprep.mubr.f32.mxu0 0.0
  %8265 = vmatmul.mubr.f32.gmra.mrb[0].mxu0 %v6570
  %v8266 = vpop.f32.mrb[0].mxu0
  %v8267 = vadd.f32 %v7626, %v8266
  %v8268 = vpop.f32.mrb[0].mxu0
  %v8269 = vadd.f32 %v7628, %v8268
  %8270 = vmatprep.mubr.f32.mxu0 0.0
  %8271 = vmatmul.mubr.f32.gmra.mrb[0].mxu0 %v6572
  %v8272 = vpop.f32.mrb[0].mxu0
  %v8273 = vpop.f32.mrb[0].mxu0
  %8274 = vmatprep.mubr.f32.mxu0 0.0
  %8275 = vmatmul.mubr.f32.gmra.mrb[0].mxu0 %v6574
  %v8276 = vpop.f32.mrb[0].mxu0
  %v8277 = vpop.f32.mrb[0].mxu0
  %8278 = vmatprep.mubr.f32.mxu0 0.0
  %8279 = vmatmul.mubr.f32.gmra.mrb[0].mxu0 %v6576
  %v8280 = vpop.f32.mrb[0].mxu0
  %v8281 = vpop.f32.mrb[0].mxu0
  %8282 = vmatprep.mubr.f32.mxu0 0.0
  %8283 = vmatmul.mubr.f32.gmra.mrb[0].mxu0 %v6578
  %v8284 = vpop.f32.mrb[0].mxu0
  %v8285 = vpop.f32.mrb[0].mxu0
  %8286 = vmatprep.mubr.f32.mxu0 0.0
  %8287 = vmatmul.mubr.f32.gmra.mrb[0].mxu0 %v6580
  %v8288 = vpop.f32.mrb[0].mxu0
  %v8289 = vadd.f32 %v7648, %v8288
  %v8290 = vpop.f32.mrb[0].mxu0
  %v8291 = vadd.f32 %v7650, %v8290
  %8292 = vmatprep.mubr.f32.mxu0 0.0
  %8293 = vmatmul.mubr.f32.gmra.mrb[0].mxu0 %v6582
  %v8294 = vpop.f32.mrb[0].mxu0
  %v8295 = vadd.f32 %v7654, %v8294
  %v8296 = vpop.f32.mrb[0].mxu0
  %v8297 = vadd.f32 %v7656, %v8296
  %8298 = vmatprep.mubr.f32.mxu0 0.0
  %8299 = vmatmul.mubr.f32.gmra.mrb[0].mxu0 %v6584
  %v8300 = vpop.f32.mrb[0].mxu0
  %v8301 = vadd.f32 %v7660, %v8300
  %v8302 = vpop.f32.mrb[0].mxu0
  %v8303 = vadd.f32 %v7662, %v8302
  %8304 = vmatprep.mubr.f32.mxu0 0.0
  %8305 = vmatmul.mubr.f32.gmra.mrb[0].mxu0 %v6586
  %v8306 = vpop.f32.mrb[0].mxu0
  %v8307 = vadd.f32 %v7666, %v8306
  %v8308 = vpop.f32.mrb[0].mxu0
  %v8309 = vadd.f32 %v7668, %v8308
  %8310 = vmatprep.mubr.f32.mxu0 0.0
  %8311 = vmatmul.mubr.f32.gmra.mrb[0].mxu0 %v6588
  %v8312 = vpop.f32.mrb[0].mxu0
  %v8313 = vpop.f32.mrb[0].mxu0
  %8314 = vmatprep.mubr.f32.mxu0 0.0
  %8315 = vmatmul.mubr.f32.gmra.mrb[0].mxu0 %v6590
  %v8316 = vpop.f32.mrb[0].mxu0
  %v8317 = vpop.f32.mrb[0].mxu0
  %8318 = vmatprep.mubr.f32.mxu0 0.0
  %8319 = vmatmul.mubr.f32.gmra.mrb[0].mxu0 %v6592
  %v8320 = vpop.f32.mrb[0].mxu0
  %v8321 = vpop.f32.mrb[0].mxu0
  %8322 = vmatprep.mubr.f32.mxu0 0.0
  %8323 = vmatmul.mubr.f32.gmra.mrb[0].mxu0 %v6594
  %v8324 = vpop.f32.mrb[0].mxu0
  %v8325 = vpop.f32.mrb[0].mxu0
  %8326 = vmatprep.mubr.f32.mxu0 0.0
  %8327 = vmatmul.mubr.f32.gmra.mrb[0].mxu0 %v6596
  %v8328 = vpop.f32.mrb[0].mxu0
  %v8329 = vadd.f32 %v7688, %v8328
  %v8330 = vpop.f32.mrb[0].mxu0
  %v8331 = vadd.f32 %v7690, %v8330
  %8332 = vmatprep.mubr.f32.mxu0 0.0
  %8333 = vmatmul.mubr.f32.gmra.mrb[0].mxu0 %v6598
  %v8334 = vpop.f32.mrb[0].mxu0
  %v8335 = vadd.f32 %v7694, %v8334
  %v8336 = vpop.f32.mrb[0].mxu0
  %v8337 = vadd.f32 %v7696, %v8336
  %8338 = vmatprep.mubr.f32.mxu0 0.0
  %8339 = vmatmul.mubr.f32.gmra.mrb[0].mxu0 %v6600
  %v8340 = vpop.f32.mrb[0].mxu0
  %v8341 = vadd.f32 %v7700, %v8340
  %v8342 = vpop.f32.mrb[0].mxu0
  %v8343 = vadd.f32 %v7702, %v8342
  %8344 = vmatprep.mubr.f32.mxu0 0.0
  %8345 = vmatmul.mubr.f32.gmra.mrb[0].mxu0 %v6602
  %v8346 = vpop.f32.mrb[0].mxu0
  %v8347 = vadd.f32 %v7706, %v8346
  %v8348 = vpop.f32.mrb[0].mxu0
  %v8349 = vadd.f32 %v7708, %v8348
  %8350 = vmatprep.mubr.f32.mxu0 0.0
  %8351 = vmatmul.mubr.f32.gmra.mrb[0].mxu0 %v6604
  %v8352 = vpop.f32.mrb[0].mxu0
  %v8353 = vpop.f32.mrb[0].mxu0
  %8354 = vmatprep.mubr.f32.mxu0 0.0
  %8355 = vmatmul.mubr.f32.gmra.mrb[0].mxu0 %v6606
  %v8356 = vpop.f32.mrb[0].mxu0
  %v8357 = vpop.f32.mrb[0].mxu0
  %8358 = vmatprep.mubr.f32.mxu0 0.0
  %8359 = vmatmul.mubr.f32.gmra.mrb[0].mxu0 %v6608
  %v8360 = vpop.f32.mrb[0].mxu0
  %v8361 = vpop.f32.mrb[0].mxu0
  %8362 = vmatprep.mubr.f32.mxu0 0.0
  %8363 = vmatmul.mubr.f32.gmra.mrb[0].mxu0 %v6610
  %v8364 = vpop.f32.mrb[0].mxu0
  %v8365 = vpop.f32.mrb[0].mxu0
  %8366 = vmatprep.mubr.f32.mxu0 0.0
  %8367 = vmatmul.mubr.f32.gmra.mrb[0].mxu0 %v6612
  %v8368 = vpop.f32.mrb[0].mxu0
  %v8369 = vadd.f32 %v7728, %v8368
  %v8370 = vpop.f32.mrb[0].mxu0
  %v8371 = vadd.f32 %v7730, %v8370
  %8372 = vmatprep.mubr.f32.mxu0 0.0
  %8373 = vmatmul.mubr.f32.gmra.mrb[0].mxu0 %v6614
  %v8374 = vpop.f32.mrb[0].mxu0
  %v8375 = vadd.f32 %v7734, %v8374
  %v8376 = vpop.f32.mrb[0].mxu0
  %v8377 = vadd.f32 %v7736, %v8376
  %8378 = vmatprep.mubr.f32.mxu0 0.0
  %8379 = vmatmul.mubr.f32.gmra.mrb[0].mxu0 %v6616
  %v8380 = vpop.f32.mrb[0].mxu0
  %v8381 = vadd.f32 %v7740, %v8380
  %v8382 = vpop.f32.mrb[0].mxu0
  %v8383 = vadd.f32 %v7742, %v8382
  %8384 = vmatprep.mubr.f32.mxu0 0.0
  %8385 = vmatmul.mubr.f32.gmra.mrb[0].mxu0 %v6618
  %v8386 = vpop.f32.mrb[0].mxu0
  %v8387 = vadd.f32 %v7746, %v8386
  %v8388 = vpop.f32.mrb[0].mxu0
  %v8389 = vadd.f32 %v7748, %v8388
  %8390 = vmatprep.mubr.f32.mxu0 0.0
  %8391 = vmatmul.mubr.f32.gmra.mrb[0].mxu0 %v6620
  %v8392 = vpop.f32.mrb[0].mxu0
  %v8393 = vpop.f32.mrb[0].mxu0
  %8394 = vmatprep.mubr.f32.mxu0 0.0
  %8395 = vmatmul.mubr.f32.gmra.mrb[0].mxu0 %v6622
  %v8396 = vpop.f32.mrb[0].mxu0
  %v8397 = vpop.f32.mrb[0].mxu0
  %8398 = vmatprep.mubr.f32.mxu0 0.0
  %8399 = vmatmul.mubr.f32.gmra.mrb[0].mxu0 %v6624
  %v8400 = vpop.f32.mrb[0].mxu0
  %v8401 = vpop.f32.mrb[0].mxu0
  %8402 = vmatprep.mubr.f32.mxu0 0.0
  %8403 = vmatmul.mubr.f32.gmra.mrb[0].mxu0 %v6626
  %v8404 = vpop.f32.mrb[0].mxu0
  %v8405 = vpop.f32.mrb[0].mxu0
  %8406 = vmatprep.mubr.f32.mxu0 0.0
  %8407 = vmatmul.mubr.f32.gmra.mrb[0].mxu0 %v6628
  %v8408 = vpop.f32.mrb[0].mxu0
  %v8409 = vadd.f32 %v7768, %v8408
  %v8410 = vpop.f32.mrb[0].mxu0
  %v8411 = vadd.f32 %v7770, %v8410
  %8412 = vmatprep.mubr.f32.mxu0 0.0
  %8413 = vmatmul.mubr.f32.gmra.mrb[0].mxu0 %v6630
  %v8414 = vpop.f32.mrb[0].mxu0
  %v8415 = vadd.f32 %v7774, %v8414
  %v8416 = vpop.f32.mrb[0].mxu0
  %v8417 = vadd.f32 %v7776, %v8416
  %8418 = vmatprep.mubr.f32.mxu0 0.0
  %8419 = vmatmul.mubr.f32.gmra.mrb[0].mxu0 %v6632
  %v8420 = vpop.f32.mrb[0].mxu0
  %v8421 = vadd.f32 %v7780, %v8420
  %v8422 = vpop.f32.mrb[0].mxu0
  %v8423 = vadd.f32 %v7782, %v8422
  %8424 = vmatprep.mubr.f32.mxu0 0.0
  %8425 = vmatmul.mubr.f32.gmra.mrb[0].mxu0 %v6634
  %v8426 = vpop.f32.mrb[0].mxu0
  %v8427 = vadd.f32 %v7786, %v8426
  %v8428 = vpop.f32.mrb[0].mxu0
  %v8429 = vadd.f32 %v7788, %v8428
  %8430 = vmatprep.mubr.f32.mxu0 0.0
  %8431 = vmatmul.mubr.f32.gmra.mrb[0].mxu0 %v6636
  %v8432 = vpop.f32.mrb[0].mxu0
  %v8433 = vpop.f32.mrb[0].mxu0
  %8434 = vmatprep.mubr.f32.mxu0 0.0
  %8435 = vmatmul.mubr.f32.gmra.mrb[0].mxu0 %v6638
  %v8436 = vpop.f32.mrb[0].mxu0
  %v8437 = vpop.f32.mrb[0].mxu0
  %8438 = vmatprep.mubr.f32.mxu0 0.0
  %8439 = vmatmul.mubr.f32.gmra.mrb[0].mxu0 %v6640
  %v8440 = vpop.f32.mrb[0].mxu0
  %v8441 = vpop.f32.mrb[0].mxu0
  %8442 = vmatprep.mubr.f32.mxu0 0.0
  %8443 = vmatmul.mubr.f32.gmra.mrb[0].mxu0 %v6642
  %v8444 = vpop.f32.mrb[0].mxu0
  %v8445 = vpop.f32.mrb[0].mxu0
  %8446 = vmatprep.mubr.f32.mxu0 0.0
  %8447 = vmatmul.mubr.f32.gmra.mrb[0].mxu0 %v6644
  %v8448 = vpop.f32.mrb[0].mxu0
  %v8449 = vadd.f32 %v7808, %v8448
  %v8450 = vpop.f32.mrb[0].mxu0
  %v8451 = vadd.f32 %v7810, %v8450
  %8452 = vmatprep.mubr.f32.mxu0 0.0
  %8453 = vmatmul.mubr.f32.gmra.mrb[0].mxu0 %v6646
  %v8454 = vpop.f32.mrb[0].mxu0
  %v8455 = vadd.f32 %v7814, %v8454
  %v8456 = vpop.f32.mrb[0].mxu0
  %v8457 = vadd.f32 %v7816, %v8456
  %8458 = vmatprep.mubr.f32.mxu0 0.0
  %8459 = vmatmul.mubr.f32.gmra.mrb[0].mxu0 %v6648
  %v8460 = vpop.f32.mrb[0].mxu0
  %v8461 = vadd.f32 %v7820, %v8460
  %v8462 = vpop.f32.mrb[0].mxu0
  %v8463 = vadd.f32 %v7822, %v8462
  %8464 = vmatprep.mubr.f32.mxu0 0.0
  %8465 = vmatmul.mubr.f32.gmra.mrb[0].mxu0 %v6650
  %v8466 = vpop.f32.mrb[0].mxu0
  %v8467 = vadd.f32 %v7826, %v8466
  %v8468 = vpop.f32.mrb[0].mxu0
  %v8469 = vadd.f32 %v7828, %v8468
  %8470 = vmatprep.mubr.f32.mxu0 0.0
  %8471 = vmatmul.mubr.f32.gmra.mrb[0].mxu0 %v6652
  %v8472 = vpop.f32.mrb[0].mxu0
  %v8473 = vpop.f32.mrb[0].mxu0
  %8474 = vmatprep.mubr.f32.mxu0 0.0
  %8475 = vmatmul.mubr.f32.gmra.mrb[0].mxu0 %v6654
  %v8476 = vpop.f32.mrb[0].mxu0
  %v8477 = vpop.f32.mrb[0].mxu0
  %8478 = vmatprep.mubr.f32.mxu0 0.0
  %8479 = vmatmul.mubr.f32.gmra.mrb[0].mxu0 %v6656
  %v8480 = vpop.f32.mrb[0].mxu0
  %v8481 = vpop.f32.mrb[0].mxu0
  %8482 = vmatprep.mubr.f32.mxu0 0.0
  %8483 = vmatmul.mubr.f32.gmra.mrb[0].mxu0 %v6658
  %v8484 = vpop.f32.mrb[0].mxu0
  %v8485 = vpop.f32.mrb[0].mxu0
  %8486 = vmatprep.mubr.f32.mxu0 0.0
  %8487 = vmatmul.mubr.f32.gmra.mrb[0].mxu0 %v6660
  %v8488 = vpop.f32.mrb[0].mxu0
  %v8489 = vadd.f32 %v7848, %v8488
  %v8490 = vpop.f32.mrb[0].mxu0
  %v8491 = vadd.f32 %v7850, %v8490
  %8492 = vmatprep.mubr.f32.mxu0 0.0
  %8493 = vmatmul.mubr.f32.gmra.mrb[0].mxu0 %v6662
  %v8494 = vpop.f32.mrb[0].mxu0
  %v8495 = vadd.f32 %v7854, %v8494
  %v8496 = vpop.f32.mrb[0].mxu0
  %v8497 = vadd.f32 %v7856, %v8496
  %8498 = vmatprep.mubr.f32.mxu0 0.0
  %8499 = vmatmul.mubr.f32.gmra.mrb[0].mxu0 %v6664
  %v8500 = vpop.f32.mrb[0].mxu0
  %v8501 = vadd.f32 %v7860, %v8500
  %v8502 = vpop.f32.mrb[0].mxu0
  %v8503 = vadd.f32 %v7862, %v8502
  %8504 = vmatprep.mubr.f32.mxu0 0.0
  %8505 = vmatmul.mubr.f32.gmra.mrb[0].mxu0 %v6666
  %v8506 = vpop.f32.mrb[0].mxu0
  %v8507 = vadd.f32 %v7866, %v8506
  %v8508 = vpop.f32.mrb[0].mxu0
  %v8509 = vadd.f32 %v7868, %v8508
  %8510 = vmatprep.mubr.f32.mxu0 0.0
  %8511 = vmatmul.mubr.f32.gmra.mrb[0].mxu0 %v6668
  %v8512 = vpop.f32.mrb[0].mxu0
  %v8513 = vpop.f32.mrb[0].mxu0
  %8514 = vmatprep.mubr.f32.mxu0 0.0
  %8515 = vmatmul.mubr.f32.gmra.mrb[0].mxu0 %v6670
  %v8516 = vpop.f32.mrb[0].mxu0
  %v8517 = vpop.f32.mrb[0].mxu0
  %8518 = vmatprep.mubr.f32.mxu0 0.0
  %8519 = vmatmul.mubr.f32.gmra.mrb[0].mxu0 %v6672
  %v8520 = vpop.f32.mrb[0].mxu0
  %v8521 = vpop.f32.mrb[0].mxu0
  %8522 = vmatprep.mubr.f32.mxu0 0.0
  %8523 = vmatmul.mubr.f32.gmra.mrb[0].mxu0 %v6674
  %v8524 = vpop.f32.mrb[0].mxu0
  %v8525 = vpop.f32.mrb[0].mxu0
  %8526 = vmatprep.mubr.f32.mxu0 0.0
  %8527 = vmatmul.mubr.f32.gmra.mrb[0].mxu0 %v6676
  %v8528 = vpop.f32.mrb[0].mxu0
  %v8529 = vadd.f32 %v7888, %v8528
  %v8530 = vpop.f32.mrb[0].mxu0
  %v8531 = vadd.f32 %v7890, %v8530
  %8532 = vmatprep.mubr.f32.mxu0 0.0
  %8533 = vmatmul.mubr.f32.gmra.mrb[0].mxu0 %v6678
  %v8534 = vpop.f32.mrb[0].mxu0
  %v8535 = vadd.f32 %v7894, %v8534
  %v8536 = vpop.f32.mrb[0].mxu0
  %v8537 = vadd.f32 %v7896, %v8536
  %8538 = vmatprep.mubr.f32.mxu0 0.0
  %8539 = vmatmul.mubr.f32.gmra.mrb[0].mxu0 %v6680
  %v8540 = vpop.f32.mrb[0].mxu0
  %v8541 = vadd.f32 %v7900, %v8540
  %v8542 = vpop.f32.mrb[0].mxu0
  %v8543 = vadd.f32 %v7902, %v8542
  %8544 = vmatprep.mubr.f32.mxu0 0.0
  %8545 = vmatmul.mubr.f32.gmra.mrb[0].mxu0 %v6682
  %v8546 = vpop.f32.mrb[0].mxu0
  %v8547 = vadd.f32 %v7906, %v8546
  %v8548 = vpop.f32.mrb[0].mxu0
  %v8549 = vadd.f32 %v7908, %v8548
  %8550 = vmatprep.mubr.f32.mxu0 0.0
  %8551 = vmatmul.mubr.f32.gmra.mrb[0].mxu0 %v6684
  %v8552 = vpop.f32.mrb[0].mxu0
  %v8553 = vpop.f32.mrb[0].mxu0
  %8554 = vmatprep.mubr.f32.mxu0 0.0
  %8555 = vmatmul.mubr.f32.gmra.mrb[0].mxu0 %v6686
  %v8556 = vpop.f32.mrb[0].mxu0
  %v8557 = vpop.f32.mrb[0].mxu0
  %8558 = vmatprep.mubr.f32.mxu0 0.0
  %8559 = vmatmul.mubr.f32.gmra.mrb[0].mxu0 %v6688
  %v8560 = vpop.f32.mrb[0].mxu0
  %v8561 = vpop.f32.mrb[0].mxu0
  %8562 = vmatprep.mubr.f32.mxu0 0.0
  %8563 = vmatmul.mubr.f32.gmra.mrb[0].mxu0 %v6690
  %v8564 = vpop.f32.mrb[0].mxu0
  %v8565 = vpop.f32.mrb[0].mxu0
  %8566 = vmatprep.mubr.f32.mxu0 0.0
  %8567 = vmatmul.mubr.f32.gmra.mrb[0].mxu0 %v6692
  %v8568 = vpop.f32.mrb[0].mxu0
  %v8569 = vpop.f32.mrb[0].mxu0
  %8570 = vmatprep.mubr.f32.mxu0 0.0
  %8571 = vmatmul.mubr.f32.gmra.mrb[0].mxu0 %v6694
  %v8572 = vpop.f32.mrb[0].mxu0
  %v8573 = vpop.f32.mrb[0].mxu0
  %8574 = vmatprep.mubr.f32.mxu0 0.0
  %8575 = vmatmul.mubr.f32.gmra.mrb[0].mxu0 %v6696
  %v8576 = vpop.f32.mrb[0].mxu0
  %v8577 = vpop.f32.mrb[0].mxu0
  %8578 = vmatprep.mubr.f32.mxu0 0.0
  %8579 = vmatmul.mubr.f32.gmra.mrb[0].mxu0 %v6698
  %v8580 = vpop.f32.mrb[0].mxu0
  %v8581 = vpop.f32.mrb[0].mxu0
  %8582 = vmatprep.mubr.f32.mxu0 0.0
  %8583 = vmatmul.mubr.f32.gmra.mrb[0].mxu0 %v6700
  %v8584 = vpop.f32.mrb[0].mxu0
  %v8585 = vpop.f32.mrb[0].mxu0
  %8586 = vmatprep.mubr.f32.mxu0 0.0
  %8587 = vmatmul.mubr.f32.gmra.mrb[0].mxu0 %v6702
  %v8588 = vpop.f32.mrb[0].mxu0
  %v8589 = vpop.f32.mrb[0].mxu0
  %8590 = vmatprep.mubr.f32.mxu0 0.0
  %8591 = vmatmul.mubr.f32.gmra.mrb[0].mxu0 %v6704
  %v8592 = vpop.f32.mrb[0].mxu0
  %v8593 = vpop.f32.mrb[0].mxu0
  %8594 = vmatprep.mubr.f32.mxu0 0.0
  %8595 = vmatmul.mubr.f32.gmra.mrb[0].mxu0 %v6706
  %v8596 = vpop.f32.mrb[0].mxu0
  %v8597 = vpop.f32.mrb[0].mxu0
  %8598 = vmatprep.mubr.f32.mxu0 0.0
  %8599 = vmatmul.mubr.f32.gmra.mrb[0].mxu0 %v6708
  %v8600 = vpop.f32.mrb[0].mxu0
  %v8601 = vpop.f32.mrb[0].mxu0
  %8602 = vmatprep.mubr.f32.mxu0 0.0
  %8603 = vmatmul.mubr.f32.gmra.mrb[0].mxu0 %v6710
  %v8604 = vpop.f32.mrb[0].mxu0
  %v8605 = vpop.f32.mrb[0].mxu0
  %8606 = vmatprep.mubr.f32.mxu0 0.0
  %8607 = vmatmul.mubr.f32.gmra.mrb[0].mxu0 %v6712
  %v8608 = vpop.f32.mrb[0].mxu0
  %v8609 = vpop.f32.mrb[0].mxu0
  %8610 = vmatprep.mubr.f32.mxu0 0.0
  %8611 = vmatmul.mubr.f32.gmra.mrb[0].mxu0 %v6714
  %v8612 = vpop.f32.mrb[0].mxu0
  %v8613 = vpop.f32.mrb[0].mxu0
  %8614 = vmatprep.mubr.f32.mxu0 0.0
  %8615 = vmatmul.mubr.f32.gmra.mrb[0].mxu0 %v6716
  %v8616 = vpop.f32.mrb[0].mxu0
  %v8617 = vpop.f32.mrb[0].mxu0
  %8618 = vmatprep.mubr.f32.mxu0 0.0
  %8619 = vmatmul.mubr.f32.gmra.mrb[0].mxu0 %v6718
  %v8620 = vpop.f32.mrb[0].mxu0
  %v8621 = vpop.f32.mrb[0].mxu0
  %8622 = vmatprep.mubr.f32.mxu0 0.0
  %8623 = vmatmul.mubr.f32.gmra.mrb[0].mxu0 %v6720
  %v8624 = vpop.f32.mrb[0].mxu0
  %v8625 = vpop.f32.mrb[0].mxu0
  %8626 = vmatprep.mubr.f32.mxu0 0.0
  %8627 = vmatmul.mubr.f32.gmra.mrb[0].mxu0 %v6722
  %v8628 = vpop.f32.mrb[0].mxu0
  %v8629 = vpop.f32.mrb[0].mxu0
  %8630 = vmatprep.mubr.f32.mxu0 0.0
  %8631 = vmatmul.mubr.f32.gmra.mrb[0].mxu0 %v6724
  %v8632 = vpop.f32.mrb[0].mxu0
  %v8633 = vpop.f32.mrb[0].mxu0
  %8634 = vmatprep.mubr.f32.mxu0 0.0
  %8635 = vmatmul.mubr.f32.gmra.mrb[0].mxu0 %v6726
  %v8636 = vpop.f32.mrb[0].mxu0
  %v8637 = vpop.f32.mrb[0].mxu0
  %8638 = vmatprep.mubr.f32.mxu0 0.0
  %8639 = vmatmul.mubr.f32.gmra.mrb[0].mxu0 %v6728
  %v8640 = vpop.f32.mrb[0].mxu0
  %v8641 = vpop.f32.mrb[0].mxu0
  %8642 = vmatprep.mubr.f32.mxu0 0.0
  %8643 = vmatmul.mubr.f32.gmra.mrb[0].mxu0 %v6730
  %v8644 = vpop.f32.mrb[0].mxu0
  %v8645 = vpop.f32.mrb[0].mxu0
  %8646 = vmatprep.mubr.f32.mxu0 0.0
  %8647 = vmatmul.mubr.f32.gmra.mrb[0].mxu0 %v6732
  %v8648 = vpop.f32.mrb[0].mxu0
  %v8649 = vpop.f32.mrb[0].mxu0
  %8650 = vmatprep.mubr.f32.mxu0 0.0
  %8651 = vmatmul.mubr.f32.gmra.mrb[0].mxu0 %v6734
  %v8652 = vpop.f32.mrb[0].mxu0
  %v8653 = vpop.f32.mrb[0].mxu0
  %8654 = vmatprep.mubr.f32.mxu0 0.0
  %8655 = vmatmul.mubr.f32.gmra.mrb[0].mxu0 %v6736
  %v8656 = vpop.f32.mrb[0].mxu0
  %v8657 = vpop.f32.mrb[0].mxu0
  %8658 = vmatprep.mubr.f32.mxu0 0.0
  %8659 = vmatmul.mubr.f32.gmra.mrb[0].mxu0 %v6738
  %v8660 = vpop.f32.mrb[0].mxu0
  %v8661 = vpop.f32.mrb[0].mxu0
  %8662 = vdwg.mxu0
  %s8663 = scalar_lea.vmem %s3, 1200
  %v8664 = vld [vmem:[%s8663] sm:$0xff]
  %v8665 = vld [vmem:[%s8663 + $0x8] sm:$0xff]
  %v8666 = vld [vmem:[%s8663 + $0x10] sm:$0xff]
  %v8667 = vld [vmem:[%s8663 + $0x18] sm:$0xff]
  %v8668 = vld [vmem:[%s8663 + $0x20] sm:$0xff]
  %v8669 = vld [vmem:[%s8663 + $0x28] sm:$0xff]
  %v8670 = vld [vmem:[%s8663 + $0x30] sm:$0xff]
  %v8671 = vld [vmem:[%s8663 + $0x38] sm:$0xff]
  %v8672 = vld [vmem:[%s8663 + $0x40] sm:$0xff]
  %v8673 = vld [vmem:[%s8663 + $0x48] sm:$0xff]
  %v8674 = vld [vmem:[%s8663 + $0x50] sm:$0xff]
  %v8675 = vld [vmem:[%s8663 + $0x58] sm:$0xff]
  %v8676 = vld [vmem:[%s8663 + $0x60] sm:$0xff]
  %v8677 = vld [vmem:[%s8663 + $0x68] sm:$0xff]
  %v8678 = vld [vmem:[%s8663 + $0x70] sm:$0xff]
  %v8679 = vld [vmem:[%s8663 + $0x78] sm:$0xff]
  %v8680 = vld [vmem:[%s8663 + $0x80] sm:$0xff]
  %v8681 = vld [vmem:[%s8663 + $0x88] sm:$0xff]
  %v8682 = vld [vmem:[%s8663 + $0x90] sm:$0xff]
  %v8683 = vld [vmem:[%s8663 + $0x98] sm:$0xff]
  %v8684 = vld [vmem:[%s8663 + $0xa0] sm:$0xff]
  %v8685 = vld [vmem:[%s8663 + $0xa8] sm:$0xff]
  %v8686 = vld [vmem:[%s8663 + $0xb0] sm:$0xff]
  %v8687 = vld [vmem:[%s8663 + $0xb8] sm:$0xff]
  %v8688 = vld [vmem:[%s8663 + $0xc0] sm:$0xff]
  %v8689 = vld [vmem:[%s8663 + $0xc8] sm:$0xff]
  %v8690 = vld [vmem:[%s8663 + $0xd0] sm:$0xff]
  %v8691 = vld [vmem:[%s8663 + $0xd8] sm:$0xff]
  %v8692 = vld [vmem:[%s8663 + $0xe0] sm:$0xff]
  %v8693 = vld [vmem:[%s8663 + $0xe8] sm:$0xff]
  %v8694 = vld [vmem:[%s8663 + $0xf0] sm:$0xff]
  %v8695 = vld [vmem:[%s8663 + $0xf8] sm:$0xff]
  %v8696 = vld [vmem:[%s8663 + $0x100] sm:$0xff]
  %v8697 = vld [vmem:[%s8663 + $0x108] sm:$0xff]
  %v8698 = vld [vmem:[%s8663 + $0x110] sm:$0xff]
  %v8699 = vld [vmem:[%s8663 + $0x118] sm:$0xff]
  %v8700 = vld [vmem:[%s8663 + $0x120] sm:$0xff]
  %v8701 = vld [vmem:[%s8663 + $0x128] sm:$0xff]
  %v8702 = vld [vmem:[%s8663 + $0x130] sm:$0xff]
  %v8703 = vld [vmem:[%s8663 + $0x138] sm:$0xff]
  %v8704 = vld [vmem:[%s8663 + $0x140] sm:$0xff]
  %v8705 = vld [vmem:[%s8663 + $0x148] sm:$0xff]
  %v8706 = vld [vmem:[%s8663 + $0x150] sm:$0xff]
  %v8707 = vld [vmem:[%s8663 + $0x158] sm:$0xff]
  %v8708 = vld [vmem:[%s8663 + $0x160] sm:$0xff]
  %v8709 = vld [vmem:[%s8663 + $0x168] sm:$0xff]
  %v8710 = vld [vmem:[%s8663 + $0x170] sm:$0xff]
  %v8711 = vld [vmem:[%s8663 + $0x178] sm:$0xff]
  %v8712 = vld [vmem:[%s8663 + $0x180] sm:$0xff]
  %v8713 = vld [vmem:[%s8663 + $0x188] sm:$0xff]
  %v8714 = vld [vmem:[%s8663 + $0x190] sm:$0xff]
  %v8715 = vld [vmem:[%s8663 + $0x198] sm:$0xff]
  %v8716 = vld [vmem:[%s8663 + $0x1a0] sm:$0xff]
  %v8717 = vld [vmem:[%s8663 + $0x1a8] sm:$0xff]
  %v8718 = vld [vmem:[%s8663 + $0x1b0] sm:$0xff]
  %v8719 = vld [vmem:[%s8663 + $0x1b8] sm:$0xff]
  %v8720 = vld [vmem:[%s8663 + $0x1c0] sm:$0xff]
  %v8721 = vld [vmem:[%s8663 + $0x1c8] sm:$0xff]
  %v8722 = vld [vmem:[%s8663 + $0x1d0] sm:$0xff]
  %v8723 = vld [vmem:[%s8663 + $0x1d8] sm:$0xff]
  %v8724 = vld [vmem:[%s8663 + $0x1e0] sm:$0xff]
  %v8725 = vld [vmem:[%s8663 + $0x1e8] sm:$0xff]
  %v8726 = vld [vmem:[%s8663 + $0x1f0] sm:$0xff]
  %v8727 = vld [vmem:[%s8663 + $0x1f8] sm:$0xff]
  %v8728 = vld [vmem:[%s8663 + $0x200] sm:$0xff]
  %v8729 = vld [vmem:[%s8663 + $0x208] sm:$0xff]
  %v8730 = vld [vmem:[%s8663 + $0x210] sm:$0xff]
  %v8731 = vld [vmem:[%s8663 + $0x218] sm:$0xff]
  %v8732 = vld [vmem:[%s8663 + $0x220] sm:$0xff]
  %v8733 = vld [vmem:[%s8663 + $0x228] sm:$0xff]
  %v8734 = vld [vmem:[%s8663 + $0x230] sm:$0xff]
  %v8735 = vld [vmem:[%s8663 + $0x238] sm:$0xff]
  %v8736 = vld [vmem:[%s8663 + $0x240] sm:$0xff]
  %v8737 = vld [vmem:[%s8663 + $0x248] sm:$0xff]
  %v8738 = vld [vmem:[%s8663 + $0x250] sm:$0xff]
  %v8739 = vld [vmem:[%s8663 + $0x258] sm:$0xff]
  %v8740 = vld [vmem:[%s8663 + $0x260] sm:$0xff]
  %v8741 = vld [vmem:[%s8663 + $0x268] sm:$0xff]
  %v8742 = vld [vmem:[%s8663 + $0x270] sm:$0xff]
  %v8743 = vld [vmem:[%s8663 + $0x278] sm:$0xff]
  %v8744 = vld [vmem:[%s8663 + $0x280] sm:$0xff]
  %v8745 = vld [vmem:[%s8663 + $0x288] sm:$0xff]
  %v8746 = vld [vmem:[%s8663 + $0x290] sm:$0xff]
  %v8747 = vld [vmem:[%s8663 + $0x298] sm:$0xff]
  %v8748 = vld [vmem:[%s8663 + $0x2a0] sm:$0xff]
  %v8749 = vld [vmem:[%s8663 + $0x2a8] sm:$0xff]
  %v8750 = vld [vmem:[%s8663 + $0x2b0] sm:$0xff]
  %v8751 = vld [vmem:[%s8663 + $0x2b8] sm:$0xff]
  %v8752 = vld [vmem:[%s8663 + $0x2c0] sm:$0xff]
  %v8753 = vld [vmem:[%s8663 + $0x2c8] sm:$0xff]
  %v8754 = vld [vmem:[%s8663 + $0x2d0] sm:$0xff]
  %v8755 = vld [vmem:[%s8663 + $0x2d8] sm:$0xff]
  %v8756 = vld [vmem:[%s8663 + $0x2e0] sm:$0xff]
  %v8757 = vld [vmem:[%s8663 + $0x2e8] sm:$0xff]
  %v8758 = vld [vmem:[%s8663 + $0x2f0] sm:$0xff]
  %v8759 = vld [vmem:[%s8663 + $0x2f8] sm:$0xff]
  %v8760 = vld [vmem:[%s8663 + $0x300] sm:$0xff]
  %v8761 = vld [vmem:[%s8663 + $0x308] sm:$0xff]
  %v8762 = vld [vmem:[%s8663 + $0x310] sm:$0xff]
  %v8763 = vld [vmem:[%s8663 + $0x318] sm:$0xff]
  %v8764 = vld [vmem:[%s8663 + $0x320] sm:$0xff]
  %v8765 = vld [vmem:[%s8663 + $0x328] sm:$0xff]
  %v8766 = vld [vmem:[%s8663 + $0x330] sm:$0xff]
  %v8767 = vld [vmem:[%s8663 + $0x338] sm:$0xff]
  %v8768 = vld [vmem:[%s8663 + $0x340] sm:$0xff]
  %v8769 = vld [vmem:[%s8663 + $0x348] sm:$0xff]
  %v8770 = vld [vmem:[%s8663 + $0x350] sm:$0xff]
  %v8771 = vld [vmem:[%s8663 + $0x358] sm:$0xff]
  %v8772 = vld [vmem:[%s8663 + $0x360] sm:$0xff]
  %v8773 = vld [vmem:[%s8663 + $0x368] sm:$0xff]
  %v8774 = vld [vmem:[%s8663 + $0x370] sm:$0xff]
  %v8775 = vld [vmem:[%s8663 + $0x378] sm:$0xff]
  %v8776 = vld [vmem:[%s8663 + $0x380] sm:$0xff]
  %v8777 = vld [vmem:[%s8663 + $0x388] sm:$0xff]
  %v8778 = vld [vmem:[%s8663 + $0x390] sm:$0xff]
  %v8779 = vld [vmem:[%s8663 + $0x398] sm:$0xff]
  %v8780 = vld [vmem:[%s8663 + $0x3a0] sm:$0xff]
  %v8781 = vld [vmem:[%s8663 + $0x3a8] sm:$0xff]
  %v8782 = vld [vmem:[%s8663 + $0x3b0] sm:$0xff]
  %v8783 = vld [vmem:[%s8663 + $0x3b8] sm:$0xff]
  %v8784 = vld [vmem:[%s8663 + $0x3c0] sm:$0xff]
  %v8785 = vld [vmem:[%s8663 + $0x3c8] sm:$0xff]
  %v8786 = vld [vmem:[%s8663 + $0x3d0] sm:$0xff]
  %v8787 = vld [vmem:[%s8663 + $0x3d8] sm:$0xff]
  %v8788 = vld [vmem:[%s8663 + $0x3e0] sm:$0xff]
  %v8789 = vld [vmem:[%s8663 + $0x3e8] sm:$0xff]
  %v8790 = vld [vmem:[%s8663 + $0x3f0] sm:$0xff]
  %v8791 = vld [vmem:[%s8663 + $0x3f8] sm:$0xff]
  %v8792 = vld [vmem:[%s8663 + $0x400] sm:$0xff]
  %v8793 = vld [vmem:[%s8663 + $0x408] sm:$0xff]
  %v8794 = vld [vmem:[%s8663 + $0x410] sm:$0xff]
  %v8795 = vld [vmem:[%s8663 + $0x418] sm:$0xff]
  %v8796 = vld [vmem:[%s8663 + $0x420] sm:$0xff]
  %v8797 = vld [vmem:[%s8663 + $0x428] sm:$0xff]
  %v8798 = vld [vmem:[%s8663 + $0x430] sm:$0xff]
  %v8799 = vld [vmem:[%s8663 + $0x438] sm:$0xff]
  %v8800 = vld [vmem:[%s8663 + $0x440] sm:$0xff]
  %v8801 = vld [vmem:[%s8663 + $0x448] sm:$0xff]
  %v8802 = vld [vmem:[%s8663 + $0x450] sm:$0xff]
  %v8803 = vld [vmem:[%s8663 + $0x458] sm:$0xff]
  %v8804 = vld [vmem:[%s8663 + $0x460] sm:$0xff]
  %v8805 = vld [vmem:[%s8663 + $0x468] sm:$0xff]
  %v8806 = vld [vmem:[%s8663 + $0x470] sm:$0xff]
  %v8807 = vld [vmem:[%s8663 + $0x478] sm:$0xff]
  %v8808 = vld [vmem:[%s8663 + $0x480] sm:$0xff]
  %v8809 = vld [vmem:[%s8663 + $0x488] sm:$0xff]
  %v8810 = vld [vmem:[%s8663 + $0x490] sm:$0xff]
  %v8811 = vld [vmem:[%s8663 + $0x498] sm:$0xff]
  %v8812 = vld [vmem:[%s8663 + $0x4a0] sm:$0xff]
  %v8813 = vld [vmem:[%s8663 + $0x4a8] sm:$0xff]
  %8814 = vmatprep.subr.mxu0 %v8665
  %8815 = vmatpush1.msra.mxu0 %v8664
  %8816 = vmatprep.subr.mxu0 %v8667
  %8817 = vmatpush1.msra.mxu0 %v8666
  %8818 = vmatprep.subr.mxu0 %v8669
  %8819 = vmatpush1.msra.mxu0 %v8668
  %8820 = vmatprep.subr.mxu0 %v8671
  %8821 = vmatpush1.msra.mxu0 %v8670
  %8822 = vmatprep.subr.mxu0 %v8673
  %8823 = vmatpush1.msra.mxu0 %v8672
  %8824 = vmatprep.subr.mxu0 %v8675
  %8825 = vmatpush1.msra.mxu0 %v8674
  %8826 = vmatprep.subr.mxu0 %v8677
  %8827 = vmatpush1.msra.mxu0 %v8676
  %8828 = vmatprep.subr.mxu0 %v8679
  %8829 = vmatpush1.msra.mxu0 %v8678
  %8830 = vmatprep.subr.mxu0 %v8681
  %8831 = vmatpush1.msra.mxu0 %v8680
  %8832 = vmatprep.subr.mxu0 %v8683
  %8833 = vmatpush1.msra.mxu0 %v8682
  %8834 = vmatprep.subr.mxu0 %v8685
  %8835 = vmatpush1.msra.mxu0 %v8684
  %8836 = vmatprep.subr.mxu0 %v8687
  %8837 = vmatpush1.msra.mxu0 %v8686
  %8838 = vmatprep.subr.mxu0 %v8689
  %8839 = vmatpush1.msra.mxu0 %v8688
  %8840 = vmatprep.subr.mxu0 %v8691
  %8841 = vmatpush1.msra.mxu0 %v8690
  %8842 = vmatprep.subr.mxu0 %v8693
  %8843 = vmatpush1.msra.mxu0 %v8692
  %8844 = vmatprep.subr.mxu0 %v8695
  %8845 = vmatpush1.msra.mxu0 %v8694
  %8846 = vmatprep.subr.mxu0 %v8697
  %8847 = vmatpush1.msra.mxu0 %v8696
  %8848 = vmatprep.subr.mxu0 %v8699
  %8849 = vmatpush1.msra.mxu0 %v8698
  %8850 = vmatprep.subr.mxu0 %v8701
  %8851 = vmatpush1.msra.mxu0 %v8700
  %8852 = vmatprep.subr.mxu0 %v8703
  %8853 = vmatpush1.msra.mxu0 %v8702
  %8854 = vmatprep.subr.mxu0 %v8705
  %8855 = vmatpush1.msra.mxu0 %v8704
  %8856 = vmatprep.subr.mxu0 %v8707
  %8857 = vmatpush1.msra.mxu0 %v8706
  %8858 = vmatprep.subr.mxu0 %v8709
  %8859 = vmatpush1.msra.mxu0 %v8708
  %8860 = vmatprep.subr.mxu0 %v8711
  %8861 = vmatpush1.msra.mxu0 %v8710
  %8862 = vmatprep.subr.mxu0 %v8713
  %8863 = vmatpush1.msra.mxu0 %v8712
  %8864 = vmatprep.subr.mxu0 %v8715
  %8865 = vmatpush1.msra.mxu0 %v8714
  %8866 = vmatprep.subr.mxu0 %v8717
  %8867 = vmatpush1.msra.mxu0 %v8716
  %8868 = vmatprep.subr.mxu0 %v8719
  %8869 = vmatpush1.msra.mxu0 %v8718
  %8870 = vmatprep.subr.mxu0 %v8721
  %8871 = vmatpush1.msra.mxu0 %v8720
  %8872 = vmatprep.subr.mxu0 %v8723
  %8873 = vmatpush1.msra.mxu0 %v8722
  %8874 = vmatprep.subr.mxu0 %v8725
  %8875 = vmatpush1.msra.mxu0 %v8724
  %8876 = vmatprep.subr.mxu0 %v8727
  %8877 = vmatpush1.msra.mxu0 %v8726
  %8878 = vmatprep.mubr.f32.mxu0 %v6109
  %8879 = vmatmul.mubr.f32.gmra.mrb[0].mxu0 %v3947
  %v8880 = vpop.f32.mrb[0].mxu0
  %v8881 = vadd.f32 0.0, %v8880
  %v8882 = vpop.f32.mrb[0].mxu0
  %v8883 = vadd.f32 0.0, %v8882
  %8884 = vmatprep.mubr.f32.mxu0 %v6110
  %8885 = vmatmul.mubr.f32.gmra.mrb[0].mxu0 %v3949
  %v8886 = vpop.f32.mrb[0].mxu0
  %v8887 = vadd.f32 0.0, %v8886
  %v8888 = vpop.f32.mrb[0].mxu0
  %v8889 = vadd.f32 0.0, %v8888
  %8890 = vmatprep.mubr.f32.mxu0 %v6111
  %8891 = vmatmul.mubr.f32.gmra.mrb[0].mxu0 %v3951
  %v8892 = vpop.f32.mrb[0].mxu0
  %v8893 = vadd.f32 0.0, %v8892
  %v8894 = vpop.f32.mrb[0].mxu0
  %v8895 = vadd.f32 0.0, %v8894
  %8896 = vmatprep.mubr.f32.mxu0 %v6112
  %8897 = vmatmul.mubr.f32.gmra.mrb[0].mxu0 %v3953
  %v8898 = vpop.f32.mrb[0].mxu0
  %v8899 = vadd.f32 0.0, %v8898
  %v8900 = vpop.f32.mrb[0].mxu0
  %v8901 = vadd.f32 0.0, %v8900
  %8902 = vmatprep.mubr.f32.mxu0 %v6113
  %8903 = vmatmul.mubr.f32.gmra.mrb[0].mxu0 %v3955
  %v8904 = vpop.f32.mrb[0].mxu0
  %v8905 = vpop.f32.mrb[0].mxu0
  %8906 = vmatprep.mubr.f32.mxu0 %v6114
  %8907 = vmatmul.mubr.f32.gmra.mrb[0].mxu0 %v3957
  %v8908 = vpop.f32.mrb[0].mxu0
  %v8909 = vpop.f32.mrb[0].mxu0
  %8910 = vmatprep.mubr.f32.mxu0 %v6115
  %8911 = vmatmul.mubr.f32.gmra.mrb[0].mxu0 %v3959
  %v8912 = vpop.f32.mrb[0].mxu0
  %v8913 = vpop.f32.mrb[0].mxu0
  %8914 = vmatprep.mubr.f32.mxu0 %v6116
  %8915 = vmatmul.mubr.f32.gmra.mrb[0].mxu0 %v3961
  %v8916 = vpop.f32.mrb[0].mxu0
  %v8917 = vpop.f32.mrb[0].mxu0
  %8918 = vmatprep.mubr.f32.mxu0 %v6117
  %8919 = vmatmul.mubr.f32.gmra.mrb[0].mxu0 %v3963
  %v8920 = vpop.f32.mrb[0].mxu0
  %v8921 = vadd.f32 0.0, %v8920
  %v8922 = vpop.f32.mrb[0].mxu0
  %v8923 = vadd.f32 0.0, %v8922
  %8924 = vmatprep.mubr.f32.mxu0 %v6118
  %8925 = vmatmul.mubr.f32.gmra.mrb[0].mxu0 %v3965
  %v8926 = vpop.f32.mrb[0].mxu0
  %v8927 = vadd.f32 0.0, %v8926
  %v8928 = vpop.f32.mrb[0].mxu0
  %v8929 = vadd.f32 0.0, %v8928
  %8930 = vmatprep.mubr.f32.mxu0 %v6119
  %8931 = vmatmul.mubr.f32.gmra.mrb[0].mxu0 %v3967
  %v8932 = vpop.f32.mrb[0].mxu0
  %v8933 = vadd.f32 0.0, %v8932
  %v8934 = vpop.f32.mrb[0].mxu0
  %v8935 = vadd.f32 0.0, %v8934
  %8936 = vmatprep.mubr.f32.mxu0 %v6120
  %8937 = vmatmul.mubr.f32.gmra.mrb[0].mxu0 %v3969
  %v8938 = vpop.f32.mrb[0].mxu0
  %v8939 = vadd.f32 0.0, %v8938
  %v8940 = vpop.f32.mrb[0].mxu0
  %v8941 = vadd.f32 0.0, %v8940
  %8942 = vmatprep.mubr.f32.mxu0 %v6121
  %8943 = vmatmul.mubr.f32.gmra.mrb[0].mxu0 %v3971
  %v8944 = vpop.f32.mrb[0].mxu0
  %v8945 = vpop.f32.mrb[0].mxu0
  %8946 = vmatprep.mubr.f32.mxu0 %v6122
  %8947 = vmatmul.mubr.f32.gmra.mrb[0].mxu0 %v3973
  %v8948 = vpop.f32.mrb[0].mxu0
  %v8949 = vpop.f32.mrb[0].mxu0
  %8950 = vmatprep.mubr.f32.mxu0 %v6123
  %8951 = vmatmul.mubr.f32.gmra.mrb[0].mxu0 %v3975
  %v8952 = vpop.f32.mrb[0].mxu0
  %v8953 = vpop.f32.mrb[0].mxu0
  %8954 = vmatprep.mubr.f32.mxu0 %v6124
  %8955 = vmatmul.mubr.f32.gmra.mrb[0].mxu0 %v3977
  %v8956 = vpop.f32.mrb[0].mxu0
  %v8957 = vpop.f32.mrb[0].mxu0
  %8958 = vmatprep.mubr.f32.mxu0 %v6125
  %8959 = vmatmul.mubr.f32.gmra.mrb[0].mxu0 %v3979
  %v8960 = vpop.f32.mrb[0].mxu0
  %v8961 = vadd.f32 0.0, %v8960
  %v8962 = vpop.f32.mrb[0].mxu0
  %v8963 = vadd.f32 0.0, %v8962
  %8964 = vmatprep.mubr.f32.mxu0 %v6126
  %8965 = vmatmul.mubr.f32.gmra.mrb[0].mxu0 %v3981
  %v8966 = vpop.f32.mrb[0].mxu0
  %v8967 = vadd.f32 0.0, %v8966
  %v8968 = vpop.f32.mrb[0].mxu0
  %v8969 = vadd.f32 0.0, %v8968
  %8970 = vmatprep.mubr.f32.mxu0 %v6127
  %8971 = vmatmul.mubr.f32.gmra.mrb[0].mxu0 %v3983
  %v8972 = vpop.f32.mrb[0].mxu0
  %v8973 = vadd.f32 0.0, %v8972
  %v8974 = vpop.f32.mrb[0].mxu0
  %v8975 = vadd.f32 0.0, %v8974
  %8976 = vmatprep.mubr.f32.mxu0 %v6128
  %8977 = vmatmul.mubr.f32.gmra.mrb[0].mxu0 %v3985
  %v8978 = vpop.f32.mrb[0].mxu0
  %v8979 = vadd.f32 0.0, %v8978
  %v8980 = vpop.f32.mrb[0].mxu0
  %v8981 = vadd.f32 0.0, %v8980
  %8982 = vmatprep.mubr.f32.mxu0 %v6129
  %8983 = vmatmul.mubr.f32.gmra.mrb[0].mxu0 %v3987
  %v8984 = vpop.f32.mrb[0].mxu0
  %v8985 = vpop.f32.mrb[0].mxu0
  %8986 = vmatprep.mubr.f32.mxu0 %v6130
  %8987 = vmatmul.mubr.f32.gmra.mrb[0].mxu0 %v3989
  %v8988 = vpop.f32.mrb[0].mxu0
  %v8989 = vpop.f32.mrb[0].mxu0
  %8990 = vmatprep.mubr.f32.mxu0 %v6131
  %8991 = vmatmul.mubr.f32.gmra.mrb[0].mxu0 %v3991
  %v8992 = vpop.f32.mrb[0].mxu0
  %v8993 = vpop.f32.mrb[0].mxu0
  %8994 = vmatprep.mubr.f32.mxu0 %v6132
  %8995 = vmatmul.mubr.f32.gmra.mrb[0].mxu0 %v3993
  %v8996 = vpop.f32.mrb[0].mxu0
  %v8997 = vpop.f32.mrb[0].mxu0
  %8998 = vmatprep.mubr.f32.mxu0 %v6133
  %8999 = vmatmul.mubr.f32.gmra.mrb[0].mxu0 %v3995
  %v9000 = vpop.f32.mrb[0].mxu0
  %v9001 = vadd.f32 0.0, %v9000
  %v9002 = vpop.f32.mrb[0].mxu0
  %v9003 = vadd.f32 0.0, %v9002
  %9004 = vmatprep.mubr.f32.mxu0 %v6134
  %9005 = vmatmul.mubr.f32.gmra.mrb[0].mxu0 %v3997
  %v9006 = vpop.f32.mrb[0].mxu0
  %v9007 = vadd.f32 0.0, %v9006
  %v9008 = vpop.f32.mrb[0].mxu0
  %v9009 = vadd.f32 0.0, %v9008
  %9010 = vmatprep.mubr.f32.mxu0 %v6135
  %9011 = vmatmul.mubr.f32.gmra.mrb[0].mxu0 %v3999
  %v9012 = vpop.f32.mrb[0].mxu0
  %v9013 = vadd.f32 0.0, %v9012
  %v9014 = vpop.f32.mrb[0].mxu0
  %v9015 = vadd.f32 0.0, %v9014
  %9016 = vmatprep.mubr.f32.mxu0 %v6136
  %9017 = vmatmul.mubr.f32.gmra.mrb[0].mxu0 %v4001
  %v9018 = vpop.f32.mrb[0].mxu0
  %v9019 = vadd.f32 0.0, %v9018
  %v9020 = vpop.f32.mrb[0].mxu0
  %v9021 = vadd.f32 0.0, %v9020
  %9022 = vmatprep.mubr.f32.mxu0 %v6137
  %9023 = vmatmul.mubr.f32.gmra.mrb[0].mxu0 %v4003
  %v9024 = vpop.f32.mrb[0].mxu0
  %v9025 = vpop.f32.mrb[0].mxu0
  %9026 = vmatprep.mubr.f32.mxu0 %v6138
  %9027 = vmatmul.mubr.f32.gmra.mrb[0].mxu0 %v4005
  %v9028 = vpop.f32.mrb[0].mxu0
  %v9029 = vpop.f32.mrb[0].mxu0
  %9030 = vmatprep.mubr.f32.mxu0 %v6139
  %9031 = vmatmul.mubr.f32.gmra.mrb[0].mxu0 %v4007
  %v9032 = vpop.f32.mrb[0].mxu0
  %v9033 = vpop.f32.mrb[0].mxu0
  %9034 = vmatprep.mubr.f32.mxu0 %v6140
  %9035 = vmatmul.mubr.f32.gmra.mrb[0].mxu0 %v4009
  %v9036 = vpop.f32.mrb[0].mxu0
  %v9037 = vpop.f32.mrb[0].mxu0
  %9038 = vmatprep.mubr.f32.mxu0 %v6141
  %9039 = vmatmul.mubr.f32.gmra.mrb[0].mxu0 %v4011
  %v9040 = vpop.f32.mrb[0].mxu0
  %v9041 = vadd.f32 0.0, %v9040
  %v9042 = vpop.f32.mrb[0].mxu0
  %v9043 = vadd.f32 0.0, %v9042
  %9044 = vmatprep.mubr.f32.mxu0 %v6142
  %9045 = vmatmul.mubr.f32.gmra.mrb[0].mxu0 %v4013
  %v9046 = vpop.f32.mrb[0].mxu0
  %v9047 = vadd.f32 0.0, %v9046
  %v9048 = vpop.f32.mrb[0].mxu0
  %v9049 = vadd.f32 0.0, %v9048
  %9050 = vmatprep.mubr.f32.mxu0 %v6143
  %9051 = vmatmul.mubr.f32.gmra.mrb[0].mxu0 %v4015
  %v9052 = vpop.f32.mrb[0].mxu0
  %v9053 = vadd.f32 0.0, %v9052
  %v9054 = vpop.f32.mrb[0].mxu0
  %v9055 = vadd.f32 0.0, %v9054
  %9056 = vmatprep.mubr.f32.mxu0 %v6144
  %9057 = vmatmul.mubr.f32.gmra.mrb[0].mxu0 %v4017
  %v9058 = vpop.f32.mrb[0].mxu0
  %v9059 = vadd.f32 0.0, %v9058
  %v9060 = vpop.f32.mrb[0].mxu0
  %v9061 = vadd.f32 0.0, %v9060
  %9062 = vmatprep.mubr.f32.mxu0 %v6145
  %9063 = vmatmul.mubr.f32.gmra.mrb[0].mxu0 %v4019
  %v9064 = vpop.f32.mrb[0].mxu0
  %v9065 = vpop.f32.mrb[0].mxu0
  %9066 = vmatprep.mubr.f32.mxu0 %v6146
  %9067 = vmatmul.mubr.f32.gmra.mrb[0].mxu0 %v4021
  %v9068 = vpop.f32.mrb[0].mxu0
  %v9069 = vpop.f32.mrb[0].mxu0
  %9070 = vmatprep.mubr.f32.mxu0 %v6147
  %9071 = vmatmul.mubr.f32.gmra.mrb[0].mxu0 %v4023
  %v9072 = vpop.f32.mrb[0].mxu0
  %v9073 = vpop.f32.mrb[0].mxu0
  %9074 = vmatprep.mubr.f32.mxu0 %v6148
  %9075 = vmatmul.mubr.f32.gmra.mrb[0].mxu0 %v4025
  %v9076 = vpop.f32.mrb[0].mxu0
  %v9077 = vpop.f32.mrb[0].mxu0
  %9078 = vmatprep.mubr.f32.mxu0 %v6149
  %9079 = vmatmul.mubr.f32.gmra.mrb[0].mxu0 %v4027
  %v9080 = vpop.f32.mrb[0].mxu0
  %v9081 = vadd.f32 0.0, %v9080
  %v9082 = vpop.f32.mrb[0].mxu0
  %v9083 = vadd.f32 0.0, %v9082
  %9084 = vmatprep.mubr.f32.mxu0 %v6150
  %9085 = vmatmul.mubr.f32.gmra.mrb[0].mxu0 %v4029
  %v9086 = vpop.f32.mrb[0].mxu0
  %v9087 = vadd.f32 0.0, %v9086
  %v9088 = vpop.f32.mrb[0].mxu0
  %v9089 = vadd.f32 0.0, %v9088
  %9090 = vmatprep.mubr.f32.mxu0 %v6151
  %9091 = vmatmul.mubr.f32.gmra.mrb[0].mxu0 %v4031
  %v9092 = vpop.f32.mrb[0].mxu0
  %v9093 = vadd.f32 0.0, %v9092
  %v9094 = vpop.f32.mrb[0].mxu0
  %v9095 = vadd.f32 0.0, %v9094
  %9096 = vmatprep.mubr.f32.mxu0 %v6152
  %9097 = vmatmul.mubr.f32.gmra.mrb[0].mxu0 %v4033
  %v9098 = vpop.f32.mrb[0].mxu0
  %v9099 = vadd.f32 0.0, %v9098
  %v9100 = vpop.f32.mrb[0].mxu0
  %v9101 = vadd.f32 0.0, %v9100
  %9102 = vmatprep.mubr.f32.mxu0 %v6153
  %9103 = vmatmul.mubr.f32.gmra.mrb[0].mxu0 %v4035
  %v9104 = vpop.f32.mrb[0].mxu0
  %v9105 = vpop.f32.mrb[0].mxu0
  %9106 = vmatprep.mubr.f32.mxu0 %v6154
  %9107 = vmatmul.mubr.f32.gmra.mrb[0].mxu0 %v4037
  %v9108 = vpop.f32.mrb[0].mxu0
  %v9109 = vpop.f32.mrb[0].mxu0
  %9110 = vmatprep.mubr.f32.mxu0 %v6155
  %9111 = vmatmul.mubr.f32.gmra.mrb[0].mxu0 %v4039
  %v9112 = vpop.f32.mrb[0].mxu0
  %v9113 = vpop.f32.mrb[0].mxu0
  %9114 = vmatprep.mubr.f32.mxu0 %v6156
  %9115 = vmatmul.mubr.f32.gmra.mrb[0].mxu0 %v4041
  %v9116 = vpop.f32.mrb[0].mxu0
  %v9117 = vpop.f32.mrb[0].mxu0
  %9118 = vmatprep.mubr.f32.mxu0 %v6157
  %9119 = vmatmul.mubr.f32.gmra.mrb[0].mxu0 %v4043
  %v9120 = vpop.f32.mrb[0].mxu0
  %v9121 = vadd.f32 0.0, %v9120
  %v9122 = vpop.f32.mrb[0].mxu0
  %v9123 = vadd.f32 0.0, %v9122
  %9124 = vmatprep.mubr.f32.mxu0 %v6158
  %9125 = vmatmul.mubr.f32.gmra.mrb[0].mxu0 %v4045
  %v9126 = vpop.f32.mrb[0].mxu0
  %v9127 = vadd.f32 0.0, %v9126
  %v9128 = vpop.f32.mrb[0].mxu0
  %v9129 = vadd.f32 0.0, %v9128
  %9130 = vmatprep.mubr.f32.mxu0 %v6159
  %9131 = vmatmul.mubr.f32.gmra.mrb[0].mxu0 %v4047
  %v9132 = vpop.f32.mrb[0].mxu0
  %v9133 = vadd.f32 0.0, %v9132
  %v9134 = vpop.f32.mrb[0].mxu0
  %v9135 = vadd.f32 0.0, %v9134
  %9136 = vmatprep.mubr.f32.mxu0 %v6160
  %9137 = vmatmul.mubr.f32.gmra.mrb[0].mxu0 %v4049
  %v9138 = vpop.f32.mrb[0].mxu0
  %v9139 = vadd.f32 0.0, %v9138
  %v9140 = vpop.f32.mrb[0].mxu0
  %v9141 = vadd.f32 0.0, %v9140
  %9142 = vmatprep.mubr.f32.mxu0 %v6161
  %9143 = vmatmul.mubr.f32.gmra.mrb[0].mxu0 %v4051
  %v9144 = vpop.f32.mrb[0].mxu0
  %v9145 = vpop.f32.mrb[0].mxu0
  %9146 = vmatprep.mubr.f32.mxu0 %v6162
  %9147 = vmatmul.mubr.f32.gmra.mrb[0].mxu0 %v4053
  %v9148 = vpop.f32.mrb[0].mxu0
  %v9149 = vpop.f32.mrb[0].mxu0
  %9150 = vmatprep.mubr.f32.mxu0 %v6163
  %9151 = vmatmul.mubr.f32.gmra.mrb[0].mxu0 %v4055
  %v9152 = vpop.f32.mrb[0].mxu0
  %v9153 = vpop.f32.mrb[0].mxu0
  %9154 = vmatprep.mubr.f32.mxu0 %v6164
  %9155 = vmatmul.mubr.f32.gmra.mrb[0].mxu0 %v4057
  %v9156 = vpop.f32.mrb[0].mxu0
  %v9157 = vpop.f32.mrb[0].mxu0
  %9158 = vmatprep.mubr.f32.mxu0 %v6165
  %9159 = vmatmul.mubr.f32.gmra.mrb[0].mxu0 %v4059
  %v9160 = vpop.f32.mrb[0].mxu0
  %v9161 = vadd.f32 0.0, %v9160
  %v9162 = vpop.f32.mrb[0].mxu0
  %v9163 = vadd.f32 0.0, %v9162
  %9164 = vmatprep.mubr.f32.mxu0 %v6166
  %9165 = vmatmul.mubr.f32.gmra.mrb[0].mxu0 %v4061
  %v9166 = vpop.f32.mrb[0].mxu0
  %v9167 = vadd.f32 0.0, %v9166
  %v9168 = vpop.f32.mrb[0].mxu0
  %v9169 = vadd.f32 0.0, %v9168
  %9170 = vmatprep.mubr.f32.mxu0 %v6167
  %9171 = vmatmul.mubr.f32.gmra.mrb[0].mxu0 %v4063
  %v9172 = vpop.f32.mrb[0].mxu0
  %v9173 = vadd.f32 0.0, %v9172
  %v9174 = vpop.f32.mrb[0].mxu0
  %v9175 = vadd.f32 0.0, %v9174
  %9176 = vmatprep.mubr.f32.mxu0 %v6168
  %9177 = vmatmul.mubr.f32.gmra.mrb[0].mxu0 %v4065
  %v9178 = vpop.f32.mrb[0].mxu0
  %v9179 = vadd.f32 0.0, %v9178
  %v9180 = vpop.f32.mrb[0].mxu0
  %v9181 = vadd.f32 0.0, %v9180
  %9182 = vmatprep.mubr.f32.mxu0 %v6169
  %9183 = vmatmul.mubr.f32.gmra.mrb[0].mxu0 %v4067
  %v9184 = vpop.f32.mrb[0].mxu0
  %v9185 = vpop.f32.mrb[0].mxu0
  %9186 = vmatprep.mubr.f32.mxu0 %v6170
  %9187 = vmatmul.mubr.f32.gmra.mrb[0].mxu0 %v4069
  %v9188 = vpop.f32.mrb[0].mxu0
  %v9189 = vpop.f32.mrb[0].mxu0
  %9190 = vmatprep.mubr.f32.mxu0 %v6171
  %9191 = vmatmul.mubr.f32.gmra.mrb[0].mxu0 %v4071
  %v9192 = vpop.f32.mrb[0].mxu0
  %v9193 = vpop.f32.mrb[0].mxu0
  %9194 = vmatprep.mubr.f32.mxu0 %v6172
  %9195 = vmatmul.mubr.f32.gmra.mrb[0].mxu0 %v4073
  %v9196 = vpop.f32.mrb[0].mxu0
  %v9197 = vpop.f32.mrb[0].mxu0
  %9198 = vmatprep.mubr.f32.mxu0 %v6173
  %9199 = vmatmul.mubr.f32.gmra.mrb[0].mxu0 %v4075
  %v9200 = vpop.f32.mrb[0].mxu0
  %v9201 = vadd.f32 0.0, %v9200
  %v9202 = vpop.f32.mrb[0].mxu0
  %v9203 = vadd.f32 0.0, %v9202
  %9204 = vmatprep.mubr.f32.mxu0 %v6174
  %9205 = vmatmul.mubr.f32.gmra.mrb[0].mxu0 %v4077
  %v9206 = vpop.f32.mrb[0].mxu0
  %v9207 = vadd.f32 0.0, %v9206
  %v9208 = vpop.f32.mrb[0].mxu0
  %v9209 = vadd.f32 0.0, %v9208
  %9210 = vmatprep.mubr.f32.mxu0 %v6175
  %9211 = vmatmul.mubr.f32.gmra.mrb[0].mxu0 %v4079
  %v9212 = vpop.f32.mrb[0].mxu0
  %v9213 = vadd.f32 0.0, %v9212
  %v9214 = vpop.f32.mrb[0].mxu0
  %v9215 = vadd.f32 0.0, %v9214
  %9216 = vmatprep.mubr.f32.mxu0 %v6176
  %9217 = vmatmul.mubr.f32.gmra.mrb[0].mxu0 %v4081
  %v9218 = vpop.f32.mrb[0].mxu0
  %v9219 = vadd.f32 0.0, %v9218
  %v9220 = vpop.f32.mrb[0].mxu0
  %v9221 = vadd.f32 0.0, %v9220
  %9222 = vmatprep.mubr.f32.mxu0 %v6177
  %9223 = vmatmul.mubr.f32.gmra.mrb[0].mxu0 %v4083
  %v9224 = vpop.f32.mrb[0].mxu0
  %v9225 = vpop.f32.mrb[0].mxu0
  %9226 = vmatprep.mubr.f32.mxu0 %v6178
  %9227 = vmatmul.mubr.f32.gmra.mrb[0].mxu0 %v4085
  %v9228 = vpop.f32.mrb[0].mxu0
  %v9229 = vpop.f32.mrb[0].mxu0
  %9230 = vmatprep.mubr.f32.mxu0 %v6179
  %9231 = vmatmul.mubr.f32.gmra.mrb[0].mxu0 %v4087
  %v9232 = vpop.f32.mrb[0].mxu0
  %v9233 = vpop.f32.mrb[0].mxu0
  %9234 = vmatprep.mubr.f32.mxu0 %v6180
  %9235 = vmatmul.mubr.f32.gmra.mrb[0].mxu0 %v4089
  %v9236 = vpop.f32.mrb[0].mxu0
  %v9237 = vpop.f32.mrb[0].mxu0
  %9238 = vmatprep.mubr.f32.mxu0 %v6181
  %9239 = vmatmul.mubr.f32.gmra.mrb[0].mxu0 %v4091
  %v9240 = vpop.f32.mrb[0].mxu0
  %v9241 = vadd.f32 0.0, %v9240
  %v9242 = vpop.f32.mrb[0].mxu0
  %v9243 = vadd.f32 0.0, %v9242
  %9244 = vmatprep.mubr.f32.mxu0 %v6182
  %9245 = vmatmul.mubr.f32.gmra.mrb[0].mxu0 %v4093
  %v9246 = vpop.f32.mrb[0].mxu0
  %v9247 = vadd.f32 0.0, %v9246
  %v9248 = vpop.f32.mrb[0].mxu0
  %v9249 = vadd.f32 0.0, %v9248
  %9250 = vmatprep.mubr.f32.mxu0 %v6183
  %9251 = vmatmul.mubr.f32.gmra.mrb[0].mxu0 %v4095
  %v9252 = vpop.f32.mrb[0].mxu0
  %v9253 = vadd.f32 0.0, %v9252
  %v9254 = vpop.f32.mrb[0].mxu0
  %v9255 = vadd.f32 0.0, %v9254
  %9256 = vmatprep.mubr.f32.mxu0 %v6184
  %9257 = vmatmul.mubr.f32.gmra.mrb[0].mxu0 %v4097
  %v9258 = vpop.f32.mrb[0].mxu0
  %v9259 = vadd.f32 0.0, %v9258
  %v9260 = vpop.f32.mrb[0].mxu0
  %v9261 = vadd.f32 0.0, %v9260
  %9262 = vmatprep.mubr.f32.mxu0 %v6185
  %9263 = vmatmul.mubr.f32.gmra.mrb[0].mxu0 %v4099
  %v9264 = vpop.f32.mrb[0].mxu0
  %v9265 = vpop.f32.mrb[0].mxu0
  %9266 = vmatprep.mubr.f32.mxu0 %v6186
  %9267 = vmatmul.mubr.f32.gmra.mrb[0].mxu0 %v4101
  %v9268 = vpop.f32.mrb[0].mxu0
  %v9269 = vpop.f32.mrb[0].mxu0
  %9270 = vmatprep.mubr.f32.mxu0 %v6187
  %9271 = vmatmul.mubr.f32.gmra.mrb[0].mxu0 %v4103
  %v9272 = vpop.f32.mrb[0].mxu0
  %v9273 = vpop.f32.mrb[0].mxu0
  %9274 = vmatprep.mubr.f32.mxu0 %v6188
  %9275 = vmatmul.mubr.f32.gmra.mrb[0].mxu0 %v4105
  %v9276 = vpop.f32.mrb[0].mxu0
  %v9277 = vpop.f32.mrb[0].mxu0
  %9278 = vmatprep.mubr.f32.mxu0 %v6189
  %9279 = vmatmul.mubr.f32.gmra.mrb[0].mxu0 %v4107
  %v9280 = vpop.f32.mrb[0].mxu0
  %v9281 = vadd.f32 0.0, %v9280
  %v9282 = vpop.f32.mrb[0].mxu0
  %v9283 = vadd.f32 0.0, %v9282
  %9284 = vmatprep.mubr.f32.mxu0 %v6190
  %9285 = vmatmul.mubr.f32.gmra.mrb[0].mxu0 %v4109
  %v9286 = vpop.f32.mrb[0].mxu0
  %v9287 = vadd.f32 0.0, %v9286
  %v9288 = vpop.f32.mrb[0].mxu0
  %v9289 = vadd.f32 0.0, %v9288
  %9290 = vmatprep.mubr.f32.mxu0 %v6191
  %9291 = vmatmul.mubr.f32.gmra.mrb[0].mxu0 %v4111
  %v9292 = vpop.f32.mrb[0].mxu0
  %v9293 = vadd.f32 0.0, %v9292
  %v9294 = vpop.f32.mrb[0].mxu0
  %v9295 = vadd.f32 0.0, %v9294
  %9296 = vmatprep.mubr.f32.mxu0 %v6192
  %9297 = vmatmul.mubr.f32.gmra.mrb[0].mxu0 %v4113
  %v9298 = vpop.f32.mrb[0].mxu0
  %v9299 = vadd.f32 0.0, %v9298
  %v9300 = vpop.f32.mrb[0].mxu0
  %v9301 = vadd.f32 0.0, %v9300
  %9302 = vmatprep.mubr.f32.mxu0 %v6193
  %9303 = vmatmul.mubr.f32.gmra.mrb[0].mxu0 %v4115
  %v9304 = vpop.f32.mrb[0].mxu0
  %v9305 = vpop.f32.mrb[0].mxu0
  %9306 = vmatprep.mubr.f32.mxu0 %v6194
  %9307 = vmatmul.mubr.f32.gmra.mrb[0].mxu0 %v4117
  %v9308 = vpop.f32.mrb[0].mxu0
  %v9309 = vpop.f32.mrb[0].mxu0
  %9310 = vmatprep.mubr.f32.mxu0 %v6195
  %9311 = vmatmul.mubr.f32.gmra.mrb[0].mxu0 %v4119
  %v9312 = vpop.f32.mrb[0].mxu0
  %v9313 = vpop.f32.mrb[0].mxu0
  %9314 = vmatprep.mubr.f32.mxu0 %v6196
  %9315 = vmatmul.mubr.f32.gmra.mrb[0].mxu0 %v4121
  %v9316 = vpop.f32.mrb[0].mxu0
  %v9317 = vpop.f32.mrb[0].mxu0
  %9318 = vmatprep.mubr.f32.mxu0 %v6197
  %9319 = vmatmul.mubr.f32.gmra.mrb[0].mxu0 %v4123
  %v9320 = vpop.f32.mrb[0].mxu0
  %v9321 = vadd.f32 0.0, %v9320
  %v9322 = vpop.f32.mrb[0].mxu0
  %v9323 = vadd.f32 0.0, %v9322
  %9324 = vmatprep.mubr.f32.mxu0 %v6198
  %9325 = vmatmul.mubr.f32.gmra.mrb[0].mxu0 %v4125
  %v9326 = vpop.f32.mrb[0].mxu0
  %v9327 = vadd.f32 0.0, %v9326
  %v9328 = vpop.f32.mrb[0].mxu0
  %v9329 = vadd.f32 0.0, %v9328
  %9330 = vmatprep.mubr.f32.mxu0 %v6199
  %9331 = vmatmul.mubr.f32.gmra.mrb[0].mxu0 %v4127
  %v9332 = vpop.f32.mrb[0].mxu0
  %v9333 = vadd.f32 0.0, %v9332
  %v9334 = vpop.f32.mrb[0].mxu0
  %v9335 = vadd.f32 0.0, %v9334
  %9336 = vmatprep.mubr.f32.mxu0 %v6200
  %9337 = vmatmul.mubr.f32.gmra.mrb[0].mxu0 %v4129
  %v9338 = vpop.f32.mrb[0].mxu0
  %v9339 = vadd.f32 0.0, %v9338
  %v9340 = vpop.f32.mrb[0].mxu0
  %v9341 = vadd.f32 0.0, %v9340
  %9342 = vmatprep.mubr.f32.mxu0 %v6201
  %9343 = vmatmul.mubr.f32.gmra.mrb[0].mxu0 %v4131
  %v9344 = vpop.f32.mrb[0].mxu0
  %v9345 = vpop.f32.mrb[0].mxu0
  %9346 = vmatprep.mubr.f32.mxu0 %v6202
  %9347 = vmatmul.mubr.f32.gmra.mrb[0].mxu0 %v4133
  %v9348 = vpop.f32.mrb[0].mxu0
  %v9349 = vpop.f32.mrb[0].mxu0
  %9350 = vmatprep.mubr.f32.mxu0 %v6203
  %9351 = vmatmul.mubr.f32.gmra.mrb[0].mxu0 %v4135
  %v9352 = vpop.f32.mrb[0].mxu0
  %v9353 = vpop.f32.mrb[0].mxu0
  %9354 = vmatprep.mubr.f32.mxu0 %v6204
  %9355 = vmatmul.mubr.f32.gmra.mrb[0].mxu0 %v4137
  %v9356 = vpop.f32.mrb[0].mxu0
  %v9357 = vpop.f32.mrb[0].mxu0
  %9358 = vmatprep.mubr.f32.mxu0 %v6205
  %9359 = vmatmul.mubr.f32.gmra.mrb[0].mxu0 %v4139
  %v9360 = vpop.f32.mrb[0].mxu0
  %v9361 = vpop.f32.mrb[0].mxu0
  %9362 = vmatprep.mubr.f32.mxu0 %v6206
  %9363 = vmatmul.mubr.f32.gmra.mrb[0].mxu0 %v4141
  %v9364 = vpop.f32.mrb[0].mxu0
  %v9365 = vpop.f32.mrb[0].mxu0
  %9366 = vmatprep.mubr.f32.mxu0 %v6207
  %9367 = vmatmul.mubr.f32.gmra.mrb[0].mxu0 %v4143
  %v9368 = vpop.f32.mrb[0].mxu0
  %v9369 = vpop.f32.mrb[0].mxu0
  %9370 = vmatprep.mubr.f32.mxu0 %v6208
  %9371 = vmatmul.mubr.f32.gmra.mrb[0].mxu0 %v4145
  %v9372 = vpop.f32.mrb[0].mxu0
  %v9373 = vpop.f32.mrb[0].mxu0
  %9374 = vmatprep.mubr.f32.mxu0 %v6209
  %9375 = vmatmul.mubr.f32.gmra.mrb[0].mxu0 %v4147
  %v9376 = vpop.f32.mrb[0].mxu0
  %v9377 = vpop.f32.mrb[0].mxu0
  %9378 = vmatprep.mubr.f32.mxu0 %v6210
  %9379 = vmatmul.mubr.f32.gmra.mrb[0].mxu0 %v4149
  %v9380 = vpop.f32.mrb[0].mxu0
  %v9381 = vpop.f32.mrb[0].mxu0
  %9382 = vmatprep.mubr.f32.mxu0 %v6211
  %9383 = vmatmul.mubr.f32.gmra.mrb[0].mxu0 %v4151
  %v9384 = vpop.f32.mrb[0].mxu0
  %v9385 = vpop.f32.mrb[0].mxu0
  %9386 = vmatprep.mubr.f32.mxu0 %v6212
  %9387 = vmatmul.mubr.f32.gmra.mrb[0].mxu0 %v4153
  %v9388 = vpop.f32.mrb[0].mxu0
  %v9389 = vpop.f32.mrb[0].mxu0
  %9390 = vmatprep.mubr.f32.mxu0 %v6213
  %9391 = vmatmul.mubr.f32.gmra.mrb[0].mxu0 %v4155
  %v9392 = vpop.f32.mrb[0].mxu0
  %v9393 = vpop.f32.mrb[0].mxu0
  %9394 = vmatprep.mubr.f32.mxu0 %v6214
  %9395 = vmatmul.mubr.f32.gmra.mrb[0].mxu0 %v4157
  %v9396 = vpop.f32.mrb[0].mxu0
  %v9397 = vpop.f32.mrb[0].mxu0
  %9398 = vmatprep.mubr.f32.mxu0 %v6215
  %9399 = vmatmul.mubr.f32.gmra.mrb[0].mxu0 %v4159
  %v9400 = vpop.f32.mrb[0].mxu0
  %v9401 = vpop.f32.mrb[0].mxu0
  %9402 = vmatprep.mubr.f32.mxu0 %v6216
  %9403 = vmatmul.mubr.f32.gmra.mrb[0].mxu0 %v4161
  %v9404 = vpop.f32.mrb[0].mxu0
  %v9405 = vpop.f32.mrb[0].mxu0
  %9406 = vmatprep.mubr.f32.mxu0 %v6217
  %9407 = vmatmul.mubr.f32.gmra.mrb[0].mxu0 %v4163
  %v9408 = vpop.f32.mrb[0].mxu0
  %v9409 = vpop.f32.mrb[0].mxu0
  %9410 = vmatprep.mubr.f32.mxu0 %v6218
  %9411 = vmatmul.mubr.f32.gmra.mrb[0].mxu0 %v4165
  %v9412 = vpop.f32.mrb[0].mxu0
  %v9413 = vpop.f32.mrb[0].mxu0
  %9414 = vmatprep.mubr.f32.mxu0 %v6219
  %9415 = vmatmul.mubr.f32.gmra.mrb[0].mxu0 %v4167
  %v9416 = vpop.f32.mrb[0].mxu0
  %v9417 = vpop.f32.mrb[0].mxu0
  %9418 = vmatprep.mubr.f32.mxu0 %v6220
  %9419 = vmatmul.mubr.f32.gmra.mrb[0].mxu0 %v4169
  %v9420 = vpop.f32.mrb[0].mxu0
  %v9421 = vpop.f32.mrb[0].mxu0
  %9422 = vmatprep.mubr.f32.mxu0 %v6221
  %9423 = vmatmul.mubr.f32.gmra.mrb[0].mxu0 %v4171
  %v9424 = vpop.f32.mrb[0].mxu0
  %v9425 = vpop.f32.mrb[0].mxu0
  %9426 = vmatprep.mubr.f32.mxu0 %v6222
  %9427 = vmatmul.mubr.f32.gmra.mrb[0].mxu0 %v4173
  %v9428 = vpop.f32.mrb[0].mxu0
  %v9429 = vpop.f32.mrb[0].mxu0
  %9430 = vmatprep.mubr.f32.mxu0 %v6223
  %9431 = vmatmul.mubr.f32.gmra.mrb[0].mxu0 %v4175
  %v9432 = vpop.f32.mrb[0].mxu0
  %v9433 = vpop.f32.mrb[0].mxu0
  %9434 = vmatprep.mubr.f32.mxu0 %v6224
  %9435 = vmatmul.mubr.f32.gmra.mrb[0].mxu0 %v4177
  %v9436 = vpop.f32.mrb[0].mxu0
  %v9437 = vpop.f32.mrb[0].mxu0
  %9438 = vmatprep.mubr.f32.mxu0 %v6225
  %9439 = vmatmul.mubr.f32.gmra.mrb[0].mxu0 %v4179
  %v9440 = vpop.f32.mrb[0].mxu0
  %v9441 = vpop.f32.mrb[0].mxu0
  %9442 = vmatprep.mubr.f32.mxu0 %v6226
  %9443 = vmatmul.mubr.f32.gmra.mrb[0].mxu0 %v4181
  %v9444 = vpop.f32.mrb[0].mxu0
  %v9445 = vpop.f32.mrb[0].mxu0
  %9446 = vmatprep.mubr.f32.mxu0 %v6227
  %9447 = vmatmul.mubr.f32.gmra.mrb[0].mxu0 %v4183
  %v9448 = vpop.f32.mrb[0].mxu0
  %v9449 = vpop.f32.mrb[0].mxu0
  %9450 = vmatprep.mubr.f32.mxu0 %v6228
  %9451 = vmatmul.mubr.f32.gmra.mrb[0].mxu0 %v4185
  %v9452 = vpop.f32.mrb[0].mxu0
  %v9453 = vpop.f32.mrb[0].mxu0
  %9454 = vdwg.mxu0
  %9455 = vmatprep.subr.mxu0 %v8729
  %9456 = vmatpush1.msra.mxu0 %v8728
  %9457 = vmatprep.subr.mxu0 %v8731
  %9458 = vmatpush1.msra.mxu0 %v8730
  %9459 = vmatprep.subr.mxu0 %v8733
  %9460 = vmatpush1.msra.mxu0 %v8732
  %9461 = vmatprep.subr.mxu0 %v8735
  %9462 = vmatpush1.msra.mxu0 %v8734
  %9463 = vmatprep.subr.mxu0 %v8737
  %9464 = vmatpush1.msra.mxu0 %v8736
  %9465 = vmatprep.subr.mxu0 %v8739
  %9466 = vmatpush1.msra.mxu0 %v8738
  %9467 = vmatprep.subr.mxu0 %v8741
  %9468 = vmatpush1.msra.mxu0 %v8740
  %9469 = vmatprep.subr.mxu0 %v8743
  %9470 = vmatpush1.msra.mxu0 %v8742
  %9471 = vmatprep.subr.mxu0 %v8745
  %9472 = vmatpush1.msra.mxu0 %v8744
  %9473 = vmatprep.subr.mxu0 %v8747
  %9474 = vmatpush1.msra.mxu0 %v8746
  %9475 = vmatprep.subr.mxu0 %v8749
  %9476 = vmatpush1.msra.mxu0 %v8748
  %9477 = vmatprep.subr.mxu0 %v8751
  %9478 = vmatpush1.msra.mxu0 %v8750
  %9479 = vmatprep.subr.mxu0 %v8753
  %9480 = vmatpush1.msra.mxu0 %v8752
  %9481 = vmatprep.subr.mxu0 %v8755
  %9482 = vmatpush1.msra.mxu0 %v8754
  %9483 = vmatprep.subr.mxu0 %v8757
  %9484 = vmatpush1.msra.mxu0 %v8756
  %9485 = vmatprep.subr.mxu0 %v8759
  %9486 = vmatpush1.msra.mxu0 %v8758
  %9487 = vmatprep.subr.mxu0 %v8761
  %9488 = vmatpush1.msra.mxu0 %v8760
  %9489 = vmatprep.subr.mxu0 %v8763
  %9490 = vmatpush1.msra.mxu0 %v8762
  %9491 = vmatprep.subr.mxu0 %v8765
  %9492 = vmatpush1.msra.mxu0 %v8764
  %9493 = vmatprep.subr.mxu0 %v8767
  %9494 = vmatpush1.msra.mxu0 %v8766
  %9495 = vmatprep.subr.mxu0 %v8769
  %9496 = vmatpush1.msra.mxu0 %v8768
  %9497 = vmatprep.subr.mxu0 %v8771
  %9498 = vmatpush1.msra.mxu0 %v8770
  %9499 = vmatprep.subr.mxu0 %v8773
  %9500 = vmatpush1.msra.mxu0 %v8772
  %9501 = vmatprep.subr.mxu0 %v8775
  %9502 = vmatpush1.msra.mxu0 %v8774
  %9503 = vmatprep.subr.mxu0 %v8777
  %9504 = vmatpush1.msra.mxu0 %v8776
  %9505 = vmatprep.subr.mxu0 %v8779
  %9506 = vmatpush1.msra.mxu0 %v8778
  %9507 = vmatprep.subr.mxu0 %v8781
  %9508 = vmatpush1.msra.mxu0 %v8780
  %9509 = vmatprep.subr.mxu0 %v8783
  %9510 = vmatpush1.msra.mxu0 %v8782
  %9511 = vmatprep.subr.mxu0 %v8785
  %9512 = vmatpush1.msra.mxu0 %v8784
  %9513 = vmatprep.subr.mxu0 %v8787
  %9514 = vmatpush1.msra.mxu0 %v8786
  %9515 = vmatprep.subr.mxu0 %v8789
  %9516 = vmatpush1.msra.mxu0 %v8788
  %9517 = vmatprep.subr.mxu0 %v8791
  %9518 = vmatpush1.msra.mxu0 %v8790
  %9519 = vmatprep.mubr.f32.mxu0 %v6229
  %9520 = vmatmul.mubr.f32.gmra.mrb[0].mxu0 %v4908
  %v9521 = vpop.f32.mrb[0].mxu0
  %v9522 = vadd.f32 %v8881, %v9521
  %v9523 = vpop.f32.mrb[0].mxu0
  %v9524 = vadd.f32 %v8883, %v9523
  %9525 = vmatprep.mubr.f32.mxu0 %v6230
  %9526 = vmatmul.mubr.f32.gmra.mrb[0].mxu0 %v4909
  %v9527 = vpop.f32.mrb[0].mxu0
  %v9528 = vadd.f32 %v8887, %v9527
  %v9529 = vpop.f32.mrb[0].mxu0
  %v9530 = vadd.f32 %v8889, %v9529
  %9531 = vmatprep.mubr.f32.mxu0 %v6231
  %9532 = vmatmul.mubr.f32.gmra.mrb[0].mxu0 %v4910
  %v9533 = vpop.f32.mrb[0].mxu0
  %v9534 = vadd.f32 %v8893, %v9533
  %v9535 = vpop.f32.mrb[0].mxu0
  %v9536 = vadd.f32 %v8895, %v9535
  %9537 = vmatprep.mubr.f32.mxu0 %v6232
  %9538 = vmatmul.mubr.f32.gmra.mrb[0].mxu0 %v4911
  %v9539 = vpop.f32.mrb[0].mxu0
  %v9540 = vadd.f32 %v8899, %v9539
  %v9541 = vpop.f32.mrb[0].mxu0
  %v9542 = vadd.f32 %v8901, %v9541
  %9543 = vmatprep.mubr.f32.mxu0 %v6233
  %9544 = vmatmul.mubr.f32.gmra.mrb[0].mxu0 %v4912
  %v9545 = vpop.f32.mrb[0].mxu0
  %v9546 = vpop.f32.mrb[0].mxu0
  %9547 = vmatprep.mubr.f32.mxu0 %v6234
  %9548 = vmatmul.mubr.f32.gmra.mrb[0].mxu0 %v4913
  %v9549 = vpop.f32.mrb[0].mxu0
  %v9550 = vpop.f32.mrb[0].mxu0
  %9551 = vmatprep.mubr.f32.mxu0 %v6235
  %9552 = vmatmul.mubr.f32.gmra.mrb[0].mxu0 %v4914
  %v9553 = vpop.f32.mrb[0].mxu0
  %v9554 = vpop.f32.mrb[0].mxu0
  %9555 = vmatprep.mubr.f32.mxu0 %v6236
  %9556 = vmatmul.mubr.f32.gmra.mrb[0].mxu0 %v4915
  %v9557 = vpop.f32.mrb[0].mxu0
  %v9558 = vpop.f32.mrb[0].mxu0
  %9559 = vmatprep.mubr.f32.mxu0 %v6237
  %9560 = vmatmul.mubr.f32.gmra.mrb[0].mxu0 %v4916
  %v9561 = vpop.f32.mrb[0].mxu0
  %v9562 = vadd.f32 %v8921, %v9561
  %v9563 = vpop.f32.mrb[0].mxu0
  %v9564 = vadd.f32 %v8923, %v9563
  %9565 = vmatprep.mubr.f32.mxu0 %v6238
  %9566 = vmatmul.mubr.f32.gmra.mrb[0].mxu0 %v4917
  %v9567 = vpop.f32.mrb[0].mxu0
  %v9568 = vadd.f32 %v8927, %v9567
  %v9569 = vpop.f32.mrb[0].mxu0
  %v9570 = vadd.f32 %v8929, %v9569
  %9571 = vmatprep.mubr.f32.mxu0 %v6239
  %9572 = vmatmul.mubr.f32.gmra.mrb[0].mxu0 %v4918
  %v9573 = vpop.f32.mrb[0].mxu0
  %v9574 = vadd.f32 %v8933, %v9573
  %v9575 = vpop.f32.mrb[0].mxu0
  %v9576 = vadd.f32 %v8935, %v9575
  %9577 = vmatprep.mubr.f32.mxu0 %v6240
  %9578 = vmatmul.mubr.f32.gmra.mrb[0].mxu0 %v4919
  %v9579 = vpop.f32.mrb[0].mxu0
  %v9580 = vadd.f32 %v8939, %v9579
  %v9581 = vpop.f32.mrb[0].mxu0
  %v9582 = vadd.f32 %v8941, %v9581
  %9583 = vmatprep.mubr.f32.mxu0 %v6241
  %9584 = vmatmul.mubr.f32.gmra.mrb[0].mxu0 %v4920
  %v9585 = vpop.f32.mrb[0].mxu0
  %v9586 = vpop.f32.mrb[0].mxu0
  %9587 = vmatprep.mubr.f32.mxu0 %v6242
  %9588 = vmatmul.mubr.f32.gmra.mrb[0].mxu0 %v4921
  %v9589 = vpop.f32.mrb[0].mxu0
  %v9590 = vpop.f32.mrb[0].mxu0
  %9591 = vmatprep.mubr.f32.mxu0 %v6243
  %9592 = vmatmul.mubr.f32.gmra.mrb[0].mxu0 %v4922
  %v9593 = vpop.f32.mrb[0].mxu0
  %v9594 = vpop.f32.mrb[0].mxu0
  %9595 = vmatprep.mubr.f32.mxu0 %v6244
  %9596 = vmatmul.mubr.f32.gmra.mrb[0].mxu0 %v4923
  %v9597 = vpop.f32.mrb[0].mxu0
  %v9598 = vpop.f32.mrb[0].mxu0
  %9599 = vmatprep.mubr.f32.mxu0 %v6245
  %9600 = vmatmul.mubr.f32.gmra.mrb[0].mxu0 %v4924
  %v9601 = vpop.f32.mrb[0].mxu0
  %v9602 = vadd.f32 %v8961, %v9601
  %v9603 = vpop.f32.mrb[0].mxu0
  %v9604 = vadd.f32 %v8963, %v9603
  %9605 = vmatprep.mubr.f32.mxu0 %v6246
  %9606 = vmatmul.mubr.f32.gmra.mrb[0].mxu0 %v4925
  %v9607 = vpop.f32.mrb[0].mxu0
  %v9608 = vadd.f32 %v8967, %v9607
  %v9609 = vpop.f32.mrb[0].mxu0
  %v9610 = vadd.f32 %v8969, %v9609
  %9611 = vmatprep.mubr.f32.mxu0 %v6247
  %9612 = vmatmul.mubr.f32.gmra.mrb[0].mxu0 %v4926
  %v9613 = vpop.f32.mrb[0].mxu0
  %v9614 = vadd.f32 %v8973, %v9613
  %v9615 = vpop.f32.mrb[0].mxu0
  %v9616 = vadd.f32 %v8975, %v9615
  %9617 = vmatprep.mubr.f32.mxu0 %v6248
  %9618 = vmatmul.mubr.f32.gmra.mrb[0].mxu0 %v4927
  %v9619 = vpop.f32.mrb[0].mxu0
  %v9620 = vadd.f32 %v8979, %v9619
  %v9621 = vpop.f32.mrb[0].mxu0
  %v9622 = vadd.f32 %v8981, %v9621
  %9623 = vmatprep.mubr.f32.mxu0 %v6249
  %9624 = vmatmul.mubr.f32.gmra.mrb[0].mxu0 %v4928
  %v9625 = vpop.f32.mrb[0].mxu0
  %v9626 = vpop.f32.mrb[0].mxu0
  %9627 = vmatprep.mubr.f32.mxu0 %v6250
  %9628 = vmatmul.mubr.f32.gmra.mrb[0].mxu0 %v4929
  %v9629 = vpop.f32.mrb[0].mxu0
  %v9630 = vpop.f32.mrb[0].mxu0
  %9631 = vmatprep.mubr.f32.mxu0 %v6251
  %9632 = vmatmul.mubr.f32.gmra.mrb[0].mxu0 %v4930
  %v9633 = vpop.f32.mrb[0].mxu0
  %v9634 = vpop.f32.mrb[0].mxu0
  %9635 = vmatprep.mubr.f32.mxu0 %v6252
  %9636 = vmatmul.mubr.f32.gmra.mrb[0].mxu0 %v4931
  %v9637 = vpop.f32.mrb[0].mxu0
  %v9638 = vpop.f32.mrb[0].mxu0
  %9639 = vmatprep.mubr.f32.mxu0 %v6253
  %9640 = vmatmul.mubr.f32.gmra.mrb[0].mxu0 %v4932
  %v9641 = vpop.f32.mrb[0].mxu0
  %v9642 = vadd.f32 %v9001, %v9641
  %v9643 = vpop.f32.mrb[0].mxu0
  %v9644 = vadd.f32 %v9003, %v9643
  %9645 = vmatprep.mubr.f32.mxu0 %v6254
  %9646 = vmatmul.mubr.f32.gmra.mrb[0].mxu0 %v4933
  %v9647 = vpop.f32.mrb[0].mxu0
  %v9648 = vadd.f32 %v9007, %v9647
  %v9649 = vpop.f32.mrb[0].mxu0
  %v9650 = vadd.f32 %v9009, %v9649
  %9651 = vmatprep.mubr.f32.mxu0 %v6255
  %9652 = vmatmul.mubr.f32.gmra.mrb[0].mxu0 %v4934
  %v9653 = vpop.f32.mrb[0].mxu0
  %v9654 = vadd.f32 %v9013, %v9653
  %v9655 = vpop.f32.mrb[0].mxu0
  %v9656 = vadd.f32 %v9015, %v9655
  %9657 = vmatprep.mubr.f32.mxu0 %v6256
  %9658 = vmatmul.mubr.f32.gmra.mrb[0].mxu0 %v4935
  %v9659 = vpop.f32.mrb[0].mxu0
  %v9660 = vadd.f32 %v9019, %v9659
  %v9661 = vpop.f32.mrb[0].mxu0
  %v9662 = vadd.f32 %v9021, %v9661
  %9663 = vmatprep.mubr.f32.mxu0 %v6257
  %9664 = vmatmul.mubr.f32.gmra.mrb[0].mxu0 %v4936
  %v9665 = vpop.f32.mrb[0].mxu0
  %v9666 = vpop.f32.mrb[0].mxu0
  %9667 = vmatprep.mubr.f32.mxu0 %v6258
  %9668 = vmatmul.mubr.f32.gmra.mrb[0].mxu0 %v4937
  %v9669 = vpop.f32.mrb[0].mxu0
  %v9670 = vpop.f32.mrb[0].mxu0
  %9671 = vmatprep.mubr.f32.mxu0 %v6259
  %9672 = vmatmul.mubr.f32.gmra.mrb[0].mxu0 %v4938
  %v9673 = vpop.f32.mrb[0].mxu0
  %v9674 = vpop.f32.mrb[0].mxu0
  %9675 = vmatprep.mubr.f32.mxu0 %v6260
  %9676 = vmatmul.mubr.f32.gmra.mrb[0].mxu0 %v4939
  %v9677 = vpop.f32.mrb[0].mxu0
  %v9678 = vpop.f32.mrb[0].mxu0
  %9679 = vmatprep.mubr.f32.mxu0 %v6261
  %9680 = vmatmul.mubr.f32.gmra.mrb[0].mxu0 %v4940
  %v9681 = vpop.f32.mrb[0].mxu0
  %v9682 = vadd.f32 %v9041, %v9681
  %v9683 = vpop.f32.mrb[0].mxu0
  %v9684 = vadd.f32 %v9043, %v9683
  %9685 = vmatprep.mubr.f32.mxu0 %v6262
  %9686 = vmatmul.mubr.f32.gmra.mrb[0].mxu0 %v4941
  %v9687 = vpop.f32.mrb[0].mxu0
  %v9688 = vadd.f32 %v9047, %v9687
  %v9689 = vpop.f32.mrb[0].mxu0
  %v9690 = vadd.f32 %v9049, %v9689
  %9691 = vmatprep.mubr.f32.mxu0 %v6263
  %9692 = vmatmul.mubr.f32.gmra.mrb[0].mxu0 %v4942
  %v9693 = vpop.f32.mrb[0].mxu0
  %v9694 = vadd.f32 %v9053, %v9693
  %v9695 = vpop.f32.mrb[0].mxu0
  %v9696 = vadd.f32 %v9055, %v9695
  %9697 = vmatprep.mubr.f32.mxu0 %v6264
  %9698 = vmatmul.mubr.f32.gmra.mrb[0].mxu0 %v4943
  %v9699 = vpop.f32.mrb[0].mxu0
  %v9700 = vadd.f32 %v9059, %v9699
  %v9701 = vpop.f32.mrb[0].mxu0
  %v9702 = vadd.f32 %v9061, %v9701
  %9703 = vmatprep.mubr.f32.mxu0 %v6265
  %9704 = vmatmul.mubr.f32.gmra.mrb[0].mxu0 %v4944
  %v9705 = vpop.f32.mrb[0].mxu0
  %v9706 = vpop.f32.mrb[0].mxu0
  %9707 = vmatprep.mubr.f32.mxu0 %v6266
  %9708 = vmatmul.mubr.f32.gmra.mrb[0].mxu0 %v4945
  %v9709 = vpop.f32.mrb[0].mxu0
  %v9710 = vpop.f32.mrb[0].mxu0
  %9711 = vmatprep.mubr.f32.mxu0 %v6267
  %9712 = vmatmul.mubr.f32.gmra.mrb[0].mxu0 %v4946
  %v9713 = vpop.f32.mrb[0].mxu0
  %v9714 = vpop.f32.mrb[0].mxu0
  %9715 = vmatprep.mubr.f32.mxu0 %v6268
  %9716 = vmatmul.mubr.f32.gmra.mrb[0].mxu0 %v4947
  %v9717 = vpop.f32.mrb[0].mxu0
  %v9718 = vpop.f32.mrb[0].mxu0
  %9719 = vmatprep.mubr.f32.mxu0 %v6269
  %9720 = vmatmul.mubr.f32.gmra.mrb[0].mxu0 %v4948
  %v9721 = vpop.f32.mrb[0].mxu0
  %v9722 = vadd.f32 %v9081, %v9721
  %v9723 = vpop.f32.mrb[0].mxu0
  %v9724 = vadd.f32 %v9083, %v9723
  %9725 = vmatprep.mubr.f32.mxu0 %v6270
  %9726 = vmatmul.mubr.f32.gmra.mrb[0].mxu0 %v4949
  %v9727 = vpop.f32.mrb[0].mxu0
  %v9728 = vadd.f32 %v9087, %v9727
  %v9729 = vpop.f32.mrb[0].mxu0
  %v9730 = vadd.f32 %v9089, %v9729
  %9731 = vmatprep.mubr.f32.mxu0 %v6271
  %9732 = vmatmul.mubr.f32.gmra.mrb[0].mxu0 %v4950
  %v9733 = vpop.f32.mrb[0].mxu0
  %v9734 = vadd.f32 %v9093, %v9733
  %v9735 = vpop.f32.mrb[0].mxu0
  %v9736 = vadd.f32 %v9095, %v9735
  %9737 = vmatprep.mubr.f32.mxu0 %v6272
  %9738 = vmatmul.mubr.f32.gmra.mrb[0].mxu0 %v4951
  %v9739 = vpop.f32.mrb[0].mxu0
  %v9740 = vadd.f32 %v9099, %v9739
  %v9741 = vpop.f32.mrb[0].mxu0
  %v9742 = vadd.f32 %v9101, %v9741
  %9743 = vmatprep.mubr.f32.mxu0 %v6273
  %9744 = vmatmul.mubr.f32.gmra.mrb[0].mxu0 %v4952
  %v9745 = vpop.f32.mrb[0].mxu0
  %v9746 = vpop.f32.mrb[0].mxu0
  %9747 = vmatprep.mubr.f32.mxu0 %v6274
  %9748 = vmatmul.mubr.f32.gmra.mrb[0].mxu0 %v4953
  %v9749 = vpop.f32.mrb[0].mxu0
  %v9750 = vpop.f32.mrb[0].mxu0
  %9751 = vmatprep.mubr.f32.mxu0 %v6275
  %9752 = vmatmul.mubr.f32.gmra.mrb[0].mxu0 %v4954
  %v9753 = vpop.f32.mrb[0].mxu0
  %v9754 = vpop.f32.mrb[0].mxu0
  %9755 = vmatprep.mubr.f32.mxu0 %v6276
  %9756 = vmatmul.mubr.f32.gmra.mrb[0].mxu0 %v4955
  %v9757 = vpop.f32.mrb[0].mxu0
  %v9758 = vpop.f32.mrb[0].mxu0
  %9759 = vmatprep.mubr.f32.mxu0 %v6277
  %9760 = vmatmul.mubr.f32.gmra.mrb[0].mxu0 %v4956
  %v9761 = vpop.f32.mrb[0].mxu0
  %v9762 = vadd.f32 %v9121, %v9761
  %v9763 = vpop.f32.mrb[0].mxu0
  %v9764 = vadd.f32 %v9123, %v9763
  %9765 = vmatprep.mubr.f32.mxu0 %v6278
  %9766 = vmatmul.mubr.f32.gmra.mrb[0].mxu0 %v4957
  %v9767 = vpop.f32.mrb[0].mxu0
  %v9768 = vadd.f32 %v9127, %v9767
  %v9769 = vpop.f32.mrb[0].mxu0
  %v9770 = vadd.f32 %v9129, %v9769
  %9771 = vmatprep.mubr.f32.mxu0 %v6279
  %9772 = vmatmul.mubr.f32.gmra.mrb[0].mxu0 %v4958
  %v9773 = vpop.f32.mrb[0].mxu0
  %v9774 = vadd.f32 %v9133, %v9773
  %v9775 = vpop.f32.mrb[0].mxu0
  %v9776 = vadd.f32 %v9135, %v9775
  %9777 = vmatprep.mubr.f32.mxu0 %v6280
  %9778 = vmatmul.mubr.f32.gmra.mrb[0].mxu0 %v4959
  %v9779 = vpop.f32.mrb[0].mxu0
  %v9780 = vadd.f32 %v9139, %v9779
  %v9781 = vpop.f32.mrb[0].mxu0
  %v9782 = vadd.f32 %v9141, %v9781
  %9783 = vmatprep.mubr.f32.mxu0 %v6281
  %9784 = vmatmul.mubr.f32.gmra.mrb[0].mxu0 %v4960
  %v9785 = vpop.f32.mrb[0].mxu0
  %v9786 = vpop.f32.mrb[0].mxu0
  %9787 = vmatprep.mubr.f32.mxu0 %v6282
  %9788 = vmatmul.mubr.f32.gmra.mrb[0].mxu0 %v4961
  %v9789 = vpop.f32.mrb[0].mxu0
  %v9790 = vpop.f32.mrb[0].mxu0
  %9791 = vmatprep.mubr.f32.mxu0 %v6283
  %9792 = vmatmul.mubr.f32.gmra.mrb[0].mxu0 %v4962
  %v9793 = vpop.f32.mrb[0].mxu0
  %v9794 = vpop.f32.mrb[0].mxu0
  %9795 = vmatprep.mubr.f32.mxu0 %v6284
  %9796 = vmatmul.mubr.f32.gmra.mrb[0].mxu0 %v4963
  %v9797 = vpop.f32.mrb[0].mxu0
  %v9798 = vpop.f32.mrb[0].mxu0
  %9799 = vmatprep.mubr.f32.mxu0 %v6285
  %9800 = vmatmul.mubr.f32.gmra.mrb[0].mxu0 %v4964
  %v9801 = vpop.f32.mrb[0].mxu0
  %v9802 = vadd.f32 %v9161, %v9801
  %v9803 = vpop.f32.mrb[0].mxu0
  %v9804 = vadd.f32 %v9163, %v9803
  %9805 = vmatprep.mubr.f32.mxu0 %v6286
  %9806 = vmatmul.mubr.f32.gmra.mrb[0].mxu0 %v4965
  %v9807 = vpop.f32.mrb[0].mxu0
  %v9808 = vadd.f32 %v9167, %v9807
  %v9809 = vpop.f32.mrb[0].mxu0
  %v9810 = vadd.f32 %v9169, %v9809
  %9811 = vmatprep.mubr.f32.mxu0 %v6287
  %9812 = vmatmul.mubr.f32.gmra.mrb[0].mxu0 %v4966
  %v9813 = vpop.f32.mrb[0].mxu0
  %v9814 = vadd.f32 %v9173, %v9813
  %v9815 = vpop.f32.mrb[0].mxu0
  %v9816 = vadd.f32 %v9175, %v9815
  %9817 = vmatprep.mubr.f32.mxu0 %v6288
  %9818 = vmatmul.mubr.f32.gmra.mrb[0].mxu0 %v4967
  %v9819 = vpop.f32.mrb[0].mxu0
  %v9820 = vadd.f32 %v9179, %v9819
  %v9821 = vpop.f32.mrb[0].mxu0
  %v9822 = vadd.f32 %v9181, %v9821
  %9823 = vmatprep.mubr.f32.mxu0 %v6289
  %9824 = vmatmul.mubr.f32.gmra.mrb[0].mxu0 %v4968
  %v9825 = vpop.f32.mrb[0].mxu0
  %v9826 = vpop.f32.mrb[0].mxu0
  %9827 = vmatprep.mubr.f32.mxu0 %v6290
  %9828 = vmatmul.mubr.f32.gmra.mrb[0].mxu0 %v4969
  %v9829 = vpop.f32.mrb[0].mxu0
  %v9830 = vpop.f32.mrb[0].mxu0
  %9831 = vmatprep.mubr.f32.mxu0 %v6291
  %9832 = vmatmul.mubr.f32.gmra.mrb[0].mxu0 %v4970
  %v9833 = vpop.f32.mrb[0].mxu0
  %v9834 = vpop.f32.mrb[0].mxu0
  %9835 = vmatprep.mubr.f32.mxu0 %v6292
  %9836 = vmatmul.mubr.f32.gmra.mrb[0].mxu0 %v4971
  %v9837 = vpop.f32.mrb[0].mxu0
  %v9838 = vpop.f32.mrb[0].mxu0
  %9839 = vmatprep.mubr.f32.mxu0 %v6293
  %9840 = vmatmul.mubr.f32.gmra.mrb[0].mxu0 %v4972
  %v9841 = vpop.f32.mrb[0].mxu0
  %v9842 = vadd.f32 %v9201, %v9841
  %v9843 = vpop.f32.mrb[0].mxu0
  %v9844 = vadd.f32 %v9203, %v9843
  %9845 = vmatprep.mubr.f32.mxu0 %v6294
  %9846 = vmatmul.mubr.f32.gmra.mrb[0].mxu0 %v4973
  %v9847 = vpop.f32.mrb[0].mxu0
  %v9848 = vadd.f32 %v9207, %v9847
  %v9849 = vpop.f32.mrb[0].mxu0
  %v9850 = vadd.f32 %v9209, %v9849
  %9851 = vmatprep.mubr.f32.mxu0 %v6295
  %9852 = vmatmul.mubr.f32.gmra.mrb[0].mxu0 %v4974
  %v9853 = vpop.f32.mrb[0].mxu0
  %v9854 = vadd.f32 %v9213, %v9853
  %v9855 = vpop.f32.mrb[0].mxu0
  %v9856 = vadd.f32 %v9215, %v9855
  %9857 = vmatprep.mubr.f32.mxu0 %v6296
  %9858 = vmatmul.mubr.f32.gmra.mrb[0].mxu0 %v4975
  %v9859 = vpop.f32.mrb[0].mxu0
  %v9860 = vadd.f32 %v9219, %v9859
  %v9861 = vpop.f32.mrb[0].mxu0
  %v9862 = vadd.f32 %v9221, %v9861
  %9863 = vmatprep.mubr.f32.mxu0 %v6297
  %9864 = vmatmul.mubr.f32.gmra.mrb[0].mxu0 %v4976
  %v9865 = vpop.f32.mrb[0].mxu0
  %v9866 = vpop.f32.mrb[0].mxu0
  %9867 = vmatprep.mubr.f32.mxu0 %v6298
  %9868 = vmatmul.mubr.f32.gmra.mrb[0].mxu0 %v4977
  %v9869 = vpop.f32.mrb[0].mxu0
  %v9870 = vpop.f32.mrb[0].mxu0
  %9871 = vmatprep.mubr.f32.mxu0 %v6299
  %9872 = vmatmul.mubr.f32.gmra.mrb[0].mxu0 %v4978
  %v9873 = vpop.f32.mrb[0].mxu0
  %v9874 = vpop.f32.mrb[0].mxu0
  %9875 = vmatprep.mubr.f32.mxu0 %v6300
  %9876 = vmatmul.mubr.f32.gmra.mrb[0].mxu0 %v4979
  %v9877 = vpop.f32.mrb[0].mxu0
  %v9878 = vpop.f32.mrb[0].mxu0
  %9879 = vmatprep.mubr.f32.mxu0 %v6301
  %9880 = vmatmul.mubr.f32.gmra.mrb[0].mxu0 %v4980
  %v9881 = vpop.f32.mrb[0].mxu0
  %v9882 = vadd.f32 %v9241, %v9881
  %v9883 = vpop.f32.mrb[0].mxu0
  %v9884 = vadd.f32 %v9243, %v9883
  %9885 = vmatprep.mubr.f32.mxu0 %v6302
  %9886 = vmatmul.mubr.f32.gmra.mrb[0].mxu0 %v4981
  %v9887 = vpop.f32.mrb[0].mxu0
  %v9888 = vadd.f32 %v9247, %v9887
  %v9889 = vpop.f32.mrb[0].mxu0
  %v9890 = vadd.f32 %v9249, %v9889
  %9891 = vmatprep.mubr.f32.mxu0 %v6303
  %9892 = vmatmul.mubr.f32.gmra.mrb[0].mxu0 %v4982
  %v9893 = vpop.f32.mrb[0].mxu0
  %v9894 = vadd.f32 %v9253, %v9893
  %v9895 = vpop.f32.mrb[0].mxu0
  %v9896 = vadd.f32 %v9255, %v9895
  %9897 = vmatprep.mubr.f32.mxu0 %v6304
  %9898 = vmatmul.mubr.f32.gmra.mrb[0].mxu0 %v4983
  %v9899 = vpop.f32.mrb[0].mxu0
  %v9900 = vadd.f32 %v9259, %v9899
  %v9901 = vpop.f32.mrb[0].mxu0
  %v9902 = vadd.f32 %v9261, %v9901
  %9903 = vmatprep.mubr.f32.mxu0 %v6305
  %9904 = vmatmul.mubr.f32.gmra.mrb[0].mxu0 %v4984
  %v9905 = vpop.f32.mrb[0].mxu0
  %v9906 = vpop.f32.mrb[0].mxu0
  %9907 = vmatprep.mubr.f32.mxu0 %v6306
  %9908 = vmatmul.mubr.f32.gmra.mrb[0].mxu0 %v4985
  %v9909 = vpop.f32.mrb[0].mxu0
  %v9910 = vpop.f32.mrb[0].mxu0
  %9911 = vmatprep.mubr.f32.mxu0 %v6307
  %9912 = vmatmul.mubr.f32.gmra.mrb[0].mxu0 %v4986
  %v9913 = vpop.f32.mrb[0].mxu0
  %v9914 = vpop.f32.mrb[0].mxu0
  %9915 = vmatprep.mubr.f32.mxu0 %v6308
  %9916 = vmatmul.mubr.f32.gmra.mrb[0].mxu0 %v4987
  %v9917 = vpop.f32.mrb[0].mxu0
  %v9918 = vpop.f32.mrb[0].mxu0
  %9919 = vmatprep.mubr.f32.mxu0 %v6309
  %9920 = vmatmul.mubr.f32.gmra.mrb[0].mxu0 %v4988
  %v9921 = vpop.f32.mrb[0].mxu0
  %v9922 = vadd.f32 %v9281, %v9921
  %v9923 = vpop.f32.mrb[0].mxu0
  %v9924 = vadd.f32 %v9283, %v9923
  %9925 = vmatprep.mubr.f32.mxu0 %v6310
  %9926 = vmatmul.mubr.f32.gmra.mrb[0].mxu0 %v4989
  %v9927 = vpop.f32.mrb[0].mxu0
  %v9928 = vadd.f32 %v9287, %v9927
  %v9929 = vpop.f32.mrb[0].mxu0
  %v9930 = vadd.f32 %v9289, %v9929
  %9931 = vmatprep.mubr.f32.mxu0 %v6311
  %9932 = vmatmul.mubr.f32.gmra.mrb[0].mxu0 %v4990
  %v9933 = vpop.f32.mrb[0].mxu0
  %v9934 = vadd.f32 %v9293, %v9933
  %v9935 = vpop.f32.mrb[0].mxu0
  %v9936 = vadd.f32 %v9295, %v9935
  %9937 = vmatprep.mubr.f32.mxu0 %v6312
  %9938 = vmatmul.mubr.f32.gmra.mrb[0].mxu0 %v4991
  %v9939 = vpop.f32.mrb[0].mxu0
  %v9940 = vadd.f32 %v9299, %v9939
  %v9941 = vpop.f32.mrb[0].mxu0
  %v9942 = vadd.f32 %v9301, %v9941
  %9943 = vmatprep.mubr.f32.mxu0 %v6313
  %9944 = vmatmul.mubr.f32.gmra.mrb[0].mxu0 %v4992
  %v9945 = vpop.f32.mrb[0].mxu0
  %v9946 = vpop.f32.mrb[0].mxu0
  %9947 = vmatprep.mubr.f32.mxu0 %v6314
  %9948 = vmatmul.mubr.f32.gmra.mrb[0].mxu0 %v4993
  %v9949 = vpop.f32.mrb[0].mxu0
  %v9950 = vpop.f32.mrb[0].mxu0
  %9951 = vmatprep.mubr.f32.mxu0 %v6315
  %9952 = vmatmul.mubr.f32.gmra.mrb[0].mxu0 %v4994
  %v9953 = vpop.f32.mrb[0].mxu0
  %v9954 = vpop.f32.mrb[0].mxu0
  %9955 = vmatprep.mubr.f32.mxu0 %v6316
  %9956 = vmatmul.mubr.f32.gmra.mrb[0].mxu0 %v4995
  %v9957 = vpop.f32.mrb[0].mxu0
  %v9958 = vpop.f32.mrb[0].mxu0
  %9959 = vmatprep.mubr.f32.mxu0 %v6317
  %9960 = vmatmul.mubr.f32.gmra.mrb[0].mxu0 %v4996
  %v9961 = vpop.f32.mrb[0].mxu0
  %v9962 = vadd.f32 %v9321, %v9961
  %v9963 = vpop.f32.mrb[0].mxu0
  %v9964 = vadd.f32 %v9323, %v9963
  %9965 = vmatprep.mubr.f32.mxu0 %v6318
  %9966 = vmatmul.mubr.f32.gmra.mrb[0].mxu0 %v4997
  %v9967 = vpop.f32.mrb[0].mxu0
  %v9968 = vadd.f32 %v9327, %v9967
  %v9969 = vpop.f32.mrb[0].mxu0
  %v9970 = vadd.f32 %v9329, %v9969
  %9971 = vmatprep.mubr.f32.mxu0 %v6319
  %9972 = vmatmul.mubr.f32.gmra.mrb[0].mxu0 %v4998
  %v9973 = vpop.f32.mrb[0].mxu0
  %v9974 = vadd.f32 %v9333, %v9973
  %v9975 = vpop.f32.mrb[0].mxu0
  %v9976 = vadd.f32 %v9335, %v9975
  %9977 = vmatprep.mubr.f32.mxu0 %v6320
  %9978 = vmatmul.mubr.f32.gmra.mrb[0].mxu0 %v4999
  %v9979 = vpop.f32.mrb[0].mxu0
  %v9980 = vadd.f32 %v9339, %v9979
  %v9981 = vpop.f32.mrb[0].mxu0
  %v9982 = vadd.f32 %v9341, %v9981
  %9983 = vmatprep.mubr.f32.mxu0 %v6321
  %9984 = vmatmul.mubr.f32.gmra.mrb[0].mxu0 %v5000
  %v9985 = vpop.f32.mrb[0].mxu0
  %v9986 = vpop.f32.mrb[0].mxu0
  %9987 = vmatprep.mubr.f32.mxu0 %v6322
  %9988 = vmatmul.mubr.f32.gmra.mrb[0].mxu0 %v5001
  %v9989 = vpop.f32.mrb[0].mxu0
  %v9990 = vpop.f32.mrb[0].mxu0
  %9991 = vmatprep.mubr.f32.mxu0 %v6323
  %9992 = vmatmul.mubr.f32.gmra.mrb[0].mxu0 %v5002
  %v9993 = vpop.f32.mrb[0].mxu0
  %v9994 = vpop.f32.mrb[0].mxu0
  %9995 = vmatprep.mubr.f32.mxu0 %v6324
  %9996 = vmatmul.mubr.f32.gmra.mrb[0].mxu0 %v5003
  %v9997 = vpop.f32.mrb[0].mxu0
  %v9998 = vpop.f32.mrb[0].mxu0
  %9999 = vmatprep.mubr.f32.mxu0 %v6325
  %10000 = vmatmul.mubr.f32.gmra.mrb[0].mxu0 %v5004
  %v10001 = vpop.f32.mrb[0].mxu0
  %v10002 = vpop.f32.mrb[0].mxu0
  %10003 = vmatprep.mubr.f32.mxu0 %v6326
  %10004 = vmatmul.mubr.f32.gmra.mrb[0].mxu0 %v5005
  %v10005 = vpop.f32.mrb[0].mxu0
  %v10006 = vpop.f32.mrb[0].mxu0
  %10007 = vmatprep.mubr.f32.mxu0 %v6327
  %10008 = vmatmul.mubr.f32.gmra.mrb[0].mxu0 %v5006
  %v10009 = vpop.f32.mrb[0].mxu0
  %v10010 = vpop.f32.mrb[0].mxu0
  %10011 = vmatprep.mubr.f32.mxu0 %v6328
  %10012 = vmatmul.mubr.f32.gmra.mrb[0].mxu0 %v5007
  %v10013 = vpop.f32.mrb[0].mxu0
  %v10014 = vpop.f32.mrb[0].mxu0
  %10015 = vmatprep.mubr.f32.mxu0 %v6329
  %10016 = vmatmul.mubr.f32.gmra.mrb[0].mxu0 %v5008
  %v10017 = vpop.f32.mrb[0].mxu0
  %v10018 = vpop.f32.mrb[0].mxu0
  %10019 = vmatprep.mubr.f32.mxu0 %v6330
  %10020 = vmatmul.mubr.f32.gmra.mrb[0].mxu0 %v5009
  %v10021 = vpop.f32.mrb[0].mxu0
  %v10022 = vpop.f32.mrb[0].mxu0
  %10023 = vmatprep.mubr.f32.mxu0 %v6331
  %10024 = vmatmul.mubr.f32.gmra.mrb[0].mxu0 %v5010
  %v10025 = vpop.f32.mrb[0].mxu0
  %v10026 = vpop.f32.mrb[0].mxu0
  %10027 = vmatprep.mubr.f32.mxu0 %v6332
  %10028 = vmatmul.mubr.f32.gmra.mrb[0].mxu0 %v5011
  %v10029 = vpop.f32.mrb[0].mxu0
  %v10030 = vpop.f32.mrb[0].mxu0
  %10031 = vmatprep.mubr.f32.mxu0 %v6333
  %10032 = vmatmul.mubr.f32.gmra.mrb[0].mxu0 %v5012
  %v10033 = vpop.f32.mrb[0].mxu0
  %v10034 = vpop.f32.mrb[0].mxu0
  %10035 = vmatprep.mubr.f32.mxu0 %v6334
  %10036 = vmatmul.mubr.f32.gmra.mrb[0].mxu0 %v5013
  %v10037 = vpop.f32.mrb[0].mxu0
  %v10038 = vpop.f32.mrb[0].mxu0
  %10039 = vmatprep.mubr.f32.mxu0 %v6335
  %10040 = vmatmul.mubr.f32.gmra.mrb[0].mxu0 %v5014
  %v10041 = vpop.f32.mrb[0].mxu0
  %v10042 = vpop.f32.mrb[0].mxu0
  %10043 = vmatprep.mubr.f32.mxu0 %v6336
  %10044 = vmatmul.mubr.f32.gmra.mrb[0].mxu0 %v5015
  %v10045 = vpop.f32.mrb[0].mxu0
  %v10046 = vpop.f32.mrb[0].mxu0
  %10047 = vmatprep.mubr.f32.mxu0 %v6337
  %10048 = vmatmul.mubr.f32.gmra.mrb[0].mxu0 %v5016
  %v10049 = vpop.f32.mrb[0].mxu0
  %v10050 = vpop.f32.mrb[0].mxu0
  %10051 = vmatprep.mubr.f32.mxu0 %v6338
  %10052 = vmatmul.mubr.f32.gmra.mrb[0].mxu0 %v5017
  %v10053 = vpop.f32.mrb[0].mxu0
  %v10054 = vpop.f32.mrb[0].mxu0
  %10055 = vmatprep.mubr.f32.mxu0 %v6339
  %10056 = vmatmul.mubr.f32.gmra.mrb[0].mxu0 %v5018
  %v10057 = vpop.f32.mrb[0].mxu0
  %v10058 = vpop.f32.mrb[0].mxu0
  %10059 = vmatprep.mubr.f32.mxu0 %v6340
  %10060 = vmatmul.mubr.f32.gmra.mrb[0].mxu0 %v5019
  %v10061 = vpop.f32.mrb[0].mxu0
  %v10062 = vpop.f32.mrb[0].mxu0
  %10063 = vmatprep.mubr.f32.mxu0 %v6341
  %10064 = vmatmul.mubr.f32.gmra.mrb[0].mxu0 %v5020
  %v10065 = vpop.f32.mrb[0].mxu0
  %v10066 = vpop.f32.mrb[0].mxu0
  %10067 = vmatprep.mubr.f32.mxu0 %v6342
  %10068 = vmatmul.mubr.f32.gmra.mrb[0].mxu0 %v5021
  %v10069 = vpop.f32.mrb[0].mxu0
  %v10070 = vpop.f32.mrb[0].mxu0
  %10071 = vmatprep.mubr.f32.mxu0 %v6343
  %10072 = vmatmul.mubr.f32.gmra.mrb[0].mxu0 %v5022
  %v10073 = vpop.f32.mrb[0].mxu0
  %v10074 = vpop.f32.mrb[0].mxu0
  %10075 = vmatprep.mubr.f32.mxu0 %v6344
  %10076 = vmatmul.mubr.f32.gmra.mrb[0].mxu0 %v5023
  %v10077 = vpop.f32.mrb[0].mxu0
  %v10078 = vpop.f32.mrb[0].mxu0
  %10079 = vmatprep.mubr.f32.mxu0 %v6345
  %10080 = vmatmul.mubr.f32.gmra.mrb[0].mxu0 %v5024
  %v10081 = vpop.f32.mrb[0].mxu0
  %v10082 = vpop.f32.mrb[0].mxu0
  %10083 = vmatprep.mubr.f32.mxu0 %v6346
  %10084 = vmatmul.mubr.f32.gmra.mrb[0].mxu0 %v5025
  %v10085 = vpop.f32.mrb[0].mxu0
  %v10086 = vpop.f32.mrb[0].mxu0
  %10087 = vmatprep.mubr.f32.mxu0 %v6347
  %10088 = vmatmul.mubr.f32.gmra.mrb[0].mxu0 %v5026
  %v10089 = vpop.f32.mrb[0].mxu0
  %v10090 = vpop.f32.mrb[0].mxu0
  %10091 = vmatprep.mubr.f32.mxu0 %v6348
  %10092 = vmatmul.mubr.f32.gmra.mrb[0].mxu0 %v5027
  %v10093 = vpop.f32.mrb[0].mxu0
  %v10094 = vpop.f32.mrb[0].mxu0
  %10095 = vdwg.mxu0
  %10096 = vmatprep.subr.mxu0 %v8793
  %10097 = vmatpush1.msra.mxu0 %v8792
  %10098 = vmatprep.subr.mxu0 %v8795
  %10099 = vmatpush1.msra.mxu0 %v8794
  %10100 = vmatprep.subr.mxu0 %v8797
  %10101 = vmatpush1.msra.mxu0 %v8796
  %10102 = vmatprep.subr.mxu0 %v8799
  %10103 = vmatpush1.msra.mxu0 %v8798
  %10104 = vmatprep.subr.mxu0 %v8801
  %10105 = vmatpush1.msra.mxu0 %v8800
  %10106 = vmatprep.subr.mxu0 %v8803
  %10107 = vmatpush1.msra.mxu0 %v8802
  %10108 = vmatprep.subr.mxu0 %v8805
  %10109 = vmatpush1.msra.mxu0 %v8804
  %10110 = vmatprep.subr.mxu0 %v8807
  %10111 = vmatpush1.msra.mxu0 %v8806
  %10112 = vmatprep.subr.mxu0 %v8809
  %10113 = vmatpush1.msra.mxu0 %v8808
  %10114 = vmatprep.subr.mxu0 %v8811
  %10115 = vmatpush1.msra.mxu0 %v8810
  %10116 = vmatprep.subr.mxu0 %v8813
  %10117 = vmatpush1.msra.mxu0 %v8812
  %10118 = vmatprep.subr.mxu0 0.0
  %10119 = vmatpush1.msra.mxu0 0.0
  %10120 = vmatprep.subr.mxu0 0.0
  %10121 = vmatpush1.msra.mxu0 0.0
  %10122 = vmatprep.subr.mxu0 0.0
  %10123 = vmatpush1.msra.mxu0 0.0
  %10124 = vmatprep.subr.mxu0 0.0
  %10125 = vmatpush1.msra.mxu0 0.0
  %10126 = vmatprep.subr.mxu0 0.0
  %10127 = vmatpush1.msra.mxu0 0.0
  %10128 = vmatprep.subr.mxu0 0.0
  %10129 = vmatpush1.msra.mxu0 0.0
  %10130 = vmatprep.subr.mxu0 0.0
  %10131 = vmatpush1.msra.mxu0 0.0
  %10132 = vmatprep.subr.mxu0 0.0
  %10133 = vmatpush1.msra.mxu0 0.0
  %10134 = vmatprep.subr.mxu0 0.0
  %10135 = vmatpush1.msra.mxu0 0.0
  %10136 = vmatprep.subr.mxu0 0.0
  %10137 = vmatpush1.msra.mxu0 0.0
  %10138 = vmatprep.subr.mxu0 0.0
  %10139 = vmatpush1.msra.mxu0 0.0
  %10140 = vmatprep.subr.mxu0 0.0
  %10141 = vmatpush1.msra.mxu0 0.0
  %10142 = vmatprep.subr.mxu0 0.0
  %10143 = vmatpush1.msra.mxu0 0.0
  %10144 = vmatprep.subr.mxu0 0.0
  %10145 = vmatpush1.msra.mxu0 0.0
  %10146 = vmatprep.subr.mxu0 0.0
  %10147 = vmatpush1.msra.mxu0 0.0
  %10148 = vmatprep.subr.mxu0 0.0
  %10149 = vmatpush1.msra.mxu0 0.0
  %10150 = vmatprep.subr.mxu0 0.0
  %10151 = vmatpush1.msra.mxu0 0.0
  %10152 = vmatprep.subr.mxu0 0.0
  %10153 = vmatpush1.msra.mxu0 0.0
  %10154 = vmatprep.subr.mxu0 0.0
  %10155 = vmatpush1.msra.mxu0 0.0
  %10156 = vmatprep.subr.mxu0 0.0
  %10157 = vmatpush1.msra.mxu0 0.0
  %10158 = vmatprep.subr.mxu0 0.0
  %10159 = vmatpush1.msra.mxu0 0.0
  %10160 = vmatprep.mubr.f32.mxu0 0.0
  %10161 = vmatmul.mubr.f32.gmra.mrb[0].mxu0 %v6500
  %v10162 = vpop.f32.mrb[0].mxu0
  %v10163 = vadd.f32 %v9522, %v10162
  %v10164 = vpop.f32.mrb[0].mxu0
  %v10165 = vadd.f32 %v9524, %v10164
  %10166 = vmatprep.mubr.f32.mxu0 0.0
  %10167 = vmatmul.mubr.f32.gmra.mrb[0].mxu0 %v6502
  %v10168 = vpop.f32.mrb[0].mxu0
  %v10169 = vadd.f32 %v9528, %v10168
  %v10170 = vpop.f32.mrb[0].mxu0
  %v10171 = vadd.f32 %v9530, %v10170
  %10172 = vmatprep.mubr.f32.mxu0 0.0
  %10173 = vmatmul.mubr.f32.gmra.mrb[0].mxu0 %v6504
  %v10174 = vpop.f32.mrb[0].mxu0
  %v10175 = vadd.f32 %v9534, %v10174
  %v10176 = vpop.f32.mrb[0].mxu0
  %v10177 = vadd.f32 %v9536, %v10176
  %10178 = vmatprep.mubr.f32.mxu0 0.0
  %10179 = vmatmul.mubr.f32.gmra.mrb[0].mxu0 %v6506
  %v10180 = vpop.f32.mrb[0].mxu0
  %v10181 = vadd.f32 %v9540, %v10180
  %v10182 = vpop.f32.mrb[0].mxu0
  %v10183 = vadd.f32 %v9542, %v10182
  %10184 = vmatprep.mubr.f32.mxu0 0.0
  %10185 = vmatmul.mubr.f32.gmra.mrb[0].mxu0 %v6508
  %v10186 = vpop.f32.mrb[0].mxu0
  %v10187 = vpop.f32.mrb[0].mxu0
  %10188 = vmatprep.mubr.f32.mxu0 0.0
  %10189 = vmatmul.mubr.f32.gmra.mrb[0].mxu0 %v6510
  %v10190 = vpop.f32.mrb[0].mxu0
  %v10191 = vpop.f32.mrb[0].mxu0
  %10192 = vmatprep.mubr.f32.mxu0 0.0
  %10193 = vmatmul.mubr.f32.gmra.mrb[0].mxu0 %v6512
  %v10194 = vpop.f32.mrb[0].mxu0
  %v10195 = vpop.f32.mrb[0].mxu0
  %10196 = vmatprep.mubr.f32.mxu0 0.0
  %10197 = vmatmul.mubr.f32.gmra.mrb[0].mxu0 %v6514
  %v10198 = vpop.f32.mrb[0].mxu0
  %v10199 = vpop.f32.mrb[0].mxu0
  %10200 = vmatprep.mubr.f32.mxu0 0.0
  %10201 = vmatmul.mubr.f32.gmra.mrb[0].mxu0 %v6516
  %v10202 = vpop.f32.mrb[0].mxu0
  %v10203 = vadd.f32 %v9562, %v10202
  %v10204 = vpop.f32.mrb[0].mxu0
  %v10205 = vadd.f32 %v9564, %v10204
  %10206 = vmatprep.mubr.f32.mxu0 0.0
  %10207 = vmatmul.mubr.f32.gmra.mrb[0].mxu0 %v6518
  %v10208 = vpop.f32.mrb[0].mxu0
  %v10209 = vadd.f32 %v9568, %v10208
  %v10210 = vpop.f32.mrb[0].mxu0
  %v10211 = vadd.f32 %v9570, %v10210
  %10212 = vmatprep.mubr.f32.mxu0 0.0
  %10213 = vmatmul.mubr.f32.gmra.mrb[0].mxu0 %v6520
  %v10214 = vpop.f32.mrb[0].mxu0
  %v10215 = vadd.f32 %v9574, %v10214
  %v10216 = vpop.f32.mrb[0].mxu0
  %v10217 = vadd.f32 %v9576, %v10216
  %10218 = vmatprep.mubr.f32.mxu0 0.0
  %10219 = vmatmul.mubr.f32.gmra.mrb[0].mxu0 %v6522
  %v10220 = vpop.f32.mrb[0].mxu0
  %v10221 = vadd.f32 %v9580, %v10220
  %v10222 = vpop.f32.mrb[0].mxu0
  %v10223 = vadd.f32 %v9582, %v10222
  %10224 = vmatprep.mubr.f32.mxu0 0.0
  %10225 = vmatmul.mubr.f32.gmra.mrb[0].mxu0 %v6524
  %v10226 = vpop.f32.mrb[0].mxu0
  %v10227 = vpop.f32.mrb[0].mxu0
  %10228 = vmatprep.mubr.f32.mxu0 0.0
  %10229 = vmatmul.mubr.f32.gmra.mrb[0].mxu0 %v6526
  %v10230 = vpop.f32.mrb[0].mxu0
  %v10231 = vpop.f32.mrb[0].mxu0
  %10232 = vmatprep.mubr.f32.mxu0 0.0
  %10233 = vmatmul.mubr.f32.gmra.mrb[0].mxu0 %v6528
  %v10234 = vpop.f32.mrb[0].mxu0
  %v10235 = vpop.f32.mrb[0].mxu0
  %10236 = vmatprep.mubr.f32.mxu0 0.0
  %10237 = vmatmul.mubr.f32.gmra.mrb[0].mxu0 %v6530
  %v10238 = vpop.f32.mrb[0].mxu0
  %v10239 = vpop.f32.mrb[0].mxu0
  %10240 = vmatprep.mubr.f32.mxu0 0.0
  %10241 = vmatmul.mubr.f32.gmra.mrb[0].mxu0 %v6532
  %v10242 = vpop.f32.mrb[0].mxu0
  %v10243 = vadd.f32 %v9602, %v10242
  %v10244 = vpop.f32.mrb[0].mxu0
  %v10245 = vadd.f32 %v9604, %v10244
  %10246 = vmatprep.mubr.f32.mxu0 0.0
  %10247 = vmatmul.mubr.f32.gmra.mrb[0].mxu0 %v6534
  %v10248 = vpop.f32.mrb[0].mxu0
  %v10249 = vadd.f32 %v9608, %v10248
  %v10250 = vpop.f32.mrb[0].mxu0
  %v10251 = vadd.f32 %v9610, %v10250
  %10252 = vmatprep.mubr.f32.mxu0 0.0
  %10253 = vmatmul.mubr.f32.gmra.mrb[0].mxu0 %v6536
  %v10254 = vpop.f32.mrb[0].mxu0
  %v10255 = vadd.f32 %v9614, %v10254
  %v10256 = vpop.f32.mrb[0].mxu0
  %v10257 = vadd.f32 %v9616, %v10256
  %10258 = vmatprep.mubr.f32.mxu0 0.0
  %10259 = vmatmul.mubr.f32.gmra.mrb[0].mxu0 %v6538
  %v10260 = vpop.f32.mrb[0].mxu0
  %v10261 = vadd.f32 %v9620, %v10260
  %v10262 = vpop.f32.mrb[0].mxu0
  %v10263 = vadd.f32 %v9622, %v10262
  %10264 = vmatprep.mubr.f32.mxu0 0.0
  %10265 = vmatmul.mubr.f32.gmra.mrb[0].mxu0 %v6540
  %v10266 = vpop.f32.mrb[0].mxu0
  %v10267 = vpop.f32.mrb[0].mxu0
  %10268 = vmatprep.mubr.f32.mxu0 0.0
  %10269 = vmatmul.mubr.f32.gmra.mrb[0].mxu0 %v6542
  %v10270 = vpop.f32.mrb[0].mxu0
  %v10271 = vpop.f32.mrb[0].mxu0
  %10272 = vmatprep.mubr.f32.mxu0 0.0
  %10273 = vmatmul.mubr.f32.gmra.mrb[0].mxu0 %v6544
  %v10274 = vpop.f32.mrb[0].mxu0
  %v10275 = vpop.f32.mrb[0].mxu0
  %10276 = vmatprep.mubr.f32.mxu0 0.0
  %10277 = vmatmul.mubr.f32.gmra.mrb[0].mxu0 %v6546
  %v10278 = vpop.f32.mrb[0].mxu0
  %v10279 = vpop.f32.mrb[0].mxu0
  %10280 = vmatprep.mubr.f32.mxu0 0.0
  %10281 = vmatmul.mubr.f32.gmra.mrb[0].mxu0 %v6548
  %v10282 = vpop.f32.mrb[0].mxu0
  %v10283 = vadd.f32 %v9642, %v10282
  %v10284 = vpop.f32.mrb[0].mxu0
  %v10285 = vadd.f32 %v9644, %v10284
  %10286 = vmatprep.mubr.f32.mxu0 0.0
  %10287 = vmatmul.mubr.f32.gmra.mrb[0].mxu0 %v6550
  %v10288 = vpop.f32.mrb[0].mxu0
  %v10289 = vadd.f32 %v9648, %v10288
  %v10290 = vpop.f32.mrb[0].mxu0
  %v10291 = vadd.f32 %v9650, %v10290
  %10292 = vmatprep.mubr.f32.mxu0 0.0
  %10293 = vmatmul.mubr.f32.gmra.mrb[0].mxu0 %v6552
  %v10294 = vpop.f32.mrb[0].mxu0
  %v10295 = vadd.f32 %v9654, %v10294
  %v10296 = vpop.f32.mrb[0].mxu0
  %v10297 = vadd.f32 %v9656, %v10296
  %10298 = vmatprep.mubr.f32.mxu0 0.0
  %10299 = vmatmul.mubr.f32.gmra.mrb[0].mxu0 %v6554
  %v10300 = vpop.f32.mrb[0].mxu0
  %v10301 = vadd.f32 %v9660, %v10300
  %v10302 = vpop.f32.mrb[0].mxu0
  %v10303 = vadd.f32 %v9662, %v10302
  %10304 = vmatprep.mubr.f32.mxu0 0.0
  %10305 = vmatmul.mubr.f32.gmra.mrb[0].mxu0 %v6556
  %v10306 = vpop.f32.mrb[0].mxu0
  %v10307 = vpop.f32.mrb[0].mxu0
  %10308 = vmatprep.mubr.f32.mxu0 0.0
  %10309 = vmatmul.mubr.f32.gmra.mrb[0].mxu0 %v6558
  %v10310 = vpop.f32.mrb[0].mxu0
  %v10311 = vpop.f32.mrb[0].mxu0
  %10312 = vmatprep.mubr.f32.mxu0 0.0
  %10313 = vmatmul.mubr.f32.gmra.mrb[0].mxu0 %v6560
  %v10314 = vpop.f32.mrb[0].mxu0
  %v10315 = vpop.f32.mrb[0].mxu0
  %10316 = vmatprep.mubr.f32.mxu0 0.0
  %10317 = vmatmul.mubr.f32.gmra.mrb[0].mxu0 %v6562
  %v10318 = vpop.f32.mrb[0].mxu0
  %v10319 = vpop.f32.mrb[0].mxu0
  %10320 = vmatprep.mubr.f32.mxu0 0.0
  %10321 = vmatmul.mubr.f32.gmra.mrb[0].mxu0 %v6564
  %v10322 = vpop.f32.mrb[0].mxu0
  %v10323 = vadd.f32 %v9682, %v10322
  %v10324 = vpop.f32.mrb[0].mxu0
  %v10325 = vadd.f32 %v9684, %v10324
  %10326 = vmatprep.mubr.f32.mxu0 0.0
  %10327 = vmatmul.mubr.f32.gmra.mrb[0].mxu0 %v6566
  %v10328 = vpop.f32.mrb[0].mxu0
  %v10329 = vadd.f32 %v9688, %v10328
  %v10330 = vpop.f32.mrb[0].mxu0
  %v10331 = vadd.f32 %v9690, %v10330
  %10332 = vmatprep.mubr.f32.mxu0 0.0
  %10333 = vmatmul.mubr.f32.gmra.mrb[0].mxu0 %v6568
  %v10334 = vpop.f32.mrb[0].mxu0
  %v10335 = vadd.f32 %v9694, %v10334
  %v10336 = vpop.f32.mrb[0].mxu0
  %v10337 = vadd.f32 %v9696, %v10336
  %10338 = vmatprep.mubr.f32.mxu0 0.0
  %10339 = vmatmul.mubr.f32.gmra.mrb[0].mxu0 %v6570
  %v10340 = vpop.f32.mrb[0].mxu0
  %v10341 = vadd.f32 %v9700, %v10340
  %v10342 = vpop.f32.mrb[0].mxu0
  %v10343 = vadd.f32 %v9702, %v10342
  %10344 = vmatprep.mubr.f32.mxu0 0.0
  %10345 = vmatmul.mubr.f32.gmra.mrb[0].mxu0 %v6572
  %v10346 = vpop.f32.mrb[0].mxu0
  %v10347 = vpop.f32.mrb[0].mxu0
  %10348 = vmatprep.mubr.f32.mxu0 0.0
  %10349 = vmatmul.mubr.f32.gmra.mrb[0].mxu0 %v6574
  %v10350 = vpop.f32.mrb[0].mxu0
  %v10351 = vpop.f32.mrb[0].mxu0
  %10352 = vmatprep.mubr.f32.mxu0 0.0
  %10353 = vmatmul.mubr.f32.gmra.mrb[0].mxu0 %v6576
  %v10354 = vpop.f32.mrb[0].mxu0
  %v10355 = vpop.f32.mrb[0].mxu0
  %10356 = vmatprep.mubr.f32.mxu0 0.0
  %10357 = vmatmul.mubr.f32.gmra.mrb[0].mxu0 %v6578
  %v10358 = vpop.f32.mrb[0].mxu0
  %v10359 = vpop.f32.mrb[0].mxu0
  %10360 = vmatprep.mubr.f32.mxu0 0.0
  %10361 = vmatmul.mubr.f32.gmra.mrb[0].mxu0 %v6580
  %v10362 = vpop.f32.mrb[0].mxu0
  %v10363 = vadd.f32 %v9722, %v10362
  %v10364 = vpop.f32.mrb[0].mxu0
  %v10365 = vadd.f32 %v9724, %v10364
  %10366 = vmatprep.mubr.f32.mxu0 0.0
  %10367 = vmatmul.mubr.f32.gmra.mrb[0].mxu0 %v6582
  %v10368 = vpop.f32.mrb[0].mxu0
  %v10369 = vadd.f32 %v9728, %v10368
  %v10370 = vpop.f32.mrb[0].mxu0
  %v10371 = vadd.f32 %v9730, %v10370
  %10372 = vmatprep.mubr.f32.mxu0 0.0
  %10373 = vmatmul.mubr.f32.gmra.mrb[0].mxu0 %v6584
  %v10374 = vpop.f32.mrb[0].mxu0
  %v10375 = vadd.f32 %v9734, %v10374
  %v10376 = vpop.f32.mrb[0].mxu0
  %v10377 = vadd.f32 %v9736, %v10376
  %10378 = vmatprep.mubr.f32.mxu0 0.0
  %10379 = vmatmul.mubr.f32.gmra.mrb[0].mxu0 %v6586
  %v10380 = vpop.f32.mrb[0].mxu0
  %v10381 = vadd.f32 %v9740, %v10380
  %v10382 = vpop.f32.mrb[0].mxu0
  %v10383 = vadd.f32 %v9742, %v10382
  %10384 = vmatprep.mubr.f32.mxu0 0.0
  %10385 = vmatmul.mubr.f32.gmra.mrb[0].mxu0 %v6588
  %v10386 = vpop.f32.mrb[0].mxu0
  %v10387 = vpop.f32.mrb[0].mxu0
  %10388 = vmatprep.mubr.f32.mxu0 0.0
  %10389 = vmatmul.mubr.f32.gmra.mrb[0].mxu0 %v6590
  %v10390 = vpop.f32.mrb[0].mxu0
  %v10391 = vpop.f32.mrb[0].mxu0
  %10392 = vmatprep.mubr.f32.mxu0 0.0
  %10393 = vmatmul.mubr.f32.gmra.mrb[0].mxu0 %v6592
  %v10394 = vpop.f32.mrb[0].mxu0
  %v10395 = vpop.f32.mrb[0].mxu0
  %10396 = vmatprep.mubr.f32.mxu0 0.0
  %10397 = vmatmul.mubr.f32.gmra.mrb[0].mxu0 %v6594
  %v10398 = vpop.f32.mrb[0].mxu0
  %v10399 = vpop.f32.mrb[0].mxu0
  %10400 = vmatprep.mubr.f32.mxu0 0.0
  %10401 = vmatmul.mubr.f32.gmra.mrb[0].mxu0 %v6596
  %v10402 = vpop.f32.mrb[0].mxu0
  %v10403 = vadd.f32 %v9762, %v10402
  %v10404 = vpop.f32.mrb[0].mxu0
  %v10405 = vadd.f32 %v9764, %v10404
  %10406 = vmatprep.mubr.f32.mxu0 0.0
  %10407 = vmatmul.mubr.f32.gmra.mrb[0].mxu0 %v6598
  %v10408 = vpop.f32.mrb[0].mxu0
  %v10409 = vadd.f32 %v9768, %v10408
  %v10410 = vpop.f32.mrb[0].mxu0
  %v10411 = vadd.f32 %v9770, %v10410
  %10412 = vmatprep.mubr.f32.mxu0 0.0
  %10413 = vmatmul.mubr.f32.gmra.mrb[0].mxu0 %v6600
  %v10414 = vpop.f32.mrb[0].mxu0
  %v10415 = vadd.f32 %v9774, %v10414
  %v10416 = vpop.f32.mrb[0].mxu0
  %v10417 = vadd.f32 %v9776, %v10416
  %10418 = vmatprep.mubr.f32.mxu0 0.0
  %10419 = vmatmul.mubr.f32.gmra.mrb[0].mxu0 %v6602
  %v10420 = vpop.f32.mrb[0].mxu0
  %v10421 = vadd.f32 %v9780, %v10420
  %v10422 = vpop.f32.mrb[0].mxu0
  %v10423 = vadd.f32 %v9782, %v10422
  %10424 = vmatprep.mubr.f32.mxu0 0.0
  %10425 = vmatmul.mubr.f32.gmra.mrb[0].mxu0 %v6604
  %v10426 = vpop.f32.mrb[0].mxu0
  %v10427 = vpop.f32.mrb[0].mxu0
  %10428 = vmatprep.mubr.f32.mxu0 0.0
  %10429 = vmatmul.mubr.f32.gmra.mrb[0].mxu0 %v6606
  %v10430 = vpop.f32.mrb[0].mxu0
  %v10431 = vpop.f32.mrb[0].mxu0
  %10432 = vmatprep.mubr.f32.mxu0 0.0
  %10433 = vmatmul.mubr.f32.gmra.mrb[0].mxu0 %v6608
  %v10434 = vpop.f32.mrb[0].mxu0
  %v10435 = vpop.f32.mrb[0].mxu0
  %10436 = vmatprep.mubr.f32.mxu0 0.0
  %10437 = vmatmul.mubr.f32.gmra.mrb[0].mxu0 %v6610
  %v10438 = vpop.f32.mrb[0].mxu0
  %v10439 = vpop.f32.mrb[0].mxu0
  %10440 = vmatprep.mubr.f32.mxu0 0.0
  %10441 = vmatmul.mubr.f32.gmra.mrb[0].mxu0 %v6612
  %v10442 = vpop.f32.mrb[0].mxu0
  %v10443 = vadd.f32 %v9802, %v10442
  %v10444 = vpop.f32.mrb[0].mxu0
  %v10445 = vadd.f32 %v9804, %v10444
  %10446 = vmatprep.mubr.f32.mxu0 0.0
  %10447 = vmatmul.mubr.f32.gmra.mrb[0].mxu0 %v6614
  %v10448 = vpop.f32.mrb[0].mxu0
  %v10449 = vadd.f32 %v9808, %v10448
  %v10450 = vpop.f32.mrb[0].mxu0
  %v10451 = vadd.f32 %v9810, %v10450
  %10452 = vmatprep.mubr.f32.mxu0 0.0
  %10453 = vmatmul.mubr.f32.gmra.mrb[0].mxu0 %v6616
  %v10454 = vpop.f32.mrb[0].mxu0
  %v10455 = vadd.f32 %v9814, %v10454
  %v10456 = vpop.f32.mrb[0].mxu0
  %v10457 = vadd.f32 %v9816, %v10456
  %10458 = vmatprep.mubr.f32.mxu0 0.0
  %10459 = vmatmul.mubr.f32.gmra.mrb[0].mxu0 %v6618
  %v10460 = vpop.f32.mrb[0].mxu0
  %v10461 = vadd.f32 %v9820, %v10460
  %v10462 = vpop.f32.mrb[0].mxu0
  %v10463 = vadd.f32 %v9822, %v10462
  %10464 = vmatprep.mubr.f32.mxu0 0.0
  %10465 = vmatmul.mubr.f32.gmra.mrb[0].mxu0 %v6620
  %v10466 = vpop.f32.mrb[0].mxu0
  %v10467 = vpop.f32.mrb[0].mxu0
  %10468 = vmatprep.mubr.f32.mxu0 0.0
  %10469 = vmatmul.mubr.f32.gmra.mrb[0].mxu0 %v6622
  %v10470 = vpop.f32.mrb[0].mxu0
  %v10471 = vpop.f32.mrb[0].mxu0
  %10472 = vmatprep.mubr.f32.mxu0 0.0
  %10473 = vmatmul.mubr.f32.gmra.mrb[0].mxu0 %v6624
  %v10474 = vpop.f32.mrb[0].mxu0
  %v10475 = vpop.f32.mrb[0].mxu0
  %10476 = vmatprep.mubr.f32.mxu0 0.0
  %10477 = vmatmul.mubr.f32.gmra.mrb[0].mxu0 %v6626
  %v10478 = vpop.f32.mrb[0].mxu0
  %v10479 = vpop.f32.mrb[0].mxu0
  %10480 = vmatprep.mubr.f32.mxu0 0.0
  %10481 = vmatmul.mubr.f32.gmra.mrb[0].mxu0 %v6628
  %v10482 = vpop.f32.mrb[0].mxu0
  %v10483 = vadd.f32 %v9842, %v10482
  %v10484 = vpop.f32.mrb[0].mxu0
  %v10485 = vadd.f32 %v9844, %v10484
  %10486 = vmatprep.mubr.f32.mxu0 0.0
  %10487 = vmatmul.mubr.f32.gmra.mrb[0].mxu0 %v6630
  %v10488 = vpop.f32.mrb[0].mxu0
  %v10489 = vadd.f32 %v9848, %v10488
  %v10490 = vpop.f32.mrb[0].mxu0
  %v10491 = vadd.f32 %v9850, %v10490
  %10492 = vmatprep.mubr.f32.mxu0 0.0
  %10493 = vmatmul.mubr.f32.gmra.mrb[0].mxu0 %v6632
  %v10494 = vpop.f32.mrb[0].mxu0
  %v10495 = vadd.f32 %v9854, %v10494
  %v10496 = vpop.f32.mrb[0].mxu0
  %v10497 = vadd.f32 %v9856, %v10496
  %10498 = vmatprep.mubr.f32.mxu0 0.0
  %10499 = vmatmul.mubr.f32.gmra.mrb[0].mxu0 %v6634
  %v10500 = vpop.f32.mrb[0].mxu0
  %v10501 = vadd.f32 %v9860, %v10500
  %v10502 = vpop.f32.mrb[0].mxu0
  %v10503 = vadd.f32 %v9862, %v10502
  %10504 = vmatprep.mubr.f32.mxu0 0.0
  %10505 = vmatmul.mubr.f32.gmra.mrb[0].mxu0 %v6636
  %v10506 = vpop.f32.mrb[0].mxu0
  %v10507 = vpop.f32.mrb[0].mxu0
  %10508 = vmatprep.mubr.f32.mxu0 0.0
  %10509 = vmatmul.mubr.f32.gmra.mrb[0].mxu0 %v6638
  %v10510 = vpop.f32.mrb[0].mxu0
  %v10511 = vpop.f32.mrb[0].mxu0
  %10512 = vmatprep.mubr.f32.mxu0 0.0
  %10513 = vmatmul.mubr.f32.gmra.mrb[0].mxu0 %v6640
  %v10514 = vpop.f32.mrb[0].mxu0
  %v10515 = vpop.f32.mrb[0].mxu0
  %10516 = vmatprep.mubr.f32.mxu0 0.0
  %10517 = vmatmul.mubr.f32.gmra.mrb[0].mxu0 %v6642
  %v10518 = vpop.f32.mrb[0].mxu0
  %v10519 = vpop.f32.mrb[0].mxu0
  %10520 = vmatprep.mubr.f32.mxu0 0.0
  %10521 = vmatmul.mubr.f32.gmra.mrb[0].mxu0 %v6644
  %v10522 = vpop.f32.mrb[0].mxu0
  %v10523 = vadd.f32 %v9882, %v10522
  %v10524 = vpop.f32.mrb[0].mxu0
  %v10525 = vadd.f32 %v9884, %v10524
  %10526 = vmatprep.mubr.f32.mxu0 0.0
  %10527 = vmatmul.mubr.f32.gmra.mrb[0].mxu0 %v6646
  %v10528 = vpop.f32.mrb[0].mxu0
  %v10529 = vadd.f32 %v9888, %v10528
  %v10530 = vpop.f32.mrb[0].mxu0
  %v10531 = vadd.f32 %v9890, %v10530
  %10532 = vmatprep.mubr.f32.mxu0 0.0
  %10533 = vmatmul.mubr.f32.gmra.mrb[0].mxu0 %v6648
  %v10534 = vpop.f32.mrb[0].mxu0
  %v10535 = vadd.f32 %v9894, %v10534
  %v10536 = vpop.f32.mrb[0].mxu0
  %v10537 = vadd.f32 %v9896, %v10536
  %10538 = vmatprep.mubr.f32.mxu0 0.0
  %10539 = vmatmul.mubr.f32.gmra.mrb[0].mxu0 %v6650
  %v10540 = vpop.f32.mrb[0].mxu0
  %v10541 = vadd.f32 %v9900, %v10540
  %v10542 = vpop.f32.mrb[0].mxu0
  %v10543 = vadd.f32 %v9902, %v10542
  %10544 = vmatprep.mubr.f32.mxu0 0.0
  %10545 = vmatmul.mubr.f32.gmra.mrb[0].mxu0 %v6652
  %v10546 = vpop.f32.mrb[0].mxu0
  %v10547 = vpop.f32.mrb[0].mxu0
  %10548 = vmatprep.mubr.f32.mxu0 0.0
  %10549 = vmatmul.mubr.f32.gmra.mrb[0].mxu0 %v6654
  %v10550 = vpop.f32.mrb[0].mxu0
  %v10551 = vpop.f32.mrb[0].mxu0
  %10552 = vmatprep.mubr.f32.mxu0 0.0
  %10553 = vmatmul.mubr.f32.gmra.mrb[0].mxu0 %v6656
  %v10554 = vpop.f32.mrb[0].mxu0
  %v10555 = vpop.f32.mrb[0].mxu0
  %10556 = vmatprep.mubr.f32.mxu0 0.0
  %10557 = vmatmul.mubr.f32.gmra.mrb[0].mxu0 %v6658
  %v10558 = vpop.f32.mrb[0].mxu0
  %v10559 = vpop.f32.mrb[0].mxu0
  %10560 = vmatprep.mubr.f32.mxu0 0.0
  %10561 = vmatmul.mubr.f32.gmra.mrb[0].mxu0 %v6660
  %v10562 = vpop.f32.mrb[0].mxu0
  %v10563 = vadd.f32 %v9922, %v10562
  %v10564 = vpop.f32.mrb[0].mxu0
  %v10565 = vadd.f32 %v9924, %v10564
  %10566 = vmatprep.mubr.f32.mxu0 0.0
  %10567 = vmatmul.mubr.f32.gmra.mrb[0].mxu0 %v6662
  %v10568 = vpop.f32.mrb[0].mxu0
  %v10569 = vadd.f32 %v9928, %v10568
  %v10570 = vpop.f32.mrb[0].mxu0
  %v10571 = vadd.f32 %v9930, %v10570
  %10572 = vmatprep.mubr.f32.mxu0 0.0
  %10573 = vmatmul.mubr.f32.gmra.mrb[0].mxu0 %v6664
  %v10574 = vpop.f32.mrb[0].mxu0
  %v10575 = vadd.f32 %v9934, %v10574
  %v10576 = vpop.f32.mrb[0].mxu0
  %v10577 = vadd.f32 %v9936, %v10576
  %10578 = vmatprep.mubr.f32.mxu0 0.0
  %10579 = vmatmul.mubr.f32.gmra.mrb[0].mxu0 %v6666
  %v10580 = vpop.f32.mrb[0].mxu0
  %v10581 = vadd.f32 %v9940, %v10580
  %v10582 = vpop.f32.mrb[0].mxu0
  %v10583 = vadd.f32 %v9942, %v10582
  %10584 = vmatprep.mubr.f32.mxu0 0.0
  %10585 = vmatmul.mubr.f32.gmra.mrb[0].mxu0 %v6668
  %v10586 = vpop.f32.mrb[0].mxu0
  %v10587 = vpop.f32.mrb[0].mxu0
  %10588 = vmatprep.mubr.f32.mxu0 0.0
  %10589 = vmatmul.mubr.f32.gmra.mrb[0].mxu0 %v6670
  %v10590 = vpop.f32.mrb[0].mxu0
  %v10591 = vpop.f32.mrb[0].mxu0
  %10592 = vmatprep.mubr.f32.mxu0 0.0
  %10593 = vmatmul.mubr.f32.gmra.mrb[0].mxu0 %v6672
  %v10594 = vpop.f32.mrb[0].mxu0
  %v10595 = vpop.f32.mrb[0].mxu0
  %10596 = vmatprep.mubr.f32.mxu0 0.0
  %10597 = vmatmul.mubr.f32.gmra.mrb[0].mxu0 %v6674
  %v10598 = vpop.f32.mrb[0].mxu0
  %v10599 = vpop.f32.mrb[0].mxu0
  %10600 = vmatprep.mubr.f32.mxu0 0.0
  %10601 = vmatmul.mubr.f32.gmra.mrb[0].mxu0 %v6676
  %v10602 = vpop.f32.mrb[0].mxu0
  %v10603 = vadd.f32 %v9962, %v10602
  %v10604 = vpop.f32.mrb[0].mxu0
  %v10605 = vadd.f32 %v9964, %v10604
  %10606 = vmatprep.mubr.f32.mxu0 0.0
  %10607 = vmatmul.mubr.f32.gmra.mrb[0].mxu0 %v6678
  %v10608 = vpop.f32.mrb[0].mxu0
  %v10609 = vadd.f32 %v9968, %v10608
  %v10610 = vpop.f32.mrb[0].mxu0
  %v10611 = vadd.f32 %v9970, %v10610
  %10612 = vmatprep.mubr.f32.mxu0 0.0
  %10613 = vmatmul.mubr.f32.gmra.mrb[0].mxu0 %v6680
  %v10614 = vpop.f32.mrb[0].mxu0
  %v10615 = vadd.f32 %v9974, %v10614
  %v10616 = vpop.f32.mrb[0].mxu0
  %v10617 = vadd.f32 %v9976, %v10616
  %10618 = vmatprep.mubr.f32.mxu0 0.0
  %10619 = vmatmul.mubr.f32.gmra.mrb[0].mxu0 %v6682
  %v10620 = vpop.f32.mrb[0].mxu0
  %v10621 = vadd.f32 %v9980, %v10620
  %v10622 = vpop.f32.mrb[0].mxu0
  %v10623 = vadd.f32 %v9982, %v10622
  %10624 = vmatprep.mubr.f32.mxu0 0.0
  %10625 = vmatmul.mubr.f32.gmra.mrb[0].mxu0 %v6684
  %v10626 = vpop.f32.mrb[0].mxu0
  %v10627 = vpop.f32.mrb[0].mxu0
  %10628 = vmatprep.mubr.f32.mxu0 0.0
  %10629 = vmatmul.mubr.f32.gmra.mrb[0].mxu0 %v6686
  %v10630 = vpop.f32.mrb[0].mxu0
  %v10631 = vpop.f32.mrb[0].mxu0
  %10632 = vmatprep.mubr.f32.mxu0 0.0
  %10633 = vmatmul.mubr.f32.gmra.mrb[0].mxu0 %v6688
  %v10634 = vpop.f32.mrb[0].mxu0
  %v10635 = vpop.f32.mrb[0].mxu0
  %10636 = vmatprep.mubr.f32.mxu0 0.0
  %10637 = vmatmul.mubr.f32.gmra.mrb[0].mxu0 %v6690
  %v10638 = vpop.f32.mrb[0].mxu0
  %v10639 = vpop.f32.mrb[0].mxu0
  %10640 = vmatprep.mubr.f32.mxu0 0.0
  %10641 = vmatmul.mubr.f32.gmra.mrb[0].mxu0 %v6692
  %v10642 = vpop.f32.mrb[0].mxu0
  %v10643 = vpop.f32.mrb[0].mxu0
  %10644 = vmatprep.mubr.f32.mxu0 0.0
  %10645 = vmatmul.mubr.f32.gmra.mrb[0].mxu0 %v6694
  %v10646 = vpop.f32.mrb[0].mxu0
  %v10647 = vpop.f32.mrb[0].mxu0
  %10648 = vmatprep.mubr.f32.mxu0 0.0
  %10649 = vmatmul.mubr.f32.gmra.mrb[0].mxu0 %v6696
  %v10650 = vpop.f32.mrb[0].mxu0
  %v10651 = vpop.f32.mrb[0].mxu0
  %10652 = vmatprep.mubr.f32.mxu0 0.0
  %10653 = vmatmul.mubr.f32.gmra.mrb[0].mxu0 %v6698
  %v10654 = vpop.f32.mrb[0].mxu0
  %v10655 = vpop.f32.mrb[0].mxu0
  %10656 = vmatprep.mubr.f32.mxu0 0.0
  %10657 = vmatmul.mubr.f32.gmra.mrb[0].mxu0 %v6700
  %v10658 = vpop.f32.mrb[0].mxu0
  %v10659 = vpop.f32.mrb[0].mxu0
  %10660 = vmatprep.mubr.f32.mxu0 0.0
  %10661 = vmatmul.mubr.f32.gmra.mrb[0].mxu0 %v6702
  %v10662 = vpop.f32.mrb[0].mxu0
  %v10663 = vpop.f32.mrb[0].mxu0
  %10664 = vmatprep.mubr.f32.mxu0 0.0
  %10665 = vmatmul.mubr.f32.gmra.mrb[0].mxu0 %v6704
  %v10666 = vpop.f32.mrb[0].mxu0
  %v10667 = vpop.f32.mrb[0].mxu0
  %10668 = vmatprep.mubr.f32.mxu0 0.0
  %10669 = vmatmul.mubr.f32.gmra.mrb[0].mxu0 %v6706
  %v10670 = vpop.f32.mrb[0].mxu0
  %v10671 = vpop.f32.mrb[0].mxu0
  %10672 = vmatprep.mubr.f32.mxu0 0.0
  %10673 = vmatmul.mubr.f32.gmra.mrb[0].mxu0 %v6708
  %v10674 = vpop.f32.mrb[0].mxu0
  %v10675 = vpop.f32.mrb[0].mxu0
  %10676 = vmatprep.mubr.f32.mxu0 0.0
  %10677 = vmatmul.mubr.f32.gmra.mrb[0].mxu0 %v6710
  %v10678 = vpop.f32.mrb[0].mxu0
  %v10679 = vpop.f32.mrb[0].mxu0
  %10680 = vmatprep.mubr.f32.mxu0 0.0
  %10681 = vmatmul.mubr.f32.gmra.mrb[0].mxu0 %v6712
  %v10682 = vpop.f32.mrb[0].mxu0
  %v10683 = vpop.f32.mrb[0].mxu0
  %10684 = vmatprep.mubr.f32.mxu0 0.0
  %10685 = vmatmul.mubr.f32.gmra.mrb[0].mxu0 %v6714
  %v10686 = vpop.f32.mrb[0].mxu0
  %v10687 = vpop.f32.mrb[0].mxu0
  %10688 = vmatprep.mubr.f32.mxu0 0.0
  %10689 = vmatmul.mubr.f32.gmra.mrb[0].mxu0 %v6716
  %v10690 = vpop.f32.mrb[0].mxu0
  %v10691 = vpop.f32.mrb[0].mxu0
  %10692 = vmatprep.mubr.f32.mxu0 0.0
  %10693 = vmatmul.mubr.f32.gmra.mrb[0].mxu0 %v6718
  %v10694 = vpop.f32.mrb[0].mxu0
  %v10695 = vpop.f32.mrb[0].mxu0
  %10696 = vmatprep.mubr.f32.mxu0 0.0
  %10697 = vmatmul.mubr.f32.gmra.mrb[0].mxu0 %v6720
  %v10698 = vpop.f32.mrb[0].mxu0
  %v10699 = vpop.f32.mrb[0].mxu0
  %10700 = vmatprep.mubr.f32.mxu0 0.0
  %10701 = vmatmul.mubr.f32.gmra.mrb[0].mxu0 %v6722
  %v10702 = vpop.f32.mrb[0].mxu0
  %v10703 = vpop.f32.mrb[0].mxu0
  %10704 = vmatprep.mubr.f32.mxu0 0.0
  %10705 = vmatmul.mubr.f32.gmra.mrb[0].mxu0 %v6724
  %v10706 = vpop.f32.mrb[0].mxu0
  %v10707 = vpop.f32.mrb[0].mxu0
  %10708 = vmatprep.mubr.f32.mxu0 0.0
  %10709 = vmatmul.mubr.f32.gmra.mrb[0].mxu0 %v6726
  %v10710 = vpop.f32.mrb[0].mxu0
  %v10711 = vpop.f32.mrb[0].mxu0
  %10712 = vmatprep.mubr.f32.mxu0 0.0
  %10713 = vmatmul.mubr.f32.gmra.mrb[0].mxu0 %v6728
  %v10714 = vpop.f32.mrb[0].mxu0
  %v10715 = vpop.f32.mrb[0].mxu0
  %10716 = vmatprep.mubr.f32.mxu0 0.0
  %10717 = vmatmul.mubr.f32.gmra.mrb[0].mxu0 %v6730
  %v10718 = vpop.f32.mrb[0].mxu0
  %v10719 = vpop.f32.mrb[0].mxu0
  %10720 = vmatprep.mubr.f32.mxu0 0.0
  %10721 = vmatmul.mubr.f32.gmra.mrb[0].mxu0 %v6732
  %v10722 = vpop.f32.mrb[0].mxu0
  %v10723 = vpop.f32.mrb[0].mxu0
  %10724 = vmatprep.mubr.f32.mxu0 0.0
  %10725 = vmatmul.mubr.f32.gmra.mrb[0].mxu0 %v6734
  %v10726 = vpop.f32.mrb[0].mxu0
  %v10727 = vpop.f32.mrb[0].mxu0
  %10728 = vmatprep.mubr.f32.mxu0 0.0
  %10729 = vmatmul.mubr.f32.gmra.mrb[0].mxu0 %v6736
  %v10730 = vpop.f32.mrb[0].mxu0
  %v10731 = vpop.f32.mrb[0].mxu0
  %10732 = vmatprep.mubr.f32.mxu0 0.0
  %10733 = vmatmul.mubr.f32.gmra.mrb[0].mxu0 %v6738
  %v10734 = vpop.f32.mrb[0].mxu0
  %v10735 = vpop.f32.mrb[0].mxu0
  %10736 = vdwg.mxu0
  %v10737 = vmax.f32 %v8089, %v10163
  %v10738 = vmax.f32 %v8091, %v10165
  %v10739 = vmax.f32 %v8095, %v10169
  %v10740 = vmax.f32 %v8097, %v10171
  %v10741 = vmax.f32 %v8101, %v10175
  %v10742 = vmax.f32 %v8103, %v10177
  %v10743 = vmax.f32 %v8107, %v10181
  %v10744 = vmax.f32 %v8109, %v10183
  %v10745 = vmax.f32 %v8129, %v10203
  %v10746 = vmax.f32 %v8131, %v10205
  %v10747 = vmax.f32 %v8135, %v10209
  %v10748 = vmax.f32 %v8137, %v10211
  %v10749 = vmax.f32 %v8141, %v10215
  %v10750 = vmax.f32 %v8143, %v10217
  %v10751 = vmax.f32 %v8147, %v10221
  %v10752 = vmax.f32 %v8149, %v10223
  %v10753 = vmax.f32 %v8169, %v10243
  %v10754 = vmax.f32 %v8171, %v10245
  %v10755 = vmax.f32 %v8175, %v10249
  %v10756 = vmax.f32 %v8177, %v10251
  %v10757 = vmax.f32 %v8181, %v10255
  %v10758 = vmax.f32 %v8183, %v10257
  %v10759 = vmax.f32 %v8187, %v10261
  %v10760 = vmax.f32 %v8189, %v10263
  %v10761 = vmax.f32 %v8209, %v10283
  %v10762 = vmax.f32 %v8211, %v10285
  %v10763 = vmax.f32 %v8215, %v10289
  %v10764 = vmax.f32 %v8217, %v10291
  %v10765 = vmax.f32 %v8221, %v10295
  %v10766 = vmax.f32 %v8223, %v10297
  %v10767 = vmax.f32 %v8227, %v10301
  %v10768 = vmax.f32 %v8229, %v10303
  %v10769 = vmax.f32 %v8249, %v10323
  %v10770 = vmax.f32 %v8251, %v10325
  %v10771 = vmax.f32 %v8255, %v10329
  %v10772 = vmax.f32 %v8257, %v10331
  %v10773 = vmax.f32 %v8261, %v10335
  %v10774 = vmax.f32 %v8263, %v10337
  %v10775 = vmax.f32 %v8267, %v10341
  %v10776 = vmax.f32 %v8269, %v10343
  %v10777 = vmax.f32 %v8289, %v10363
  %v10778 = vmax.f32 %v8291, %v10365
  %v10779 = vmax.f32 %v8295, %v10369
  %v10780 = vmax.f32 %v8297, %v10371
  %v10781 = vmax.f32 %v8301, %v10375
  %v10782 = vmax.f32 %v8303, %v10377
  %v10783 = vmax.f32 %v8307, %v10381
  %v10784 = vmax.f32 %v8309, %v10383
  %v10785 = vmax.f32 %v8329, %v10403
  %v10786 = vmax.f32 %v8331, %v10405
  %v10787 = vmax.f32 %v8335, %v10409
  %v10788 = vmax.f32 %v8337, %v10411
  %v10789 = vmax.f32 %v8341, %v10415
  %v10790 = vmax.f32 %v8343, %v10417
  %v10791 = vmax.f32 %v8347, %v10421
  %v10792 = vmax.f32 %v8349, %v10423
  %v10793 = vmax.f32 %v8369, %v10443
  %v10794 = vmax.f32 %v8371, %v10445
  %v10795 = vmax.f32 %v8375, %v10449
  %v10796 = vmax.f32 %v8377, %v10451
  %v10797 = vmax.f32 %v8381, %v10455
  %v10798 = vmax.f32 %v8383, %v10457
  %v10799 = vmax.f32 %v8387, %v10461
  %v10800 = vmax.f32 %v8389, %v10463
  %v10801 = vmax.f32 %v8409, %v10483
  %v10802 = vmax.f32 %v8411, %v10485
  %v10803 = vmax.f32 %v8415, %v10489
  %v10804 = vmax.f32 %v8417, %v10491
  %v10805 = vmax.f32 %v8421, %v10495
  %v10806 = vmax.f32 %v8423, %v10497
  %v10807 = vmax.f32 %v8427, %v10501
  %v10808 = vmax.f32 %v8429, %v10503
  %v10809 = vmax.f32 %v8449, %v10523
  %v10810 = vmax.f32 %v8451, %v10525
  %v10811 = vmax.f32 %v8455, %v10529
  %v10812 = vmax.f32 %v8457, %v10531
  %v10813 = vmax.f32 %v8461, %v10535
  %v10814 = vmax.f32 %v8463, %v10537
  %v10815 = vmax.f32 %v8467, %v10541
  %v10816 = vmax.f32 %v8469, %v10543
  %v10817 = vmax.f32 %v8489, %v10563
  %v10818 = vmax.f32 %v8491, %v10565
  %v10819 = vmax.f32 %v8495, %v10569
  %v10820 = vmax.f32 %v8497, %v10571
  %v10821 = vmax.f32 %v8501, %v10575
  %v10822 = vmax.f32 %v8503, %v10577
  %v10823 = vmax.f32 %v8507, %v10581
  %v10824 = vmax.f32 %v8509, %v10583
  %v10825 = vmax.f32 %v8529, %v10603
  %v10826 = vmax.f32 %v8531, %v10605
  %v10827 = vmax.f32 %v8535, %v10609
  %v10828 = vmax.f32 %v8537, %v10611
  %v10829 = vmax.f32 %v8541, %v10615
  %v10830 = vmax.f32 %v8543, %v10617
  %v10831 = vmax.f32 %v8547, %v10621
  %v10832 = vmax.f32 %v8549, %v10623
  %v10833 = vmax.f32 %v10737, %v10745
  %v10834 = vmax.f32 %v10738, %v10746
  %v10835 = vmax.f32 %v10739, %v10747
  %v10836 = vmax.f32 %v10740, %v10748
  %v10837 = vmax.f32 %v10741, %v10749
  %v10838 = vmax.f32 %v10742, %v10750
  %v10839 = vmax.f32 %v10743, %v10751
  %v10840 = vmax.f32 %v10744, %v10752
  %v10841 = vmax.f32 %v10753, %v10761
  %v10842 = vmax.f32 %v10754, %v10762
  %v10843 = vmax.f32 %v10755, %v10763
  %v10844 = vmax.f32 %v10756, %v10764
  %v10845 = vmax.f32 %v10757, %v10765
  %v10846 = vmax.f32 %v10758, %v10766
  %v10847 = vmax.f32 %v10759, %v10767
  %v10848 = vmax.f32 %v10760, %v10768
  %v10849 = vmax.f32 %v10769, %v10777
  %v10850 = vmax.f32 %v10770, %v10778
  %v10851 = vmax.f32 %v10771, %v10779
  %v10852 = vmax.f32 %v10772, %v10780
  %v10853 = vmax.f32 %v10773, %v10781
  %v10854 = vmax.f32 %v10774, %v10782
  %v10855 = vmax.f32 %v10775, %v10783
  %v10856 = vmax.f32 %v10776, %v10784
  %v10857 = vmax.f32 %v10785, %v10793
  %v10858 = vmax.f32 %v10786, %v10794
  %v10859 = vmax.f32 %v10787, %v10795
  %v10860 = vmax.f32 %v10788, %v10796
  %v10861 = vmax.f32 %v10789, %v10797
  %v10862 = vmax.f32 %v10790, %v10798
  %v10863 = vmax.f32 %v10791, %v10799
  %v10864 = vmax.f32 %v10792, %v10800
  %v10865 = vmax.f32 %v10801, %v10809
  %v10866 = vmax.f32 %v10802, %v10810
  %v10867 = vmax.f32 %v10803, %v10811
  %v10868 = vmax.f32 %v10804, %v10812
  %v10869 = vmax.f32 %v10805, %v10813
  %v10870 = vmax.f32 %v10806, %v10814
  %v10871 = vmax.f32 %v10807, %v10815
  %v10872 = vmax.f32 %v10808, %v10816
  %v10873 = vmax.f32 %v10817, %v10825
  %v10874 = vmax.f32 %v10818, %v10826
  %v10875 = vmax.f32 %v10819, %v10827
  %v10876 = vmax.f32 %v10820, %v10828
  %v10877 = vmax.f32 %v10821, %v10829
  %v10878 = vmax.f32 %v10822, %v10830
  %v10879 = vmax.f32 %v10823, %v10831
  %v10880 = vmax.f32 %v10824, %v10832
  %v10881 = vld [vmem:[%s4] sm:$0x3]
  %v10883 = vlaneseq
  %v10884 = vshrl.u32 %v10883, 7
  %v10885 = vsub.s32 0, %v10884
  %v10886 = vrot.slane %v10881, %v10885
  %v10887 = vlaneseq
  %v10888 = vshrl.u32 %v10887, 7
  %v10889 = vsub.s32 1, %v10888
  %v10890 = vrot.slane %v10881, %v10889
  %v10893 = vadd.f32 %v10833, %v10886
  %v10894 = vadd.f32 %v10834, %v10890
  %v10895 = vadd.f32 %v10835, %v10886
  %v10896 = vadd.f32 %v10836, %v10890
  %v10897 = vadd.f32 %v10837, %v10886
  %v10898 = vadd.f32 %v10838, %v10890
  %v10899 = vadd.f32 %v10839, %v10886
  %v10900 = vadd.f32 %v10840, %v10890
  %v10901 = vadd.f32 %v10841, %v10886
  %v10902 = vadd.f32 %v10842, %v10890
  %v10903 = vadd.f32 %v10843, %v10886
  %v10904 = vadd.f32 %v10844, %v10890
  %v10905 = vadd.f32 %v10845, %v10886
  %v10906 = vadd.f32 %v10846, %v10890
  %v10907 = vadd.f32 %v10847, %v10886
  %v10908 = vadd.f32 %v10848, %v10890
  %v10909 = vadd.f32 %v10849, %v10886
  %v10910 = vadd.f32 %v10850, %v10890
  %v10911 = vadd.f32 %v10851, %v10886
  %v10912 = vadd.f32 %v10852, %v10890
  %v10913 = vadd.f32 %v10853, %v10886
  %v10914 = vadd.f32 %v10854, %v10890
  %v10915 = vadd.f32 %v10855, %v10886
  %v10916 = vadd.f32 %v10856, %v10890
  %v10917 = vadd.f32 %v10857, %v10886
  %v10918 = vadd.f32 %v10858, %v10890
  %v10919 = vadd.f32 %v10859, %v10886
  %v10920 = vadd.f32 %v10860, %v10890
  %v10921 = vadd.f32 %v10861, %v10886
  %v10922 = vadd.f32 %v10862, %v10890
  %v10923 = vadd.f32 %v10863, %v10886
  %v10924 = vadd.f32 %v10864, %v10890
  %v10925 = vadd.f32 %v10865, %v10886
  %v10926 = vadd.f32 %v10866, %v10890
  %v10927 = vadd.f32 %v10867, %v10886
  %v10928 = vadd.f32 %v10868, %v10890
  %v10929 = vadd.f32 %v10869, %v10886
  %v10930 = vadd.f32 %v10870, %v10890
  %v10931 = vadd.f32 %v10871, %v10886
  %v10932 = vadd.f32 %v10872, %v10890
  %v10933 = vadd.f32 %v10873, %v10886
  %v10934 = vadd.f32 %v10874, %v10890
  %v10935 = vadd.f32 %v10875, %v10886
  %v10936 = vadd.f32 %v10876, %v10890
  %v10937 = vadd.f32 %v10877, %v10886
  %v10938 = vadd.f32 %v10878, %v10890
  %v10939 = vadd.f32 %v10879, %v10886
  %v10940 = vadd.f32 %v10880, %v10890
  %v10941 = vmax.f32 %v10893, 0.0
  %v10942 = vmax.f32 %v10894, 0.0
  %v10943 = vmax.f32 %v10895, 0.0
  %v10944 = vmax.f32 %v10896, 0.0
  %v10945 = vmax.f32 %v10897, 0.0
  %v10946 = vmax.f32 %v10898, 0.0
  %v10947 = vmax.f32 %v10899, 0.0
  %v10948 = vmax.f32 %v10900, 0.0
  %v10949 = vmax.f32 %v10901, 0.0
  %v10950 = vmax.f32 %v10902, 0.0
  %v10951 = vmax.f32 %v10903, 0.0
  %v10952 = vmax.f32 %v10904, 0.0
  %v10953 = vmax.f32 %v10905, 0.0
  %v10954 = vmax.f32 %v10906, 0.0
  %v10955 = vmax.f32 %v10907, 0.0
  %v10956 = vmax.f32 %v10908, 0.0
  %v10957 = vmax.f32 %v10909, 0.0
  %v10958 = vmax.f32 %v10910, 0.0
  %v10959 = vmax.f32 %v10911, 0.0
  %v10960 = vmax.f32 %v10912, 0.0
  %v10961 = vmax.f32 %v10913, 0.0
  %v10962 = vmax.f32 %v10914, 0.0
  %v10963 = vmax.f32 %v10915, 0.0
  %v10964 = vmax.f32 %v10916, 0.0
  %v10965 = vmax.f32 %v10917, 0.0
  %v10966 = vmax.f32 %v10918, 0.0
  %v10967 = vmax.f32 %v10919, 0.0
  %v10968 = vmax.f32 %v10920, 0.0
  %v10969 = vmax.f32 %v10921, 0.0
  %v10970 = vmax.f32 %v10922, 0.0
  %v10971 = vmax.f32 %v10923, 0.0
  %v10972 = vmax.f32 %v10924, 0.0
  %v10973 = vmax.f32 %v10925, 0.0
  %v10974 = vmax.f32 %v10926, 0.0
  %v10975 = vmax.f32 %v10927, 0.0
  %v10976 = vmax.f32 %v10928, 0.0
  %v10977 = vmax.f32 %v10929, 0.0
  %v10978 = vmax.f32 %v10930, 0.0
  %v10979 = vmax.f32 %v10931, 0.0
  %v10980 = vmax.f32 %v10932, 0.0
  %v10981 = vmax.f32 %v10933, 0.0
  %v10982 = vmax.f32 %v10934, 0.0
  %v10983 = vmax.f32 %v10935, 0.0
  %v10984 = vmax.f32 %v10936, 0.0
  %v10985 = vmax.f32 %v10937, 0.0
  %v10986 = vmax.f32 %v10938, 0.0
  %v10987 = vmax.f32 %v10939, 0.0
  %v10988 = vmax.f32 %v10940, 0.0
  %10997 = vrot.lane.b32.xlu0 %v10949, 32
  %v10998 = vpop.permute.xlu0 %10997
  %10999 = vrot.lane.b32.xlu0 %v10950, 32
  %v11000 = vpop.permute.xlu0 %10999
  %11001 = vrot.lane.b32.xlu0 %v10951, 32
  %v11002 = vpop.permute.xlu0 %11001
  %11003 = vrot.lane.b32.xlu0 %v10952, 32
  %v11004 = vpop.permute.xlu0 %11003
  %11005 = vrot.lane.b32.xlu0 %v10953, 32
  %v11006 = vpop.permute.xlu0 %11005
  %11007 = vrot.lane.b32.xlu0 %v10954, 32
  %v11008 = vpop.permute.xlu0 %11007
  %11009 = vrot.lane.b32.xlu0 %v10955, 32
  %v11010 = vpop.permute.xlu0 %11009
  %11011 = vrot.lane.b32.xlu0 %v10956, 32
  %v11012 = vpop.permute.xlu0 %11011
  %vm11013 = vcmask 261120
  %v11014 = vsel %vm11013, %v10998, %v11000
  %v11015 = vsel %vm11013, %v11002, %v11004
  %v11016 = vsel %vm11013, %v11006, %v11008
  %v11017 = vsel %vm11013, %v11010, %v11012
  %11034 = vrot.lane.b32.xlu0 %v10957, 64
  %v11035 = vpop.permute.xlu0 %11034
  %11036 = vrot.lane.b32.xlu0 %v10958, 64
  %v11037 = vpop.permute.xlu0 %11036
  %11038 = vrot.lane.b32.xlu0 %v10959, 64
  %v11039 = vpop.permute.xlu0 %11038
  %11040 = vrot.lane.b32.xlu0 %v10960, 64
  %v11041 = vpop.permute.xlu0 %11040
  %11042 = vrot.lane.b32.xlu0 %v10961, 64
  %v11043 = vpop.permute.xlu0 %11042
  %11044 = vrot.lane.b32.xlu0 %v10962, 64
  %v11045 = vpop.permute.xlu0 %11044
  %11046 = vrot.lane.b32.xlu0 %v10963, 64
  %v11047 = vpop.permute.xlu0 %11046
  %11048 = vrot.lane.b32.xlu0 %v10964, 64
  %v11049 = vpop.permute.xlu0 %11048
  %vm11050 = vcmask 523264
  %v11051 = vsel %vm11050, %v11035, %v11037
  %v11052 = vsel %vm11050, %v11039, %v11041
  %v11053 = vsel %vm11050, %v11043, %v11045
  %v11054 = vsel %vm11050, %v11047, %v11049
  %11071 = vrot.lane.b32.xlu0 %v10965, 96
  %v11072 = vpop.permute.xlu0 %11071
  %11073 = vrot.lane.b32.xlu0 %v10966, 96
  %v11074 = vpop.permute.xlu0 %11073
  %11075 = vrot.lane.b32.xlu0 %v10967, 96
  %v11076 = vpop.permute.xlu0 %11075
  %11077 = vrot.lane.b32.xlu0 %v10968, 96
  %v11078 = vpop.permute.xlu0 %11077
  %11079 = vrot.lane.b32.xlu0 %v10969, 96
  %v11080 = vpop.permute.xlu0 %11079
  %11081 = vrot.lane.b32.xlu0 %v10970, 96
  %v11082 = vpop.permute.xlu0 %11081
  %11083 = vrot.lane.b32.xlu0 %v10971, 96
  %v11084 = vpop.permute.xlu0 %11083
  %11085 = vrot.lane.b32.xlu0 %v10972, 96
  %v11086 = vpop.permute.xlu0 %11085
  %vm11087 = vcmask 785408
  %v11088 = vsel %vm11087, %v11072, %v11074
  %v11089 = vsel %vm11087, %v11076, %v11078
  %v11090 = vsel %vm11087, %v11080, %v11082
  %v11091 = vsel %vm11087, %v11084, %v11086
  %11108 = vrot.lane.b32.xlu0 %v10981, 32
  %v11109 = vpop.permute.xlu0 %11108
  %11110 = vrot.lane.b32.xlu0 %v10982, 32
  %v11111 = vpop.permute.xlu0 %11110
  %11112 = vrot.lane.b32.xlu0 %v10983, 32
  %v11113 = vpop.permute.xlu0 %11112
  %11114 = vrot.lane.b32.xlu0 %v10984, 32
  %v11115 = vpop.permute.xlu0 %11114
  %11116 = vrot.lane.b32.xlu0 %v10985, 32
  %v11117 = vpop.permute.xlu0 %11116
  %11118 = vrot.lane.b32.xlu0 %v10986, 32
  %v11119 = vpop.permute.xlu0 %11118
  %11120 = vrot.lane.b32.xlu0 %v10987, 32
  %v11121 = vpop.permute.xlu0 %11120
  %11122 = vrot.lane.b32.xlu0 %v10988, 32
  %v11123 = vpop.permute.xlu0 %11122
  %v11124 = vsel %vm11013, %v11109, %v11111
  %v11125 = vsel %vm11013, %v11113, %v11115
  %v11126 = vsel %vm11013, %v11117, %v11119
  %v11127 = vsel %vm11013, %v11121, %v11123
  %v11132 = vsel %vm11013, %v10942, %v10998
  %v11133 = vsel %vm11013, %v10944, %v11002
  %v11134 = vsel %vm11013, %v10946, %v11006
  %v11135 = vsel %vm11013, %v10948, %v11010
  %v11136 = vsel %vm11050, %v11014, %v11035
  %v11137 = vsel %vm11050, %v11015, %v11039
  %v11138 = vsel %vm11050, %v11016, %v11043
  %v11139 = vsel %vm11050, %v11017, %v11047
  %v11140 = vsel %vm11087, %v11051, %v11072
  %v11141 = vsel %vm11087, %v11052, %v11076
  %v11142 = vsel %vm11087, %v11053, %v11080
  %v11143 = vsel %vm11087, %v11054, %v11084
  %v11144 = vsel %vm11013, %v10974, %v11109
  %v11145 = vsel %vm11013, %v10976, %v11113
  %v11146 = vsel %vm11013, %v10978, %v11117
  %v11147 = vsel %vm11013, %v10980, %v11121
  %v11148 = vld [vmem:[%s5] sm:$0xff]
  %v11149 = vld [vmem:[%s5 + $0x8] sm:$0xff]
  %v11150 = vld [vmem:[%s5 + $0x10] sm:$0xff]
  %v11151 = vld [vmem:[%s5 + $0x18] sm:$0xff]
  %v11152 = vld [vmem:[%s5 + $0x20] sm:$0xff]
  %v11153 = vld [vmem:[%s5 + $0x28] sm:$0xff]
  %v11154 = vld [vmem:[%s5 + $0x30] sm:$0xff]
  %v11155 = vld [vmem:[%s5 + $0x38] sm:$0xff]
  %v11156 = vld [vmem:[%s5 + $0x40] sm:$0xff]
  %v11157 = vld [vmem:[%s5 + $0x48] sm:$0xff]
  %v11158 = vld [vmem:[%s5 + $0x50] sm:$0xff]
  %v11159 = vld [vmem:[%s5 + $0x58] sm:$0xff]
  %v11160 = vld [vmem:[%s5 + $0x60] sm:$0xff]
  %v11161 = vld [vmem:[%s5 + $0x68] sm:$0xff]
  %v11162 = vld [vmem:[%s5 + $0x70] sm:$0xff]
  %v11163 = vld [vmem:[%s5 + $0x78] sm:$0xff]
  %v11164 = vld [vmem:[%s5 + $0x80] sm:$0xff]
  %v11165 = vld [vmem:[%s5 + $0x88] sm:$0xff]
  %v11166 = vld [vmem:[%s5 + $0x90] sm:$0xff]
  %v11167 = vld [vmem:[%s5 + $0x98] sm:$0xff]
  %v11168 = vld [vmem:[%s5 + $0xa0] sm:$0xff]
  %v11169 = vld [vmem:[%s5 + $0xa8] sm:$0xff]
  %v11170 = vld [vmem:[%s5 + $0xb0] sm:$0xff]
  %v11171 = vld [vmem:[%s5 + $0xb8] sm:$0xff]
  %v11172 = vld [vmem:[%s5 + $0xc0] sm:$0xff]
  %v11173 = vld [vmem:[%s5 + $0xc8] sm:$0xff]
  %v11174 = vld [vmem:[%s5 + $0xd0] sm:$0xff]
  %v11175 = vld [vmem:[%s5 + $0xd8] sm:$0xff]
  %v11176 = vld [vmem:[%s5 + $0xe0] sm:$0xff]
  %v11177 = vld [vmem:[%s5 + $0xe8] sm:$0xff]
  %v11178 = vld [vmem:[%s5 + $0xf0] sm:$0xff]
  %v11179 = vld [vmem:[%s5 + $0xf8] sm:$0xff]
  %v11180 = vld [vmem:[%s5 + $0x100] sm:$0xff]
  %v11181 = vld [vmem:[%s5 + $0x108] sm:$0xff]
  %v11182 = vld [vmem:[%s5 + $0x110] sm:$0xff]
  %v11183 = vld [vmem:[%s5 + $0x118] sm:$0xff]
  %v11184 = vld [vmem:[%s5 + $0x120] sm:$0xff]
  %v11185 = vld [vmem:[%s5 + $0x128] sm:$0xff]
  %v11186 = vld [vmem:[%s5 + $0x130] sm:$0xff]
  %v11187 = vld [vmem:[%s5 + $0x138] sm:$0xff]
  %v11188 = vld [vmem:[%s5 + $0x140] sm:$0xff]
  %v11189 = vld [vmem:[%s5 + $0x148] sm:$0xff]
  %v11190 = vld [vmem:[%s5 + $0x150] sm:$0xff]
  %v11191 = vld [vmem:[%s5 + $0x158] sm:$0xff]
  %v11192 = vld [vmem:[%s5 + $0x160] sm:$0xff]
  %v11193 = vld [vmem:[%s5 + $0x168] sm:$0xff]
  %v11194 = vld [vmem:[%s5 + $0x170] sm:$0xff]
  %v11195 = vld [vmem:[%s5 + $0x178] sm:$0xff]
  %v11196 = vld [vmem:[%s5 + $0x180] sm:$0xff]
  %v11197 = vld [vmem:[%s5 + $0x188] sm:$0xff]
  %v11198 = vld [vmem:[%s5 + $0x190] sm:$0xff]
  %v11199 = vld [vmem:[%s5 + $0x198] sm:$0xff]
  %v11200 = vld [vmem:[%s5 + $0x1a0] sm:$0xff]
  %v11201 = vld [vmem:[%s5 + $0x1a8] sm:$0xff]
  %v11202 = vld [vmem:[%s5 + $0x1b0] sm:$0xff]
  %v11203 = vld [vmem:[%s5 + $0x1b8] sm:$0xff]
  %v11204 = vld [vmem:[%s5 + $0x1c0] sm:$0xff]
  %v11205 = vld [vmem:[%s5 + $0x1c8] sm:$0xff]
  %v11206 = vld [vmem:[%s5 + $0x1d0] sm:$0xff]
  %v11207 = vld [vmem:[%s5 + $0x1d8] sm:$0xff]
  %v11208 = vld [vmem:[%s5 + $0x1e0] sm:$0xff]
  %v11209 = vld [vmem:[%s5 + $0x1e8] sm:$0xff]
  %v11210 = vld [vmem:[%s5 + $0x1f0] sm:$0xff]
  %v11211 = vld [vmem:[%s5 + $0x1f8] sm:$0xff]
  %v11212 = vld [vmem:[%s5 + $0x200] sm:$0xff]
  %v11213 = vld [vmem:[%s5 + $0x208] sm:$0xff]
  %v11214 = vld [vmem:[%s5 + $0x210] sm:$0xff]
  %v11215 = vld [vmem:[%s5 + $0x218] sm:$0xff]
  %v11216 = vld [vmem:[%s5 + $0x220] sm:$0xff]
  %v11217 = vld [vmem:[%s5 + $0x228] sm:$0xff]
  %v11218 = vld [vmem:[%s5 + $0x230] sm:$0xff]
  %v11219 = vld [vmem:[%s5 + $0x238] sm:$0xff]
  %v11220 = vld [vmem:[%s5 + $0x240] sm:$0xff]
  %v11221 = vld [vmem:[%s5 + $0x248] sm:$0xff]
  %v11222 = vld [vmem:[%s5 + $0x250] sm:$0xff]
  %v11223 = vld [vmem:[%s5 + $0x258] sm:$0xff]
  %v11224 = vld [vmem:[%s5 + $0x260] sm:$0xff]
  %v11225 = vld [vmem:[%s5 + $0x268] sm:$0xff]
  %v11226 = vld [vmem:[%s5 + $0x270] sm:$0xff]
  %v11227 = vld [vmem:[%s5 + $0x278] sm:$0xff]
  %v11228 = vld [vmem:[%s5 + $0x280] sm:$0xff]
  %v11229 = vld [vmem:[%s5 + $0x288] sm:$0xff]
  %v11230 = vld [vmem:[%s5 + $0x290] sm:$0xff]
  %v11231 = vld [vmem:[%s5 + $0x298] sm:$0xff]
  %v11232 = vld [vmem:[%s5 + $0x2a0] sm:$0xff]
  %v11233 = vld [vmem:[%s5 + $0x2a8] sm:$0xff]
  %v11234 = vld [vmem:[%s5 + $0x2b0] sm:$0xff]
  %v11235 = vld [vmem:[%s5 + $0x2b8] sm:$0xff]
  %v11236 = vld [vmem:[%s5 + $0x2c0] sm:$0xff]
  %v11237 = vld [vmem:[%s5 + $0x2c8] sm:$0xff]
  %v11238 = vld [vmem:[%s5 + $0x2d0] sm:$0xff]
  %v11239 = vld [vmem:[%s5 + $0x2d8] sm:$0xff]
  %v11240 = vld [vmem:[%s5 + $0x2e0] sm:$0xff]
  %v11241 = vld [vmem:[%s5 + $0x2e8] sm:$0xff]
  %v11242 = vld [vmem:[%s5 + $0x2f0] sm:$0xff]
  %v11243 = vld [vmem:[%s5 + $0x2f8] sm:$0xff]
  %v11244 = vld [vmem:[%s5 + $0x300] sm:$0xff]
  %v11245 = vld [vmem:[%s5 + $0x308] sm:$0xff]
  %v11246 = vld [vmem:[%s5 + $0x310] sm:$0xff]
  %v11247 = vld [vmem:[%s5 + $0x318] sm:$0xff]
  %v11248 = vld [vmem:[%s5 + $0x320] sm:$0xff]
  %v11249 = vld [vmem:[%s5 + $0x328] sm:$0xff]
  %v11250 = vld [vmem:[%s5 + $0x330] sm:$0xff]
  %v11251 = vld [vmem:[%s5 + $0x338] sm:$0xff]
  %v11252 = vld [vmem:[%s5 + $0x340] sm:$0xff]
  %v11253 = vld [vmem:[%s5 + $0x348] sm:$0xff]
  %v11254 = vld [vmem:[%s5 + $0x350] sm:$0xff]
  %v11255 = vld [vmem:[%s5 + $0x358] sm:$0xff]
  %v11256 = vld [vmem:[%s5 + $0x360] sm:$0xff]
  %v11257 = vld [vmem:[%s5 + $0x368] sm:$0xff]
  %v11258 = vld [vmem:[%s5 + $0x370] sm:$0xff]
  %v11259 = vld [vmem:[%s5 + $0x378] sm:$0xff]
  %v11260 = vld [vmem:[%s5 + $0x380] sm:$0xff]
  %v11261 = vld [vmem:[%s5 + $0x388] sm:$0xff]
  %v11262 = vld [vmem:[%s5 + $0x390] sm:$0xff]
  %v11263 = vld [vmem:[%s5 + $0x398] sm:$0xff]
  %v11264 = vld [vmem:[%s5 + $0x3a0] sm:$0xff]
  %v11265 = vld [vmem:[%s5 + $0x3a8] sm:$0xff]
  %v11266 = vld [vmem:[%s5 + $0x3b0] sm:$0xff]
  %v11267 = vld [vmem:[%s5 + $0x3b8] sm:$0xff]
  %v11268 = vld [vmem:[%s6] sm:$0x1]
  %v11270 = vlaneseq
  %v11271 = vshrl.u32 %v11270, 7
  %v11272 = vsub.s32 0, %v11271
  %v11273 = vrot.slane %v11268, %v11272
  %v11275 = vsel %vm11050, %v11124, 0
  %v11277 = vsel %vm11050, %v11125, 0
  %v11279 = vsel %vm11050, %v11126, 0
  %v11281 = vsel %vm11050, %v11127, 0
  %11283 = vmatprep.subr.mxu0 0.0
  %11284 = vmatpush1.msra.mxu0 %v11148
  %11285 = vmatprep.subr.mxu0 0.0
  %11286 = vmatpush1.msra.mxu0 %v11149
  %11287 = vmatprep.subr.mxu0 0.0
  %11288 = vmatpush1.msra.mxu0 %v11150
  %11289 = vmatprep.subr.mxu0 0.0
  %11290 = vmatpush1.msra.mxu0 %v11151
  %11291 = vmatprep.subr.mxu0 0.0
  %11292 = vmatpush1.msra.mxu0 %v11152
  %11293 = vmatprep.subr.mxu0 0.0
  %11294 = vmatpush1.msra.mxu0 %v11153
  %11295 = vmatprep.subr.mxu0 0.0
  %11296 = vmatpush1.msra.mxu0 %v11154
  %11297 = vmatprep.subr.mxu0 0.0
  %11298 = vmatpush1.msra.mxu0 %v11155
  %11299 = vmatprep.subr.mxu0 0.0
  %11300 = vmatpush1.msra.mxu0 %v11156
  %11301 = vmatprep.subr.mxu0 0.0
  %11302 = vmatpush1.msra.mxu0 %v11157
  %11303 = vmatprep.subr.mxu0 0.0
  %11304 = vmatpush1.msra.mxu0 %v11158
  %11305 = vmatprep.subr.mxu0 0.0
  %11306 = vmatpush1.msra.mxu0 %v11159
  %11307 = vmatprep.subr.mxu0 0.0
  %11308 = vmatpush1.msra.mxu0 %v11160
  %11309 = vmatprep.subr.mxu0 0.0
  %11310 = vmatpush1.msra.mxu0 %v11161
  %11311 = vmatprep.subr.mxu0 0.0
  %11312 = vmatpush1.msra.mxu0 %v11162
  %11313 = vmatprep.subr.mxu0 0.0
  %11314 = vmatpush1.msra.mxu0 %v11163
  %11315 = vmatprep.subr.mxu0 0.0
  %11316 = vmatpush1.msra.mxu0 %v11164
  %11317 = vmatprep.subr.mxu0 0.0
  %11318 = vmatpush1.msra.mxu0 %v11165
  %11319 = vmatprep.subr.mxu0 0.0
  %11320 = vmatpush1.msra.mxu0 %v11166
  %11321 = vmatprep.subr.mxu0 0.0
  %11322 = vmatpush1.msra.mxu0 %v11167
  %11323 = vmatprep.subr.mxu0 0.0
  %11324 = vmatpush1.msra.mxu0 %v11168
  %11325 = vmatprep.subr.mxu0 0.0
  %11326 = vmatpush1.msra.mxu0 %v11169
  %11327 = vmatprep.subr.mxu0 0.0
  %11328 = vmatpush1.msra.mxu0 %v11170
  %11329 = vmatprep.subr.mxu0 0.0
  %11330 = vmatpush1.msra.mxu0 %v11171
  %11331 = vmatprep.subr.mxu0 0.0
  %11332 = vmatpush1.msra.mxu0 %v11172
  %11333 = vmatprep.subr.mxu0 0.0
  %11334 = vmatpush1.msra.mxu0 %v11173
  %11335 = vmatprep.subr.mxu0 0.0
  %11336 = vmatpush1.msra.mxu0 %v11174
  %11337 = vmatprep.subr.mxu0 0.0
  %11338 = vmatpush1.msra.mxu0 %v11175
  %11339 = vmatprep.subr.mxu0 0.0
  %11340 = vmatpush1.msra.mxu0 %v11176
  %11341 = vmatprep.subr.mxu0 0.0
  %11342 = vmatpush1.msra.mxu0 %v11177
  %11343 = vmatprep.subr.mxu0 0.0
  %11344 = vmatpush1.msra.mxu0 %v11178
  %11345 = vmatprep.subr.mxu0 0.0
  %11346 = vmatpush1.msra.mxu0 %v11179
  %11347 = vmatprep.mubr.f32.mxu0 %v11132
  %11348 = vmatmul.mubr.f32.gmra.mrb[0].mxu0 %v10941
  %v11349 = vpop.f32.mrb[0].mxu0
  %v11350 = vadd.f32 %v11273, %v11349
  %v11351 = vpop.f32.mrb[0].mxu0
  %11352 = vmatprep.mubr.f32.mxu0 %v11133
  %11353 = vmatmul.mubr.f32.gmra.mrb[0].mxu0 %v10943
  %v11354 = vpop.f32.mrb[0].mxu0
  %v11355 = vadd.f32 %v11273, %v11354
  %v11356 = vpop.f32.mrb[0].mxu0
  %11357 = vmatprep.mubr.f32.mxu0 %v11134
  %11358 = vmatmul.mubr.f32.gmra.mrb[0].mxu0 %v10945
  %v11359 = vpop.f32.mrb[0].mxu0
  %v11360 = vadd.f32 %v11273, %v11359
  %v11361 = vpop.f32.mrb[0].mxu0
  %11362 = vmatprep.mubr.f32.mxu0 %v11135
  %11363 = vmatmul.mubr.f32.gmra.mrb[0].mxu0 %v10947
  %v11364 = vpop.f32.mrb[0].mxu0
  %v11365 = vadd.f32 %v11273, %v11364
  %v11366 = vpop.f32.mrb[0].mxu0
  %11367 = vdwg.mxu0
  %11368 = vmatprep.subr.mxu0 0.0
  %11369 = vmatpush1.msra.mxu0 %v11180
  %11370 = vmatprep.subr.mxu0 0.0
  %11371 = vmatpush1.msra.mxu0 %v11181
  %11372 = vmatprep.subr.mxu0 0.0
  %11373 = vmatpush1.msra.mxu0 %v11182
  %11374 = vmatprep.subr.mxu0 0.0
  %11375 = vmatpush1.msra.mxu0 %v11183
  %11376 = vmatprep.subr.mxu0 0.0
  %11377 = vmatpush1.msra.mxu0 %v11184
  %11378 = vmatprep.subr.mxu0 0.0
  %11379 = vmatpush1.msra.mxu0 %v11185
  %11380 = vmatprep.subr.mxu0 0.0
  %11381 = vmatpush1.msra.mxu0 %v11186
  %11382 = vmatprep.subr.mxu0 0.0
  %11383 = vmatpush1.msra.mxu0 %v11187
  %11384 = vmatprep.subr.mxu0 0.0
  %11385 = vmatpush1.msra.mxu0 %v11188
  %11386 = vmatprep.subr.mxu0 0.0
  %11387 = vmatpush1.msra.mxu0 %v11189
  %11388 = vmatprep.subr.mxu0 0.0
  %11389 = vmatpush1.msra.mxu0 %v11190
  %11390 = vmatprep.subr.mxu0 0.0
  %11391 = vmatpush1.msra.mxu0 %v11191
  %11392 = vmatprep.subr.mxu0 0.0
  %11393 = vmatpush1.msra.mxu0 %v11192
  %11394 = vmatprep.subr.mxu0 0.0
  %11395 = vmatpush1.msra.mxu0 %v11193
  %11396 = vmatprep.subr.mxu0 0.0
  %11397 = vmatpush1.msra.mxu0 %v11194
  %11398 = vmatprep.subr.mxu0 0.0
  %11399 = vmatpush1.msra.mxu0 %v11195
  %11400 = vmatprep.subr.mxu0 0.0
  %11401 = vmatpush1.msra.mxu0 %v11196
  %11402 = vmatprep.subr.mxu0 0.0
  %11403 = vmatpush1.msra.mxu0 %v11197
  %11404 = vmatprep.subr.mxu0 0.0
  %11405 = vmatpush1.msra.mxu0 %v11198
  %11406 = vmatprep.subr.mxu0 0.0
  %11407 = vmatpush1.msra.mxu0 %v11199
  %11408 = vmatprep.subr.mxu0 0.0
  %11409 = vmatpush1.msra.mxu0 %v11200
  %11410 = vmatprep.subr.mxu0 0.0
  %11411 = vmatpush1.msra.mxu0 %v11201
  %11412 = vmatprep.subr.mxu0 0.0
  %11413 = vmatpush1.msra.mxu0 %v11202
  %11414 = vmatprep.subr.mxu0 0.0
  %11415 = vmatpush1.msra.mxu0 %v11203
  %11416 = vmatprep.subr.mxu0 0.0
  %11417 = vmatpush1.msra.mxu0 %v11204
  %11418 = vmatprep.subr.mxu0 0.0
  %11419 = vmatpush1.msra.mxu0 %v11205
  %11420 = vmatprep.subr.mxu0 0.0
  %11421 = vmatpush1.msra.mxu0 %v11206
  %11422 = vmatprep.subr.mxu0 0.0
  %11423 = vmatpush1.msra.mxu0 %v11207
  %11424 = vmatprep.subr.mxu0 0.0
  %11425 = vmatpush1.msra.mxu0 %v11208
  %11426 = vmatprep.subr.mxu0 0.0
  %11427 = vmatpush1.msra.mxu0 %v11209
  %11428 = vmatprep.subr.mxu0 0.0
  %11429 = vmatpush1.msra.mxu0 %v11210
  %11430 = vmatprep.subr.mxu0 0.0
  %11431 = vmatpush1.msra.mxu0 %v11211
  %11432 = vmatprep.mubr.f32.mxu0 %v11140
  %11433 = vmatmul.mubr.f32.gmra.mrb[0].mxu0 %v11136
  %v11434 = vpop.f32.mrb[0].mxu0
  %v11435 = vadd.f32 %v11350, %v11434
  %v11436 = vpop.f32.mrb[0].mxu0
  %11437 = vmatprep.mubr.f32.mxu0 %v11141
  %11438 = vmatmul.mubr.f32.gmra.mrb[0].mxu0 %v11137
  %v11439 = vpop.f32.mrb[0].mxu0
  %v11440 = vadd.f32 %v11355, %v11439
  %v11441 = vpop.f32.mrb[0].mxu0
  %11442 = vmatprep.mubr.f32.mxu0 %v11142
  %11443 = vmatmul.mubr.f32.gmra.mrb[0].mxu0 %v11138
  %v11444 = vpop.f32.mrb[0].mxu0
  %v11445 = vadd.f32 %v11360, %v11444
  %v11446 = vpop.f32.mrb[0].mxu0
  %11447 = vmatprep.mubr.f32.mxu0 %v11143
  %11448 = vmatmul.mubr.f32.gmra.mrb[0].mxu0 %v11139
  %v11449 = vpop.f32.mrb[0].mxu0
  %v11450 = vadd.f32 %v11365, %v11449
  %v11451 = vpop.f32.mrb[0].mxu0
  %11452 = vdwg.mxu0
  %11453 = vmatprep.subr.mxu0 0.0
  %11454 = vmatpush1.msra.mxu0 %v11212
  %11455 = vmatprep.subr.mxu0 0.0
  %11456 = vmatpush1.msra.mxu0 %v11213
  %11457 = vmatprep.subr.mxu0 0.0
  %11458 = vmatpush1.msra.mxu0 %v11214
  %11459 = vmatprep.subr.mxu0 0.0
  %11460 = vmatpush1.msra.mxu0 %v11215
  %11461 = vmatprep.subr.mxu0 0.0
  %11462 = vmatpush1.msra.mxu0 %v11216
  %11463 = vmatprep.subr.mxu0 0.0
  %11464 = vmatpush1.msra.mxu0 %v11217
  %11465 = vmatprep.subr.mxu0 0.0
  %11466 = vmatpush1.msra.mxu0 %v11218
  %11467 = vmatprep.subr.mxu0 0.0
  %11468 = vmatpush1.msra.mxu0 %v11219
  %11469 = vmatprep.subr.mxu0 0.0
  %11470 = vmatpush1.msra.mxu0 %v11220
  %11471 = vmatprep.subr.mxu0 0.0
  %11472 = vmatpush1.msra.mxu0 %v11221
  %11473 = vmatprep.subr.mxu0 0.0
  %11474 = vmatpush1.msra.mxu0 %v11222
  %11475 = vmatprep.subr.mxu0 0.0
  %11476 = vmatpush1.msra.mxu0 %v11223
  %11477 = vmatprep.subr.mxu0 0.0
  %11478 = vmatpush1.msra.mxu0 %v11224
  %11479 = vmatprep.subr.mxu0 0.0
  %11480 = vmatpush1.msra.mxu0 %v11225
  %11481 = vmatprep.subr.mxu0 0.0
  %11482 = vmatpush1.msra.mxu0 %v11226
  %11483 = vmatprep.subr.mxu0 0.0
  %11484 = vmatpush1.msra.mxu0 %v11227
  %11485 = vmatprep.subr.mxu0 0.0
  %11486 = vmatpush1.msra.mxu0 %v11228
  %11487 = vmatprep.subr.mxu0 0.0
  %11488 = vmatpush1.msra.mxu0 %v11229
  %11489 = vmatprep.subr.mxu0 0.0
  %11490 = vmatpush1.msra.mxu0 %v11230
  %11491 = vmatprep.subr.mxu0 0.0
  %11492 = vmatpush1.msra.mxu0 %v11231
  %11493 = vmatprep.subr.mxu0 0.0
  %11494 = vmatpush1.msra.mxu0 %v11232
  %11495 = vmatprep.subr.mxu0 0.0
  %11496 = vmatpush1.msra.mxu0 %v11233
  %11497 = vmatprep.subr.mxu0 0.0
  %11498 = vmatpush1.msra.mxu0 %v11234
  %11499 = vmatprep.subr.mxu0 0.0
  %11500 = vmatpush1.msra.mxu0 %v11235
  %11501 = vmatprep.subr.mxu0 0.0
  %11502 = vmatpush1.msra.mxu0 %v11236
  %11503 = vmatprep.subr.mxu0 0.0
  %11504 = vmatpush1.msra.mxu0 %v11237
  %11505 = vmatprep.subr.mxu0 0.0
  %11506 = vmatpush1.msra.mxu0 %v11238
  %11507 = vmatprep.subr.mxu0 0.0
  %11508 = vmatpush1.msra.mxu0 %v11239
  %11509 = vmatprep.subr.mxu0 0.0
  %11510 = vmatpush1.msra.mxu0 %v11240
  %11511 = vmatprep.subr.mxu0 0.0
  %11512 = vmatpush1.msra.mxu0 %v11241
  %11513 = vmatprep.subr.mxu0 0.0
  %11514 = vmatpush1.msra.mxu0 %v11242
  %11515 = vmatprep.subr.mxu0 0.0
  %11516 = vmatpush1.msra.mxu0 %v11243
  %11517 = vmatprep.mubr.f32.mxu0 %v10973
  %11518 = vmatmul.mubr.f32.gmra.mrb[0].mxu0 %v11088
  %v11519 = vpop.f32.mrb[0].mxu0
  %v11520 = vadd.f32 %v11435, %v11519
  %v11521 = vpop.f32.mrb[0].mxu0
  %11522 = vmatprep.mubr.f32.mxu0 %v10975
  %11523 = vmatmul.mubr.f32.gmra.mrb[0].mxu0 %v11089
  %v11524 = vpop.f32.mrb[0].mxu0
  %v11525 = vadd.f32 %v11440, %v11524
  %v11526 = vpop.f32.mrb[0].mxu0
  %11527 = vmatprep.mubr.f32.mxu0 %v10977
  %11528 = vmatmul.mubr.f32.gmra.mrb[0].mxu0 %v11090
  %v11529 = vpop.f32.mrb[0].mxu0
  %v11530 = vadd.f32 %v11445, %v11529
  %v11531 = vpop.f32.mrb[0].mxu0
  %11532 = vmatprep.mubr.f32.mxu0 %v10979
  %11533 = vmatmul.mubr.f32.gmra.mrb[0].mxu0 %v11091
  %v11534 = vpop.f32.mrb[0].mxu0
  %v11535 = vadd.f32 %v11450, %v11534
  %v11536 = vpop.f32.mrb[0].mxu0
  %11537 = vdwg.mxu0
  %11538 = vmatprep.subr.mxu0 0.0
  %11539 = vmatpush1.msra.mxu0 %v11244
  %11540 = vmatprep.subr.mxu0 0.0
  %11541 = vmatpush1.msra.mxu0 %v11245
  %11542 = vmatprep.subr.mxu0 0.0
  %11543 = vmatpush1.msra.mxu0 %v11246
  %11544 = vmatprep.subr.mxu0 0.0
  %11545 = vmatpush1.msra.mxu0 %v11247
  %11546 = vmatprep.subr.mxu0 0.0
  %11547 = vmatpush1.msra.mxu0 %v11248
  %11548 = vmatprep.subr.mxu0 0.0
  %11549 = vmatpush1.msra.mxu0 %v11249
  %11550 = vmatprep.subr.mxu0 0.0
  %11551 = vmatpush1.msra.mxu0 %v11250
  %11552 = vmatprep.subr.mxu0 0.0
  %11553 = vmatpush1.msra.mxu0 %v11251
  %11554 = vmatprep.subr.mxu0 0.0
  %11555 = vmatpush1.msra.mxu0 %v11252
  %11556 = vmatprep.subr.mxu0 0.0
  %11557 = vmatpush1.msra.mxu0 %v11253
  %11558 = vmatprep.subr.mxu0 0.0
  %11559 = vmatpush1.msra.mxu0 %v11254
  %11560 = vmatprep.subr.mxu0 0.0
  %11561 = vmatpush1.msra.mxu0 %v11255
  %11562 = vmatprep.subr.mxu0 0.0
  %11563 = vmatpush1.msra.mxu0 %v11256
  %11564 = vmatprep.subr.mxu0 0.0
  %11565 = vmatpush1.msra.mxu0 %v11257
  %11566 = vmatprep.subr.mxu0 0.0
  %11567 = vmatpush1.msra.mxu0 %v11258
  %11568 = vmatprep.subr.mxu0 0.0
  %11569 = vmatpush1.msra.mxu0 %v11259
  %11570 = vmatprep.subr.mxu0 0.0
  %11571 = vmatpush1.msra.mxu0 %v11260
  %11572 = vmatprep.subr.mxu0 0.0
  %11573 = vmatpush1.msra.mxu0 %v11261
  %11574 = vmatprep.subr.mxu0 0.0
  %11575 = vmatpush1.msra.mxu0 %v11262
  %11576 = vmatprep.subr.mxu0 0.0
  %11577 = vmatpush1.msra.mxu0 %v11263
  %11578 = vmatprep.subr.mxu0 0.0
  %11579 = vmatpush1.msra.mxu0 %v11264
  %11580 = vmatprep.subr.mxu0 0.0
  %11581 = vmatpush1.msra.mxu0 %v11265
  %11582 = vmatprep.subr.mxu0 0.0
  %11583 = vmatpush1.msra.mxu0 %v11266
  %11584 = vmatprep.subr.mxu0 0.0
  %11585 = vmatpush1.msra.mxu0 %v11267
  %11586 = vmatprep.subr.mxu0 0.0
  %11587 = vmatpush1.msra.mxu0 0.0
  %11588 = vmatprep.subr.mxu0 0.0
  %11589 = vmatpush1.msra.mxu0 0.0
  %11590 = vmatprep.subr.mxu0 0.0
  %11591 = vmatpush1.msra.mxu0 0.0
  %11592 = vmatprep.subr.mxu0 0.0
  %11593 = vmatpush1.msra.mxu0 0.0
  %11594 = vmatprep.subr.mxu0 0.0
  %11595 = vmatpush1.msra.mxu0 0.0
  %11596 = vmatprep.subr.mxu0 0.0
  %11597 = vmatpush1.msra.mxu0 0.0
  %11598 = vmatprep.subr.mxu0 0.0
  %11599 = vmatpush1.msra.mxu0 0.0
  %11600 = vmatprep.subr.mxu0 0.0
  %11601 = vmatpush1.msra.mxu0 0.0
  %11602 = vmatprep.mubr.f32.mxu0 %v11275
  %11603 = vmatmul.mubr.f32.gmra.mrb[0].mxu0 %v11144
  %v11604 = vpop.f32.mrb[0].mxu0
  %v11605 = vadd.f32 %v11520, %v11604
  %v11606 = vpop.f32.mrb[0].mxu0
  %11607 = vmatprep.mubr.f32.mxu0 %v11277
  %11608 = vmatmul.mubr.f32.gmra.mrb[0].mxu0 %v11145
  %v11609 = vpop.f32.mrb[0].mxu0
  %v11610 = vadd.f32 %v11525, %v11609
  %v11611 = vpop.f32.mrb[0].mxu0
  %11612 = vmatprep.mubr.f32.mxu0 %v11279
  %11613 = vmatmul.mubr.f32.gmra.mrb[0].mxu0 %v11146
  %v11614 = vpop.f32.mrb[0].mxu0
  %v11615 = vadd.f32 %v11530, %v11614
  %v11616 = vpop.f32.mrb[0].mxu0
  %11617 = vmatprep.mubr.f32.mxu0 %v11281
  %11618 = vmatmul.mubr.f32.gmra.mrb[0].mxu0 %v11147
  %v11619 = vpop.f32.mrb[0].mxu0
  %v11620 = vadd.f32 %v11535, %v11619
  %v11621 = vpop.f32.mrb[0].mxu0
  %11622 = vdwg.mxu0
  %v11623 = vmax.f32 %v11605, 0.0
  %v11624 = vmax.f32 %v11610, 0.0
  %v11625 = vmax.f32 %v11615, 0.0
  %v11626 = vmax.f32 %v11620, 0.0
  %v11627 = vld [vmem:[%s7] sm:$0xff]
  %v11628 = vld [vmem:[%s7 + $0x8] sm:$0xff]
  %v11629 = vld [vmem:[%s7 + $0x10] sm:$0xff]
  %v11630 = vld [vmem:[%s7 + $0x18] sm:$0xff]
  %v11631 = vld [vmem:[%s7 + $0x20] sm:$0xff]
  %v11632 = vld [vmem:[%s7 + $0x28] sm:$0xff]
  %v11633 = vld [vmem:[%s7 + $0x30] sm:$0xff]
  %v11634 = vld [vmem:[%s7 + $0x38] sm:$0xff]
  %v11635 = vld [vmem:[%s7 + $0x40] sm:$0xff]
  %v11636 = vld [vmem:[%s7 + $0x48] sm:$0xff]
  %v11637 = vld [vmem:[%s8] sm:$0x1]
  %v11639 = vlaneseq
  %v11640 = vshrl.u32 %v11639, 7
  %v11641 = vsub.s32 0, %v11640
  %v11642 = vrot.slane %v11637, %v11641
  %vm11644 = vcmask 654336
  %v11646 = vsel %vm11644, %v11623, 0
  %v11649 = vsel %vm11644, %v11624, 0
  %v11652 = vsel %vm11644, %v11625, 0
  %v11655 = vsel %vm11644, %v11626, 0
  %11657 = vmatprep.subr.mxu0 0.0
  %11658 = vmatpush1.msra.mxu0 %v11627
  %11659 = vmatprep.subr.mxu0 0.0
  %11660 = vmatpush1.msra.mxu0 %v11628
  %11661 = vmatprep.subr.mxu0 0.0
  %11662 = vmatpush1.msra.mxu0 %v11629
  %11663 = vmatprep.subr.mxu0 0.0
  %11664 = vmatpush1.msra.mxu0 %v11630
  %11665 = vmatprep.subr.mxu0 0.0
  %11666 = vmatpush1.msra.mxu0 %v11631
  %11667 = vmatprep.subr.mxu0 0.0
  %11668 = vmatpush1.msra.mxu0 %v11632
  %11669 = vmatprep.subr.mxu0 0.0
  %11670 = vmatpush1.msra.mxu0 %v11633
  %11671 = vmatprep.subr.mxu0 0.0
  %11672 = vmatpush1.msra.mxu0 %v11634
  %11673 = vmatprep.subr.mxu0 0.0
  %11674 = vmatpush1.msra.mxu0 %v11635
  %11675 = vmatprep.subr.mxu0 0.0
  %11676 = vmatpush1.msra.mxu0 %v11636
  %11677 = vmatprep.subr.mxu0 0.0
  %11678 = vmatpush1.msra.mxu0 0.0
  %11679 = vmatprep.subr.mxu0 0.0
  %11680 = vmatpush1.msra.mxu0 0.0
  %11681 = vmatprep.subr.mxu0 0.0
  %11682 = vmatpush1.msra.mxu0 0.0
  %11683 = vmatprep.subr.mxu0 0.0
  %11684 = vmatpush1.msra.mxu0 0.0
  %11685 = vmatprep.subr.mxu0 0.0
  %11686 = vmatpush1.msra.mxu0 0.0
  %11687 = vmatprep.subr.mxu0 0.0
  %11688 = vmatpush1.msra.mxu0 0.0
  %11689 = vmatprep.subr.mxu0 0.0
  %11690 = vmatpush1.msra.mxu0 0.0
  %11691 = vmatprep.subr.mxu0 0.0
  %11692 = vmatpush1.msra.mxu0 0.0
  %11693 = vmatprep.subr.mxu0 0.0
  %11694 = vmatpush1.msra.mxu0 0.0
  %11695 = vmatprep.subr.mxu0 0.0
  %11696 = vmatpush1.msra.mxu0 0.0
  %11697 = vmatprep.subr.mxu0 0.0
  %11698 = vmatpush1.msra.mxu0 0.0
  %11699 = vmatprep.subr.mxu0 0.0
  %11700 = vmatpush1.msra.mxu0 0.0
  %11701 = vmatprep.subr.mxu0 0.0
  %11702 = vmatpush1.msra.mxu0 0.0
  %11703 = vmatprep.subr.mxu0 0.0
  %11704 = vmatpush1.msra.mxu0 0.0
  %11705 = vmatprep.subr.mxu0 0.0
  %11706 = vmatpush1.msra.mxu0 0.0
  %11707 = vmatprep.subr.mxu0 0.0
  %11708 = vmatpush1.msra.mxu0 0.0
  %11709 = vmatprep.subr.mxu0 0.0
  %11710 = vmatpush1.msra.mxu0 0.0
  %11711 = vmatprep.subr.mxu0 0.0
  %11712 = vmatpush1.msra.mxu0 0.0
  %11713 = vmatprep.subr.mxu0 0.0
  %11714 = vmatpush1.msra.mxu0 0.0
  %11715 = vmatprep.subr.mxu0 0.0
  %11716 = vmatpush1.msra.mxu0 0.0
  %11717 = vmatprep.subr.mxu0 0.0
  %11718 = vmatpush1.msra.mxu0 0.0
  %11719 = vmatprep.subr.mxu0 0.0
  %11720 = vmatpush1.msra.mxu0 0.0
  %11721 = vmatprep.mubr.f32.mxu0 0.0
  %11722 = vmatmul.mubr.f32.gmra.mrb[0].mxu0 %v11646
  %v11723 = vpop.f32.mrb[0].mxu0
  %v11724 = vadd.f32 %v11642, %v11723
  %v11725 = vpop.f32.mrb[0].mxu0
  %11726 = vmatprep.mubr.f32.mxu0 0.0
  %11727 = vmatmul.mubr.f32.gmra.mrb[0].mxu0 %v11649
  %v11728 = vpop.f32.mrb[0].mxu0
  %v11729 = vadd.f32 %v11642, %v11728
  %v11730 = vpop.f32.mrb[0].mxu0
  %11731 = vmatprep.mubr.f32.mxu0 0.0
  %11732 = vmatmul.mubr.f32.gmra.mrb[0].mxu0 %v11652
  %v11733 = vpop.f32.mrb[0].mxu0
  %v11734 = vadd.f32 %v11642, %v11733
  %v11735 = vpop.f32.mrb[0].mxu0
  %11736 = vmatprep.mubr.f32.mxu0 0.0
  %11737 = vmatmul.mubr.f32.gmra.mrb[0].mxu0 %v11655
  %v11738 = vpop.f32.mrb[0].mxu0
  %v11739 = vadd.f32 %v11642, %v11738
  %v11740 = vpop.f32.mrb[0].mxu0
  %11741 = vdwg.mxu0
  %11742 = vst [vmem:[%s9] sm:$0xff] %v11724
  %11743 = vst [vmem:[%s9 + $0x8] sm:$0xff] %v11729
  %11744 = vst [vmem:[%s9 + $0x10] sm:$0xff] %v11734
  %11745 = vst [vmem:[%s9 + $0x18] sm:$0xff] %v11739
  // Predicated region
  $region38: #{cnn_forward_pallas.1} parent=0 // pred_check
    _
  $region39: #{cnn_forward_pallas.1} parent=0 // pred_check_branch
    %11747 = sbr.rel (0) target = $region41
  $region40: #{cnn_forward_pallas.1} parent=0 // pred_region
    _
  $region41: #{cnn_forward_pallas.1} parent=0 // pred_fallthru
    _
  // Predicated region
  $region42: #{cnn_forward_pallas.1} parent=0 // pred_check
    _
  $region43: #{cnn_forward_pallas.1} parent=0 // pred_check_branch
    %11749 = sbr.rel (0) target = $region45
  $region44: #{cnn_forward_pallas.1} parent=0 // pred_region
    _
  $region45: #{cnn_forward_pallas.1} parent=0 // pred_fallthru
    _

</llo_original>
